<compile_context>
chip_gen: v7x
topology: tpu7x:2x2x1
jax: 0.10.0
libtpu: 0.0.40
codegen_flags: <defaults>
</compile_context>

<pallas_src>
import functools

import jax
import jax.numpy as jnp
from jax.experimental import pallas as pl
from jax.experimental.pallas import tpu as pltpu


def _round_up(x, m):
    return (x + m - 1) // m * m


def _num_tensorcores():
    """Best-effort TensorCore count (2 on v7x-class chips, 1 on v5e/v6e)."""
    try:
        dev = jax.devices()[0]
        for attr in ("num_cores", "core_count"):
            v = getattr(dev, attr, None)
            if v is not None and int(v) > 0:
                return int(v)
    except Exception:
        pass
    try:
        info = pltpu.get_tpu_info()
        for attr in ("num_cores", "tensorcore_count", "num_tensorcores", "core_count"):
            v = getattr(info, attr, None)
            if v is not None and int(v) > 0:
                return int(v)
    except Exception:
        pass
    return 1


def _vmem_capacity_bytes():
    try:
        return int(pltpu.get_tpu_info().vmem_capacity_bytes)
    except Exception:
        return 64 << 20  # conservative default (v7x per-core VMEM)


def _recurrence_vmem_bytes(tt, bb, d, hp, single_buffer_weights=True):
    """Approximate VMEM footprint of one grid step of the fused kernel."""
    wbuf = 1 if single_buffer_weights else 2
    total = 0
    total += 2 * tt * bb * d * 2        # x block (bf16), double buffered
    total += 2 * tt * bb * hp * 4       # out block (f32), double buffered
    total += wbuf * d * 4 * hp * 2      # W_ih^T (bf16), resident
    total += wbuf * hp * 4 * hp * 2     # W_hh^T (bf16), resident
    total += wbuf * 4 * hp * 4          # combined bias (f32)
    total += 2 * 2 * bb * hp * 4        # h0 / c0 inputs, double buffered
    total += 2 * 2 * bb * hp * 4        # h_n / c_n outputs, double buffered
    total += 2 * bb * hp * 4            # h / c VMEM scratch carries
    return total


# ---------------------------------------------------------------------------
# Fused kernel: input projection + sequential LSTM recurrence, TT steps / grid step.
# ---------------------------------------------------------------------------
def _fused_lstm_kernel(x_ref, w_ih_ref, b_ref, w_hh_ref, h0_ref, c0_ref,
                       out_ref, hn_ref, cn_ref, h_scr, c_scr,
                       *, hp, tt_block, t_real, need_mask, unroll):
    """One grid step == `tt_block` timesteps of the LSTM for one batch block.

    x_ref   : (TT, BB, D)   bf16  embedded inputs (time block, batch block)
    w_ih_ref: (D, 4Hp)      bf16  input->gates weights (resident, single-buffered)
    b_ref   : (1, 4Hp)      f32   combined bias b_ih + b_hh
    w_hh_ref: (Hp, 4Hp)     bf16  hidden->gates weights (resident, single-buffered)
    h0/c0   : (BB, Hp)      f32   initial states
    out_ref : (TT, BB, Hp)  f32   per-step hidden outputs (time-major block)
    hn/cn   : (BB, Hp)      f32   final states (written on the last time block)
    h_scr/c_scr : VMEM (BB, Hp) f32 carries, persistent across the time blocks.
    """
    tblk = pl.program_id(1)  # sequential time axis (innermost grid dim)

    @pl.when(tblk == 0)
    def _():
        h_scr[...] = h0_ref[...]
        c_scr[...] = c0_ref[...]

    def step(tt, carry):
        h = h_scr[...]
        c = c_scr[...]
        # Fused input projection for this timestep.  It does not depend on the h/c
        # carry, so its MXU work overlaps the previous step's VPU/EUP tail.
        gates = (
            jnp.dot(x_ref[tt], w_ih_ref[...], preferred_element_type=jnp.float32)
            + b_ref[...]
            + jnp.dot(h.astype(jnp.bfloat16), w_hh_ref[...],
                      preferred_element_type=jnp.float32)
        )  # (BB, 4Hp) f32; gate slices are lane-aligned since Hp % 128 == 0

        i_g = jax.nn.sigmoid(gates[:, 0 * hp:1 * hp])
        f_g = jax.nn.sigmoid(gates[:, 1 * hp:2 * hp])
        g_g = jnp.tanh(gates[:, 2 * hp:3 * hp])
        o_g = jax.nn.sigmoid(gates[:, 3 * hp:4 * hp])

        c_new = f_g * c + i_g * g_g
        h_new = o_g * jnp.tanh(c_new)

        # Padded timesteps (only possible when need_mask) still write h_new into
        # out_ref; the wrapper slices the padded tail off, so this is harmless.
        out_ref[tt] = h_new.astype(out_ref.dtype)

        if need_mask:  # statically False whenever TT divides T (the common case)
            valid = (tblk * tt_block + tt) < t_real
            c_new = jnp.where(valid, c_new, c)
            h_new = jnp.where(valid, h_new, h)

        h_scr[...] = h_new
        c_scr[...] = c_new
        return carry

    # Visible loop (bounded vreg live ranges) rather than static Python unrolling.
    jax.lax.fori_loop(0, tt_block, step, 0, unroll=unroll)

    @pl.when(tblk == pl.num_programs(1) - 1)
    def _():
        hn_ref[...] = h_scr[...]
        cn_ref[...] = c_scr[...]


def lstm_fused_pallas(x_tm, w_ih_p, bias_p, w_hh_p, h0, c0, *,
                      t_real, tt_block, batch_block, unroll,
                      single_buffer_weights, vmem_limit_bytes):
    """x_tm: (Tp, Bp, D) bf16; weights pre-padded/transposed; h0/c0: (Bp, Hp) f32."""
    Tp, Bp, D = x_tm.shape
    Hp = w_hh_p.shape[0]
    assert Tp % tt_block == 0
    assert Bp % batch_block == 0 and batch_block % 8 == 0
    need_mask = (Tp != t_real)

    n_bblocks = Bp // batch_block
    n_tblocks = Tp // tt_block

    kernel = functools.partial(
        _fused_lstm_kernel, hp=Hp, tt_block=tt_block, t_real=t_real,
        need_mask=need_mask, unroll=unroll)

    # Constant-index blocks: request single buffering (halves their VMEM use,
    # near-mandatory on v7x's 64 MiB for large H).
    resident = {}
    if single_buffer_weights and hasattr(pl, "Buffered"):
        resident = dict(pipeline_mode=pl.Buffered(1))

    grid_spec = pltpu.PrefetchScalarGridSpec(
        num_scalar_prefetch=0,
        grid=(n_bblocks, n_tblocks),  # batch (parallel) outer, time (sequential) inner
        in_specs=[
            pl.BlockSpec((tt_block, batch_block, D), lambda b, t: (t, b, 0)),    # x
            pl.BlockSpec((D, 4 * Hp), lambda b, t: (0, 0), **resident),          # W_ih^T
            pl.BlockSpec((1, 4 * Hp), lambda b, t: (0, 0), **resident),          # bias
            pl.BlockSpec((Hp, 4 * Hp), lambda b, t: (0, 0), **resident),         # W_hh^T
            pl.BlockSpec((batch_block, Hp), lambda b, t: (b, 0)),                # h0
            pl.BlockSpec((batch_block, Hp), lambda b, t: (b, 0)),                # c0
        ],
        out_specs=[
            pl.BlockSpec((tt_block, batch_block, Hp), lambda b, t: (t, b, 0)),   # outputs
            pl.BlockSpec((batch_block, Hp), lambda b, t: (b, 0)),                # h_n
            pl.BlockSpec((batch_block, Hp), lambda b, t: (b, 0)),                # c_n
        ],
        scratch_shapes=[
            pltpu.VMEM((batch_block, Hp), jnp.float32),  # h carry
            pltpu.VMEM((batch_block, Hp), jnp.float32),  # c carry
        ],
    )

    return pl.pallas_call(
        kernel,
        out_shape=(
            jax.ShapeDtypeStruct((Tp, Bp, Hp), jnp.float32),
            jax.ShapeDtypeStruct((Bp, Hp), jnp.float32),
            jax.ShapeDtypeStruct((Bp, Hp), jnp.float32),
        ),
        grid_spec=grid_spec,
        compiler_params=pltpu.CompilerParams(
            # batch blocks independent (megacore on v7x); time is a strict recurrence.
            dimension_semantics=("parallel", "arbitrary"),
            vmem_limit_bytes=int(vmem_limit_bytes),
        ),
    )(x_tm, w_ih_p, bias_p, w_hh_p, h0, c0)


# ---------------------------------------------------------------------------
# Module wrapper (JAX/Pallas equivalent of the PyTorch EncoderLSTM).
# ---------------------------------------------------------------------------
class EncoderLSTMPallas:
    """n_layers=1, drop_prob=0 (dropout is identity in forward), batch_first=True."""

    def __init__(self, vocab_len, input_dim, hidden_dim, n_layers=1, drop_prob=0.0,
                 key=jax.random.PRNGKey(0)):
        assert n_layers == 1, "kernel implements the single-layer case used by default"
        self.vocab_len = vocab_len
        self.input_dim = input_dim
        self.hidden_dim = hidden_dim
        self.n_layers = n_layers
        self.drop_prob = drop_prob

        k_emb, k_wih, k_whh, k_bih, k_bhh = jax.random.split(key, 5)
        # nn.Embedding default init: N(0, 1)
        self.embedding = jax.random.normal(k_emb, (vocab_len, input_dim), jnp.float32)
        # nn.LSTM default init: U(-1/sqrt(H), 1/sqrt(H)); gate order [i, f, g, o]
        bound = 1.0 / (hidden_dim ** 0.5)
        self.w_ih = jax.random.uniform(k_wih, (4 * hidden_dim, input_dim),
                                       jnp.float32, -bound, bound)
        self.w_hh = jax.random.uniform(k_whh, (4 * hidden_dim, hidden_dim),
                                       jnp.float32, -bound, bound)
        self.b_ih = jax.random.uniform(k_bih, (4 * hidden_dim,), jnp.float32, -bound, bound)
        self.b_hh = jax.random.uniform(k_bhh, (4 * hidden_dim,), jnp.float32, -bound, bound)

        # ---- precompute lane-aligned, bf16 kernel-side parameters ----
        H = hidden_dim
        Hp = _round_up(H, 128)            # per-gate lane-aligned hidden size
        self.hidden_pad = Hp

        # NOTE(correctness): the padded gate columns carry ZERO weights and ZERO bias,
        # and W_hh's padded ROWS are zero.  With zero-padded h0/c0, padded hidden/cell
        # lanes therefore stay exactly 0 and can never leak into real lanes.  Do not
        # change the pad value.
        def pad_gate_cols(w):  # (rows, 4H) -> (rows, 4Hp), each gate padded independently
            parts = [jnp.pad(w[:, g * H:(g + 1) * H], ((0, 0), (0, Hp - H)))
                     for g in range(4)]
            return jnp.concatenate(parts, axis=1)

        # NOTE(numerics): weights/x are bf16 for full-rate MXU (f32 accumulate), which
        # drifts slightly from PyTorch's f32 LSTM; the bundled reference mirrors the casts.
        # TODO(synk): add an f32-weight fallback if exact f32 parity is required.
        self.w_ih_p = pad_gate_cols(self.w_ih.T).astype(jnp.bfloat16)             # (D, 4Hp)
        self.w_hh_p = jnp.pad(pad_gate_cols(self.w_hh.T),
                              ((0, Hp - H), (0, 0))).astype(jnp.bfloat16)          # (Hp, 4Hp)
        self.bias_p = pad_gate_cols((self.b_ih + self.b_hh)[None, :])              # (1, 4Hp) f32

    def __call__(self, inputs, encoder_state_vector, encoder_cell_vector):
        """inputs: (B, T) int32 token ids; states: (1, B, H) float32.

        Returns (output (B, T, H), (h_n (1, B, H), c_n (1, B, H))).
        """
        B, T = inputs.shape
        assert T >= 1
        D, H, Hp = self.input_dim, self.hidden_dim, self.hidden_pad

        # --- tiling policy -------------------------------------------------
        n_cores = _num_tensorcores()
        bsplit = 2 if (n_cores >= 2 and B >= 16) else 1   # split batch only on multi-TC chips
        Bp = _round_up(B, 16 * bsplit)                    # 16: clean sublane tiling (f32 & bf16)
        batch_block = Bp // bsplit

        capacity = _vmem_capacity_bytes()
        budget = (capacity * 3) // 4                      # headroom (v7x: <= ~48 MiB of 64)

        def fits(tt):
            return _recurrence_vmem_bytes(tt, batch_block, D, Hp) <= budget

        # Prefer a TT that divides T (no masked tail on the serial critical path).
        TT = None
        for cand in range(min(T, 32), 0, -1):
            if T % cand == 0 and fits(cand):
                TT = cand
                break
        if TT is None or (TT < 8 < T):
            # No usable divisor -> one padded, statically-masked tail block.
            TT = next((c for c in (16, 8, 4, 2, 1) if fits(c)), 1)
        Tp = _round_up(T, TT)
        unroll = TT if TT <= 8 else max(u for u in (8, 4, 2, 1) if TT % u == 0)

        footprint = _recurrence_vmem_bytes(TT, batch_block, D, Hp)
        vmem_limit = int(min(0.9 * capacity, max(2 * footprint, 32 << 20)))

        # --- glue: embedding gather + time-major layout + padding ----------
        # TODO(synk): the embedding gather stays in XLA; a Pallas DMA-gather kernel adds
        # nothing at these sizes.
        embedded = self.embedding[inputs]                       # (B, T, D) f32
        x_tm = jnp.transpose(embedded, (1, 0, 2))               # (T, B, D) time-major
        x_tm = jnp.pad(x_tm, ((0, Tp - T), (0, Bp - B), (0, 0))).astype(jnp.bfloat16)

        h0 = jnp.pad(encoder_state_vector[0], ((0, Bp - B), (0, Hp - H)))  # (Bp, Hp)
        c0 = jnp.pad(encoder_cell_vector[0], ((0, Bp - B), (0, Hp - H)))

        # --- fused projection + recurrence kernel --------------------------
        call = functools.partial(
            lstm_fused_pallas, x_tm, self.w_ih_p, self.bias_p, self.w_hh_p, h0, c0,
            t_real=T, tt_block=TT, batch_block=batch_block, unroll=unroll,
            vmem_limit_bytes=vmem_limit)
        try:
            out_tm, h_n, c_n = call(single_buffer_weights=True)
        except Exception:
            # pl.Buffered(1) unsupported on this jax/libtpu -> default double buffering.
            out_tm, h_n, c_n = call(single_buffer_weights=False)

        # TODO(synk): optionally emit the output batch-major from the kernel to remove
        # this transpose pass (only if the per-t scratch stores stay unmasked).
        output = jnp.transpose(out_tm[:T, :B, :H], (1, 0, 2))   # (B, T, H) batch_first
        h_n = h_n[:B, :H][None]                                 # (1, B, H)
        c_n = c_n[:B, :H][None]
        # dropout with p=0 is identity (module default drop_prob=0)
        return output, (h_n, c_n)


# ---------------------------------------------------------------------------
# Pure-JAX reference with the same numerics (bf16 matmul inputs, f32 accumulate).
# ---------------------------------------------------------------------------
def _reference_forward(model, inputs, h0, c0):
    B, T = inputs.shape
    D, H = model.input_dim, model.hidden_dim
    embedded = model.embedding[inputs]              # (B, T, D)
    x_tm = jnp.transpose(embedded, (1, 0, 2))       # (T, B, D)

    w_ih_bf = model.w_ih.T.astype(jnp.bfloat16)     # (D, 4H)
    w_hh_bf = model.w_hh.T.astype(jnp.bfloat16)     # (H, 4H)
    bias = (model.b_ih + model.b_hh)[None, :]       # (1, 4H)

    gx = jnp.dot(x_tm.astype(jnp.bfloat16).reshape(T * B, D), w_ih_bf,
                 preferred_element_type=jnp.float32).reshape(T, B, 4 * H) + bias

    def step(carry, gx_t):
        h, c = carry
        gates = gx_t + jnp.dot(h.astype(jnp.bfloat16), w_hh_bf,
                               preferred_element_type=jnp.float32)
        i = jax.nn.sigmoid(gates[:, 0 * H:1 * H])
        f = jax.nn.sigmoid(gates[:, 1 * H:2 * H])
        g = jnp.tanh(gates[:, 2 * H:3 * H])
        o = jax.nn.sigmoid(gates[:, 3 * H:4 * H])
        c = f * c + i * g
        h = o * jnp.tanh(c)
        return (h, c), h

    (h_n, c_n), out_tm = jax.lax.scan(step, (h0[0], c0[0]), gx)
    return jnp.transpose(out_tm, (1, 0, 2)), (h_n[None], c_n[None])


if __name__ == "__main__":
    VOCAB, D, H = 50, 16, 32
    B, T = 2, 8

    model = EncoderLSTMPallas(VOCAB, D, H, n_layers=1, drop_prob=0.0,
                              key=jax.random.PRNGKey(0))

    key = jax.random.PRNGKey(0)
    k_tok, k_h, k_c = jax.random.split(key, 3)
    inputs = jax.random.randint(k_tok, (B, T), 0, VOCAB, dtype=jnp.int32)
    h0 = jax.random.normal(k_h, (1, B, H), jnp.float32)
    c0 = jax.random.normal(k_c, (1, B, H), jnp.float32)

    output, (h_n, c_n) = model(inputs, h0, c0)
    jax.block_until_ready((output, h_n, c_n))

    # correctness check vs. pure-JAX reference with matching (bf16-matmul) numerics
    ref_out, (ref_h, ref_c) = _reference_forward(model, inputs, h0, c0)
    assert output.shape == (B, T, H) and h_n.shape == (1, B, H) and c_n.shape == (1, B, H)
    assert jnp.allclose(output, ref_out, atol=1e-3, rtol=1e-3)
    assert jnp.allclose(h_n, ref_h, atol=1e-3, rtol=1e-3)
    assert jnp.allclose(c_n, ref_c, atol=1e-3, rtol=1e-3)

    print("KERNEL_OK")
</pallas_src>

<mosaic_0001>
module attributes {stable_mosaic.version = 11 : i64} {
  func.func @_fused_lstm_kernel(%arg0: i32, %arg1: i32, %arg2: memref<8x16x16xbf16, #tpu.memory_space<vmem>>, %arg3: memref<16x512xbf16, #tpu.memory_space<vmem>>, %arg4: memref<1x512xf32, #tpu.memory_space<vmem>>, %arg5: memref<128x512xbf16, #tpu.memory_space<vmem>>, %arg6: memref<16x128xf32, #tpu.memory_space<vmem>>, %arg7: memref<16x128xf32, #tpu.memory_space<vmem>>, %arg8: memref<8x16x128xf32, #tpu.memory_space<vmem>>, %arg9: memref<16x128xf32, #tpu.memory_space<vmem>>, %arg10: memref<16x128xf32, #tpu.memory_space<vmem>>, %arg11: memref<16x128xf32, #tpu.memory_space<vmem>>, %arg12: memref<16x128xf32, #tpu.memory_space<vmem>>) attributes {dimension_semantics = [#tpu.dimension_semantics<parallel>, #tpu.dimension_semantics<arbitrary>], iteration_bounds = array<i64: 1, 1>, scalar_prefetch = 0 : i64, scratch_operands = 2 : i64, tpu.core_type = #tpu.core_type<tc>, window_params = [{transform_indices = @transform_0, window_bounds = array<i64: 8, 16, 16>}, {pipeline_mode = #tpu.pipeline_mode<synchronous>, transform_indices = @transform_1, window_bounds = array<i64: 16, 512>}, {pipeline_mode = #tpu.pipeline_mode<synchronous>, transform_indices = @transform_2, window_bounds = array<i64: 1, 512>}, {pipeline_mode = #tpu.pipeline_mode<synchronous>, transform_indices = @transform_3, window_bounds = array<i64: 128, 512>}, {transform_indices = @transform_4, window_bounds = array<i64: 16, 128>}, {transform_indices = @transform_5, window_bounds = array<i64: 16, 128>}, {transform_indices = @transform_6, window_bounds = array<i64: 8, 16, 128>}, {transform_indices = @transform_7, window_bounds = array<i64: 16, 128>}, {transform_indices = @transform_8, window_bounds = array<i64: 16, 128>}]} {
    %c0_i32 = arith.constant 0 : i32
    %0 = arith.cmpi eq, %arg1, %c0_i32 : i32
    %1 = arith.extui %0 : i1 to i32
    %c0_i32_0 = arith.constant 0 : i32
    %2 = arith.cmpi ne, %1, %c0_i32_0 : i32
    scf.if %2 {
      %c0_186 = arith.constant 0 : index
      %c0_187 = arith.constant 0 : index
      %366 = vector.load %arg6[%c0_186, %c0_187] : memref<16x128xf32, #tpu.memory_space<vmem>>, vector<16x128xf32>
      %c0_188 = arith.constant 0 : index
      %c0_189 = arith.constant 0 : index
      %367 = vector.load %arg11[%c0_188, %c0_189] : memref<16x128xf32, #tpu.memory_space<vmem>>, vector<16x128xf32>
      tpu.vector_store %arg11[%c0_188, %c0_189], %366 {strides = array<i32>} : memref<16x128xf32, #tpu.memory_space<vmem>>, vector<16x128xf32>,
      %c0_190 = arith.constant 0 : index
      %c0_191 = arith.constant 0 : index
      %368 = vector.load %arg7[%c0_190, %c0_191] : memref<16x128xf32, #tpu.memory_space<vmem>>, vector<16x128xf32>
      %c0_192 = arith.constant 0 : index
      %c0_193 = arith.constant 0 : index
      %369 = vector.load %arg12[%c0_192, %c0_193] : memref<16x128xf32, #tpu.memory_space<vmem>>, vector<16x128xf32>
      tpu.vector_store %arg12[%c0_192, %c0_193], %368 {strides = array<i32>} : memref<16x128xf32, #tpu.memory_space<vmem>>, vector<16x128xf32>,
    } else {
    }
    %c0_i32_1 = arith.constant 0 : i32
    %c0 = arith.constant 0 : index
    %c0_2 = arith.constant 0 : index
    %3 = vector.load %arg11[%c0, %c0_2] : memref<16x128xf32, #tpu.memory_space<vmem>>, vector<16x128xf32>
    %c0_3 = arith.constant 0 : index
    %c0_4 = arith.constant 0 : index
    %4 = vector.load %arg12[%c0_3, %c0_4] : memref<16x128xf32, #tpu.memory_space<vmem>>, vector<16x128xf32>
    %5 = arith.index_cast %c0_i32_1 : i32 to index
    %c0_5 = arith.constant 0 : index
    %c0_6 = arith.constant 0 : index
    %6 = vector.load %arg2[%5, %c0_5, %c0_6] : memref<8x16x16xbf16, #tpu.memory_space<vmem>>, vector<1x16x16xbf16>
    %7 = vector.shape_cast %6 : vector<1x16x16xbf16> to vector<16x16xbf16>
    %c0_7 = arith.constant 0 : index
    %c0_8 = arith.constant 0 : index
    %8 = vector.load %arg3[%c0_7, %c0_8] : memref<16x512xbf16, #tpu.memory_space<vmem>>, vector<16x512xbf16>
    %cst = arith.constant dense<0.000000e+00> : vector<16x512xf32>
    %9 = tpu.matmul %7, %8, %cst {dimension_numbers = #tpu.dot_dimension_numbers<[1], [0], [0], [1], [0, 0, 1, 1], [], []>} : vector<16x16xbf16>, vector<16x512xbf16>, vector<16x512xf32> -> vector<16x512xf32>
    %c0_9 = arith.constant 0 : index
    %c0_10 = arith.constant 0 : index
    %10 = vector.load %arg4[%c0_9, %c0_10] : memref<1x512xf32, #tpu.memory_space<vmem>>, vector<1x512xf32>
    %11 = vector.broadcast %10 : vector<1x512xf32> to vector<16x512xf32>
    %12 = arith.addf %9, %11 : vector<16x512xf32>
    %13 = arith.truncf %3 : vector<16x128xf32> to vector<16x128xbf16>
    %c0_11 = arith.constant 0 : index
    %c0_12 = arith.constant 0 : index
    %14 = vector.load %arg5[%c0_11, %c0_12] : memref<128x512xbf16, #tpu.memory_space<vmem>>, vector<128x512xbf16>
    %cst_13 = arith.constant dense<0.000000e+00> : vector<16x512xf32>
    %15 = tpu.matmul %13, %14, %cst_13 {dimension_numbers = #tpu.dot_dimension_numbers<[1], [0], [0], [1], [0, 0, 1, 1], [], []>} : vector<16x128xbf16>, vector<128x512xbf16>, vector<16x512xf32> -> vector<16x512xf32>
    %16 = arith.addf %12, %15 : vector<16x512xf32>
    %17 = vector.extract_strided_slice %16 {offsets = [0, 0], sizes = [16, 128], strides = [1, 1]} : vector<16x512xf32> to vector<16x128xf32>
    %18 = arith.negf %17 : vector<16x128xf32>
    %19 = math.exp %18 : vector<16x128xf32>
    %cst_14 = arith.constant 1.000000e+00 : f32
    %20 = vector.broadcast %cst_14 : f32 to vector<16x128xf32>
    %21 = arith.addf %20, %19 : vector<16x128xf32>
    %22 = arith.divf %20, %21 : vector<16x128xf32>
    %23 = vector.extract_strided_slice %16 {offsets = [0, 128], sizes = [16, 128], strides = [1, 1]} : vector<16x512xf32> to vector<16x128xf32>
    %24 = arith.negf %23 : vector<16x128xf32>
    %25 = math.exp %24 : vector<16x128xf32>
    %cst_15 = arith.constant 1.000000e+00 : f32
    %26 = vector.broadcast %cst_15 : f32 to vector<16x128xf32>
    %27 = arith.addf %26, %25 : vector<16x128xf32>
    %28 = arith.divf %26, %27 : vector<16x128xf32>
    %29 = vector.extract_strided_slice %16 {offsets = [0, 256], sizes = [16, 128], strides = [1, 1]} : vector<16x512xf32> to vector<16x128xf32>
    %30 = math.tanh %29 : vector<16x128xf32>
    %31 = vector.extract_strided_slice %16 {offsets = [0, 384], sizes = [16, 128], strides = [1, 1]} : vector<16x512xf32> to vector<16x128xf32>
    %32 = arith.negf %31 : vector<16x128xf32>
    %33 = math.exp %32 : vector<16x128xf32>
    %cst_16 = arith.constant 1.000000e+00 : f32
    %34 = vector.broadcast %cst_16 : f32 to vector<16x128xf32>
    %35 = arith.addf %34, %33 : vector<16x128xf32>
    %36 = arith.divf %34, %35 : vector<16x128xf32>
    %37 = arith.mulf %28, %4 : vector<16x128xf32>
    %38 = arith.mulf %22, %30 : vector<16x128xf32>
    %39 = arith.addf %37, %38 : vector<16x128xf32>
    %40 = math.tanh %39 : vector<16x128xf32>
    %41 = arith.mulf %36, %40 : vector<16x128xf32>
    %42 = arith.index_cast %c0_i32_1 : i32 to index
    %c0_17 = arith.constant 0 : index
    %c0_18 = arith.constant 0 : index
    %43 = vector.load %arg8[%42, %c0_17, %c0_18] : memref<8x16x128xf32, #tpu.memory_space<vmem>>, vector<1x16x128xf32>
    %44 = vector.shape_cast %43 : vector<1x16x128xf32> to vector<16x128xf32>
    %45 = vector.shape_cast %41 : vector<16x128xf32> to vector<1x16x128xf32>
    tpu.vector_store %arg8[%42, %c0_17, %c0_18], %45 {strides = array<i32>} : memref<8x16x128xf32, #tpu.memory_space<vmem>>, vector<1x16x128xf32>,
    %c0_19 = arith.constant 0 : index
    %c0_20 = arith.constant 0 : index
    %46 = vector.load %arg11[%c0_19, %c0_20] : memref<16x128xf32, #tpu.memory_space<vmem>>, vector<16x128xf32>
    tpu.vector_store %arg11[%c0_19, %c0_20], %41 {strides = array<i32>} : memref<16x128xf32, #tpu.memory_space<vmem>>, vector<16x128xf32>,
    %c0_21 = arith.constant 0 : index
    %c0_22 = arith.constant 0 : index
    %47 = vector.load %arg12[%c0_21, %c0_22] : memref<16x128xf32, #tpu.memory_space<vmem>>, vector<16x128xf32>
    tpu.vector_store %arg12[%c0_21, %c0_22], %39 {strides = array<i32>} : memref<16x128xf32, #tpu.memory_space<vmem>>, vector<16x128xf32>,
    %c1_i32 = arith.constant 1 : i32
    %c0_23 = arith.constant 0 : index
    %c0_24 = arith.constant 0 : index
    %48 = vector.load %arg11[%c0_23, %c0_24] : memref<16x128xf32, #tpu.memory_space<vmem>>, vector<16x128xf32>
    %c0_25 = arith.constant 0 : index
    %c0_26 = arith.constant 0 : index
    %49 = vector.load %arg12[%c0_25, %c0_26] : memref<16x128xf32, #tpu.memory_space<vmem>>, vector<16x128xf32>
    %50 = arith.index_cast %c1_i32 : i32 to index
    %c0_27 = arith.constant 0 : index
    %c0_28 = arith.constant 0 : index
    %51 = vector.load %arg2[%50, %c0_27, %c0_28] : memref<8x16x16xbf16, #tpu.memory_space<vmem>>, vector<1x16x16xbf16>
    %52 = vector.shape_cast %51 : vector<1x16x16xbf16> to vector<16x16xbf16>
    %c0_29 = arith.constant 0 : index
    %c0_30 = arith.constant 0 : index
    %53 = vector.load %arg3[%c0_29, %c0_30] : memref<16x512xbf16, #tpu.memory_space<vmem>>, vector<16x512xbf16>
    %cst_31 = arith.constant dense<0.000000e+00> : vector<16x512xf32>
    %54 = tpu.matmul %52, %53, %cst_31 {dimension_numbers = #tpu.dot_dimension_numbers<[1], [0], [0], [1], [0, 0, 1, 1], [], []>} : vector<16x16xbf16>, vector<16x512xbf16>, vector<16x512xf32> -> vector<16x512xf32>
    %c0_32 = arith.constant 0 : index
    %c0_33 = arith.constant 0 : index
    %55 = vector.load %arg4[%c0_32, %c0_33] : memref<1x512xf32, #tpu.memory_space<vmem>>, vector<1x512xf32>
    %56 = vector.broadcast %55 : vector<1x512xf32> to vector<16x512xf32>
    %57 = arith.addf %54, %56 : vector<16x512xf32>
    %58 = arith.truncf %48 : vector<16x128xf32> to vector<16x128xbf16>
    %c0_34 = arith.constant 0 : index
    %c0_35 = arith.constant 0 : index
    %59 = vector.load %arg5[%c0_34, %c0_35] : memref<128x512xbf16, #tpu.memory_space<vmem>>, vector<128x512xbf16>
    %cst_36 = arith.constant dense<0.000000e+00> : vector<16x512xf32>
    %60 = tpu.matmul %58, %59, %cst_36 {dimension_numbers = #tpu.dot_dimension_numbers<[1], [0], [0], [1], [0, 0, 1, 1], [], []>} : vector<16x128xbf16>, vector<128x512xbf16>, vector<16x512xf32> -> vector<16x512xf32>
    %61 = arith.addf %57, %60 : vector<16x512xf32>
    %62 = vector.extract_strided_slice %61 {offsets = [0, 0], sizes = [16, 128], strides = [1, 1]} : vector<16x512xf32> to vector<16x128xf32>
    %63 = arith.negf %62 : vector<16x128xf32>
    %64 = math.exp %63 : vector<16x128xf32>
    %cst_37 = arith.constant 1.000000e+00 : f32
    %65 = vector.broadcast %cst_37 : f32 to vector<16x128xf32>
    %66 = arith.addf %65, %64 : vector<16x128xf32>
    %67 = arith.divf %65, %66 : vector<16x128xf32>
    %68 = vector.extract_strided_slice %61 {offsets = [0, 128], sizes = [16, 128], strides = [1, 1]} : vector<16x512xf32> to vector<16x128xf32>
    %69 = arith.negf %68 : vector<16x128xf32>
    %70 = math.exp %69 : vector<16x128xf32>
    %cst_38 = arith.constant 1.000000e+00 : f32
    %71 = vector.broadcast %cst_38 : f32 to vector<16x128xf32>
    %72 = arith.addf %71, %70 : vector<16x128xf32>
    %73 = arith.divf %71, %72 : vector<16x128xf32>
    %74 = vector.extract_strided_slice %61 {offsets = [0, 256], sizes = [16, 128], strides = [1, 1]} : vector<16x512xf32> to vector<16x128xf32>
    %75 = math.tanh %74 : vector<16x128xf32>
    %76 = vector.extract_strided_slice %61 {offsets = [0, 384], sizes = [16, 128], strides = [1, 1]} : vector<16x512xf32> to vector<16x128xf32>
    %77 = arith.negf %76 : vector<16x128xf32>
    %78 = math.exp %77 : vector<16x128xf32>
    %cst_39 = arith.constant 1.000000e+00 : f32
    %79 = vector.broadcast %cst_39 : f32 to vector<16x128xf32>
    %80 = arith.addf %79, %78 : vector<16x128xf32>
    %81 = arith.divf %79, %80 : vector<16x128xf32>
    %82 = arith.mulf %73, %49 : vector<16x128xf32>
    %83 = arith.mulf %67, %75 : vector<16x128xf32>
    %84 = arith.addf %82, %83 : vector<16x128xf32>
    %85 = math.tanh %84 : vector<16x128xf32>
    %86 = arith.mulf %81, %85 : vector<16x128xf32>
    %87 = arith.index_cast %c1_i32 : i32 to index
    %c0_40 = arith.constant 0 : index
    %c0_41 = arith.constant 0 : index
    %88 = vector.load %arg8[%87, %c0_40, %c0_41] : memref<8x16x128xf32, #tpu.memory_space<vmem>>, vector<1x16x128xf32>
    %89 = vector.shape_cast %88 : vector<1x16x128xf32> to vector<16x128xf32>
    %90 = vector.shape_cast %86 : vector<16x128xf32> to vector<1x16x128xf32>
    tpu.vector_store %arg8[%87, %c0_40, %c0_41], %90 {strides = array<i32>} : memref<8x16x128xf32, #tpu.memory_space<vmem>>, vector<1x16x128xf32>,
    %c0_42 = arith.constant 0 : index
    %c0_43 = arith.constant 0 : index
    %91 = vector.load %arg11[%c0_42, %c0_43] : memref<16x128xf32, #tpu.memory_space<vmem>>, vector<16x128xf32>
    tpu.vector_store %arg11[%c0_42, %c0_43], %86 {strides = array<i32>} : memref<16x128xf32, #tpu.memory_space<vmem>>, vector<16x128xf32>,
    %c0_44 = arith.constant 0 : index
    %c0_45 = arith.constant 0 : index
    %92 = vector.load %arg12[%c0_44, %c0_45] : memref<16x128xf32, #tpu.memory_space<vmem>>, vector<16x128xf32>
    tpu.vector_store %arg12[%c0_44, %c0_45], %84 {strides = array<i32>} : memref<16x128xf32, #tpu.memory_space<vmem>>, vector<16x128xf32>,
    %c2_i32 = arith.constant 2 : i32
    %c0_46 = arith.constant 0 : index
    %c0_47 = arith.constant 0 : index
    %93 = vector.load %arg11[%c0_46, %c0_47] : memref<16x128xf32, #tpu.memory_space<vmem>>, vector<16x128xf32>
    %c0_48 = arith.constant 0 : index
    %c0_49 = arith.constant 0 : index
    %94 = vector.load %arg12[%c0_48, %c0_49] : memref<16x128xf32, #tpu.memory_space<vmem>>, vector<16x128xf32>
    %95 = arith.index_cast %c2_i32 : i32 to index
    %c0_50 = arith.constant 0 : index
    %c0_51 = arith.constant 0 : index
    %96 = vector.load %arg2[%95, %c0_50, %c0_51] : memref<8x16x16xbf16, #tpu.memory_space<vmem>>, vector<1x16x16xbf16>
    %97 = vector.shape_cast %96 : vector<1x16x16xbf16> to vector<16x16xbf16>
    %c0_52 = arith.constant 0 : index
    %c0_53 = arith.constant 0 : index
    %98 = vector.load %arg3[%c0_52, %c0_53] : memref<16x512xbf16, #tpu.memory_space<vmem>>, vector<16x512xbf16>
    %cst_54 = arith.constant dense<0.000000e+00> : vector<16x512xf32>
    %99 = tpu.matmul %97, %98, %cst_54 {dimension_numbers = #tpu.dot_dimension_numbers<[1], [0], [0], [1], [0, 0, 1, 1], [], []>} : vector<16x16xbf16>, vector<16x512xbf16>, vector<16x512xf32> -> vector<16x512xf32>
    %c0_55 = arith.constant 0 : index
    %c0_56 = arith.constant 0 : index
    %100 = vector.load %arg4[%c0_55, %c0_56] : memref<1x512xf32, #tpu.memory_space<vmem>>, vector<1x512xf32>
    %101 = vector.broadcast %100 : vector<1x512xf32> to vector<16x512xf32>
    %102 = arith.addf %99, %101 : vector<16x512xf32>
    %103 = arith.truncf %93 : vector<16x128xf32> to vector<16x128xbf16>
    %c0_57 = arith.constant 0 : index
    %c0_58 = arith.constant 0 : index
    %104 = vector.load %arg5[%c0_57, %c0_58] : memref<128x512xbf16, #tpu.memory_space<vmem>>, vector<128x512xbf16>
    %cst_59 = arith.constant dense<0.000000e+00> : vector<16x512xf32>
    %105 = tpu.matmul %103, %104, %cst_59 {dimension_numbers = #tpu.dot_dimension_numbers<[1], [0], [0], [1], [0, 0, 1, 1], [], []>} : vector<16x128xbf16>, vector<128x512xbf16>, vector<16x512xf32> -> vector<16x512xf32>
    %106 = arith.addf %102, %105 : vector<16x512xf32>
    %107 = vector.extract_strided_slice %106 {offsets = [0, 0], sizes = [16, 128], strides = [1, 1]} : vector<16x512xf32> to vector<16x128xf32>
    %108 = arith.negf %107 : vector<16x128xf32>
    %109 = math.exp %108 : vector<16x128xf32>
    %cst_60 = arith.constant 1.000000e+00 : f32
    %110 = vector.broadcast %cst_60 : f32 to vector<16x128xf32>
    %111 = arith.addf %110, %109 : vector<16x128xf32>
    %112 = arith.divf %110, %111 : vector<16x128xf32>
    %113 = vector.extract_strided_slice %106 {offsets = [0, 128], sizes = [16, 128], strides = [1, 1]} : vector<16x512xf32> to vector<16x128xf32>
    %114 = arith.negf %113 : vector<16x128xf32>
    %115 = math.exp %114 : vector<16x128xf32>
    %cst_61 = arith.constant 1.000000e+00 : f32
    %116 = vector.broadcast %cst_61 : f32 to vector<16x128xf32>
    %117 = arith.addf %116, %115 : vector<16x128xf32>
    %118 = arith.divf %116, %117 : vector<16x128xf32>
    %119 = vector.extract_strided_slice %106 {offsets = [0, 256], sizes = [16, 128], strides = [1, 1]} : vector<16x512xf32> to vector<16x128xf32>
    %120 = math.tanh %119 : vector<16x128xf32>
    %121 = vector.extract_strided_slice %106 {offsets = [0, 384], sizes = [16, 128], strides = [1, 1]} : vector<16x512xf32> to vector<16x128xf32>
    %122 = arith.negf %121 : vector<16x128xf32>
    %123 = math.exp %122 : vector<16x128xf32>
    %cst_62 = arith.constant 1.000000e+00 : f32
    %124 = vector.broadcast %cst_62 : f32 to vector<16x128xf32>
    %125 = arith.addf %124, %123 : vector<16x128xf32>
    %126 = arith.divf %124, %125 : vector<16x128xf32>
    %127 = arith.mulf %118, %94 : vector<16x128xf32>
    %128 = arith.mulf %112, %120 : vector<16x128xf32>
    %129 = arith.addf %127, %128 : vector<16x128xf32>
    %130 = math.tanh %129 : vector<16x128xf32>
    %131 = arith.mulf %126, %130 : vector<16x128xf32>
    %132 = arith.index_cast %c2_i32 : i32 to index
    %c0_63 = arith.constant 0 : index
    %c0_64 = arith.constant 0 : index
    %133 = vector.load %arg8[%132, %c0_63, %c0_64] : memref<8x16x128xf32, #tpu.memory_space<vmem>>, vector<1x16x128xf32>
    %134 = vector.shape_cast %133 : vector<1x16x128xf32> to vector<16x128xf32>
    %135 = vector.shape_cast %131 : vector<16x128xf32> to vector<1x16x128xf32>
    tpu.vector_store %arg8[%132, %c0_63, %c0_64], %135 {strides = array<i32>} : memref<8x16x128xf32, #tpu.memory_space<vmem>>, vector<1x16x128xf32>,
    %c0_65 = arith.constant 0 : index
    %c0_66 = arith.constant 0 : index
    %136 = vector.load %arg11[%c0_65, %c0_66] : memref<16x128xf32, #tpu.memory_space<vmem>>, vector<16x128xf32>
    tpu.vector_store %arg11[%c0_65, %c0_66], %131 {strides = array<i32>} : memref<16x128xf32, #tpu.memory_space<vmem>>, vector<16x128xf32>,
    %c0_67 = arith.constant 0 : index
    %c0_68 = arith.constant 0 : index
    %137 = vector.load %arg12[%c0_67, %c0_68] : memref<16x128xf32, #tpu.memory_space<vmem>>, vector<16x128xf32>
    tpu.vector_store %arg12[%c0_67, %c0_68], %129 {strides = array<i32>} : memref<16x128xf32, #tpu.memory_space<vmem>>, vector<16x128xf32>,
    %c3_i32 = arith.constant 3 : i32
    %c0_69 = arith.constant 0 : index
    %c0_70 = arith.constant 0 : index
    %138 = vector.load %arg11[%c0_69, %c0_70] : memref<16x128xf32, #tpu.memory_space<vmem>>, vector<16x128xf32>
    %c0_71 = arith.constant 0 : index
    %c0_72 = arith.constant 0 : index
    %139 = vector.load %arg12[%c0_71, %c0_72] : memref<16x128xf32, #tpu.memory_space<vmem>>, vector<16x128xf32>
    %140 = arith.index_cast %c3_i32 : i32 to index
    %c0_73 = arith.constant 0 : index
    %c0_74 = arith.constant 0 : index
    %141 = vector.load %arg2[%140, %c0_73, %c0_74] : memref<8x16x16xbf16, #tpu.memory_space<vmem>>, vector<1x16x16xbf16>
    %142 = vector.shape_cast %141 : vector<1x16x16xbf16> to vector<16x16xbf16>
    %c0_75 = arith.constant 0 : index
    %c0_76 = arith.constant 0 : index
    %143 = vector.load %arg3[%c0_75, %c0_76] : memref<16x512xbf16, #tpu.memory_space<vmem>>, vector<16x512xbf16>
    %cst_77 = arith.constant dense<0.000000e+00> : vector<16x512xf32>
    %144 = tpu.matmul %142, %143, %cst_77 {dimension_numbers = #tpu.dot_dimension_numbers<[1], [0], [0], [1], [0, 0, 1, 1], [], []>} : vector<16x16xbf16>, vector<16x512xbf16>, vector<16x512xf32> -> vector<16x512xf32>
    %c0_78 = arith.constant 0 : index
    %c0_79 = arith.constant 0 : index
    %145 = vector.load %arg4[%c0_78, %c0_79] : memref<1x512xf32, #tpu.memory_space<vmem>>, vector<1x512xf32>
    %146 = vector.broadcast %145 : vector<1x512xf32> to vector<16x512xf32>
    %147 = arith.addf %144, %146 : vector<16x512xf32>
    %148 = arith.truncf %138 : vector<16x128xf32> to vector<16x128xbf16>
    %c0_80 = arith.constant 0 : index
    %c0_81 = arith.constant 0 : index
    %149 = vector.load %arg5[%c0_80, %c0_81] : memref<128x512xbf16, #tpu.memory_space<vmem>>, vector<128x512xbf16>
    %cst_82 = arith.constant dense<0.000000e+00> : vector<16x512xf32>
    %150 = tpu.matmul %148, %149, %cst_82 {dimension_numbers = #tpu.dot_dimension_numbers<[1], [0], [0], [1], [0, 0, 1, 1], [], []>} : vector<16x128xbf16>, vector<128x512xbf16>, vector<16x512xf32> -> vector<16x512xf32>
    %151 = arith.addf %147, %150 : vector<16x512xf32>
    %152 = vector.extract_strided_slice %151 {offsets = [0, 0], sizes = [16, 128], strides = [1, 1]} : vector<16x512xf32> to vector<16x128xf32>
    %153 = arith.negf %152 : vector<16x128xf32>
    %154 = math.exp %153 : vector<16x128xf32>
    %cst_83 = arith.constant 1.000000e+00 : f32
    %155 = vector.broadcast %cst_83 : f32 to vector<16x128xf32>
    %156 = arith.addf %155, %154 : vector<16x128xf32>
    %157 = arith.divf %155, %156 : vector<16x128xf32>
    %158 = vector.extract_strided_slice %151 {offsets = [0, 128], sizes = [16, 128], strides = [1, 1]} : vector<16x512xf32> to vector<16x128xf32>
    %159 = arith.negf %158 : vector<16x128xf32>
    %160 = math.exp %159 : vector<16x128xf32>
    %cst_84 = arith.constant 1.000000e+00 : f32
    %161 = vector.broadcast %cst_84 : f32 to vector<16x128xf32>
    %162 = arith.addf %161, %160 : vector<16x128xf32>
    %163 = arith.divf %161, %162 : vector<16x128xf32>
    %164 = vector.extract_strided_slice %151 {offsets = [0, 256], sizes = [16, 128], strides = [1, 1]} : vector<16x512xf32> to vector<16x128xf32>
    %165 = math.tanh %164 : vector<16x128xf32>
    %166 = vector.extract_strided_slice %151 {offsets = [0, 384], sizes = [16, 128], strides = [1, 1]} : vector<16x512xf32> to vector<16x128xf32>
    %167 = arith.negf %166 : vector<16x128xf32>
    %168 = math.exp %167 : vector<16x128xf32>
    %cst_85 = arith.constant 1.000000e+00 : f32
    %169 = vector.broadcast %cst_85 : f32 to vector<16x128xf32>
    %170 = arith.addf %169, %168 : vector<16x128xf32>
    %171 = arith.divf %169, %170 : vector<16x128xf32>
    %172 = arith.mulf %163, %139 : vector<16x128xf32>
    %173 = arith.mulf %157, %165 : vector<16x128xf32>
    %174 = arith.addf %172, %173 : vector<16x128xf32>
    %175 = math.tanh %174 : vector<16x128xf32>
    %176 = arith.mulf %171, %175 : vector<16x128xf32>
    %177 = arith.index_cast %c3_i32 : i32 to index
    %c0_86 = arith.constant 0 : index
    %c0_87 = arith.constant 0 : index
    %178 = vector.load %arg8[%177, %c0_86, %c0_87] : memref<8x16x128xf32, #tpu.memory_space<vmem>>, vector<1x16x128xf32>
    %179 = vector.shape_cast %178 : vector<1x16x128xf32> to vector<16x128xf32>
    %180 = vector.shape_cast %176 : vector<16x128xf32> to vector<1x16x128xf32>
    tpu.vector_store %arg8[%177, %c0_86, %c0_87], %180 {strides = array<i32>} : memref<8x16x128xf32, #tpu.memory_space<vmem>>, vector<1x16x128xf32>,
    %c0_88 = arith.constant 0 : index
    %c0_89 = arith.constant 0 : index
    %181 = vector.load %arg11[%c0_88, %c0_89] : memref<16x128xf32, #tpu.memory_space<vmem>>, vector<16x128xf32>
    tpu.vector_store %arg11[%c0_88, %c0_89], %176 {strides = array<i32>} : memref<16x128xf32, #tpu.memory_space<vmem>>, vector<16x128xf32>,
    %c0_90 = arith.constant 0 : index
    %c0_91 = arith.constant 0 : index
    %182 = vector.load %arg12[%c0_90, %c0_91] : memref<16x128xf32, #tpu.memory_space<vmem>>, vector<16x128xf32>
    tpu.vector_store %arg12[%c0_90, %c0_91], %174 {strides = array<i32>} : memref<16x128xf32, #tpu.memory_space<vmem>>, vector<16x128xf32>,
    %c4_i32 = arith.constant 4 : i32
    %c0_92 = arith.constant 0 : index
    %c0_93 = arith.constant 0 : index
    %183 = vector.load %arg11[%c0_92, %c0_93] : memref<16x128xf32, #tpu.memory_space<vmem>>, vector<16x128xf32>
    %c0_94 = arith.constant 0 : index
    %c0_95 = arith.constant 0 : index
    %184 = vector.load %arg12[%c0_94, %c0_95] : memref<16x128xf32, #tpu.memory_space<vmem>>, vector<16x128xf32>
    %185 = arith.index_cast %c4_i32 : i32 to index
    %c0_96 = arith.constant 0 : index
    %c0_97 = arith.constant 0 : index
    %186 = vector.load %arg2[%185, %c0_96, %c0_97] : memref<8x16x16xbf16, #tpu.memory_space<vmem>>, vector<1x16x16xbf16>
    %187 = vector.shape_cast %186 : vector<1x16x16xbf16> to vector<16x16xbf16>
    %c0_98 = arith.constant 0 : index
    %c0_99 = arith.constant 0 : index
    %188 = vector.load %arg3[%c0_98, %c0_99] : memref<16x512xbf16, #tpu.memory_space<vmem>>, vector<16x512xbf16>
    %cst_100 = arith.constant dense<0.000000e+00> : vector<16x512xf32>
    %189 = tpu.matmul %187, %188, %cst_100 {dimension_numbers = #tpu.dot_dimension_numbers<[1], [0], [0], [1], [0, 0, 1, 1], [], []>} : vector<16x16xbf16>, vector<16x512xbf16>, vector<16x512xf32> -> vector<16x512xf32>
    %c0_101 = arith.constant 0 : index
    %c0_102 = arith.constant 0 : index
    %190 = vector.load %arg4[%c0_101, %c0_102] : memref<1x512xf32, #tpu.memory_space<vmem>>, vector<1x512xf32>
    %191 = vector.broadcast %190 : vector<1x512xf32> to vector<16x512xf32>
    %192 = arith.addf %189, %191 : vector<16x512xf32>
    %193 = arith.truncf %183 : vector<16x128xf32> to vector<16x128xbf16>
    %c0_103 = arith.constant 0 : index
    %c0_104 = arith.constant 0 : index
    %194 = vector.load %arg5[%c0_103, %c0_104] : memref<128x512xbf16, #tpu.memory_space<vmem>>, vector<128x512xbf16>
    %cst_105 = arith.constant dense<0.000000e+00> : vector<16x512xf32>
    %195 = tpu.matmul %193, %194, %cst_105 {dimension_numbers = #tpu.dot_dimension_numbers<[1], [0], [0], [1], [0, 0, 1, 1], [], []>} : vector<16x128xbf16>, vector<128x512xbf16>, vector<16x512xf32> -> vector<16x512xf32>
    %196 = arith.addf %192, %195 : vector<16x512xf32>
    %197 = vector.extract_strided_slice %196 {offsets = [0, 0], sizes = [16, 128], strides = [1, 1]} : vector<16x512xf32> to vector<16x128xf32>
    %198 = arith.negf %197 : vector<16x128xf32>
    %199 = math.exp %198 : vector<16x128xf32>
    %cst_106 = arith.constant 1.000000e+00 : f32
    %200 = vector.broadcast %cst_106 : f32 to vector<16x128xf32>
    %201 = arith.addf %200, %199 : vector<16x128xf32>
    %202 = arith.divf %200, %201 : vector<16x128xf32>
    %203 = vector.extract_strided_slice %196 {offsets = [0, 128], sizes = [16, 128], strides = [1, 1]} : vector<16x512xf32> to vector<16x128xf32>
    %204 = arith.negf %203 : vector<16x128xf32>
    %205 = math.exp %204 : vector<16x128xf32>
    %cst_107 = arith.constant 1.000000e+00 : f32
    %206 = vector.broadcast %cst_107 : f32 to vector<16x128xf32>
    %207 = arith.addf %206, %205 : vector<16x128xf32>
    %208 = arith.divf %206, %207 : vector<16x128xf32>
    %209 = vector.extract_strided_slice %196 {offsets = [0, 256], sizes = [16, 128], strides = [1, 1]} : vector<16x512xf32> to vector<16x128xf32>
    %210 = math.tanh %209 : vector<16x128xf32>
    %211 = vector.extract_strided_slice %196 {offsets = [0, 384], sizes = [16, 128], strides = [1, 1]} : vector<16x512xf32> to vector<16x128xf32>
    %212 = arith.negf %211 : vector<16x128xf32>
    %213 = math.exp %212 : vector<16x128xf32>
    %cst_108 = arith.constant 1.000000e+00 : f32
    %214 = vector.broadcast %cst_108 : f32 to vector<16x128xf32>
    %215 = arith.addf %214, %213 : vector<16x128xf32>
    %216 = arith.divf %214, %215 : vector<16x128xf32>
    %217 = arith.mulf %208, %184 : vector<16x128xf32>
    %218 = arith.mulf %202, %210 : vector<16x128xf32>
    %219 = arith.addf %217, %218 : vector<16x128xf32>
    %220 = math.tanh %219 : vector<16x128xf32>
    %221 = arith.mulf %216, %220 : vector<16x128xf32>
    %222 = arith.index_cast %c4_i32 : i32 to index
    %c0_109 = arith.constant 0 : index
    %c0_110 = arith.constant 0 : index
    %223 = vector.load %arg8[%222, %c0_109, %c0_110] : memref<8x16x128xf32, #tpu.memory_space<vmem>>, vector<1x16x128xf32>
    %224 = vector.shape_cast %223 : vector<1x16x128xf32> to vector<16x128xf32>
    %225 = vector.shape_cast %221 : vector<16x128xf32> to vector<1x16x128xf32>
    tpu.vector_store %arg8[%222, %c0_109, %c0_110], %225 {strides = array<i32>} : memref<8x16x128xf32, #tpu.memory_space<vmem>>, vector<1x16x128xf32>,
    %c0_111 = arith.constant 0 : index
    %c0_112 = arith.constant 0 : index
    %226 = vector.load %arg11[%c0_111, %c0_112] : memref<16x128xf32, #tpu.memory_space<vmem>>, vector<16x128xf32>
    tpu.vector_store %arg11[%c0_111, %c0_112], %221 {strides = array<i32>} : memref<16x128xf32, #tpu.memory_space<vmem>>, vector<16x128xf32>,
    %c0_113 = arith.constant 0 : index
    %c0_114 = arith.constant 0 : index
    %227 = vector.load %arg12[%c0_113, %c0_114] : memref<16x128xf32, #tpu.memory_space<vmem>>, vector<16x128xf32>
    tpu.vector_store %arg12[%c0_113, %c0_114], %219 {strides = array<i32>} : memref<16x128xf32, #tpu.memory_space<vmem>>, vector<16x128xf32>,
    %c5_i32 = arith.constant 5 : i32
    %c0_115 = arith.constant 0 : index
    %c0_116 = arith.constant 0 : index
    %228 = vector.load %arg11[%c0_115, %c0_116] : memref<16x128xf32, #tpu.memory_space<vmem>>, vector<16x128xf32>
    %c0_117 = arith.constant 0 : index
    %c0_118 = arith.constant 0 : index
    %229 = vector.load %arg12[%c0_117, %c0_118] : memref<16x128xf32, #tpu.memory_space<vmem>>, vector<16x128xf32>
    %230 = arith.index_cast %c5_i32 : i32 to index
    %c0_119 = arith.constant 0 : index
    %c0_120 = arith.constant 0 : index
    %231 = vector.load %arg2[%230, %c0_119, %c0_120] : memref<8x16x16xbf16, #tpu.memory_space<vmem>>, vector<1x16x16xbf16>
    %232 = vector.shape_cast %231 : vector<1x16x16xbf16> to vector<16x16xbf16>
    %c0_121 = arith.constant 0 : index
    %c0_122 = arith.constant 0 : index
    %233 = vector.load %arg3[%c0_121, %c0_122] : memref<16x512xbf16, #tpu.memory_space<vmem>>, vector<16x512xbf16>
    %cst_123 = arith.constant dense<0.000000e+00> : vector<16x512xf32>
    %234 = tpu.matmul %232, %233, %cst_123 {dimension_numbers = #tpu.dot_dimension_numbers<[1], [0], [0], [1], [0, 0, 1, 1], [], []>} : vector<16x16xbf16>, vector<16x512xbf16>, vector<16x512xf32> -> vector<16x512xf32>
    %c0_124 = arith.constant 0 : index
    %c0_125 = arith.constant 0 : index
    %235 = vector.load %arg4[%c0_124, %c0_125] : memref<1x512xf32, #tpu.memory_space<vmem>>, vector<1x512xf32>
    %236 = vector.broadcast %235 : vector<1x512xf32> to vector<16x512xf32>
    %237 = arith.addf %234, %236 : vector<16x512xf32>
    %238 = arith.truncf %228 : vector<16x128xf32> to vector<16x128xbf16>
    %c0_126 = arith.constant 0 : index
    %c0_127 = arith.constant 0 : index
    %239 = vector.load %arg5[%c0_126, %c0_127] : memref<128x512xbf16, #tpu.memory_space<vmem>>, vector<128x512xbf16>
    %cst_128 = arith.constant dense<0.000000e+00> : vector<16x512xf32>
    %240 = tpu.matmul %238, %239, %cst_128 {dimension_numbers = #tpu.dot_dimension_numbers<[1], [0], [0], [1], [0, 0, 1, 1], [], []>} : vector<16x128xbf16>, vector<128x512xbf16>, vector<16x512xf32> -> vector<16x512xf32>
    %241 = arith.addf %237, %240 : vector<16x512xf32>
    %242 = vector.extract_strided_slice %241 {offsets = [0, 0], sizes = [16, 128], strides = [1, 1]} : vector<16x512xf32> to vector<16x128xf32>
    %243 = arith.negf %242 : vector<16x128xf32>
    %244 = math.exp %243 : vector<16x128xf32>
    %cst_129 = arith.constant 1.000000e+00 : f32
    %245 = vector.broadcast %cst_129 : f32 to vector<16x128xf32>
    %246 = arith.addf %245, %244 : vector<16x128xf32>
    %247 = arith.divf %245, %246 : vector<16x128xf32>
    %248 = vector.extract_strided_slice %241 {offsets = [0, 128], sizes = [16, 128], strides = [1, 1]} : vector<16x512xf32> to vector<16x128xf32>
    %249 = arith.negf %248 : vector<16x128xf32>
    %250 = math.exp %249 : vector<16x128xf32>
    %cst_130 = arith.constant 1.000000e+00 : f32
    %251 = vector.broadcast %cst_130 : f32 to vector<16x128xf32>
    %252 = arith.addf %251, %250 : vector<16x128xf32>
    %253 = arith.divf %251, %252 : vector<16x128xf32>
    %254 = vector.extract_strided_slice %241 {offsets = [0, 256], sizes = [16, 128], strides = [1, 1]} : vector<16x512xf32> to vector<16x128xf32>
    %255 = math.tanh %254 : vector<16x128xf32>
    %256 = vector.extract_strided_slice %241 {offsets = [0, 384], sizes = [16, 128], strides = [1, 1]} : vector<16x512xf32> to vector<16x128xf32>
    %257 = arith.negf %256 : vector<16x128xf32>
    %258 = math.exp %257 : vector<16x128xf32>
    %cst_131 = arith.constant 1.000000e+00 : f32
    %259 = vector.broadcast %cst_131 : f32 to vector<16x128xf32>
    %260 = arith.addf %259, %258 : vector<16x128xf32>
    %261 = arith.divf %259, %260 : vector<16x128xf32>
    %262 = arith.mulf %253, %229 : vector<16x128xf32>
    %263 = arith.mulf %247, %255 : vector<16x128xf32>
    %264 = arith.addf %262, %263 : vector<16x128xf32>
    %265 = math.tanh %264 : vector<16x128xf32>
    %266 = arith.mulf %261, %265 : vector<16x128xf32>
    %267 = arith.index_cast %c5_i32 : i32 to index
    %c0_132 = arith.constant 0 : index
    %c0_133 = arith.constant 0 : index
    %268 = vector.load %arg8[%267, %c0_132, %c0_133] : memref<8x16x128xf32, #tpu.memory_space<vmem>>, vector<1x16x128xf32>
    %269 = vector.shape_cast %268 : vector<1x16x128xf32> to vector<16x128xf32>
    %270 = vector.shape_cast %266 : vector<16x128xf32> to vector<1x16x128xf32>
    tpu.vector_store %arg8[%267, %c0_132, %c0_133], %270 {strides = array<i32>} : memref<8x16x128xf32, #tpu.memory_space<vmem>>, vector<1x16x128xf32>,
    %c0_134 = arith.constant 0 : index
    %c0_135 = arith.constant 0 : index
    %271 = vector.load %arg11[%c0_134, %c0_135] : memref<16x128xf32, #tpu.memory_space<vmem>>, vector<16x128xf32>
    tpu.vector_store %arg11[%c0_134, %c0_135], %266 {strides = array<i32>} : memref<16x128xf32, #tpu.memory_space<vmem>>, vector<16x128xf32>,
    %c0_136 = arith.constant 0 : index
    %c0_137 = arith.constant 0 : index
    %272 = vector.load %arg12[%c0_136, %c0_137] : memref<16x128xf32, #tpu.memory_space<vmem>>, vector<16x128xf32>
    tpu.vector_store %arg12[%c0_136, %c0_137], %264 {strides = array<i32>} : memref<16x128xf32, #tpu.memory_space<vmem>>, vector<16x128xf32>,
    %c6_i32 = arith.constant 6 : i32
    %c0_138 = arith.constant 0 : index
    %c0_139 = arith.constant 0 : index
    %273 = vector.load %arg11[%c0_138, %c0_139] : memref<16x128xf32, #tpu.memory_space<vmem>>, vector<16x128xf32>
    %c0_140 = arith.constant 0 : index
    %c0_141 = arith.constant 0 : index
    %274 = vector.load %arg12[%c0_140, %c0_141] : memref<16x128xf32, #tpu.memory_space<vmem>>, vector<16x128xf32>
    %275 = arith.index_cast %c6_i32 : i32 to index
    %c0_142 = arith.constant 0 : index
    %c0_143 = arith.constant 0 : index
    %276 = vector.load %arg2[%275, %c0_142, %c0_143] : memref<8x16x16xbf16, #tpu.memory_space<vmem>>, vector<1x16x16xbf16>
    %277 = vector.shape_cast %276 : vector<1x16x16xbf16> to vector<16x16xbf16>
    %c0_144 = arith.constant 0 : index
    %c0_145 = arith.constant 0 : index
    %278 = vector.load %arg3[%c0_144, %c0_145] : memref<16x512xbf16, #tpu.memory_space<vmem>>, vector<16x512xbf16>
    %cst_146 = arith.constant dense<0.000000e+00> : vector<16x512xf32>
    %279 = tpu.matmul %277, %278, %cst_146 {dimension_numbers = #tpu.dot_dimension_numbers<[1], [0], [0], [1], [0, 0, 1, 1], [], []>} : vector<16x16xbf16>, vector<16x512xbf16>, vector<16x512xf32> -> vector<16x512xf32>
    %c0_147 = arith.constant 0 : index
    %c0_148 = arith.constant 0 : index
    %280 = vector.load %arg4[%c0_147, %c0_148] : memref<1x512xf32, #tpu.memory_space<vmem>>, vector<1x512xf32>
    %281 = vector.broadcast %280 : vector<1x512xf32> to vector<16x512xf32>
    %282 = arith.addf %279, %281 : vector<16x512xf32>
    %283 = arith.truncf %273 : vector<16x128xf32> to vector<16x128xbf16>
    %c0_149 = arith.constant 0 : index
    %c0_150 = arith.constant 0 : index
    %284 = vector.load %arg5[%c0_149, %c0_150] : memref<128x512xbf16, #tpu.memory_space<vmem>>, vector<128x512xbf16>
    %cst_151 = arith.constant dense<0.000000e+00> : vector<16x512xf32>
    %285 = tpu.matmul %283, %284, %cst_151 {dimension_numbers = #tpu.dot_dimension_numbers<[1], [0], [0], [1], [0, 0, 1, 1], [], []>} : vector<16x128xbf16>, vector<128x512xbf16>, vector<16x512xf32> -> vector<16x512xf32>
    %286 = arith.addf %282, %285 : vector<16x512xf32>
    %287 = vector.extract_strided_slice %286 {offsets = [0, 0], sizes = [16, 128], strides = [1, 1]} : vector<16x512xf32> to vector<16x128xf32>
    %288 = arith.negf %287 : vector<16x128xf32>
    %289 = math.exp %288 : vector<16x128xf32>
    %cst_152 = arith.constant 1.000000e+00 : f32
    %290 = vector.broadcast %cst_152 : f32 to vector<16x128xf32>
    %291 = arith.addf %290, %289 : vector<16x128xf32>
    %292 = arith.divf %290, %291 : vector<16x128xf32>
    %293 = vector.extract_strided_slice %286 {offsets = [0, 128], sizes = [16, 128], strides = [1, 1]} : vector<16x512xf32> to vector<16x128xf32>
    %294 = arith.negf %293 : vector<16x128xf32>
    %295 = math.exp %294 : vector<16x128xf32>
    %cst_153 = arith.constant 1.000000e+00 : f32
    %296 = vector.broadcast %cst_153 : f32 to vector<16x128xf32>
    %297 = arith.addf %296, %295 : vector<16x128xf32>
    %298 = arith.divf %296, %297 : vector<16x128xf32>
    %299 = vector.extract_strided_slice %286 {offsets = [0, 256], sizes = [16, 128], strides = [1, 1]} : vector<16x512xf32> to vector<16x128xf32>
    %300 = math.tanh %299 : vector<16x128xf32>
    %301 = vector.extract_strided_slice %286 {offsets = [0, 384], sizes = [16, 128], strides = [1, 1]} : vector<16x512xf32> to vector<16x128xf32>
    %302 = arith.negf %301 : vector<16x128xf32>
    %303 = math.exp %302 : vector<16x128xf32>
    %cst_154 = arith.constant 1.000000e+00 : f32
    %304 = vector.broadcast %cst_154 : f32 to vector<16x128xf32>
    %305 = arith.addf %304, %303 : vector<16x128xf32>
    %306 = arith.divf %304, %305 : vector<16x128xf32>
    %307 = arith.mulf %298, %274 : vector<16x128xf32>
    %308 = arith.mulf %292, %300 : vector<16x128xf32>
    %309 = arith.addf %307, %308 : vector<16x128xf32>
    %310 = math.tanh %309 : vector<16x128xf32>
    %311 = arith.mulf %306, %310 : vector<16x128xf32>
    %312 = arith.index_cast %c6_i32 : i32 to index
    %c0_155 = arith.constant 0 : index
    %c0_156 = arith.constant 0 : index
    %313 = vector.load %arg8[%312, %c0_155, %c0_156] : memref<8x16x128xf32, #tpu.memory_space<vmem>>, vector<1x16x128xf32>
    %314 = vector.shape_cast %313 : vector<1x16x128xf32> to vector<16x128xf32>
    %315 = vector.shape_cast %311 : vector<16x128xf32> to vector<1x16x128xf32>
    tpu.vector_store %arg8[%312, %c0_155, %c0_156], %315 {strides = array<i32>} : memref<8x16x128xf32, #tpu.memory_space<vmem>>, vector<1x16x128xf32>,
    %c0_157 = arith.constant 0 : index
    %c0_158 = arith.constant 0 : index
    %316 = vector.load %arg11[%c0_157, %c0_158] : memref<16x128xf32, #tpu.memory_space<vmem>>, vector<16x128xf32>
    tpu.vector_store %arg11[%c0_157, %c0_158], %311 {strides = array<i32>} : memref<16x128xf32, #tpu.memory_space<vmem>>, vector<16x128xf32>,
    %c0_159 = arith.constant 0 : index
    %c0_160 = arith.constant 0 : index
    %317 = vector.load %arg12[%c0_159, %c0_160] : memref<16x128xf32, #tpu.memory_space<vmem>>, vector<16x128xf32>
    tpu.vector_store %arg12[%c0_159, %c0_160], %309 {strides = array<i32>} : memref<16x128xf32, #tpu.memory_space<vmem>>, vector<16x128xf32>,
    %c7_i32 = arith.constant 7 : i32
    %c0_161 = arith.constant 0 : index
    %c0_162 = arith.constant 0 : index
    %318 = vector.load %arg11[%c0_161, %c0_162] : memref<16x128xf32, #tpu.memory_space<vmem>>, vector<16x128xf32>
    %c0_163 = arith.constant 0 : index
    %c0_164 = arith.constant 0 : index
    %319 = vector.load %arg12[%c0_163, %c0_164] : memref<16x128xf32, #tpu.memory_space<vmem>>, vector<16x128xf32>
    %320 = arith.index_cast %c7_i32 : i32 to index
    %c0_165 = arith.constant 0 : index
    %c0_166 = arith.constant 0 : index
    %321 = vector.load %arg2[%320, %c0_165, %c0_166] : memref<8x16x16xbf16, #tpu.memory_space<vmem>>, vector<1x16x16xbf16>
    %322 = vector.shape_cast %321 : vector<1x16x16xbf16> to vector<16x16xbf16>
    %c0_167 = arith.constant 0 : index
    %c0_168 = arith.constant 0 : index
    %323 = vector.load %arg3[%c0_167, %c0_168] : memref<16x512xbf16, #tpu.memory_space<vmem>>, vector<16x512xbf16>
    %cst_169 = arith.constant dense<0.000000e+00> : vector<16x512xf32>
    %324 = tpu.matmul %322, %323, %cst_169 {dimension_numbers = #tpu.dot_dimension_numbers<[1], [0], [0], [1], [0, 0, 1, 1], [], []>} : vector<16x16xbf16>, vector<16x512xbf16>, vector<16x512xf32> -> vector<16x512xf32>
    %c0_170 = arith.constant 0 : index
    %c0_171 = arith.constant 0 : index
    %325 = vector.load %arg4[%c0_170, %c0_171] : memref<1x512xf32, #tpu.memory_space<vmem>>, vector<1x512xf32>
    %326 = vector.broadcast %325 : vector<1x512xf32> to vector<16x512xf32>
    %327 = arith.addf %324, %326 : vector<16x512xf32>
    %328 = arith.truncf %318 : vector<16x128xf32> to vector<16x128xbf16>
    %c0_172 = arith.constant 0 : index
    %c0_173 = arith.constant 0 : index
    %329 = vector.load %arg5[%c0_172, %c0_173] : memref<128x512xbf16, #tpu.memory_space<vmem>>, vector<128x512xbf16>
    %cst_174 = arith.constant dense<0.000000e+00> : vector<16x512xf32>
    %330 = tpu.matmul %328, %329, %cst_174 {dimension_numbers = #tpu.dot_dimension_numbers<[1], [0], [0], [1], [0, 0, 1, 1], [], []>} : vector<16x128xbf16>, vector<128x512xbf16>, vector<16x512xf32> -> vector<16x512xf32>
    %331 = arith.addf %327, %330 : vector<16x512xf32>
    %332 = vector.extract_strided_slice %331 {offsets = [0, 0], sizes = [16, 128], strides = [1, 1]} : vector<16x512xf32> to vector<16x128xf32>
    %333 = arith.negf %332 : vector<16x128xf32>
    %334 = math.exp %333 : vector<16x128xf32>
    %cst_175 = arith.constant 1.000000e+00 : f32
    %335 = vector.broadcast %cst_175 : f32 to vector<16x128xf32>
    %336 = arith.addf %335, %334 : vector<16x128xf32>
    %337 = arith.divf %335, %336 : vector<16x128xf32>
    %338 = vector.extract_strided_slice %331 {offsets = [0, 128], sizes = [16, 128], strides = [1, 1]} : vector<16x512xf32> to vector<16x128xf32>
    %339 = arith.negf %338 : vector<16x128xf32>
    %340 = math.exp %339 : vector<16x128xf32>
    %cst_176 = arith.constant 1.000000e+00 : f32
    %341 = vector.broadcast %cst_176 : f32 to vector<16x128xf32>
    %342 = arith.addf %341, %340 : vector<16x128xf32>
    %343 = arith.divf %341, %342 : vector<16x128xf32>
    %344 = vector.extract_strided_slice %331 {offsets = [0, 256], sizes = [16, 128], strides = [1, 1]} : vector<16x512xf32> to vector<16x128xf32>
    %345 = math.tanh %344 : vector<16x128xf32>
    %346 = vector.extract_strided_slice %331 {offsets = [0, 384], sizes = [16, 128], strides = [1, 1]} : vector<16x512xf32> to vector<16x128xf32>
    %347 = arith.negf %346 : vector<16x128xf32>
    %348 = math.exp %347 : vector<16x128xf32>
    %cst_177 = arith.constant 1.000000e+00 : f32
    %349 = vector.broadcast %cst_177 : f32 to vector<16x128xf32>
    %350 = arith.addf %349, %348 : vector<16x128xf32>
    %351 = arith.divf %349, %350 : vector<16x128xf32>
    %352 = arith.mulf %343, %319 : vector<16x128xf32>
    %353 = arith.mulf %337, %345 : vector<16x128xf32>
    %354 = arith.addf %352, %353 : vector<16x128xf32>
    %355 = math.tanh %354 : vector<16x128xf32>
    %356 = arith.mulf %351, %355 : vector<16x128xf32>
    %357 = arith.index_cast %c7_i32 : i32 to index
    %c0_178 = arith.constant 0 : index
    %c0_179 = arith.constant 0 : index
    %358 = vector.load %arg8[%357, %c0_178, %c0_179] : memref<8x16x128xf32, #tpu.memory_space<vmem>>, vector<1x16x128xf32>
    %359 = vector.shape_cast %358 : vector<1x16x128xf32> to vector<16x128xf32>
    %360 = vector.shape_cast %356 : vector<16x128xf32> to vector<1x16x128xf32>
    tpu.vector_store %arg8[%357, %c0_178, %c0_179], %360 {strides = array<i32>} : memref<8x16x128xf32, #tpu.memory_space<vmem>>, vector<1x16x128xf32>,
    %c0_180 = arith.constant 0 : index
    %c0_181 = arith.constant 0 : index
    %361 = vector.load %arg11[%c0_180, %c0_181] : memref<16x128xf32, #tpu.memory_space<vmem>>, vector<16x128xf32>
    tpu.vector_store %arg11[%c0_180, %c0_181], %356 {strides = array<i32>} : memref<16x128xf32, #tpu.memory_space<vmem>>, vector<16x128xf32>,
    %c0_182 = arith.constant 0 : index
    %c0_183 = arith.constant 0 : index
    %362 = vector.load %arg12[%c0_182, %c0_183] : memref<16x128xf32, #tpu.memory_space<vmem>>, vector<16x128xf32>
    tpu.vector_store %arg12[%c0_182, %c0_183], %354 {strides = array<i32>} : memref<16x128xf32, #tpu.memory_space<vmem>>, vector<16x128xf32>,
    %c8_i32 = arith.constant 8 : i32
    %c0_i32_184 = arith.constant 0 : i32
    %363 = arith.cmpi eq, %arg1, %c0_i32_184 : i32
    %364 = arith.extui %363 : i1 to i32
    %c0_i32_185 = arith.constant 0 : i32
    %365 = arith.cmpi ne, %364, %c0_i32_185 : i32
    scf.if %365 {
      %c0_186 = arith.constant 0 : index
      %c0_187 = arith.constant 0 : index
      %366 = vector.load %arg11[%c0_186, %c0_187] : memref<16x128xf32, #tpu.memory_space<vmem>>, vector<16x128xf32>
      %c0_188 = arith.constant 0 : index
      %c0_189 = arith.constant 0 : index
      %367 = vector.load %arg9[%c0_188, %c0_189] : memref<16x128xf32, #tpu.memory_space<vmem>>, vector<16x128xf32>
      tpu.vector_store %arg9[%c0_188, %c0_189], %366 {strides = array<i32>} : memref<16x128xf32, #tpu.memory_space<vmem>>, vector<16x128xf32>,
      %c0_190 = arith.constant 0 : index
      %c0_191 = arith.constant 0 : index
      %368 = vector.load %arg12[%c0_190, %c0_191] : memref<16x128xf32, #tpu.memory_space<vmem>>, vector<16x128xf32>
      %c0_192 = arith.constant 0 : index
      %c0_193 = arith.constant 0 : index
      %369 = vector.load %arg10[%c0_192, %c0_193] : memref<16x128xf32, #tpu.memory_space<vmem>>, vector<16x128xf32>
      tpu.vector_store %arg10[%c0_192, %c0_193], %368 {strides = array<i32>} : memref<16x128xf32, #tpu.memory_space<vmem>>, vector<16x128xf32>,
    } else {
    }
    return
  }
  func.func @transform_0(%arg0: i32, %arg1: i32) -> (i32, i32, i32) {
    %c0_i32 = arith.constant 0 : i32
    %c0_i32_0 = arith.constant 0 : i32
    return %arg1, %arg0, %c0_i32 : i32, i32, i32
  }
  func.func @transform_1(%arg0: i32, %arg1: i32) -> (i32, i32) {
    %c0_i32 = arith.constant 0 : i32
    %c0_i32_0 = arith.constant 0 : i32
    %c0_i32_1 = arith.constant 0 : i32
    return %c0_i32, %c0_i32_0 : i32, i32
  }
  func.func @transform_2(%arg0: i32, %arg1: i32) -> (i32, i32) {
    %c0_i32 = arith.constant 0 : i32
    %c0_i32_0 = arith.constant 0 : i32
    %c0_i32_1 = arith.constant 0 : i32
    return %c0_i32, %c0_i32_0 : i32, i32
  }
  func.func @transform_3(%arg0: i32, %arg1: i32) -> (i32, i32) {
    %c0_i32 = arith.constant 0 : i32
    %c0_i32_0 = arith.constant 0 : i32
    %c0_i32_1 = arith.constant 0 : i32
    return %c0_i32, %c0_i32_0 : i32, i32
  }
  func.func @transform_4(%arg0: i32, %arg1: i32) -> (i32, i32) {
    %c0_i32 = arith.constant 0 : i32
    %c0_i32_0 = arith.constant 0 : i32
    return %arg0, %c0_i32 : i32, i32
  }
  func.func @transform_5(%arg0: i32, %arg1: i32) -> (i32, i32) {
    %c0_i32 = arith.constant 0 : i32
    %c0_i32_0 = arith.constant 0 : i32
    return %arg0, %c0_i32 : i32, i32
  }
  func.func @transform_6(%arg0: i32, %arg1: i32) -> (i32, i32, i32) {
    %c0_i32 = arith.constant 0 : i32
    %c0_i32_0 = arith.constant 0 : i32
    return %arg1, %arg0, %c0_i32 : i32, i32, i32
  }
  func.func @transform_7(%arg0: i32, %arg1: i32) -> (i32, i32) {
    %c0_i32 = arith.constant 0 : i32
    %c0_i32_0 = arith.constant 0 : i32
    return %arg0, %c0_i32 : i32, i32
  }
  func.func @transform_8(%arg0: i32, %arg1: i32) -> (i32, i32) {
    %c0_i32 = arith.constant 0 : i32
    %c0_i32_0 = arith.constant 0 : i32
    return %arg0, %c0_i32 : i32, i32
  }
}

module attributes {stable_mosaic.version = 11 : i64} {
  func.func @_fused_lstm_kernel(%arg0: i32, %arg1: i32, %arg2: memref<8x16x16xbf16, #tpu.memory_space<vmem>>, %arg3: memref<16x512xbf16, #tpu.memory_space<vmem>>, %arg4: memref<1x512xf32, #tpu.memory_space<vmem>>, %arg5: memref<128x512xbf16, #tpu.memory_space<vmem>>, %arg6: memref<16x128xf32, #tpu.memory_space<vmem>>, %arg7: memref<16x128xf32, #tpu.memory_space<vmem>>, %arg8: memref<8x16x128xf32, #tpu.memory_space<vmem>>, %arg9: memref<16x128xf32, #tpu.memory_space<vmem>>, %arg10: memref<16x128xf32, #tpu.memory_space<vmem>>, %arg11: memref<16x128xf32, #tpu.memory_space<vmem>>, %arg12: memref<16x128xf32, #tpu.memory_space<vmem>>) attributes {dimension_semantics = [#tpu.dimension_semantics<parallel>, #tpu.dimension_semantics<arbitrary>], iteration_bounds = array<i64: 1, 1>, scalar_prefetch = 0 : i64, scratch_operands = 2 : i64, tpu.core_type = #tpu.core_type<tc>, window_params = [{transform_indices = @transform_0, window_bounds = array<i64: 8, 16, 16>}, {pipeline_mode = #tpu.pipeline_mode<synchronous>, transform_indices = @transform_1, window_bounds = array<i64: 16, 512>}, {pipeline_mode = #tpu.pipeline_mode<synchronous>, transform_indices = @transform_2, window_bounds = array<i64: 1, 512>}, {pipeline_mode = #tpu.pipeline_mode<synchronous>, transform_indices = @transform_3, window_bounds = array<i64: 128, 512>}, {transform_indices = @transform_4, window_bounds = array<i64: 16, 128>}, {transform_indices = @transform_5, window_bounds = array<i64: 16, 128>}, {transform_indices = @transform_6, window_bounds = array<i64: 8, 16, 128>}, {transform_indices = @transform_7, window_bounds = array<i64: 16, 128>}, {transform_indices = @transform_8, window_bounds = array<i64: 16, 128>}]} {
    %c0_i32 = arith.constant 0 : i32
    %0 = arith.cmpi eq, %arg1, %c0_i32 : i32
    %1 = arith.extui %0 : i1 to i32
    %c0_i32_0 = arith.constant 0 : i32
    %2 = arith.cmpi ne, %1, %c0_i32_0 : i32
    scf.if %2 {
      %c0_186 = arith.constant 0 : index
      %c0_187 = arith.constant 0 : index
      %366 = vector.load %arg6[%c0_186, %c0_187] : memref<16x128xf32, #tpu.memory_space<vmem>>, vector<16x128xf32>
      %c0_188 = arith.constant 0 : index
      %c0_189 = arith.constant 0 : index
      %367 = vector.load %arg11[%c0_188, %c0_189] : memref<16x128xf32, #tpu.memory_space<vmem>>, vector<16x128xf32>
      tpu.vector_store %arg11[%c0_188, %c0_189], %366 {strides = array<i32>} : memref<16x128xf32, #tpu.memory_space<vmem>>, vector<16x128xf32>,
      %c0_190 = arith.constant 0 : index
      %c0_191 = arith.constant 0 : index
      %368 = vector.load %arg7[%c0_190, %c0_191] : memref<16x128xf32, #tpu.memory_space<vmem>>, vector<16x128xf32>
      %c0_192 = arith.constant 0 : index
      %c0_193 = arith.constant 0 : index
      %369 = vector.load %arg12[%c0_192, %c0_193] : memref<16x128xf32, #tpu.memory_space<vmem>>, vector<16x128xf32>
      tpu.vector_store %arg12[%c0_192, %c0_193], %368 {strides = array<i32>} : memref<16x128xf32, #tpu.memory_space<vmem>>, vector<16x128xf32>,
    } else {
    }
    %c0_i32_1 = arith.constant 0 : i32
    %c0 = arith.constant 0 : index
    %c0_2 = arith.constant 0 : index
    %3 = vector.load %arg11[%c0, %c0_2] : memref<16x128xf32, #tpu.memory_space<vmem>>, vector<16x128xf32>
    %c0_3 = arith.constant 0 : index
    %c0_4 = arith.constant 0 : index
    %4 = vector.load %arg12[%c0_3, %c0_4] : memref<16x128xf32, #tpu.memory_space<vmem>>, vector<16x128xf32>
    %5 = arith.index_cast %c0_i32_1 : i32 to index
    %c0_5 = arith.constant 0 : index
    %c0_6 = arith.constant 0 : index
    %6 = vector.load %arg2[%5, %c0_5, %c0_6] : memref<8x16x16xbf16, #tpu.memory_space<vmem>>, vector<1x16x16xbf16>
    %7 = vector.shape_cast %6 : vector<1x16x16xbf16> to vector<16x16xbf16>
    %c0_7 = arith.constant 0 : index
    %c0_8 = arith.constant 0 : index
    %8 = vector.load %arg3[%c0_7, %c0_8] : memref<16x512xbf16, #tpu.memory_space<vmem>>, vector<16x512xbf16>
    %cst = arith.constant dense<0.000000e+00> : vector<16x512xf32>
    %9 = tpu.matmul %7, %8, %cst {dimension_numbers = #tpu.dot_dimension_numbers<[1], [0], [0], [1], [0, 0, 1, 1], [], []>} : vector<16x16xbf16>, vector<16x512xbf16>, vector<16x512xf32> -> vector<16x512xf32>
    %c0_9 = arith.constant 0 : index
    %c0_10 = arith.constant 0 : index
    %10 = vector.load %arg4[%c0_9, %c0_10] : memref<1x512xf32, #tpu.memory_space<vmem>>, vector<1x512xf32>
    %11 = vector.broadcast %10 : vector<1x512xf32> to vector<16x512xf32>
    %12 = arith.addf %9, %11 : vector<16x512xf32>
    %13 = arith.truncf %3 : vector<16x128xf32> to vector<16x128xbf16>
    %c0_11 = arith.constant 0 : index
    %c0_12 = arith.constant 0 : index
    %14 = vector.load %arg5[%c0_11, %c0_12] : memref<128x512xbf16, #tpu.memory_space<vmem>>, vector<128x512xbf16>
    %cst_13 = arith.constant dense<0.000000e+00> : vector<16x512xf32>
    %15 = tpu.matmul %13, %14, %cst_13 {dimension_numbers = #tpu.dot_dimension_numbers<[1], [0], [0], [1], [0, 0, 1, 1], [], []>} : vector<16x128xbf16>, vector<128x512xbf16>, vector<16x512xf32> -> vector<16x512xf32>
    %16 = arith.addf %12, %15 : vector<16x512xf32>
    %17 = vector.extract_strided_slice %16 {offsets = [0, 0], sizes = [16, 128], strides = [1, 1]} : vector<16x512xf32> to vector<16x128xf32>
    %18 = arith.negf %17 : vector<16x128xf32>
    %19 = math.exp %18 : vector<16x128xf32>
    %cst_14 = arith.constant 1.000000e+00 : f32
    %20 = vector.broadcast %cst_14 : f32 to vector<16x128xf32>
    %21 = arith.addf %20, %19 : vector<16x128xf32>
    %22 = arith.divf %20, %21 : vector<16x128xf32>
    %23 = vector.extract_strided_slice %16 {offsets = [0, 128], sizes = [16, 128], strides = [1, 1]} : vector<16x512xf32> to vector<16x128xf32>
    %24 = arith.negf %23 : vector<16x128xf32>
    %25 = math.exp %24 : vector<16x128xf32>
    %cst_15 = arith.constant 1.000000e+00 : f32
    %26 = vector.broadcast %cst_15 : f32 to vector<16x128xf32>
    %27 = arith.addf %26, %25 : vector<16x128xf32>
    %28 = arith.divf %26, %27 : vector<16x128xf32>
    %29 = vector.extract_strided_slice %16 {offsets = [0, 256], sizes = [16, 128], strides = [1, 1]} : vector<16x512xf32> to vector<16x128xf32>
    %30 = math.tanh %29 : vector<16x128xf32>
    %31 = vector.extract_strided_slice %16 {offsets = [0, 384], sizes = [16, 128], strides = [1, 1]} : vector<16x512xf32> to vector<16x128xf32>
    %32 = arith.negf %31 : vector<16x128xf32>
    %33 = math.exp %32 : vector<16x128xf32>
    %cst_16 = arith.constant 1.000000e+00 : f32
    %34 = vector.broadcast %cst_16 : f32 to vector<16x128xf32>
    %35 = arith.addf %34, %33 : vector<16x128xf32>
    %36 = arith.divf %34, %35 : vector<16x128xf32>
    %37 = arith.mulf %28, %4 : vector<16x128xf32>
    %38 = arith.mulf %22, %30 : vector<16x128xf32>
    %39 = arith.addf %37, %38 : vector<16x128xf32>
    %40 = math.tanh %39 : vector<16x128xf32>
    %41 = arith.mulf %36, %40 : vector<16x128xf32>
    %42 = arith.index_cast %c0_i32_1 : i32 to index
    %c0_17 = arith.constant 0 : index
    %c0_18 = arith.constant 0 : index
    %43 = vector.load %arg8[%42, %c0_17, %c0_18] : memref<8x16x128xf32, #tpu.memory_space<vmem>>, vector<1x16x128xf32>
    %44 = vector.shape_cast %43 : vector<1x16x128xf32> to vector<16x128xf32>
    %45 = vector.shape_cast %41 : vector<16x128xf32> to vector<1x16x128xf32>
    tpu.vector_store %arg8[%42, %c0_17, %c0_18], %45 {strides = array<i32>} : memref<8x16x128xf32, #tpu.memory_space<vmem>>, vector<1x16x128xf32>,
    %c0_19 = arith.constant 0 : index
    %c0_20 = arith.constant 0 : index
    %46 = vector.load %arg11[%c0_19, %c0_20] : memref<16x128xf32, #tpu.memory_space<vmem>>, vector<16x128xf32>
    tpu.vector_store %arg11[%c0_19, %c0_20], %41 {strides = array<i32>} : memref<16x128xf32, #tpu.memory_space<vmem>>, vector<16x128xf32>,
    %c0_21 = arith.constant 0 : index
    %c0_22 = arith.constant 0 : index
    %47 = vector.load %arg12[%c0_21, %c0_22] : memref<16x128xf32, #tpu.memory_space<vmem>>, vector<16x128xf32>
    tpu.vector_store %arg12[%c0_21, %c0_22], %39 {strides = array<i32>} : memref<16x128xf32, #tpu.memory_space<vmem>>, vector<16x128xf32>,
    %c1_i32 = arith.constant 1 : i32
    %c0_23 = arith.constant 0 : index
    %c0_24 = arith.constant 0 : index
    %48 = vector.load %arg11[%c0_23, %c0_24] : memref<16x128xf32, #tpu.memory_space<vmem>>, vector<16x128xf32>
    %c0_25 = arith.constant 0 : index
    %c0_26 = arith.constant 0 : index
    %49 = vector.load %arg12[%c0_25, %c0_26] : memref<16x128xf32, #tpu.memory_space<vmem>>, vector<16x128xf32>
    %50 = arith.index_cast %c1_i32 : i32 to index
    %c0_27 = arith.constant 0 : index
    %c0_28 = arith.constant 0 : index
    %51 = vector.load %arg2[%50, %c0_27, %c0_28] : memref<8x16x16xbf16, #tpu.memory_space<vmem>>, vector<1x16x16xbf16>
    %52 = vector.shape_cast %51 : vector<1x16x16xbf16> to vector<16x16xbf16>
    %c0_29 = arith.constant 0 : index
    %c0_30 = arith.constant 0 : index
    %53 = vector.load %arg3[%c0_29, %c0_30] : memref<16x512xbf16, #tpu.memory_space<vmem>>, vector<16x512xbf16>
    %cst_31 = arith.constant dense<0.000000e+00> : vector<16x512xf32>
    %54 = tpu.matmul %52, %53, %cst_31 {dimension_numbers = #tpu.dot_dimension_numbers<[1], [0], [0], [1], [0, 0, 1, 1], [], []>} : vector<16x16xbf16>, vector<16x512xbf16>, vector<16x512xf32> -> vector<16x512xf32>
    %c0_32 = arith.constant 0 : index
    %c0_33 = arith.constant 0 : index
    %55 = vector.load %arg4[%c0_32, %c0_33] : memref<1x512xf32, #tpu.memory_space<vmem>>, vector<1x512xf32>
    %56 = vector.broadcast %55 : vector<1x512xf32> to vector<16x512xf32>
    %57 = arith.addf %54, %56 : vector<16x512xf32>
    %58 = arith.truncf %48 : vector<16x128xf32> to vector<16x128xbf16>
    %c0_34 = arith.constant 0 : index
    %c0_35 = arith.constant 0 : index
    %59 = vector.load %arg5[%c0_34, %c0_35] : memref<128x512xbf16, #tpu.memory_space<vmem>>, vector<128x512xbf16>
    %cst_36 = arith.constant dense<0.000000e+00> : vector<16x512xf32>
    %60 = tpu.matmul %58, %59, %cst_36 {dimension_numbers = #tpu.dot_dimension_numbers<[1], [0], [0], [1], [0, 0, 1, 1], [], []>} : vector<16x128xbf16>, vector<128x512xbf16>, vector<16x512xf32> -> vector<16x512xf32>
    %61 = arith.addf %57, %60 : vector<16x512xf32>
    %62 = vector.extract_strided_slice %61 {offsets = [0, 0], sizes = [16, 128], strides = [1, 1]} : vector<16x512xf32> to vector<16x128xf32>
    %63 = arith.negf %62 : vector<16x128xf32>
    %64 = math.exp %63 : vector<16x128xf32>
    %cst_37 = arith.constant 1.000000e+00 : f32
    %65 = vector.broadcast %cst_37 : f32 to vector<16x128xf32>
    %66 = arith.addf %65, %64 : vector<16x128xf32>
    %67 = arith.divf %65, %66 : vector<16x128xf32>
    %68 = vector.extract_strided_slice %61 {offsets = [0, 128], sizes = [16, 128], strides = [1, 1]} : vector<16x512xf32> to vector<16x128xf32>
    %69 = arith.negf %68 : vector<16x128xf32>
    %70 = math.exp %69 : vector<16x128xf32>
    %cst_38 = arith.constant 1.000000e+00 : f32
    %71 = vector.broadcast %cst_38 : f32 to vector<16x128xf32>
    %72 = arith.addf %71, %70 : vector<16x128xf32>
    %73 = arith.divf %71, %72 : vector<16x128xf32>
    %74 = vector.extract_strided_slice %61 {offsets = [0, 256], sizes = [16, 128], strides = [1, 1]} : vector<16x512xf32> to vector<16x128xf32>
    %75 = math.tanh %74 : vector<16x128xf32>
    %76 = vector.extract_strided_slice %61 {offsets = [0, 384], sizes = [16, 128], strides = [1, 1]} : vector<16x512xf32> to vector<16x128xf32>
    %77 = arith.negf %76 : vector<16x128xf32>
    %78 = math.exp %77 : vector<16x128xf32>
    %cst_39 = arith.constant 1.000000e+00 : f32
    %79 = vector.broadcast %cst_39 : f32 to vector<16x128xf32>
    %80 = arith.addf %79, %78 : vector<16x128xf32>
    %81 = arith.divf %79, %80 : vector<16x128xf32>
    %82 = arith.mulf %73, %49 : vector<16x128xf32>
    %83 = arith.mulf %67, %75 : vector<16x128xf32>
    %84 = arith.addf %82, %83 : vector<16x128xf32>
    %85 = math.tanh %84 : vector<16x128xf32>
    %86 = arith.mulf %81, %85 : vector<16x128xf32>
    %87 = arith.index_cast %c1_i32 : i32 to index
    %c0_40 = arith.constant 0 : index
    %c0_41 = arith.constant 0 : index
    %88 = vector.load %arg8[%87, %c0_40, %c0_41] : memref<8x16x128xf32, #tpu.memory_space<vmem>>, vector<1x16x128xf32>
    %89 = vector.shape_cast %88 : vector<1x16x128xf32> to vector<16x128xf32>
    %90 = vector.shape_cast %86 : vector<16x128xf32> to vector<1x16x128xf32>
    tpu.vector_store %arg8[%87, %c0_40, %c0_41], %90 {strides = array<i32>} : memref<8x16x128xf32, #tpu.memory_space<vmem>>, vector<1x16x128xf32>,
    %c0_42 = arith.constant 0 : index
    %c0_43 = arith.constant 0 : index
    %91 = vector.load %arg11[%c0_42, %c0_43] : memref<16x128xf32, #tpu.memory_space<vmem>>, vector<16x128xf32>
    tpu.vector_store %arg11[%c0_42, %c0_43], %86 {strides = array<i32>} : memref<16x128xf32, #tpu.memory_space<vmem>>, vector<16x128xf32>,
    %c0_44 = arith.constant 0 : index
    %c0_45 = arith.constant 0 : index
    %92 = vector.load %arg12[%c0_44, %c0_45] : memref<16x128xf32, #tpu.memory_space<vmem>>, vector<16x128xf32>
    tpu.vector_store %arg12[%c0_44, %c0_45], %84 {strides = array<i32>} : memref<16x128xf32, #tpu.memory_space<vmem>>, vector<16x128xf32>,
    %c2_i32 = arith.constant 2 : i32
    %c0_46 = arith.constant 0 : index
    %c0_47 = arith.constant 0 : index
    %93 = vector.load %arg11[%c0_46, %c0_47] : memref<16x128xf32, #tpu.memory_space<vmem>>, vector<16x128xf32>
    %c0_48 = arith.constant 0 : index
    %c0_49 = arith.constant 0 : index
    %94 = vector.load %arg12[%c0_48, %c0_49] : memref<16x128xf32, #tpu.memory_space<vmem>>, vector<16x128xf32>
    %95 = arith.index_cast %c2_i32 : i32 to index
    %c0_50 = arith.constant 0 : index
    %c0_51 = arith.constant 0 : index
    %96 = vector.load %arg2[%95, %c0_50, %c0_51] : memref<8x16x16xbf16, #tpu.memory_space<vmem>>, vector<1x16x16xbf16>
    %97 = vector.shape_cast %96 : vector<1x16x16xbf16> to vector<16x16xbf16>
    %c0_52 = arith.constant 0 : index
    %c0_53 = arith.constant 0 : index
    %98 = vector.load %arg3[%c0_52, %c0_53] : memref<16x512xbf16, #tpu.memory_space<vmem>>, vector<16x512xbf16>
    %cst_54 = arith.constant dense<0.000000e+00> : vector<16x512xf32>
    %99 = tpu.matmul %97, %98, %cst_54 {dimension_numbers = #tpu.dot_dimension_numbers<[1], [0], [0], [1], [0, 0, 1, 1], [], []>} : vector<16x16xbf16>, vector<16x512xbf16>, vector<16x512xf32> -> vector<16x512xf32>
    %c0_55 = arith.constant 0 : index
    %c0_56 = arith.constant 0 : index
    %100 = vector.load %arg4[%c0_55, %c0_56] : memref<1x512xf32, #tpu.memory_space<vmem>>, vector<1x512xf32>
    %101 = vector.broadcast %100 : vector<1x512xf32> to vector<16x512xf32>
    %102 = arith.addf %99, %101 : vector<16x512xf32>
    %103 = arith.truncf %93 : vector<16x128xf32> to vector<16x128xbf16>
    %c0_57 = arith.constant 0 : index
    %c0_58 = arith.constant 0 : index
    %104 = vector.load %arg5[%c0_57, %c0_58] : memref<128x512xbf16, #tpu.memory_space<vmem>>, vector<128x512xbf16>
    %cst_59 = arith.constant dense<0.000000e+00> : vector<16x512xf32>
    %105 = tpu.matmul %103, %104, %cst_59 {dimension_numbers = #tpu.dot_dimension_numbers<[1], [0], [0], [1], [0, 0, 1, 1], [], []>} : vector<16x128xbf16>, vector<128x512xbf16>, vector<16x512xf32> -> vector<16x512xf32>
    %106 = arith.addf %102, %105 : vector<16x512xf32>
    %107 = vector.extract_strided_slice %106 {offsets = [0, 0], sizes = [16, 128], strides = [1, 1]} : vector<16x512xf32> to vector<16x128xf32>
    %108 = arith.negf %107 : vector<16x128xf32>
    %109 = math.exp %108 : vector<16x128xf32>
    %cst_60 = arith.constant 1.000000e+00 : f32
    %110 = vector.broadcast %cst_60 : f32 to vector<16x128xf32>
    %111 = arith.addf %110, %109 : vector<16x128xf32>
    %112 = arith.divf %110, %111 : vector<16x128xf32>
    %113 = vector.extract_strided_slice %106 {offsets = [0, 128], sizes = [16, 128], strides = [1, 1]} : vector<16x512xf32> to vector<16x128xf32>
    %114 = arith.negf %113 : vector<16x128xf32>
    %115 = math.exp %114 : vector<16x128xf32>
    %cst_61 = arith.constant 1.000000e+00 : f32
    %116 = vector.broadcast %cst_61 : f32 to vector<16x128xf32>
    %117 = arith.addf %116, %115 : vector<16x128xf32>
    %118 = arith.divf %116, %117 : vector<16x128xf32>
    %119 = vector.extract_strided_slice %106 {offsets = [0, 256], sizes = [16, 128], strides = [1, 1]} : vector<16x512xf32> to vector<16x128xf32>
    %120 = math.tanh %119 : vector<16x128xf32>
    %121 = vector.extract_strided_slice %106 {offsets = [0, 384], sizes = [16, 128], strides = [1, 1]} : vector<16x512xf32> to vector<16x128xf32>
    %122 = arith.negf %121 : vector<16x128xf32>
    %123 = math.exp %122 : vector<16x128xf32>
    %cst_62 = arith.constant 1.000000e+00 : f32
    %124 = vector.broadcast %cst_62 : f32 to vector<16x128xf32>
    %125 = arith.addf %124, %123 : vector<16x128xf32>
    %126 = arith.divf %124, %125 : vector<16x128xf32>
    %127 = arith.mulf %118, %94 : vector<16x128xf32>
    %128 = arith.mulf %112, %120 : vector<16x128xf32>
    %129 = arith.addf %127, %128 : vector<16x128xf32>
    %130 = math.tanh %129 : vector<16x128xf32>
    %131 = arith.mulf %126, %130 : vector<16x128xf32>
    %132 = arith.index_cast %c2_i32 : i32 to index
    %c0_63 = arith.constant 0 : index
    %c0_64 = arith.constant 0 : index
    %133 = vector.load %arg8[%132, %c0_63, %c0_64] : memref<8x16x128xf32, #tpu.memory_space<vmem>>, vector<1x16x128xf32>
    %134 = vector.shape_cast %133 : vector<1x16x128xf32> to vector<16x128xf32>
    %135 = vector.shape_cast %131 : vector<16x128xf32> to vector<1x16x128xf32>
    tpu.vector_store %arg8[%132, %c0_63, %c0_64], %135 {strides = array<i32>} : memref<8x16x128xf32, #tpu.memory_space<vmem>>, vector<1x16x128xf32>,
    %c0_65 = arith.constant 0 : index
    %c0_66 = arith.constant 0 : index
    %136 = vector.load %arg11[%c0_65, %c0_66] : memref<16x128xf32, #tpu.memory_space<vmem>>, vector<16x128xf32>
    tpu.vector_store %arg11[%c0_65, %c0_66], %131 {strides = array<i32>} : memref<16x128xf32, #tpu.memory_space<vmem>>, vector<16x128xf32>,
    %c0_67 = arith.constant 0 : index
    %c0_68 = arith.constant 0 : index
    %137 = vector.load %arg12[%c0_67, %c0_68] : memref<16x128xf32, #tpu.memory_space<vmem>>, vector<16x128xf32>
    tpu.vector_store %arg12[%c0_67, %c0_68], %129 {strides = array<i32>} : memref<16x128xf32, #tpu.memory_space<vmem>>, vector<16x128xf32>,
    %c3_i32 = arith.constant 3 : i32
    %c0_69 = arith.constant 0 : index
    %c0_70 = arith.constant 0 : index
    %138 = vector.load %arg11[%c0_69, %c0_70] : memref<16x128xf32, #tpu.memory_space<vmem>>, vector<16x128xf32>
    %c0_71 = arith.constant 0 : index
    %c0_72 = arith.constant 0 : index
    %139 = vector.load %arg12[%c0_71, %c0_72] : memref<16x128xf32, #tpu.memory_space<vmem>>, vector<16x128xf32>
    %140 = arith.index_cast %c3_i32 : i32 to index
    %c0_73 = arith.constant 0 : index
    %c0_74 = arith.constant 0 : index
    %141 = vector.load %arg2[%140, %c0_73, %c0_74] : memref<8x16x16xbf16, #tpu.memory_space<vmem>>, vector<1x16x16xbf16>
    %142 = vector.shape_cast %141 : vector<1x16x16xbf16> to vector<16x16xbf16>
    %c0_75 = arith.constant 0 : index
    %c0_76 = arith.constant 0 : index
    %143 = vector.load %arg3[%c0_75, %c0_76] : memref<16x512xbf16, #tpu.memory_space<vmem>>, vector<16x512xbf16>
    %cst_77 = arith.constant dense<0.000000e+00> : vector<16x512xf32>
    %144 = tpu.matmul %142, %143, %cst_77 {dimension_numbers = #tpu.dot_dimension_numbers<[1], [0], [0], [1], [0, 0, 1, 1], [], []>} : vector<16x16xbf16>, vector<16x512xbf16>, vector<16x512xf32> -> vector<16x512xf32>
    %c0_78 = arith.constant 0 : index
    %c0_79 = arith.constant 0 : index
    %145 = vector.load %arg4[%c0_78, %c0_79] : memref<1x512xf32, #tpu.memory_space<vmem>>, vector<1x512xf32>
    %146 = vector.broadcast %145 : vector<1x512xf32> to vector<16x512xf32>
    %147 = arith.addf %144, %146 : vector<16x512xf32>
    %148 = arith.truncf %138 : vector<16x128xf32> to vector<16x128xbf16>
    %c0_80 = arith.constant 0 : index
    %c0_81 = arith.constant 0 : index
    %149 = vector.load %arg5[%c0_80, %c0_81] : memref<128x512xbf16, #tpu.memory_space<vmem>>, vector<128x512xbf16>
    %cst_82 = arith.constant dense<0.000000e+00> : vector<16x512xf32>
    %150 = tpu.matmul %148, %149, %cst_82 {dimension_numbers = #tpu.dot_dimension_numbers<[1], [0], [0], [1], [0, 0, 1, 1], [], []>} : vector<16x128xbf16>, vector<128x512xbf16>, vector<16x512xf32> -> vector<16x512xf32>
    %151 = arith.addf %147, %150 : vector<16x512xf32>
    %152 = vector.extract_strided_slice %151 {offsets = [0, 0], sizes = [16, 128], strides = [1, 1]} : vector<16x512xf32> to vector<16x128xf32>
    %153 = arith.negf %152 : vector<16x128xf32>
    %154 = math.exp %153 : vector<16x128xf32>
    %cst_83 = arith.constant 1.000000e+00 : f32
    %155 = vector.broadcast %cst_83 : f32 to vector<16x128xf32>
    %156 = arith.addf %155, %154 : vector<16x128xf32>
    %157 = arith.divf %155, %156 : vector<16x128xf32>
    %158 = vector.extract_strided_slice %151 {offsets = [0, 128], sizes = [16, 128], strides = [1, 1]} : vector<16x512xf32> to vector<16x128xf32>
    %159 = arith.negf %158 : vector<16x128xf32>
    %160 = math.exp %159 : vector<16x128xf32>
    %cst_84 = arith.constant 1.000000e+00 : f32
    %161 = vector.broadcast %cst_84 : f32 to vector<16x128xf32>
    %162 = arith.addf %161, %160 : vector<16x128xf32>
    %163 = arith.divf %161, %162 : vector<16x128xf32>
    %164 = vector.extract_strided_slice %151 {offsets = [0, 256], sizes = [16, 128], strides = [1, 1]} : vector<16x512xf32> to vector<16x128xf32>
    %165 = math.tanh %164 : vector<16x128xf32>
    %166 = vector.extract_strided_slice %151 {offsets = [0, 384], sizes = [16, 128], strides = [1, 1]} : vector<16x512xf32> to vector<16x128xf32>
    %167 = arith.negf %166 : vector<16x128xf32>
    %168 = math.exp %167 : vector<16x128xf32>
    %cst_85 = arith.constant 1.000000e+00 : f32
    %169 = vector.broadcast %cst_85 : f32 to vector<16x128xf32>
    %170 = arith.addf %169, %168 : vector<16x128xf32>
    %171 = arith.divf %169, %170 : vector<16x128xf32>
    %172 = arith.mulf %163, %139 : vector<16x128xf32>
    %173 = arith.mulf %157, %165 : vector<16x128xf32>
    %174 = arith.addf %172, %173 : vector<16x128xf32>
    %175 = math.tanh %174 : vector<16x128xf32>
    %176 = arith.mulf %171, %175 : vector<16x128xf32>
    %177 = arith.index_cast %c3_i32 : i32 to index
    %c0_86 = arith.constant 0 : index
    %c0_87 = arith.constant 0 : index
    %178 = vector.load %arg8[%177, %c0_86, %c0_87] : memref<8x16x128xf32, #tpu.memory_space<vmem>>, vector<1x16x128xf32>
    %179 = vector.shape_cast %178 : vector<1x16x128xf32> to vector<16x128xf32>
    %180 = vector.shape_cast %176 : vector<16x128xf32> to vector<1x16x128xf32>
    tpu.vector_store %arg8[%177, %c0_86, %c0_87], %180 {strides = array<i32>} : memref<8x16x128xf32, #tpu.memory_space<vmem>>, vector<1x16x128xf32>,
    %c0_88 = arith.constant 0 : index
    %c0_89 = arith.constant 0 : index
    %181 = vector.load %arg11[%c0_88, %c0_89] : memref<16x128xf32, #tpu.memory_space<vmem>>, vector<16x128xf32>
    tpu.vector_store %arg11[%c0_88, %c0_89], %176 {strides = array<i32>} : memref<16x128xf32, #tpu.memory_space<vmem>>, vector<16x128xf32>,
    %c0_90 = arith.constant 0 : index
    %c0_91 = arith.constant 0 : index
    %182 = vector.load %arg12[%c0_90, %c0_91] : memref<16x128xf32, #tpu.memory_space<vmem>>, vector<16x128xf32>
    tpu.vector_store %arg12[%c0_90, %c0_91], %174 {strides = array<i32>} : memref<16x128xf32, #tpu.memory_space<vmem>>, vector<16x128xf32>,
    %c4_i32 = arith.constant 4 : i32
    %c0_92 = arith.constant 0 : index
    %c0_93 = arith.constant 0 : index
    %183 = vector.load %arg11[%c0_92, %c0_93] : memref<16x128xf32, #tpu.memory_space<vmem>>, vector<16x128xf32>
    %c0_94 = arith.constant 0 : index
    %c0_95 = arith.constant 0 : index
    %184 = vector.load %arg12[%c0_94, %c0_95] : memref<16x128xf32, #tpu.memory_space<vmem>>, vector<16x128xf32>
    %185 = arith.index_cast %c4_i32 : i32 to index
    %c0_96 = arith.constant 0 : index
    %c0_97 = arith.constant 0 : index
    %186 = vector.load %arg2[%185, %c0_96, %c0_97] : memref<8x16x16xbf16, #tpu.memory_space<vmem>>, vector<1x16x16xbf16>
    %187 = vector.shape_cast %186 : vector<1x16x16xbf16> to vector<16x16xbf16>
    %c0_98 = arith.constant 0 : index
    %c0_99 = arith.constant 0 : index
    %188 = vector.load %arg3[%c0_98, %c0_99] : memref<16x512xbf16, #tpu.memory_space<vmem>>, vector<16x512xbf16>
    %cst_100 = arith.constant dense<0.000000e+00> : vector<16x512xf32>
    %189 = tpu.matmul %187, %188, %cst_100 {dimension_numbers = #tpu.dot_dimension_numbers<[1], [0], [0], [1], [0, 0, 1, 1], [], []>} : vector<16x16xbf16>, vector<16x512xbf16>, vector<16x512xf32> -> vector<16x512xf32>
    %c0_101 = arith.constant 0 : index
    %c0_102 = arith.constant 0 : index
    %190 = vector.load %arg4[%c0_101, %c0_102] : memref<1x512xf32, #tpu.memory_space<vmem>>, vector<1x512xf32>
    %191 = vector.broadcast %190 : vector<1x512xf32> to vector<16x512xf32>
    %192 = arith.addf %189, %191 : vector<16x512xf32>
    %193 = arith.truncf %183 : vector<16x128xf32> to vector<16x128xbf16>
    %c0_103 = arith.constant 0 : index
    %c0_104 = arith.constant 0 : index
    %194 = vector.load %arg5[%c0_103, %c0_104] : memref<128x512xbf16, #tpu.memory_space<vmem>>, vector<128x512xbf16>
    %cst_105 = arith.constant dense<0.000000e+00> : vector<16x512xf32>
    %195 = tpu.matmul %193, %194, %cst_105 {dimension_numbers = #tpu.dot_dimension_numbers<[1], [0], [0], [1], [0, 0, 1, 1], [], []>} : vector<16x128xbf16>, vector<128x512xbf16>, vector<16x512xf32> -> vector<16x512xf32>
    %196 = arith.addf %192, %195 : vector<16x512xf32>
    %197 = vector.extract_strided_slice %196 {offsets = [0, 0], sizes = [16, 128], strides = [1, 1]} : vector<16x512xf32> to vector<16x128xf32>
    %198 = arith.negf %197 : vector<16x128xf32>
    %199 = math.exp %198 : vector<16x128xf32>
    %cst_106 = arith.constant 1.000000e+00 : f32
    %200 = vector.broadcast %cst_106 : f32 to vector<16x128xf32>
    %201 = arith.addf %200, %199 : vector<16x128xf32>
    %202 = arith.divf %200, %201 : vector<16x128xf32>
    %203 = vector.extract_strided_slice %196 {offsets = [0, 128], sizes = [16, 128], strides = [1, 1]} : vector<16x512xf32> to vector<16x128xf32>
    %204 = arith.negf %203 : vector<16x128xf32>
    %205 = math.exp %204 : vector<16x128xf32>
    %cst_107 = arith.constant 1.000000e+00 : f32
    %206 = vector.broadcast %cst_107 : f32 to vector<16x128xf32>
    %207 = arith.addf %206, %205 : vector<16x128xf32>
    %208 = arith.divf %206, %207 : vector<16x128xf32>
    %209 = vector.extract_strided_slice %196 {offsets = [0, 256], sizes = [16, 128], strides = [1, 1]} : vector<16x512xf32> to vector<16x128xf32>
    %210 = math.tanh %209 : vector<16x128xf32>
    %211 = vector.extract_strided_slice %196 {offsets = [0, 384], sizes = [16, 128], strides = [1, 1]} : vector<16x512xf32> to vector<16x128xf32>
    %212 = arith.negf %211 : vector<16x128xf32>
    %213 = math.exp %212 : vector<16x128xf32>
    %cst_108 = arith.constant 1.000000e+00 : f32
    %214 = vector.broadcast %cst_108 : f32 to vector<16x128xf32>
    %215 = arith.addf %214, %213 : vector<16x128xf32>
    %216 = arith.divf %214, %215 : vector<16x128xf32>
    %217 = arith.mulf %208, %184 : vector<16x128xf32>
    %218 = arith.mulf %202, %210 : vector<16x128xf32>
    %219 = arith.addf %217, %218 : vector<16x128xf32>
    %220 = math.tanh %219 : vector<16x128xf32>
    %221 = arith.mulf %216, %220 : vector<16x128xf32>
    %222 = arith.index_cast %c4_i32 : i32 to index
    %c0_109 = arith.constant 0 : index
    %c0_110 = arith.constant 0 : index
    %223 = vector.load %arg8[%222, %c0_109, %c0_110] : memref<8x16x128xf32, #tpu.memory_space<vmem>>, vector<1x16x128xf32>
    %224 = vector.shape_cast %223 : vector<1x16x128xf32> to vector<16x128xf32>
    %225 = vector.shape_cast %221 : vector<16x128xf32> to vector<1x16x128xf32>
    tpu.vector_store %arg8[%222, %c0_109, %c0_110], %225 {strides = array<i32>} : memref<8x16x128xf32, #tpu.memory_space<vmem>>, vector<1x16x128xf32>,
    %c0_111 = arith.constant 0 : index
    %c0_112 = arith.constant 0 : index
    %226 = vector.load %arg11[%c0_111, %c0_112] : memref<16x128xf32, #tpu.memory_space<vmem>>, vector<16x128xf32>
    tpu.vector_store %arg11[%c0_111, %c0_112], %221 {strides = array<i32>} : memref<16x128xf32, #tpu.memory_space<vmem>>, vector<16x128xf32>,
    %c0_113 = arith.constant 0 : index
    %c0_114 = arith.constant 0 : index
    %227 = vector.load %arg12[%c0_113, %c0_114] : memref<16x128xf32, #tpu.memory_space<vmem>>, vector<16x128xf32>
    tpu.vector_store %arg12[%c0_113, %c0_114], %219 {strides = array<i32>} : memref<16x128xf32, #tpu.memory_space<vmem>>, vector<16x128xf32>,
    %c5_i32 = arith.constant 5 : i32
    %c0_115 = arith.constant 0 : index
    %c0_116 = arith.constant 0 : index
    %228 = vector.load %arg11[%c0_115, %c0_116] : memref<16x128xf32, #tpu.memory_space<vmem>>, vector<16x128xf32>
    %c0_117 = arith.constant 0 : index
    %c0_118 = arith.constant 0 : index
    %229 = vector.load %arg12[%c0_117, %c0_118] : memref<16x128xf32, #tpu.memory_space<vmem>>, vector<16x128xf32>
    %230 = arith.index_cast %c5_i32 : i32 to index
    %c0_119 = arith.constant 0 : index
    %c0_120 = arith.constant 0 : index
    %231 = vector.load %arg2[%230, %c0_119, %c0_120] : memref<8x16x16xbf16, #tpu.memory_space<vmem>>, vector<1x16x16xbf16>
    %232 = vector.shape_cast %231 : vector<1x16x16xbf16> to vector<16x16xbf16>
    %c0_121 = arith.constant 0 : index
    %c0_122 = arith.constant 0 : index
    %233 = vector.load %arg3[%c0_121, %c0_122] : memref<16x512xbf16, #tpu.memory_space<vmem>>, vector<16x512xbf16>
    %cst_123 = arith.constant dense<0.000000e+00> : vector<16x512xf32>
    %234 = tpu.matmul %232, %233, %cst_123 {dimension_numbers = #tpu.dot_dimension_numbers<[1], [0], [0], [1], [0, 0, 1, 1], [], []>} : vector<16x16xbf16>, vector<16x512xbf16>, vector<16x512xf32> -> vector<16x512xf32>
    %c0_124 = arith.constant 0 : index
    %c0_125 = arith.constant 0 : index
    %235 = vector.load %arg4[%c0_124, %c0_125] : memref<1x512xf32, #tpu.memory_space<vmem>>, vector<1x512xf32>
    %236 = vector.broadcast %235 : vector<1x512xf32> to vector<16x512xf32>
    %237 = arith.addf %234, %236 : vector<16x512xf32>
    %238 = arith.truncf %228 : vector<16x128xf32> to vector<16x128xbf16>
    %c0_126 = arith.constant 0 : index
    %c0_127 = arith.constant 0 : index
    %239 = vector.load %arg5[%c0_126, %c0_127] : memref<128x512xbf16, #tpu.memory_space<vmem>>, vector<128x512xbf16>
    %cst_128 = arith.constant dense<0.000000e+00> : vector<16x512xf32>
    %240 = tpu.matmul %238, %239, %cst_128 {dimension_numbers = #tpu.dot_dimension_numbers<[1], [0], [0], [1], [0, 0, 1, 1], [], []>} : vector<16x128xbf16>, vector<128x512xbf16>, vector<16x512xf32> -> vector<16x512xf32>
    %241 = arith.addf %237, %240 : vector<16x512xf32>
    %242 = vector.extract_strided_slice %241 {offsets = [0, 0], sizes = [16, 128], strides = [1, 1]} : vector<16x512xf32> to vector<16x128xf32>
    %243 = arith.negf %242 : vector<16x128xf32>
    %244 = math.exp %243 : vector<16x128xf32>
    %cst_129 = arith.constant 1.000000e+00 : f32
    %245 = vector.broadcast %cst_129 : f32 to vector<16x128xf32>
    %246 = arith.addf %245, %244 : vector<16x128xf32>
    %247 = arith.divf %245, %246 : vector<16x128xf32>
    %248 = vector.extract_strided_slice %241 {offsets = [0, 128], sizes = [16, 128], strides = [1, 1]} : vector<16x512xf32> to vector<16x128xf32>
    %249 = arith.negf %248 : vector<16x128xf32>
    %250 = math.exp %249 : vector<16x128xf32>
    %cst_130 = arith.constant 1.000000e+00 : f32
    %251 = vector.broadcast %cst_130 : f32 to vector<16x128xf32>
    %252 = arith.addf %251, %250 : vector<16x128xf32>
    %253 = arith.divf %251, %252 : vector<16x128xf32>
    %254 = vector.extract_strided_slice %241 {offsets = [0, 256], sizes = [16, 128], strides = [1, 1]} : vector<16x512xf32> to vector<16x128xf32>
    %255 = math.tanh %254 : vector<16x128xf32>
    %256 = vector.extract_strided_slice %241 {offsets = [0, 384], sizes = [16, 128], strides = [1, 1]} : vector<16x512xf32> to vector<16x128xf32>
    %257 = arith.negf %256 : vector<16x128xf32>
    %258 = math.exp %257 : vector<16x128xf32>
    %cst_131 = arith.constant 1.000000e+00 : f32
    %259 = vector.broadcast %cst_131 : f32 to vector<16x128xf32>
    %260 = arith.addf %259, %258 : vector<16x128xf32>
    %261 = arith.divf %259, %260 : vector<16x128xf32>
    %262 = arith.mulf %253, %229 : vector<16x128xf32>
    %263 = arith.mulf %247, %255 : vector<16x128xf32>
    %264 = arith.addf %262, %263 : vector<16x128xf32>
    %265 = math.tanh %264 : vector<16x128xf32>
    %266 = arith.mulf %261, %265 : vector<16x128xf32>
    %267 = arith.index_cast %c5_i32 : i32 to index
    %c0_132 = arith.constant 0 : index
    %c0_133 = arith.constant 0 : index
    %268 = vector.load %arg8[%267, %c0_132, %c0_133] : memref<8x16x128xf32, #tpu.memory_space<vmem>>, vector<1x16x128xf32>
    %269 = vector.shape_cast %268 : vector<1x16x128xf32> to vector<16x128xf32>
    %270 = vector.shape_cast %266 : vector<16x128xf32> to vector<1x16x128xf32>
    tpu.vector_store %arg8[%267, %c0_132, %c0_133], %270 {strides = array<i32>} : memref<8x16x128xf32, #tpu.memory_space<vmem>>, vector<1x16x128xf32>,
    %c0_134 = arith.constant 0 : index
    %c0_135 = arith.constant 0 : index
    %271 = vector.load %arg11[%c0_134, %c0_135] : memref<16x128xf32, #tpu.memory_space<vmem>>, vector<16x128xf32>
    tpu.vector_store %arg11[%c0_134, %c0_135], %266 {strides = array<i32>} : memref<16x128xf32, #tpu.memory_space<vmem>>, vector<16x128xf32>,
    %c0_136 = arith.constant 0 : index
    %c0_137 = arith.constant 0 : index
    %272 = vector.load %arg12[%c0_136, %c0_137] : memref<16x128xf32, #tpu.memory_space<vmem>>, vector<16x128xf32>
    tpu.vector_store %arg12[%c0_136, %c0_137], %264 {strides = array<i32>} : memref<16x128xf32, #tpu.memory_space<vmem>>, vector<16x128xf32>,
    %c6_i32 = arith.constant 6 : i32
    %c0_138 = arith.constant 0 : index
    %c0_139 = arith.constant 0 : index
    %273 = vector.load %arg11[%c0_138, %c0_139] : memref<16x128xf32, #tpu.memory_space<vmem>>, vector<16x128xf32>
    %c0_140 = arith.constant 0 : index
    %c0_141 = arith.constant 0 : index
    %274 = vector.load %arg12[%c0_140, %c0_141] : memref<16x128xf32, #tpu.memory_space<vmem>>, vector<16x128xf32>
    %275 = arith.index_cast %c6_i32 : i32 to index
    %c0_142 = arith.constant 0 : index
    %c0_143 = arith.constant 0 : index
    %276 = vector.load %arg2[%275, %c0_142, %c0_143] : memref<8x16x16xbf16, #tpu.memory_space<vmem>>, vector<1x16x16xbf16>
    %277 = vector.shape_cast %276 : vector<1x16x16xbf16> to vector<16x16xbf16>
    %c0_144 = arith.constant 0 : index
    %c0_145 = arith.constant 0 : index
    %278 = vector.load %arg3[%c0_144, %c0_145] : memref<16x512xbf16, #tpu.memory_space<vmem>>, vector<16x512xbf16>
    %cst_146 = arith.constant dense<0.000000e+00> : vector<16x512xf32>
    %279 = tpu.matmul %277, %278, %cst_146 {dimension_numbers = #tpu.dot_dimension_numbers<[1], [0], [0], [1], [0, 0, 1, 1], [], []>} : vector<16x16xbf16>, vector<16x512xbf16>, vector<16x512xf32> -> vector<16x512xf32>
    %c0_147 = arith.constant 0 : index
    %c0_148 = arith.constant 0 : index
    %280 = vector.load %arg4[%c0_147, %c0_148] : memref<1x512xf32, #tpu.memory_space<vmem>>, vector<1x512xf32>
    %281 = vector.broadcast %280 : vector<1x512xf32> to vector<16x512xf32>
    %282 = arith.addf %279, %281 : vector<16x512xf32>
    %283 = arith.truncf %273 : vector<16x128xf32> to vector<16x128xbf16>
    %c0_149 = arith.constant 0 : index
    %c0_150 = arith.constant 0 : index
    %284 = vector.load %arg5[%c0_149, %c0_150] : memref<128x512xbf16, #tpu.memory_space<vmem>>, vector<128x512xbf16>
    %cst_151 = arith.constant dense<0.000000e+00> : vector<16x512xf32>
    %285 = tpu.matmul %283, %284, %cst_151 {dimension_numbers = #tpu.dot_dimension_numbers<[1], [0], [0], [1], [0, 0, 1, 1], [], []>} : vector<16x128xbf16>, vector<128x512xbf16>, vector<16x512xf32> -> vector<16x512xf32>
    %286 = arith.addf %282, %285 : vector<16x512xf32>
    %287 = vector.extract_strided_slice %286 {offsets = [0, 0], sizes = [16, 128], strides = [1, 1]} : vector<16x512xf32> to vector<16x128xf32>
    %288 = arith.negf %287 : vector<16x128xf32>
    %289 = math.exp %288 : vector<16x128xf32>
    %cst_152 = arith.constant 1.000000e+00 : f32
    %290 = vector.broadcast %cst_152 : f32 to vector<16x128xf32>
    %291 = arith.addf %290, %289 : vector<16x128xf32>
    %292 = arith.divf %290, %291 : vector<16x128xf32>
    %293 = vector.extract_strided_slice %286 {offsets = [0, 128], sizes = [16, 128], strides = [1, 1]} : vector<16x512xf32> to vector<16x128xf32>
    %294 = arith.negf %293 : vector<16x128xf32>
    %295 = math.exp %294 : vector<16x128xf32>
    %cst_153 = arith.constant 1.000000e+00 : f32
    %296 = vector.broadcast %cst_153 : f32 to vector<16x128xf32>
    %297 = arith.addf %296, %295 : vector<16x128xf32>
    %298 = arith.divf %296, %297 : vector<16x128xf32>
    %299 = vector.extract_strided_slice %286 {offsets = [0, 256], sizes = [16, 128], strides = [1, 1]} : vector<16x512xf32> to vector<16x128xf32>
    %300 = math.tanh %299 : vector<16x128xf32>
    %301 = vector.extract_strided_slice %286 {offsets = [0, 384], sizes = [16, 128], strides = [1, 1]} : vector<16x512xf32> to vector<16x128xf32>
    %302 = arith.negf %301 : vector<16x128xf32>
    %303 = math.exp %302 : vector<16x128xf32>
    %cst_154 = arith.constant 1.000000e+00 : f32
    %304 = vector.broadcast %cst_154 : f32 to vector<16x128xf32>
    %305 = arith.addf %304, %303 : vector<16x128xf32>
    %306 = arith.divf %304, %305 : vector<16x128xf32>
    %307 = arith.mulf %298, %274 : vector<16x128xf32>
    %308 = arith.mulf %292, %300 : vector<16x128xf32>
    %309 = arith.addf %307, %308 : vector<16x128xf32>
    %310 = math.tanh %309 : vector<16x128xf32>
    %311 = arith.mulf %306, %310 : vector<16x128xf32>
    %312 = arith.index_cast %c6_i32 : i32 to index
    %c0_155 = arith.constant 0 : index
    %c0_156 = arith.constant 0 : index
    %313 = vector.load %arg8[%312, %c0_155, %c0_156] : memref<8x16x128xf32, #tpu.memory_space<vmem>>, vector<1x16x128xf32>
    %314 = vector.shape_cast %313 : vector<1x16x128xf32> to vector<16x128xf32>
    %315 = vector.shape_cast %311 : vector<16x128xf32> to vector<1x16x128xf32>
    tpu.vector_store %arg8[%312, %c0_155, %c0_156], %315 {strides = array<i32>} : memref<8x16x128xf32, #tpu.memory_space<vmem>>, vector<1x16x128xf32>,
    %c0_157 = arith.constant 0 : index
    %c0_158 = arith.constant 0 : index
    %316 = vector.load %arg11[%c0_157, %c0_158] : memref<16x128xf32, #tpu.memory_space<vmem>>, vector<16x128xf32>
    tpu.vector_store %arg11[%c0_157, %c0_158], %311 {strides = array<i32>} : memref<16x128xf32, #tpu.memory_space<vmem>>, vector<16x128xf32>,
    %c0_159 = arith.constant 0 : index
    %c0_160 = arith.constant 0 : index
    %317 = vector.load %arg12[%c0_159, %c0_160] : memref<16x128xf32, #tpu.memory_space<vmem>>, vector<16x128xf32>
    tpu.vector_store %arg12[%c0_159, %c0_160], %309 {strides = array<i32>} : memref<16x128xf32, #tpu.memory_space<vmem>>, vector<16x128xf32>,
    %c7_i32 = arith.constant 7 : i32
    %c0_161 = arith.constant 0 : index
    %c0_162 = arith.constant 0 : index
    %318 = vector.load %arg11[%c0_161, %c0_162] : memref<16x128xf32, #tpu.memory_space<vmem>>, vector<16x128xf32>
    %c0_163 = arith.constant 0 : index
    %c0_164 = arith.constant 0 : index
    %319 = vector.load %arg12[%c0_163, %c0_164] : memref<16x128xf32, #tpu.memory_space<vmem>>, vector<16x128xf32>
    %320 = arith.index_cast %c7_i32 : i32 to index
    %c0_165 = arith.constant 0 : index
    %c0_166 = arith.constant 0 : index
    %321 = vector.load %arg2[%320, %c0_165, %c0_166] : memref<8x16x16xbf16, #tpu.memory_space<vmem>>, vector<1x16x16xbf16>
    %322 = vector.shape_cast %321 : vector<1x16x16xbf16> to vector<16x16xbf16>
    %c0_167 = arith.constant 0 : index
    %c0_168 = arith.constant 0 : index
    %323 = vector.load %arg3[%c0_167, %c0_168] : memref<16x512xbf16, #tpu.memory_space<vmem>>, vector<16x512xbf16>
    %cst_169 = arith.constant dense<0.000000e+00> : vector<16x512xf32>
    %324 = tpu.matmul %322, %323, %cst_169 {dimension_numbers = #tpu.dot_dimension_numbers<[1], [0], [0], [1], [0, 0, 1, 1], [], []>} : vector<16x16xbf16>, vector<16x512xbf16>, vector<16x512xf32> -> vector<16x512xf32>
    %c0_170 = arith.constant 0 : index
    %c0_171 = arith.constant 0 : index
    %325 = vector.load %arg4[%c0_170, %c0_171] : memref<1x512xf32, #tpu.memory_space<vmem>>, vector<1x512xf32>
    %326 = vector.broadcast %325 : vector<1x512xf32> to vector<16x512xf32>
    %327 = arith.addf %324, %326 : vector<16x512xf32>
    %328 = arith.truncf %318 : vector<16x128xf32> to vector<16x128xbf16>
    %c0_172 = arith.constant 0 : index
    %c0_173 = arith.constant 0 : index
    %329 = vector.load %arg5[%c0_172, %c0_173] : memref<128x512xbf16, #tpu.memory_space<vmem>>, vector<128x512xbf16>
    %cst_174 = arith.constant dense<0.000000e+00> : vector<16x512xf32>
    %330 = tpu.matmul %328, %329, %cst_174 {dimension_numbers = #tpu.dot_dimension_numbers<[1], [0], [0], [1], [0, 0, 1, 1], [], []>} : vector<16x128xbf16>, vector<128x512xbf16>, vector<16x512xf32> -> vector<16x512xf32>
    %331 = arith.addf %327, %330 : vector<16x512xf32>
    %332 = vector.extract_strided_slice %331 {offsets = [0, 0], sizes = [16, 128], strides = [1, 1]} : vector<16x512xf32> to vector<16x128xf32>
    %333 = arith.negf %332 : vector<16x128xf32>
    %334 = math.exp %333 : vector<16x128xf32>
    %cst_175 = arith.constant 1.000000e+00 : f32
    %335 = vector.broadcast %cst_175 : f32 to vector<16x128xf32>
    %336 = arith.addf %335, %334 : vector<16x128xf32>
    %337 = arith.divf %335, %336 : vector<16x128xf32>
    %338 = vector.extract_strided_slice %331 {offsets = [0, 128], sizes = [16, 128], strides = [1, 1]} : vector<16x512xf32> to vector<16x128xf32>
    %339 = arith.negf %338 : vector<16x128xf32>
    %340 = math.exp %339 : vector<16x128xf32>
    %cst_176 = arith.constant 1.000000e+00 : f32
    %341 = vector.broadcast %cst_176 : f32 to vector<16x128xf32>
    %342 = arith.addf %341, %340 : vector<16x128xf32>
    %343 = arith.divf %341, %342 : vector<16x128xf32>
    %344 = vector.extract_strided_slice %331 {offsets = [0, 256], sizes = [16, 128], strides = [1, 1]} : vector<16x512xf32> to vector<16x128xf32>
    %345 = math.tanh %344 : vector<16x128xf32>
    %346 = vector.extract_strided_slice %331 {offsets = [0, 384], sizes = [16, 128], strides = [1, 1]} : vector<16x512xf32> to vector<16x128xf32>
    %347 = arith.negf %346 : vector<16x128xf32>
    %348 = math.exp %347 : vector<16x128xf32>
    %cst_177 = arith.constant 1.000000e+00 : f32
    %349 = vector.broadcast %cst_177 : f32 to vector<16x128xf32>
    %350 = arith.addf %349, %348 : vector<16x128xf32>
    %351 = arith.divf %349, %350 : vector<16x128xf32>
    %352 = arith.mulf %343, %319 : vector<16x128xf32>
    %353 = arith.mulf %337, %345 : vector<16x128xf32>
    %354 = arith.addf %352, %353 : vector<16x128xf32>
    %355 = math.tanh %354 : vector<16x128xf32>
    %356 = arith.mulf %351, %355 : vector<16x128xf32>
    %357 = arith.index_cast %c7_i32 : i32 to index
    %c0_178 = arith.constant 0 : index
    %c0_179 = arith.constant 0 : index
    %358 = vector.load %arg8[%357, %c0_178, %c0_179] : memref<8x16x128xf32, #tpu.memory_space<vmem>>, vector<1x16x128xf32>
    %359 = vector.shape_cast %358 : vector<1x16x128xf32> to vector<16x128xf32>
    %360 = vector.shape_cast %356 : vector<16x128xf32> to vector<1x16x128xf32>
    tpu.vector_store %arg8[%357, %c0_178, %c0_179], %360 {strides = array<i32>} : memref<8x16x128xf32, #tpu.memory_space<vmem>>, vector<1x16x128xf32>,
    %c0_180 = arith.constant 0 : index
    %c0_181 = arith.constant 0 : index
    %361 = vector.load %arg11[%c0_180, %c0_181] : memref<16x128xf32, #tpu.memory_space<vmem>>, vector<16x128xf32>
    tpu.vector_store %arg11[%c0_180, %c0_181], %356 {strides = array<i32>} : memref<16x128xf32, #tpu.memory_space<vmem>>, vector<16x128xf32>,
    %c0_182 = arith.constant 0 : index
    %c0_183 = arith.constant 0 : index
    %362 = vector.load %arg12[%c0_182, %c0_183] : memref<16x128xf32, #tpu.memory_space<vmem>>, vector<16x128xf32>
    tpu.vector_store %arg12[%c0_182, %c0_183], %354 {strides = array<i32>} : memref<16x128xf32, #tpu.memory_space<vmem>>, vector<16x128xf32>,
    %c8_i32 = arith.constant 8 : i32
    %c0_i32_184 = arith.constant 0 : i32
    %363 = arith.cmpi eq, %arg1, %c0_i32_184 : i32
    %364 = arith.extui %363 : i1 to i32
    %c0_i32_185 = arith.constant 0 : i32
    %365 = arith.cmpi ne, %364, %c0_i32_185 : i32
    scf.if %365 {
      %c0_186 = arith.constant 0 : index
      %c0_187 = arith.constant 0 : index
      %366 = vector.load %arg11[%c0_186, %c0_187] : memref<16x128xf32, #tpu.memory_space<vmem>>, vector<16x128xf32>
      %c0_188 = arith.constant 0 : index
      %c0_189 = arith.constant 0 : index
      %367 = vector.load %arg9[%c0_188, %c0_189] : memref<16x128xf32, #tpu.memory_space<vmem>>, vector<16x128xf32>
      tpu.vector_store %arg9[%c0_188, %c0_189], %366 {strides = array<i32>} : memref<16x128xf32, #tpu.memory_space<vmem>>, vector<16x128xf32>,
      %c0_190 = arith.constant 0 : index
      %c0_191 = arith.constant 0 : index
      %368 = vector.load %arg12[%c0_190, %c0_191] : memref<16x128xf32, #tpu.memory_space<vmem>>, vector<16x128xf32>
      %c0_192 = arith.constant 0 : index
      %c0_193 = arith.constant 0 : index
      %369 = vector.load %arg10[%c0_192, %c0_193] : memref<16x128xf32, #tpu.memory_space<vmem>>, vector<16x128xf32>
      tpu.vector_store %arg10[%c0_192, %c0_193], %368 {strides = array<i32>} : memref<16x128xf32, #tpu.memory_space<vmem>>, vector<16x128xf32>,
    } else {
    }
    return
  }
  func.func @transform_0(%arg0: i32, %arg1: i32) -> (i32, i32, i32) {
    %c0_i32 = arith.constant 0 : i32
    %c0_i32_0 = arith.constant 0 : i32
    return %arg1, %arg0, %c0_i32 : i32, i32, i32
  }
  func.func @transform_1(%arg0: i32, %arg1: i32) -> (i32, i32) {
    %c0_i32 = arith.constant 0 : i32
    %c0_i32_0 = arith.constant 0 : i32
    %c0_i32_1 = arith.constant 0 : i32
    return %c0_i32, %c0_i32_0 : i32, i32
  }
  func.func @transform_2(%arg0: i32, %arg1: i32) -> (i32, i32) {
    %c0_i32 = arith.constant 0 : i32
    %c0_i32_0 = arith.constant 0 : i32
    %c0_i32_1 = arith.constant 0 : i32
    return %c0_i32, %c0_i32_0 : i32, i32
  }
  func.func @transform_3(%arg0: i32, %arg1: i32) -> (i32, i32) {
    %c0_i32 = arith.constant 0 : i32
    %c0_i32_0 = arith.constant 0 : i32
    %c0_i32_1 = arith.constant 0 : i32
    return %c0_i32, %c0_i32_0 : i32, i32
  }
  func.func @transform_4(%arg0: i32, %arg1: i32) -> (i32, i32) {
    %c0_i32 = arith.constant 0 : i32
    %c0_i32_0 = arith.constant 0 : i32
    return %arg0, %c0_i32 : i32, i32
  }
  func.func @transform_5(%arg0: i32, %arg1: i32) -> (i32, i32) {
    %c0_i32 = arith.constant 0 : i32
    %c0_i32_0 = arith.constant 0 : i32
    return %arg0, %c0_i32 : i32, i32
  }
  func.func @transform_6(%arg0: i32, %arg1: i32) -> (i32, i32, i32) {
    %c0_i32 = arith.constant 0 : i32
    %c0_i32_0 = arith.constant 0 : i32
    return %arg1, %arg0, %c0_i32 : i32, i32, i32
  }
  func.func @transform_7(%arg0: i32, %arg1: i32) -> (i32, i32) {
    %c0_i32 = arith.constant 0 : i32
    %c0_i32_0 = arith.constant 0 : i32
    return %arg0, %c0_i32 : i32, i32
  }
  func.func @transform_8(%arg0: i32, %arg1: i32) -> (i32, i32) {
    %c0_i32 = arith.constant 0 : i32
    %c0_i32_0 = arith.constant 0 : i32
    return %arg0, %c0_i32 : i32, i32
  }
}

</mosaic_0001>

<llo_original>
// kernel: tpu_custom_call.1
$region0: #{tpu_custom_call.1}
  #allocation0 [shape = 'u32[]', space=smem, size = 0x4, offset = 0x4, fixed_abs, tag = 'smem constant byte address 0x4 - core index']
  #allocation1 [shape = 'u32[144,128]{1,0:T(1,128)}', space=vmem, size = 0x12000, scoped, tag = 'internal scratch']
  #allocation2 [shape = 'f32[16,128]{1,0:T(8,128)}', space=vmem, size = 0x2000, scoped, tag = 'scratch operand']
  #allocation3 [shape = 'f32[16,128]{1,0:T(8,128)}', space=vmem, size = 0x2000, scoped, tag = 'scratch operand']
  %s0 = inlined_call_operand.hbm [shape: bf16[8,16,16], index: 0, kind: input, shape index: {}]
  %s1 = inlined_call_operand.hbm [shape: bf16[16,512], index: 1, kind: input, shape index: {}]
  %s2 = inlined_call_operand.hbm [shape: f32[1,512], index: 2, kind: input, shape index: {}]
  %s3 = inlined_call_operand.hbm [shape: bf16[128,512], index: 3, kind: input, shape index: {}]
  %s4 = inlined_call_operand.hbm [shape: f32[16,128], index: 4, kind: input, shape index: {}]
  %s5 = inlined_call_operand.vmem [shape: f32[16,128], index: 5, kind: input, shape index: {}]
  %s6 = inlined_call_operand.hbm [shape: f32[8,16,128], index: 6, kind: output, shape index: {0}]
  %s7 = inlined_call_operand.hbm [shape: f32[16,128], index: 7, kind: output, shape index: {1}]
  %s8 = inlined_call_operand.hbm [shape: f32[16,128], index: 8, kind: output, shape index: {2}]
  %9 = xla_tuple %s6, %s7, %s8
  %s10 = sld [smem:[#allocation0]]
  $region78: #{tpu_custom_call.1} parent=0
    _
  %s12 = ssub.s32 1, %s10
  %s13 = scalar_select 0, %s12, %s10
  $region1: #{tpu_custom_call.1} parent=0
    #allocation4 [shape = 'u8[32768]{0}', space=vmem, size = 0x8000, scoped, tag = 'input window, operand 0, single buffered']
    #allocation5 [shape = 's32[1]{0}', space=sflag, size = 0x4, scoped, tag = 'scoped memory for tpu_custom_call.1']
    #allocation6 [shape = 's32[1]{0}', space=sflag, size = 0x4, scoped, tag = 'scoped memory for tpu_custom_call.1']
    #allocation7 [shape = 'u8[16384]{0}', space=vmem, size = 0x4000, scoped, tag = 'input window, operand 1, single buffered']
    #allocation8 [shape = 's32[1]{0}', space=sflag, size = 0x4, scoped, tag = 'scoped memory for tpu_custom_call.1']
    #allocation9 [shape = 'u8[2048]{0}', space=vmem, size = 0x800, scoped, tag = 'input window, operand 2, single buffered']
    #allocation10 [shape = 'u8[131072]{0}', space=vmem, size = 0x20000, scoped, tag = 'input window, operand 3, single buffered']
    #allocation11 [shape = 's32[1]{0}', space=sflag, size = 0x4, scoped, tag = 'scoped memory for tpu_custom_call.1']
    #allocation12 [shape = 'u8[8192]{0}', space=vmem, size = 0x2000, scoped, tag = 'input window, operand 4, single buffered']
    #allocation13 [shape = 'u8[65536]{0}', space=vmem, size = 0x10000, scoped, tag = 'output window, operand 0, single buffered']
    #allocation14 [shape = 'u8[8192]{0}', space=vmem, size = 0x2000, scoped, tag = 'output window, operand 1, single buffered']
    #allocation15 [shape = 's32[1]{0}', space=sflag, size = 0x4, scoped, tag = 'scoped memory for tpu_custom_call.1']
    #allocation16 [shape = 'u8[8192]{0}', space=vmem, size = 0x2000, scoped, tag = 'output window, operand 2, single buffered']
    %14 = vsyncpa [#allocation5], 0
    %15 = vsyncpa [#allocation8], 0
    %16 = vsyncpa [#allocation11], 0
    %17 = vsyncpa [#allocation6], 0
    %18 = vsyncpa [#allocation15], 0
    // Predicated region
    $region2: #{tpu_custom_call.1} parent=1 // pred_check
      _
    $region3: #{tpu_custom_call.1} parent=1 // pred_check_branch
      %20 = sbr.rel (0) target = $region5
    $region4: #{tpu_custom_call.1} parent=1 // pred_region
      %s22 = ssub.s32 1024, 1024
      %23 = vsyncadd [#allocation5], %s22
      %s24 = sshll.u32 [#allocation4], 4
      %s25 = int_to_ptr.vmem [resolvable:$true] %s24
      %30 = dma.hbm_to_vmem [thread:$0]  %s0, 1024, %s25, [#allocation5], 64, 64, 4
    $region5: #{tpu_custom_call.1} parent=1 // pred_fallthru
      _
    // Predicated region
    $region6: #{tpu_custom_call.1} parent=1 // pred_check
      _
    $region7: #{tpu_custom_call.1} parent=1 // pred_check_branch
      %32 = sbr.rel (0) target = $region9
    $region8: #{tpu_custom_call.1} parent=1 // pred_region
      %s34 = ssub.s32 512, 512
      %35 = vsyncadd [#allocation8], %s34
      %s36 = sshll.u32 [#allocation7], 4
      %s37 = int_to_ptr.vmem [resolvable:$true] %s36
      %42 = dma.hbm_to_vmem [thread:$0]  %s1, 512, %s37, [#allocation8], 256, 256, 16
    $region9: #{tpu_custom_call.1} parent=1 // pred_fallthru
      _
    // Predicated region
    $region10: #{tpu_custom_call.1} parent=1 // pred_check
      _
    $region11: #{tpu_custom_call.1} parent=1 // pred_check_branch
      %44 = sbr.rel (0) target = $region13
    $region12: #{tpu_custom_call.1} parent=1 // pred_region
      %s46 = ssub.s32 64, 64
      %47 = vsyncadd [#allocation8], %s46
      %s49 = sshll.u32 [#allocation9], 4
      %s50 = int_to_ptr.vmem [resolvable:$true] %s49
      %52 = dma.hbm_to_vmem [thread:$0]  %s2, 64, %s50, [#allocation8]
    $region13: #{tpu_custom_call.1} parent=1 // pred_fallthru
      _
    // Predicated region
    $region14: #{tpu_custom_call.1} parent=1 // pred_check
      _
    $region15: #{tpu_custom_call.1} parent=1 // pred_check_branch
      %54 = sbr.rel (0) target = $region17
    $region16: #{tpu_custom_call.1} parent=1 // pred_region
      %s56 = ssub.s32 4096, 4096
      %57 = vsyncadd [#allocation11], %s56
      %s58 = sshll.u32 [#allocation10], 4
      %s59 = int_to_ptr.vmem [resolvable:$true] %s58
      %64 = dma.hbm_to_vmem [thread:$0]  %s3, 4096, %s59, [#allocation11], 256, 256, 16
    $region17: #{tpu_custom_call.1} parent=1 // pred_fallthru
      _
    // Predicated region
    $region18: #{tpu_custom_call.1} parent=1 // pred_check
      _
    $region19: #{tpu_custom_call.1} parent=1 // pred_check_branch
      %66 = sbr.rel (0) target = $region21
    $region20: #{tpu_custom_call.1} parent=1 // pred_region
      %s68 = ssub.s32 256, 256
      %69 = vsyncadd [#allocation11], %s68
      %s70 = sshll.u32 [#allocation12], 4
      %s71 = int_to_ptr.vmem [resolvable:$true] %s70
      %76 = dma.hbm_to_vmem [thread:$0]  %s4, 256, %s71, [#allocation11], 128, 128, 8
    $region21: #{tpu_custom_call.1} parent=1 // pred_fallthru
      _
    // Predicated region
    $region22: #{tpu_custom_call.1} parent=1 // pred_check
      _
    $region23: #{tpu_custom_call.1} parent=1 // pred_check_branch
      %78 = sbr.rel (0) target = $region25
    $region24: #{tpu_custom_call.1} parent=1 // pred_region
      _
    $region25: #{tpu_custom_call.1} parent=1 // pred_fallthru
      _
    // Predicated region
    $region26: #{tpu_custom_call.1} parent=1 // pred_check
      _
    $region27: #{tpu_custom_call.1} parent=1 // pred_check_branch
      %80 = sbr.rel (0) target = $region29
    $region28: #{tpu_custom_call.1} parent=1 // pred_region
      %81 = dma.done [#allocation5], 1024
    $region29: #{tpu_custom_call.1} parent=1 // pred_fallthru
      _
    // Predicated region
    $region30: #{tpu_custom_call.1} parent=1 // pred_check
      _
    $region31: #{tpu_custom_call.1} parent=1 // pred_check_branch
      %83 = sbr.rel (0) target = $region33
    $region32: #{tpu_custom_call.1} parent=1 // pred_region
      %84 = dma.done [#allocation8], 512
    $region33: #{tpu_custom_call.1} parent=1 // pred_fallthru
      _
    // Predicated region
    $region34: #{tpu_custom_call.1} parent=1 // pred_check
      _
    $region35: #{tpu_custom_call.1} parent=1 // pred_check_branch
      %86 = sbr.rel (0) target = $region37
    $region36: #{tpu_custom_call.1} parent=1 // pred_region
      %87 = dma.done [#allocation8], 64
    $region37: #{tpu_custom_call.1} parent=1 // pred_fallthru
      _
    // Predicated region
    $region38: #{tpu_custom_call.1} parent=1 // pred_check
      _
    $region39: #{tpu_custom_call.1} parent=1 // pred_check_branch
      %89 = sbr.rel (0) target = $region41
    $region40: #{tpu_custom_call.1} parent=1 // pred_region
      %90 = dma.done [#allocation11], 4096
    $region41: #{tpu_custom_call.1} parent=1 // pred_fallthru
      _
    // Predicated region
    $region42: #{tpu_custom_call.1} parent=1 // pred_check
      _
    $region43: #{tpu_custom_call.1} parent=1 // pred_check_branch
      %92 = sbr.rel (0) target = $region45
    $region44: #{tpu_custom_call.1} parent=1 // pred_region
      %93 = dma.done [#allocation11], 256
    $region45: #{tpu_custom_call.1} parent=1 // pred_fallthru
      _
    %p95 = scmp.eq.s32.totalorder 0, 0
    // Predicated region
    $region46: #{tpu_custom_call.1} parent=1 // pred_check
      %p96 = pneg %p95
    $region47: #{tpu_custom_call.1} parent=1 // pred_check_branch
      %98 = sbr.rel (%p96) target = $region49
    $region48: #{tpu_custom_call.1} parent=1 // pred_region
      %v99 = vld [vmem:[#allocation12] sm:$0xff]
      %v100 = vld [vmem:[#allocation12 + $0x8] sm:$0xff]
      %101 = vst [vmem:[#allocation2] sm:$0xff] %v99
      %102 = vst [vmem:[#allocation2 + $0x8] sm:$0xff] %v100
      %v103 = vld [vmem:[%s5] sm:$0xff]
      %v104 = vld [vmem:[%s5 + $0x8] sm:$0xff]
      %105 = vst [vmem:[#allocation3] sm:$0xff] %v103
      %106 = vst [vmem:[#allocation3 + $0x8] sm:$0xff] %v104
    $region49: #{tpu_custom_call.1} parent=1 // pred_fallthru
      _
    %v107 = vld [vmem:[#allocation2] sm:$0xff]
    %v108 = vld [vmem:[#allocation2 + $0x8] sm:$0xff]
    %v109 = vld [vmem:[#allocation3] sm:$0xff]
    %v110 = vld [vmem:[#allocation3 + $0x8] sm:$0xff]
    %v111 = vld [vmem:[#allocation4] sm:$0xf]
    %v112 = vld [vmem:[#allocation4 + $0x4] sm:$0xf]
    %v113 = vld [vmem:[#allocation7] sm:$0xff]
    %v114 = vld [vmem:[#allocation7 + $0x8] sm:$0xff]
    %v115 = vld [vmem:[#allocation7 + $0x10] sm:$0xff]
    %v116 = vld [vmem:[#allocation7 + $0x18] sm:$0xff]
    %v117 = vld [vmem:[#allocation9] sm:$0xf]
    %v119 = vlaneseq
    %v120 = vshrl.u32 %v119, 7
    %v121 = vsub.s32 0, %v120
    %v122 = vrot.slane %v117, %v121
    %v123 = vlaneseq
    %v124 = vshrl.u32 %v123, 7
    %v125 = vsub.s32 1, %v124
    %v126 = vrot.slane %v117, %v125
    %v127 = vlaneseq
    %v128 = vshrl.u32 %v127, 7
    %v129 = vsub.s32 2, %v128
    %v130 = vrot.slane %v117, %v129
    %v131 = vlaneseq
    %v132 = vshrl.u32 %v131, 7
    %v133 = vsub.s32 3, %v132
    %v134 = vrot.slane %v117, %v133
    %v141 = vunpack.c.l.b16 %v111
    %v142 = vunpack.c.l.b16 %v112
    %v143 = vpack.c.b16 %v142, %v141
    %v148 = vunpack.c.l.b16 %v113
    %v149 = vunpack.c.h.b16 %v113
    %v150 = vunpack.c.l.b16 %v114
    %v151 = vunpack.c.h.b16 %v114
    %v152 = vunpack.c.l.b16 %v115
    %v153 = vunpack.c.h.b16 %v115
    %v154 = vunpack.c.l.b16 %v116
    %v155 = vunpack.c.h.b16 %v116
    %v156 = vpack.c.b16 %v152, %v148
    %v157 = vpack.c.b16 %v153, %v149
    %v158 = vpack.c.b16 %v154, %v150
    %v159 = vpack.c.b16 %v155, %v151
    %vm164 = vcmask 130048
    %v166 = vsel %vm164, %v143, 0
    %168 = vmatprep.subr.bf16.mxu0 %v157
    %169 = vmatpush1.bf16.msra.mxu0 %v156
    %170 = vmatprep.subr.bf16.mxu0 0
    %171 = vmatpush1.bf16.msra.mxu0 0
    %172 = vmatprep.subr.bf16.mxu0 0
    %173 = vmatpush1.bf16.msra.mxu0 0
    %174 = vmatprep.subr.bf16.mxu0 0
    %175 = vmatpush1.bf16.msra.mxu0 0
    %176 = vmatprep.subr.bf16.mxu0 0
    %177 = vmatpush1.bf16.msra.mxu0 0
    %178 = vmatprep.subr.bf16.mxu0 0
    %179 = vmatpush1.bf16.msra.mxu0 0
    %180 = vmatprep.subr.bf16.mxu0 0
    %181 = vmatpush1.bf16.msra.mxu0 0
    %182 = vmatprep.subr.bf16.mxu0 0
    %183 = vmatpush1.bf16.msra.mxu0 0
    %184 = vmatprep.subr.bf16.mxu0 0
    %185 = vmatpush1.bf16.msra.mxu0 0
    %186 = vmatprep.subr.bf16.mxu0 0
    %187 = vmatpush1.bf16.msra.mxu0 0
    %188 = vmatprep.subr.bf16.mxu0 0
    %189 = vmatpush1.bf16.msra.mxu0 0
    %190 = vmatprep.subr.bf16.mxu0 0
    %191 = vmatpush1.bf16.msra.mxu0 0
    %192 = vmatprep.subr.bf16.mxu0 0
    %193 = vmatpush1.bf16.msra.mxu0 0
    %194 = vmatprep.subr.bf16.mxu0 0
    %195 = vmatpush1.bf16.msra.mxu0 0
    %196 = vmatprep.subr.bf16.mxu0 0
    %197 = vmatpush1.bf16.msra.mxu0 0
    %198 = vmatprep.subr.bf16.mxu0 0
    %199 = vmatpush1.bf16.msra.mxu0 0
    %200 = vmatprep.mubr.bf16.mxu0 0
    %201 = vmatmul.mubr.bf16.gmra.mrb[0].mxu0 %v166
    %v202 = vpop.f32.mrb[0].mxu0
    %v203 = vadd.f32 %v122, %v202
    %v204 = vpop.f32.mrb[0].mxu0
    %v205 = vadd.f32 %v126, %v204
    %v206 = vpop.f32.mrb[0].mxu0
    %v207 = vadd.f32 %v122, %v206
    %v208 = vpop.f32.mrb[0].mxu0
    %v209 = vadd.f32 %v126, %v208
    %210 = vdwg.mxu0
    %211 = vmatprep.subr.bf16.mxu0 %v159
    %212 = vmatpush1.bf16.msra.mxu0 %v158
    %213 = vmatprep.subr.bf16.mxu0 0
    %214 = vmatpush1.bf16.msra.mxu0 0
    %215 = vmatprep.subr.bf16.mxu0 0
    %216 = vmatpush1.bf16.msra.mxu0 0
    %217 = vmatprep.subr.bf16.mxu0 0
    %218 = vmatpush1.bf16.msra.mxu0 0
    %219 = vmatprep.subr.bf16.mxu0 0
    %220 = vmatpush1.bf16.msra.mxu0 0
    %221 = vmatprep.subr.bf16.mxu0 0
    %222 = vmatpush1.bf16.msra.mxu0 0
    %223 = vmatprep.subr.bf16.mxu0 0
    %224 = vmatpush1.bf16.msra.mxu0 0
    %225 = vmatprep.subr.bf16.mxu0 0
    %226 = vmatpush1.bf16.msra.mxu0 0
    %227 = vmatprep.subr.bf16.mxu0 0
    %228 = vmatpush1.bf16.msra.mxu0 0
    %229 = vmatprep.subr.bf16.mxu0 0
    %230 = vmatpush1.bf16.msra.mxu0 0
    %231 = vmatprep.subr.bf16.mxu0 0
    %232 = vmatpush1.bf16.msra.mxu0 0
    %233 = vmatprep.subr.bf16.mxu0 0
    %234 = vmatpush1.bf16.msra.mxu0 0
    %235 = vmatprep.subr.bf16.mxu0 0
    %236 = vmatpush1.bf16.msra.mxu0 0
    %237 = vmatprep.subr.bf16.mxu0 0
    %238 = vmatpush1.bf16.msra.mxu0 0
    %239 = vmatprep.subr.bf16.mxu0 0
    %240 = vmatpush1.bf16.msra.mxu0 0
    %241 = vmatprep.subr.bf16.mxu0 0
    %242 = vmatpush1.bf16.msra.mxu0 0
    %243 = vmatprep.mubr.bf16.mxu0 0
    %244 = vmatmul.mubr.bf16.gmra.mrb[0].mxu0 %v166
    %v245 = vpop.f32.mrb[0].mxu0
    %v246 = vadd.f32 %v130, %v245
    %v247 = vpop.f32.mrb[0].mxu0
    %v248 = vadd.f32 %v134, %v247
    %v249 = vpop.f32.mrb[0].mxu0
    %v250 = vadd.f32 %v130, %v249
    %v251 = vpop.f32.mrb[0].mxu0
    %v252 = vadd.f32 %v134, %v251
    %253 = vdwg.mxu0
    %v254 = vpack.c.bf16 %v108, %v107
    %v255 = vld [vmem:[#allocation10] sm:$0xff]
    %v256 = vld [vmem:[#allocation10 + $0x8] sm:$0xff]
    %v257 = vld [vmem:[#allocation10 + $0x10] sm:$0xff]
    %v258 = vld [vmem:[#allocation10 + $0x18] sm:$0xff]
    %v259 = vld [vmem:[#allocation10 + $0x20] sm:$0xff]
    %v260 = vld [vmem:[#allocation10 + $0x28] sm:$0xff]
    %v261 = vld [vmem:[#allocation10 + $0x30] sm:$0xff]
    %v262 = vld [vmem:[#allocation10 + $0x38] sm:$0xff]
    %v263 = vld [vmem:[#allocation10 + $0x40] sm:$0xff]
    %v264 = vld [vmem:[#allocation10 + $0x48] sm:$0xff]
    %v265 = vld [vmem:[#allocation10 + $0x50] sm:$0xff]
    %v266 = vld [vmem:[#allocation10 + $0x58] sm:$0xff]
    %v267 = vld [vmem:[#allocation10 + $0x60] sm:$0xff]
    %v268 = vld [vmem:[#allocation10 + $0x68] sm:$0xff]
    %v269 = vld [vmem:[#allocation10 + $0x70] sm:$0xff]
    %v270 = vld [vmem:[#allocation10 + $0x78] sm:$0xff]
    %v271 = vld [vmem:[#allocation10 + $0x80] sm:$0xff]
    %v272 = vld [vmem:[#allocation10 + $0x88] sm:$0xff]
    %v273 = vld [vmem:[#allocation10 + $0x90] sm:$0xff]
    %v274 = vld [vmem:[#allocation10 + $0x98] sm:$0xff]
    %v275 = vld [vmem:[#allocation10 + $0xa0] sm:$0xff]
    %v276 = vld [vmem:[#allocation10 + $0xa8] sm:$0xff]
    %v277 = vld [vmem:[#allocation10 + $0xb0] sm:$0xff]
    %v278 = vld [vmem:[#allocation10 + $0xb8] sm:$0xff]
    %v279 = vld [vmem:[#allocation10 + $0xc0] sm:$0xff]
    %v280 = vld [vmem:[#allocation10 + $0xc8] sm:$0xff]
    %v281 = vld [vmem:[#allocation10 + $0xd0] sm:$0xff]
    %v282 = vld [vmem:[#allocation10 + $0xd8] sm:$0xff]
    %v283 = vld [vmem:[#allocation10 + $0xe0] sm:$0xff]
    %v284 = vld [vmem:[#allocation10 + $0xe8] sm:$0xff]
    %v285 = vld [vmem:[#allocation10 + $0xf0] sm:$0xff]
    %v286 = vld [vmem:[#allocation10 + $0xf8] sm:$0xff]
    %v319 = vunpack.c.l.b16 %v255
    %v320 = vunpack.c.h.b16 %v255
    %v321 = vunpack.c.l.b16 %v256
    %v322 = vunpack.c.h.b16 %v256
    %v323 = vunpack.c.l.b16 %v257
    %v324 = vunpack.c.h.b16 %v257
    %v325 = vunpack.c.l.b16 %v258
    %v326 = vunpack.c.h.b16 %v258
    %v327 = vunpack.c.l.b16 %v259
    %v328 = vunpack.c.h.b16 %v259
    %v329 = vunpack.c.l.b16 %v260
    %v330 = vunpack.c.h.b16 %v260
    %v331 = vunpack.c.l.b16 %v261
    %v332 = vunpack.c.h.b16 %v261
    %v333 = vunpack.c.l.b16 %v262
    %v334 = vunpack.c.h.b16 %v262
    %v335 = vunpack.c.l.b16 %v263
    %v336 = vunpack.c.h.b16 %v263
    %v337 = vunpack.c.l.b16 %v264
    %v338 = vunpack.c.h.b16 %v264
    %v339 = vunpack.c.l.b16 %v265
    %v340 = vunpack.c.h.b16 %v265
    %v341 = vunpack.c.l.b16 %v266
    %v342 = vunpack.c.h.b16 %v266
    %v343 = vunpack.c.l.b16 %v267
    %v344 = vunpack.c.h.b16 %v267
    %v345 = vunpack.c.l.b16 %v268
    %v346 = vunpack.c.h.b16 %v268
    %v347 = vunpack.c.l.b16 %v269
    %v348 = vunpack.c.h.b16 %v269
    %v349 = vunpack.c.l.b16 %v270
    %v350 = vunpack.c.h.b16 %v270
    %v351 = vunpack.c.l.b16 %v271
    %v352 = vunpack.c.h.b16 %v271
    %v353 = vunpack.c.l.b16 %v272
    %v354 = vunpack.c.h.b16 %v272
    %v355 = vunpack.c.l.b16 %v273
    %v356 = vunpack.c.h.b16 %v273
    %v357 = vunpack.c.l.b16 %v274
    %v358 = vunpack.c.h.b16 %v274
    %v359 = vunpack.c.l.b16 %v275
    %v360 = vunpack.c.h.b16 %v275
    %v361 = vunpack.c.l.b16 %v276
    %v362 = vunpack.c.h.b16 %v276
    %v363 = vunpack.c.l.b16 %v277
    %v364 = vunpack.c.h.b16 %v277
    %v365 = vunpack.c.l.b16 %v278
    %v366 = vunpack.c.h.b16 %v278
    %v367 = vunpack.c.l.b16 %v279
    %v368 = vunpack.c.h.b16 %v279
    %v369 = vunpack.c.l.b16 %v280
    %v370 = vunpack.c.h.b16 %v280
    %v371 = vunpack.c.l.b16 %v281
    %v372 = vunpack.c.h.b16 %v281
    %v373 = vunpack.c.l.b16 %v282
    %v374 = vunpack.c.h.b16 %v282
    %v375 = vunpack.c.l.b16 %v283
    %v376 = vunpack.c.h.b16 %v283
    %v377 = vunpack.c.l.b16 %v284
    %v378 = vunpack.c.h.b16 %v284
    %v379 = vunpack.c.l.b16 %v285
    %v380 = vunpack.c.h.b16 %v285
    %v381 = vunpack.c.l.b16 %v286
    %v382 = vunpack.c.h.b16 %v286
    %v383 = vpack.c.b16 %v323, %v319
    %v384 = vpack.c.b16 %v324, %v320
    %v385 = vpack.c.b16 %v325, %v321
    %v386 = vpack.c.b16 %v326, %v322
    %v387 = vpack.c.b16 %v331, %v327
    %v388 = vpack.c.b16 %v332, %v328
    %v389 = vpack.c.b16 %v333, %v329
    %v390 = vpack.c.b16 %v334, %v330
    %v391 = vpack.c.b16 %v339, %v335
    %v392 = vpack.c.b16 %v340, %v336
    %v393 = vpack.c.b16 %v341, %v337
    %v394 = vpack.c.b16 %v342, %v338
    %v395 = vpack.c.b16 %v347, %v343
    %v396 = vpack.c.b16 %v348, %v344
    %v397 = vpack.c.b16 %v349, %v345
    %v398 = vpack.c.b16 %v350, %v346
    %v399 = vpack.c.b16 %v355, %v351
    %v400 = vpack.c.b16 %v356, %v352
    %v401 = vpack.c.b16 %v357, %v353
    %v402 = vpack.c.b16 %v358, %v354
    %v403 = vpack.c.b16 %v363, %v359
    %v404 = vpack.c.b16 %v364, %v360
    %v405 = vpack.c.b16 %v365, %v361
    %v406 = vpack.c.b16 %v366, %v362
    %v407 = vpack.c.b16 %v371, %v367
    %v408 = vpack.c.b16 %v372, %v368
    %v409 = vpack.c.b16 %v373, %v369
    %v410 = vpack.c.b16 %v374, %v370
    %v411 = vpack.c.b16 %v379, %v375
    %v412 = vpack.c.b16 %v380, %v376
    %v413 = vpack.c.b16 %v381, %v377
    %v414 = vpack.c.b16 %v382, %v378
    %447 = vmatprep.subr.bf16.mxu0 %v384
    %448 = vmatpush1.bf16.msra.mxu0 %v383
    %449 = vmatprep.subr.bf16.mxu0 %v388
    %450 = vmatpush1.bf16.msra.mxu0 %v387
    %451 = vmatprep.subr.bf16.mxu0 %v392
    %452 = vmatpush1.bf16.msra.mxu0 %v391
    %453 = vmatprep.subr.bf16.mxu0 %v396
    %454 = vmatpush1.bf16.msra.mxu0 %v395
    %455 = vmatprep.subr.bf16.mxu0 %v400
    %456 = vmatpush1.bf16.msra.mxu0 %v399
    %457 = vmatprep.subr.bf16.mxu0 %v404
    %458 = vmatpush1.bf16.msra.mxu0 %v403
    %459 = vmatprep.subr.bf16.mxu0 %v408
    %460 = vmatpush1.bf16.msra.mxu0 %v407
    %461 = vmatprep.subr.bf16.mxu0 %v412
    %462 = vmatpush1.bf16.msra.mxu0 %v411
    %463 = vmatprep.subr.bf16.mxu0 0
    %464 = vmatpush1.bf16.msra.mxu0 0
    %465 = vmatprep.subr.bf16.mxu0 0
    %466 = vmatpush1.bf16.msra.mxu0 0
    %467 = vmatprep.subr.bf16.mxu0 0
    %468 = vmatpush1.bf16.msra.mxu0 0
    %469 = vmatprep.subr.bf16.mxu0 0
    %470 = vmatpush1.bf16.msra.mxu0 0
    %471 = vmatprep.subr.bf16.mxu0 0
    %472 = vmatpush1.bf16.msra.mxu0 0
    %473 = vmatprep.subr.bf16.mxu0 0
    %474 = vmatpush1.bf16.msra.mxu0 0
    %475 = vmatprep.subr.bf16.mxu0 0
    %476 = vmatpush1.bf16.msra.mxu0 0
    %477 = vmatprep.subr.bf16.mxu0 0
    %478 = vmatpush1.bf16.msra.mxu0 0
    %479 = vmatprep.mubr.bf16.mxu0 0
    %480 = vmatmul.mubr.bf16.gmra.mrb[0].mxu0 %v254
    %v481 = vpop.f32.mrb[0].mxu0
    %v482 = vadd.f32 0.0, %v481
    %v483 = vpop.f32.mrb[0].mxu0
    %v484 = vadd.f32 0.0, %v483
    %v485 = vpop.f32.mrb[0].mxu0
    %v486 = vadd.f32 0.0, %v485
    %v487 = vpop.f32.mrb[0].mxu0
    %v488 = vadd.f32 0.0, %v487
    %489 = vdwg.mxu0
    %490 = vmatprep.subr.bf16.mxu0 %v386
    %491 = vmatpush1.bf16.msra.mxu0 %v385
    %492 = vmatprep.subr.bf16.mxu0 %v390
    %493 = vmatpush1.bf16.msra.mxu0 %v389
    %494 = vmatprep.subr.bf16.mxu0 %v394
    %495 = vmatpush1.bf16.msra.mxu0 %v393
    %496 = vmatprep.subr.bf16.mxu0 %v398
    %497 = vmatpush1.bf16.msra.mxu0 %v397
    %498 = vmatprep.subr.bf16.mxu0 %v402
    %499 = vmatpush1.bf16.msra.mxu0 %v401
    %500 = vmatprep.subr.bf16.mxu0 %v406
    %501 = vmatpush1.bf16.msra.mxu0 %v405
    %502 = vmatprep.subr.bf16.mxu0 %v410
    %503 = vmatpush1.bf16.msra.mxu0 %v409
    %504 = vmatprep.subr.bf16.mxu0 %v414
    %505 = vmatpush1.bf16.msra.mxu0 %v413
    %506 = vmatprep.subr.bf16.mxu0 0
    %507 = vmatpush1.bf16.msra.mxu0 0
    %508 = vmatprep.subr.bf16.mxu0 0
    %509 = vmatpush1.bf16.msra.mxu0 0
    %510 = vmatprep.subr.bf16.mxu0 0
    %511 = vmatpush1.bf16.msra.mxu0 0
    %512 = vmatprep.subr.bf16.mxu0 0
    %513 = vmatpush1.bf16.msra.mxu0 0
    %514 = vmatprep.subr.bf16.mxu0 0
    %515 = vmatpush1.bf16.msra.mxu0 0
    %516 = vmatprep.subr.bf16.mxu0 0
    %517 = vmatpush1.bf16.msra.mxu0 0
    %518 = vmatprep.subr.bf16.mxu0 0
    %519 = vmatpush1.bf16.msra.mxu0 0
    %520 = vmatprep.subr.bf16.mxu0 0
    %521 = vmatpush1.bf16.msra.mxu0 0
    %522 = vmatprep.mubr.bf16.mxu0 0
    %523 = vmatmul.mubr.bf16.gmra.mrb[0].mxu0 %v254
    %v524 = vpop.f32.mrb[0].mxu0
    %v525 = vadd.f32 0.0, %v524
    %v526 = vpop.f32.mrb[0].mxu0
    %v527 = vadd.f32 0.0, %v526
    %v528 = vpop.f32.mrb[0].mxu0
    %v529 = vadd.f32 0.0, %v528
    %v530 = vpop.f32.mrb[0].mxu0
    %v531 = vadd.f32 0.0, %v530
    %532 = vdwg.mxu0
    %v533 = vadd.f32 %v203, %v482
    %v534 = vadd.f32 %v205, %v484
    %v535 = vadd.f32 %v246, %v525
    %v536 = vadd.f32 %v248, %v527
    %v537 = vadd.f32 %v207, %v486
    %v538 = vadd.f32 %v209, %v488
    %v539 = vadd.f32 %v250, %v529
    %v540 = vadd.f32 %v252, %v531
    %v541 = vxor.u32 %v533, 2147483648
    %v542 = vxor.u32 %v537, 2147483648
    %v543 = vmul.f32 %v541, 1.442695
    %v544 = vpow.pop %v543
    %v545 = vmul.f32 %v542, 1.442695
    %v546 = vpow.pop %v545
    %v547 = vadd.f32 %v544, 1.0
    %v548 = vadd.f32 %v546, 1.0
    %v549 = vrcp.pop %v547
    %v550 = vmul.f32 1.0, %v549
    %v551 = vrcp.pop %v548
    %v552 = vmul.f32 1.0, %v551
    %v553 = vxor.u32 %v534, 2147483648
    %v554 = vxor.u32 %v538, 2147483648
    %v555 = vmul.f32 %v553, 1.442695
    %v556 = vpow.pop %v555
    %v557 = vmul.f32 %v554, 1.442695
    %v558 = vpow.pop %v557
    %v559 = vadd.f32 %v556, 1.0
    %v560 = vadd.f32 %v558, 1.0
    %v561 = vrcp.pop %v559
    %v562 = vmul.f32 1.0, %v561
    %v563 = vrcp.pop %v560
    %v564 = vmul.f32 1.0, %v563
    %v565 = vtanh.pop %v535
    %v566 = vtanh.pop %v539
    %v567 = vxor.u32 %v536, 2147483648
    %v568 = vxor.u32 %v540, 2147483648
    %v569 = vmul.f32 %v567, 1.442695
    %v570 = vpow.pop %v569
    %v571 = vmul.f32 %v568, 1.442695
    %v572 = vpow.pop %v571
    %v573 = vadd.f32 %v570, 1.0
    %v574 = vadd.f32 %v572, 1.0
    %v575 = vrcp.pop %v573
    %v576 = vmul.f32 1.0, %v575
    %v577 = vrcp.pop %v574
    %v578 = vmul.f32 1.0, %v577
    %v579 = vmul.f32 %v562, %v109
    %v580 = vmul.f32 %v564, %v110
    %v581 = vmul.f32 %v550, %v565
    %v582 = vmul.f32 %v552, %v566
    %v583 = vadd.f32 %v579, %v581
    %v584 = vadd.f32 %v580, %v582
    %v585 = vtanh.pop %v583
    %v586 = vtanh.pop %v584
    %v587 = vmul.f32 %v576, %v585
    %v588 = vmul.f32 %v578, %v586
    %589 = vst [vmem:[#allocation13] sm:$0xff] %v587
    %590 = vst [vmem:[#allocation13 + $0x8] sm:$0xff] %v588
    %591 = vst [vmem:[#allocation2] sm:$0xff] %v587
    %592 = vst [vmem:[#allocation2 + $0x8] sm:$0xff] %v588
    %593 = vst [vmem:[#allocation3] sm:$0xff] %v583
    %594 = vst [vmem:[#allocation3 + $0x8] sm:$0xff] %v584
    %v595 = vld [vmem:[#allocation2] sm:$0xff]
    %v596 = vld [vmem:[#allocation2 + $0x8] sm:$0xff]
    %v597 = vld [vmem:[#allocation3] sm:$0xff]
    %v598 = vld [vmem:[#allocation3 + $0x8] sm:$0xff]
    %s599 = scalar_lea.vmem [#allocation4], 8
    %v600 = vld [vmem:[%s599] sm:$0xf]
    %v601 = vld [vmem:[%s599 + $0x4] sm:$0xf]
    %v602 = vld [vmem:[#allocation7] sm:$0xff]
    %v603 = vld [vmem:[#allocation7 + $0x8] sm:$0xff]
    %v604 = vld [vmem:[#allocation7 + $0x10] sm:$0xff]
    %v605 = vld [vmem:[#allocation7 + $0x18] sm:$0xff]
    %v606 = vld [vmem:[#allocation9] sm:$0xf]
    %v608 = vlaneseq
    %v609 = vshrl.u32 %v608, 7
    %v610 = vsub.s32 0, %v609
    %v611 = vrot.slane %v606, %v610
    %v612 = vlaneseq
    %v613 = vshrl.u32 %v612, 7
    %v614 = vsub.s32 1, %v613
    %v615 = vrot.slane %v606, %v614
    %v616 = vlaneseq
    %v617 = vshrl.u32 %v616, 7
    %v618 = vsub.s32 2, %v617
    %v619 = vrot.slane %v606, %v618
    %v620 = vlaneseq
    %v621 = vshrl.u32 %v620, 7
    %v622 = vsub.s32 3, %v621
    %v623 = vrot.slane %v606, %v622
    %v630 = vunpack.c.l.b16 %v600
    %v631 = vunpack.c.l.b16 %v601
    %v632 = vpack.c.b16 %v631, %v630
    %v637 = vunpack.c.l.b16 %v602
    %v638 = vunpack.c.h.b16 %v602
    %v639 = vunpack.c.l.b16 %v603
    %v640 = vunpack.c.h.b16 %v603
    %v641 = vunpack.c.l.b16 %v604
    %v642 = vunpack.c.h.b16 %v604
    %v643 = vunpack.c.l.b16 %v605
    %v644 = vunpack.c.h.b16 %v605
    %v645 = vpack.c.b16 %v641, %v637
    %v646 = vpack.c.b16 %v642, %v638
    %v647 = vpack.c.b16 %v643, %v639
    %v648 = vpack.c.b16 %v644, %v640
    %v654 = vsel %vm164, %v632, 0
    %656 = vmatprep.subr.bf16.mxu0 %v646
    %657 = vmatpush1.bf16.msra.mxu0 %v645
    %658 = vmatprep.subr.bf16.mxu0 0
    %659 = vmatpush1.bf16.msra.mxu0 0
    %660 = vmatprep.subr.bf16.mxu0 0
    %661 = vmatpush1.bf16.msra.mxu0 0
    %662 = vmatprep.subr.bf16.mxu0 0
    %663 = vmatpush1.bf16.msra.mxu0 0
    %664 = vmatprep.subr.bf16.mxu0 0
    %665 = vmatpush1.bf16.msra.mxu0 0
    %666 = vmatprep.subr.bf16.mxu0 0
    %667 = vmatpush1.bf16.msra.mxu0 0
    %668 = vmatprep.subr.bf16.mxu0 0
    %669 = vmatpush1.bf16.msra.mxu0 0
    %670 = vmatprep.subr.bf16.mxu0 0
    %671 = vmatpush1.bf16.msra.mxu0 0
    %672 = vmatprep.subr.bf16.mxu0 0
    %673 = vmatpush1.bf16.msra.mxu0 0
    %674 = vmatprep.subr.bf16.mxu0 0
    %675 = vmatpush1.bf16.msra.mxu0 0
    %676 = vmatprep.subr.bf16.mxu0 0
    %677 = vmatpush1.bf16.msra.mxu0 0
    %678 = vmatprep.subr.bf16.mxu0 0
    %679 = vmatpush1.bf16.msra.mxu0 0
    %680 = vmatprep.subr.bf16.mxu0 0
    %681 = vmatpush1.bf16.msra.mxu0 0
    %682 = vmatprep.subr.bf16.mxu0 0
    %683 = vmatpush1.bf16.msra.mxu0 0
    %684 = vmatprep.subr.bf16.mxu0 0
    %685 = vmatpush1.bf16.msra.mxu0 0
    %686 = vmatprep.subr.bf16.mxu0 0
    %687 = vmatpush1.bf16.msra.mxu0 0
    %688 = vmatprep.mubr.bf16.mxu0 0
    %689 = vmatmul.mubr.bf16.gmra.mrb[0].mxu0 %v654
    %v690 = vpop.f32.mrb[0].mxu0
    %v691 = vadd.f32 %v611, %v690
    %v692 = vpop.f32.mrb[0].mxu0
    %v693 = vadd.f32 %v615, %v692
    %v694 = vpop.f32.mrb[0].mxu0
    %v695 = vadd.f32 %v611, %v694
    %v696 = vpop.f32.mrb[0].mxu0
    %v697 = vadd.f32 %v615, %v696
    %698 = vdwg.mxu0
    %699 = vmatprep.subr.bf16.mxu0 %v648
    %700 = vmatpush1.bf16.msra.mxu0 %v647
    %701 = vmatprep.subr.bf16.mxu0 0
    %702 = vmatpush1.bf16.msra.mxu0 0
    %703 = vmatprep.subr.bf16.mxu0 0
    %704 = vmatpush1.bf16.msra.mxu0 0
    %705 = vmatprep.subr.bf16.mxu0 0
    %706 = vmatpush1.bf16.msra.mxu0 0
    %707 = vmatprep.subr.bf16.mxu0 0
    %708 = vmatpush1.bf16.msra.mxu0 0
    %709 = vmatprep.subr.bf16.mxu0 0
    %710 = vmatpush1.bf16.msra.mxu0 0
    %711 = vmatprep.subr.bf16.mxu0 0
    %712 = vmatpush1.bf16.msra.mxu0 0
    %713 = vmatprep.subr.bf16.mxu0 0
    %714 = vmatpush1.bf16.msra.mxu0 0
    %715 = vmatprep.subr.bf16.mxu0 0
    %716 = vmatpush1.bf16.msra.mxu0 0
    %717 = vmatprep.subr.bf16.mxu0 0
    %718 = vmatpush1.bf16.msra.mxu0 0
    %719 = vmatprep.subr.bf16.mxu0 0
    %720 = vmatpush1.bf16.msra.mxu0 0
    %721 = vmatprep.subr.bf16.mxu0 0
    %722 = vmatpush1.bf16.msra.mxu0 0
    %723 = vmatprep.subr.bf16.mxu0 0
    %724 = vmatpush1.bf16.msra.mxu0 0
    %725 = vmatprep.subr.bf16.mxu0 0
    %726 = vmatpush1.bf16.msra.mxu0 0
    %727 = vmatprep.subr.bf16.mxu0 0
    %728 = vmatpush1.bf16.msra.mxu0 0
    %729 = vmatprep.subr.bf16.mxu0 0
    %730 = vmatpush1.bf16.msra.mxu0 0
    %731 = vmatprep.mubr.bf16.mxu0 0
    %732 = vmatmul.mubr.bf16.gmra.mrb[0].mxu0 %v654
    %v733 = vpop.f32.mrb[0].mxu0
    %v734 = vadd.f32 %v619, %v733
    %v735 = vpop.f32.mrb[0].mxu0
    %v736 = vadd.f32 %v623, %v735
    %v737 = vpop.f32.mrb[0].mxu0
    %v738 = vadd.f32 %v619, %v737
    %v739 = vpop.f32.mrb[0].mxu0
    %v740 = vadd.f32 %v623, %v739
    %741 = vdwg.mxu0
    %v742 = vpack.c.bf16 %v596, %v595
    %v743 = vld [vmem:[#allocation10] sm:$0xff]
    %v744 = vld [vmem:[#allocation10 + $0x8] sm:$0xff]
    %v745 = vld [vmem:[#allocation10 + $0x10] sm:$0xff]
    %v746 = vld [vmem:[#allocation10 + $0x18] sm:$0xff]
    %v747 = vld [vmem:[#allocation10 + $0x20] sm:$0xff]
    %v748 = vld [vmem:[#allocation10 + $0x28] sm:$0xff]
    %v749 = vld [vmem:[#allocation10 + $0x30] sm:$0xff]
    %v750 = vld [vmem:[#allocation10 + $0x38] sm:$0xff]
    %v751 = vld [vmem:[#allocation10 + $0x40] sm:$0xff]
    %v752 = vld [vmem:[#allocation10 + $0x48] sm:$0xff]
    %v753 = vld [vmem:[#allocation10 + $0x50] sm:$0xff]
    %v754 = vld [vmem:[#allocation10 + $0x58] sm:$0xff]
    %v755 = vld [vmem:[#allocation10 + $0x60] sm:$0xff]
    %v756 = vld [vmem:[#allocation10 + $0x68] sm:$0xff]
    %v757 = vld [vmem:[#allocation10 + $0x70] sm:$0xff]
    %v758 = vld [vmem:[#allocation10 + $0x78] sm:$0xff]
    %v759 = vld [vmem:[#allocation10 + $0x80] sm:$0xff]
    %v760 = vld [vmem:[#allocation10 + $0x88] sm:$0xff]
    %v761 = vld [vmem:[#allocation10 + $0x90] sm:$0xff]
    %v762 = vld [vmem:[#allocation10 + $0x98] sm:$0xff]
    %v763 = vld [vmem:[#allocation10 + $0xa0] sm:$0xff]
    %v764 = vld [vmem:[#allocation10 + $0xa8] sm:$0xff]
    %v765 = vld [vmem:[#allocation10 + $0xb0] sm:$0xff]
    %v766 = vld [vmem:[#allocation10 + $0xb8] sm:$0xff]
    %v767 = vld [vmem:[#allocation10 + $0xc0] sm:$0xff]
    %v768 = vld [vmem:[#allocation10 + $0xc8] sm:$0xff]
    %v769 = vld [vmem:[#allocation10 + $0xd0] sm:$0xff]
    %v770 = vld [vmem:[#allocation10 + $0xd8] sm:$0xff]
    %v771 = vld [vmem:[#allocation10 + $0xe0] sm:$0xff]
    %v772 = vld [vmem:[#allocation10 + $0xe8] sm:$0xff]
    %v773 = vld [vmem:[#allocation10 + $0xf0] sm:$0xff]
    %v774 = vld [vmem:[#allocation10 + $0xf8] sm:$0xff]
    %v807 = vunpack.c.l.b16 %v743
    %v808 = vunpack.c.h.b16 %v743
    %v809 = vunpack.c.l.b16 %v744
    %v810 = vunpack.c.h.b16 %v744
    %v811 = vunpack.c.l.b16 %v745
    %v812 = vunpack.c.h.b16 %v745
    %v813 = vunpack.c.l.b16 %v746
    %v814 = vunpack.c.h.b16 %v746
    %v815 = vunpack.c.l.b16 %v747
    %v816 = vunpack.c.h.b16 %v747
    %v817 = vunpack.c.l.b16 %v748
    %v818 = vunpack.c.h.b16 %v748
    %v819 = vunpack.c.l.b16 %v749
    %v820 = vunpack.c.h.b16 %v749
    %v821 = vunpack.c.l.b16 %v750
    %v822 = vunpack.c.h.b16 %v750
    %v823 = vunpack.c.l.b16 %v751
    %v824 = vunpack.c.h.b16 %v751
    %v825 = vunpack.c.l.b16 %v752
    %v826 = vunpack.c.h.b16 %v752
    %v827 = vunpack.c.l.b16 %v753
    %v828 = vunpack.c.h.b16 %v753
    %v829 = vunpack.c.l.b16 %v754
    %v830 = vunpack.c.h.b16 %v754
    %v831 = vunpack.c.l.b16 %v755
    %v832 = vunpack.c.h.b16 %v755
    %v833 = vunpack.c.l.b16 %v756
    %v834 = vunpack.c.h.b16 %v756
    %v835 = vunpack.c.l.b16 %v757
    %v836 = vunpack.c.h.b16 %v757
    %v837 = vunpack.c.l.b16 %v758
    %v838 = vunpack.c.h.b16 %v758
    %v839 = vunpack.c.l.b16 %v759
    %v840 = vunpack.c.h.b16 %v759
    %v841 = vunpack.c.l.b16 %v760
    %v842 = vunpack.c.h.b16 %v760
    %v843 = vunpack.c.l.b16 %v761
    %v844 = vunpack.c.h.b16 %v761
    %v845 = vunpack.c.l.b16 %v762
    %v846 = vunpack.c.h.b16 %v762
    %v847 = vunpack.c.l.b16 %v763
    %v848 = vunpack.c.h.b16 %v763
    %v849 = vunpack.c.l.b16 %v764
    %v850 = vunpack.c.h.b16 %v764
    %v851 = vunpack.c.l.b16 %v765
    %v852 = vunpack.c.h.b16 %v765
    %v853 = vunpack.c.l.b16 %v766
    %v854 = vunpack.c.h.b16 %v766
    %v855 = vunpack.c.l.b16 %v767
    %v856 = vunpack.c.h.b16 %v767
    %v857 = vunpack.c.l.b16 %v768
    %v858 = vunpack.c.h.b16 %v768
    %v859 = vunpack.c.l.b16 %v769
    %v860 = vunpack.c.h.b16 %v769
    %v861 = vunpack.c.l.b16 %v770
    %v862 = vunpack.c.h.b16 %v770
    %v863 = vunpack.c.l.b16 %v771
    %v864 = vunpack.c.h.b16 %v771
    %v865 = vunpack.c.l.b16 %v772
    %v866 = vunpack.c.h.b16 %v772
    %v867 = vunpack.c.l.b16 %v773
    %v868 = vunpack.c.h.b16 %v773
    %v869 = vunpack.c.l.b16 %v774
    %v870 = vunpack.c.h.b16 %v774
    %v871 = vpack.c.b16 %v811, %v807
    %v872 = vpack.c.b16 %v812, %v808
    %v873 = vpack.c.b16 %v813, %v809
    %v874 = vpack.c.b16 %v814, %v810
    %v875 = vpack.c.b16 %v819, %v815
    %v876 = vpack.c.b16 %v820, %v816
    %v877 = vpack.c.b16 %v821, %v817
    %v878 = vpack.c.b16 %v822, %v818
    %v879 = vpack.c.b16 %v827, %v823
    %v880 = vpack.c.b16 %v828, %v824
    %v881 = vpack.c.b16 %v829, %v825
    %v882 = vpack.c.b16 %v830, %v826
    %v883 = vpack.c.b16 %v835, %v831
    %v884 = vpack.c.b16 %v836, %v832
    %v885 = vpack.c.b16 %v837, %v833
    %v886 = vpack.c.b16 %v838, %v834
    %v887 = vpack.c.b16 %v843, %v839
    %v888 = vpack.c.b16 %v844, %v840
    %v889 = vpack.c.b16 %v845, %v841
    %v890 = vpack.c.b16 %v846, %v842
    %v891 = vpack.c.b16 %v851, %v847
    %v892 = vpack.c.b16 %v852, %v848
    %v893 = vpack.c.b16 %v853, %v849
    %v894 = vpack.c.b16 %v854, %v850
    %v895 = vpack.c.b16 %v859, %v855
    %v896 = vpack.c.b16 %v860, %v856
    %v897 = vpack.c.b16 %v861, %v857
    %v898 = vpack.c.b16 %v862, %v858
    %v899 = vpack.c.b16 %v867, %v863
    %v900 = vpack.c.b16 %v868, %v864
    %v901 = vpack.c.b16 %v869, %v865
    %v902 = vpack.c.b16 %v870, %v866
    %935 = vmatprep.subr.bf16.mxu0 %v872
    %936 = vmatpush1.bf16.msra.mxu0 %v871
    %937 = vmatprep.subr.bf16.mxu0 %v876
    %938 = vmatpush1.bf16.msra.mxu0 %v875
    %939 = vmatprep.subr.bf16.mxu0 %v880
    %940 = vmatpush1.bf16.msra.mxu0 %v879
    %941 = vmatprep.subr.bf16.mxu0 %v884
    %942 = vmatpush1.bf16.msra.mxu0 %v883
    %943 = vmatprep.subr.bf16.mxu0 %v888
    %944 = vmatpush1.bf16.msra.mxu0 %v887
    %945 = vmatprep.subr.bf16.mxu0 %v892
    %946 = vmatpush1.bf16.msra.mxu0 %v891
    %947 = vmatprep.subr.bf16.mxu0 %v896
    %948 = vmatpush1.bf16.msra.mxu0 %v895
    %949 = vmatprep.subr.bf16.mxu0 %v900
    %950 = vmatpush1.bf16.msra.mxu0 %v899
    %951 = vmatprep.subr.bf16.mxu0 0
    %952 = vmatpush1.bf16.msra.mxu0 0
    %953 = vmatprep.subr.bf16.mxu0 0
    %954 = vmatpush1.bf16.msra.mxu0 0
    %955 = vmatprep.subr.bf16.mxu0 0
    %956 = vmatpush1.bf16.msra.mxu0 0
    %957 = vmatprep.subr.bf16.mxu0 0
    %958 = vmatpush1.bf16.msra.mxu0 0
    %959 = vmatprep.subr.bf16.mxu0 0
    %960 = vmatpush1.bf16.msra.mxu0 0
    %961 = vmatprep.subr.bf16.mxu0 0
    %962 = vmatpush1.bf16.msra.mxu0 0
    %963 = vmatprep.subr.bf16.mxu0 0
    %964 = vmatpush1.bf16.msra.mxu0 0
    %965 = vmatprep.subr.bf16.mxu0 0
    %966 = vmatpush1.bf16.msra.mxu0 0
    %967 = vmatprep.mubr.bf16.mxu0 0
    %968 = vmatmul.mubr.bf16.gmra.mrb[0].mxu0 %v742
    %v969 = vpop.f32.mrb[0].mxu0
    %v970 = vadd.f32 0.0, %v969
    %v971 = vpop.f32.mrb[0].mxu0
    %v972 = vadd.f32 0.0, %v971
    %v973 = vpop.f32.mrb[0].mxu0
    %v974 = vadd.f32 0.0, %v973
    %v975 = vpop.f32.mrb[0].mxu0
    %v976 = vadd.f32 0.0, %v975
    %977 = vdwg.mxu0
    %978 = vmatprep.subr.bf16.mxu0 %v874
    %979 = vmatpush1.bf16.msra.mxu0 %v873
    %980 = vmatprep.subr.bf16.mxu0 %v878
    %981 = vmatpush1.bf16.msra.mxu0 %v877
    %982 = vmatprep.subr.bf16.mxu0 %v882
    %983 = vmatpush1.bf16.msra.mxu0 %v881
    %984 = vmatprep.subr.bf16.mxu0 %v886
    %985 = vmatpush1.bf16.msra.mxu0 %v885
    %986 = vmatprep.subr.bf16.mxu0 %v890
    %987 = vmatpush1.bf16.msra.mxu0 %v889
    %988 = vmatprep.subr.bf16.mxu0 %v894
    %989 = vmatpush1.bf16.msra.mxu0 %v893
    %990 = vmatprep.subr.bf16.mxu0 %v898
    %991 = vmatpush1.bf16.msra.mxu0 %v897
    %992 = vmatprep.subr.bf16.mxu0 %v902
    %993 = vmatpush1.bf16.msra.mxu0 %v901
    %994 = vmatprep.subr.bf16.mxu0 0
    %995 = vmatpush1.bf16.msra.mxu0 0
    %996 = vmatprep.subr.bf16.mxu0 0
    %997 = vmatpush1.bf16.msra.mxu0 0
    %998 = vmatprep.subr.bf16.mxu0 0
    %999 = vmatpush1.bf16.msra.mxu0 0
    %1000 = vmatprep.subr.bf16.mxu0 0
    %1001 = vmatpush1.bf16.msra.mxu0 0
    %1002 = vmatprep.subr.bf16.mxu0 0
    %1003 = vmatpush1.bf16.msra.mxu0 0
    %1004 = vmatprep.subr.bf16.mxu0 0
    %1005 = vmatpush1.bf16.msra.mxu0 0
    %1006 = vmatprep.subr.bf16.mxu0 0
    %1007 = vmatpush1.bf16.msra.mxu0 0
    %1008 = vmatprep.subr.bf16.mxu0 0
    %1009 = vmatpush1.bf16.msra.mxu0 0
    %1010 = vmatprep.mubr.bf16.mxu0 0
    %1011 = vmatmul.mubr.bf16.gmra.mrb[0].mxu0 %v742
    %v1012 = vpop.f32.mrb[0].mxu0
    %v1013 = vadd.f32 0.0, %v1012
    %v1014 = vpop.f32.mrb[0].mxu0
    %v1015 = vadd.f32 0.0, %v1014
    %v1016 = vpop.f32.mrb[0].mxu0
    %v1017 = vadd.f32 0.0, %v1016
    %v1018 = vpop.f32.mrb[0].mxu0
    %v1019 = vadd.f32 0.0, %v1018
    %1020 = vdwg.mxu0
    %v1021 = vadd.f32 %v691, %v970
    %v1022 = vadd.f32 %v693, %v972
    %v1023 = vadd.f32 %v734, %v1013
    %v1024 = vadd.f32 %v736, %v1015
    %v1025 = vadd.f32 %v695, %v974
    %v1026 = vadd.f32 %v697, %v976
    %v1027 = vadd.f32 %v738, %v1017
    %v1028 = vadd.f32 %v740, %v1019
    %v1029 = vxor.u32 %v1021, 2147483648
    %v1030 = vxor.u32 %v1025, 2147483648
    %v1031 = vmul.f32 %v1029, 1.442695
    %v1032 = vpow.pop %v1031
    %v1033 = vmul.f32 %v1030, 1.442695
    %v1034 = vpow.pop %v1033
    %v1035 = vadd.f32 %v1032, 1.0
    %v1036 = vadd.f32 %v1034, 1.0
    %v1037 = vrcp.pop %v1035
    %v1038 = vmul.f32 1.0, %v1037
    %v1039 = vrcp.pop %v1036
    %v1040 = vmul.f32 1.0, %v1039
    %v1041 = vxor.u32 %v1022, 2147483648
    %v1042 = vxor.u32 %v1026, 2147483648
    %v1043 = vmul.f32 %v1041, 1.442695
    %v1044 = vpow.pop %v1043
    %v1045 = vmul.f32 %v1042, 1.442695
    %v1046 = vpow.pop %v1045
    %v1047 = vadd.f32 %v1044, 1.0
    %v1048 = vadd.f32 %v1046, 1.0
    %v1049 = vrcp.pop %v1047
    %v1050 = vmul.f32 1.0, %v1049
    %v1051 = vrcp.pop %v1048
    %v1052 = vmul.f32 1.0, %v1051
    %v1053 = vtanh.pop %v1023
    %v1054 = vtanh.pop %v1027
    %v1055 = vxor.u32 %v1024, 2147483648
    %v1056 = vxor.u32 %v1028, 2147483648
    %v1057 = vmul.f32 %v1055, 1.442695
    %v1058 = vpow.pop %v1057
    %v1059 = vmul.f32 %v1056, 1.442695
    %v1060 = vpow.pop %v1059
    %v1061 = vadd.f32 %v1058, 1.0
    %v1062 = vadd.f32 %v1060, 1.0
    %v1063 = vrcp.pop %v1061
    %v1064 = vmul.f32 1.0, %v1063
    %v1065 = vrcp.pop %v1062
    %v1066 = vmul.f32 1.0, %v1065
    %v1067 = vmul.f32 %v1050, %v597
    %v1068 = vmul.f32 %v1052, %v598
    %v1069 = vmul.f32 %v1038, %v1053
    %v1070 = vmul.f32 %v1040, %v1054
    %v1071 = vadd.f32 %v1067, %v1069
    %v1072 = vadd.f32 %v1068, %v1070
    %v1073 = vtanh.pop %v1071
    %v1074 = vtanh.pop %v1072
    %v1075 = vmul.f32 %v1064, %v1073
    %v1076 = vmul.f32 %v1066, %v1074
    %s1077 = scalar_lea.vmem [#allocation13], 16
    %1078 = vst [vmem:[%s1077] sm:$0xff] %v1075
    %1079 = vst [vmem:[%s1077 + $0x8] sm:$0xff] %v1076
    %1080 = vst [vmem:[#allocation2] sm:$0xff] %v1075
    %1081 = vst [vmem:[#allocation2 + $0x8] sm:$0xff] %v1076
    %1082 = vst [vmem:[#allocation3] sm:$0xff] %v1071
    %1083 = vst [vmem:[#allocation3 + $0x8] sm:$0xff] %v1072
    %v1084 = vld [vmem:[#allocation2] sm:$0xff]
    %v1085 = vld [vmem:[#allocation2 + $0x8] sm:$0xff]
    %v1086 = vld [vmem:[#allocation3] sm:$0xff]
    %v1087 = vld [vmem:[#allocation3 + $0x8] sm:$0xff]
    %s1088 = scalar_lea.vmem [#allocation4], 16
    %v1089 = vld [vmem:[%s1088] sm:$0xf]
    %v1090 = vld [vmem:[%s1088 + $0x4] sm:$0xf]
    %v1091 = vld [vmem:[#allocation7] sm:$0xff]
    %v1092 = vld [vmem:[#allocation7 + $0x8] sm:$0xff]
    %v1093 = vld [vmem:[#allocation7 + $0x10] sm:$0xff]
    %v1094 = vld [vmem:[#allocation7 + $0x18] sm:$0xff]
    %v1095 = vld [vmem:[#allocation9] sm:$0xf]
    %v1097 = vlaneseq
    %v1098 = vshrl.u32 %v1097, 7
    %v1099 = vsub.s32 0, %v1098
    %v1100 = vrot.slane %v1095, %v1099
    %v1101 = vlaneseq
    %v1102 = vshrl.u32 %v1101, 7
    %v1103 = vsub.s32 1, %v1102
    %v1104 = vrot.slane %v1095, %v1103
    %v1105 = vlaneseq
    %v1106 = vshrl.u32 %v1105, 7
    %v1107 = vsub.s32 2, %v1106
    %v1108 = vrot.slane %v1095, %v1107
    %v1109 = vlaneseq
    %v1110 = vshrl.u32 %v1109, 7
    %v1111 = vsub.s32 3, %v1110
    %v1112 = vrot.slane %v1095, %v1111
    %v1119 = vunpack.c.l.b16 %v1089
    %v1120 = vunpack.c.l.b16 %v1090
    %v1121 = vpack.c.b16 %v1120, %v1119
    %v1126 = vunpack.c.l.b16 %v1091
    %v1127 = vunpack.c.h.b16 %v1091
    %v1128 = vunpack.c.l.b16 %v1092
    %v1129 = vunpack.c.h.b16 %v1092
    %v1130 = vunpack.c.l.b16 %v1093
    %v1131 = vunpack.c.h.b16 %v1093
    %v1132 = vunpack.c.l.b16 %v1094
    %v1133 = vunpack.c.h.b16 %v1094
    %v1134 = vpack.c.b16 %v1130, %v1126
    %v1135 = vpack.c.b16 %v1131, %v1127
    %v1136 = vpack.c.b16 %v1132, %v1128
    %v1137 = vpack.c.b16 %v1133, %v1129
    %v1143 = vsel %vm164, %v1121, 0
    %1145 = vmatprep.subr.bf16.mxu0 %v1135
    %1146 = vmatpush1.bf16.msra.mxu0 %v1134
    %1147 = vmatprep.subr.bf16.mxu0 0
    %1148 = vmatpush1.bf16.msra.mxu0 0
    %1149 = vmatprep.subr.bf16.mxu0 0
    %1150 = vmatpush1.bf16.msra.mxu0 0
    %1151 = vmatprep.subr.bf16.mxu0 0
    %1152 = vmatpush1.bf16.msra.mxu0 0
    %1153 = vmatprep.subr.bf16.mxu0 0
    %1154 = vmatpush1.bf16.msra.mxu0 0
    %1155 = vmatprep.subr.bf16.mxu0 0
    %1156 = vmatpush1.bf16.msra.mxu0 0
    %1157 = vmatprep.subr.bf16.mxu0 0
    %1158 = vmatpush1.bf16.msra.mxu0 0
    %1159 = vmatprep.subr.bf16.mxu0 0
    %1160 = vmatpush1.bf16.msra.mxu0 0
    %1161 = vmatprep.subr.bf16.mxu0 0
    %1162 = vmatpush1.bf16.msra.mxu0 0
    %1163 = vmatprep.subr.bf16.mxu0 0
    %1164 = vmatpush1.bf16.msra.mxu0 0
    %1165 = vmatprep.subr.bf16.mxu0 0
    %1166 = vmatpush1.bf16.msra.mxu0 0
    %1167 = vmatprep.subr.bf16.mxu0 0
    %1168 = vmatpush1.bf16.msra.mxu0 0
    %1169 = vmatprep.subr.bf16.mxu0 0
    %1170 = vmatpush1.bf16.msra.mxu0 0
    %1171 = vmatprep.subr.bf16.mxu0 0
    %1172 = vmatpush1.bf16.msra.mxu0 0
    %1173 = vmatprep.subr.bf16.mxu0 0
    %1174 = vmatpush1.bf16.msra.mxu0 0
    %1175 = vmatprep.subr.bf16.mxu0 0
    %1176 = vmatpush1.bf16.msra.mxu0 0
    %1177 = vmatprep.mubr.bf16.mxu0 0
    %1178 = vmatmul.mubr.bf16.gmra.mrb[0].mxu0 %v1143
    %v1179 = vpop.f32.mrb[0].mxu0
    %v1180 = vadd.f32 %v1100, %v1179
    %v1181 = vpop.f32.mrb[0].mxu0
    %v1182 = vadd.f32 %v1104, %v1181
    %v1183 = vpop.f32.mrb[0].mxu0
    %v1184 = vadd.f32 %v1100, %v1183
    %v1185 = vpop.f32.mrb[0].mxu0
    %v1186 = vadd.f32 %v1104, %v1185
    %1187 = vdwg.mxu0
    %1188 = vmatprep.subr.bf16.mxu0 %v1137
    %1189 = vmatpush1.bf16.msra.mxu0 %v1136
    %1190 = vmatprep.subr.bf16.mxu0 0
    %1191 = vmatpush1.bf16.msra.mxu0 0
    %1192 = vmatprep.subr.bf16.mxu0 0
    %1193 = vmatpush1.bf16.msra.mxu0 0
    %1194 = vmatprep.subr.bf16.mxu0 0
    %1195 = vmatpush1.bf16.msra.mxu0 0
    %1196 = vmatprep.subr.bf16.mxu0 0
    %1197 = vmatpush1.bf16.msra.mxu0 0
    %1198 = vmatprep.subr.bf16.mxu0 0
    %1199 = vmatpush1.bf16.msra.mxu0 0
    %1200 = vmatprep.subr.bf16.mxu0 0
    %1201 = vmatpush1.bf16.msra.mxu0 0
    %1202 = vmatprep.subr.bf16.mxu0 0
    %1203 = vmatpush1.bf16.msra.mxu0 0
    %1204 = vmatprep.subr.bf16.mxu0 0
    %1205 = vmatpush1.bf16.msra.mxu0 0
    %1206 = vmatprep.subr.bf16.mxu0 0
    %1207 = vmatpush1.bf16.msra.mxu0 0
    %1208 = vmatprep.subr.bf16.mxu0 0
    %1209 = vmatpush1.bf16.msra.mxu0 0
    %1210 = vmatprep.subr.bf16.mxu0 0
    %1211 = vmatpush1.bf16.msra.mxu0 0
    %1212 = vmatprep.subr.bf16.mxu0 0
    %1213 = vmatpush1.bf16.msra.mxu0 0
    %1214 = vmatprep.subr.bf16.mxu0 0
    %1215 = vmatpush1.bf16.msra.mxu0 0
    %1216 = vmatprep.subr.bf16.mxu0 0
    %1217 = vmatpush1.bf16.msra.mxu0 0
    %1218 = vmatprep.subr.bf16.mxu0 0
    %1219 = vmatpush1.bf16.msra.mxu0 0
    %1220 = vmatprep.mubr.bf16.mxu0 0
    %1221 = vmatmul.mubr.bf16.gmra.mrb[0].mxu0 %v1143
    %v1222 = vpop.f32.mrb[0].mxu0
    %v1223 = vadd.f32 %v1108, %v1222
    %v1224 = vpop.f32.mrb[0].mxu0
    %v1225 = vadd.f32 %v1112, %v1224
    %v1226 = vpop.f32.mrb[0].mxu0
    %v1227 = vadd.f32 %v1108, %v1226
    %v1228 = vpop.f32.mrb[0].mxu0
    %v1229 = vadd.f32 %v1112, %v1228
    %1230 = vdwg.mxu0
    %v1231 = vpack.c.bf16 %v1085, %v1084
    %v1232 = vld [vmem:[#allocation10] sm:$0xff]
    %v1233 = vld [vmem:[#allocation10 + $0x8] sm:$0xff]
    %v1234 = vld [vmem:[#allocation10 + $0x10] sm:$0xff]
    %v1235 = vld [vmem:[#allocation10 + $0x18] sm:$0xff]
    %v1236 = vld [vmem:[#allocation10 + $0x20] sm:$0xff]
    %v1237 = vld [vmem:[#allocation10 + $0x28] sm:$0xff]
    %v1238 = vld [vmem:[#allocation10 + $0x30] sm:$0xff]
    %v1239 = vld [vmem:[#allocation10 + $0x38] sm:$0xff]
    %v1240 = vld [vmem:[#allocation10 + $0x40] sm:$0xff]
    %v1241 = vld [vmem:[#allocation10 + $0x48] sm:$0xff]
    %v1242 = vld [vmem:[#allocation10 + $0x50] sm:$0xff]
    %v1243 = vld [vmem:[#allocation10 + $0x58] sm:$0xff]
    %v1244 = vld [vmem:[#allocation10 + $0x60] sm:$0xff]
    %v1245 = vld [vmem:[#allocation10 + $0x68] sm:$0xff]
    %v1246 = vld [vmem:[#allocation10 + $0x70] sm:$0xff]
    %v1247 = vld [vmem:[#allocation10 + $0x78] sm:$0xff]
    %v1248 = vld [vmem:[#allocation10 + $0x80] sm:$0xff]
    %v1249 = vld [vmem:[#allocation10 + $0x88] sm:$0xff]
    %v1250 = vld [vmem:[#allocation10 + $0x90] sm:$0xff]
    %v1251 = vld [vmem:[#allocation10 + $0x98] sm:$0xff]
    %v1252 = vld [vmem:[#allocation10 + $0xa0] sm:$0xff]
    %v1253 = vld [vmem:[#allocation10 + $0xa8] sm:$0xff]
    %v1254 = vld [vmem:[#allocation10 + $0xb0] sm:$0xff]
    %v1255 = vld [vmem:[#allocation10 + $0xb8] sm:$0xff]
    %v1256 = vld [vmem:[#allocation10 + $0xc0] sm:$0xff]
    %v1257 = vld [vmem:[#allocation10 + $0xc8] sm:$0xff]
    %v1258 = vld [vmem:[#allocation10 + $0xd0] sm:$0xff]
    %v1259 = vld [vmem:[#allocation10 + $0xd8] sm:$0xff]
    %v1260 = vld [vmem:[#allocation10 + $0xe0] sm:$0xff]
    %v1261 = vld [vmem:[#allocation10 + $0xe8] sm:$0xff]
    %v1262 = vld [vmem:[#allocation10 + $0xf0] sm:$0xff]
    %v1263 = vld [vmem:[#allocation10 + $0xf8] sm:$0xff]
    %v1296 = vunpack.c.l.b16 %v1232
    %v1297 = vunpack.c.h.b16 %v1232
    %v1298 = vunpack.c.l.b16 %v1233
    %v1299 = vunpack.c.h.b16 %v1233
    %v1300 = vunpack.c.l.b16 %v1234
    %v1301 = vunpack.c.h.b16 %v1234
    %v1302 = vunpack.c.l.b16 %v1235
    %v1303 = vunpack.c.h.b16 %v1235
    %v1304 = vunpack.c.l.b16 %v1236
    %v1305 = vunpack.c.h.b16 %v1236
    %v1306 = vunpack.c.l.b16 %v1237
    %v1307 = vunpack.c.h.b16 %v1237
    %v1308 = vunpack.c.l.b16 %v1238
    %v1309 = vunpack.c.h.b16 %v1238
    %v1310 = vunpack.c.l.b16 %v1239
    %v1311 = vunpack.c.h.b16 %v1239
    %v1312 = vunpack.c.l.b16 %v1240
    %v1313 = vunpack.c.h.b16 %v1240
    %v1314 = vunpack.c.l.b16 %v1241
    %v1315 = vunpack.c.h.b16 %v1241
    %v1316 = vunpack.c.l.b16 %v1242
    %v1317 = vunpack.c.h.b16 %v1242
    %v1318 = vunpack.c.l.b16 %v1243
    %v1319 = vunpack.c.h.b16 %v1243
    %v1320 = vunpack.c.l.b16 %v1244
    %v1321 = vunpack.c.h.b16 %v1244
    %v1322 = vunpack.c.l.b16 %v1245
    %v1323 = vunpack.c.h.b16 %v1245
    %v1324 = vunpack.c.l.b16 %v1246
    %v1325 = vunpack.c.h.b16 %v1246
    %v1326 = vunpack.c.l.b16 %v1247
    %v1327 = vunpack.c.h.b16 %v1247
    %v1328 = vunpack.c.l.b16 %v1248
    %v1329 = vunpack.c.h.b16 %v1248
    %v1330 = vunpack.c.l.b16 %v1249
    %v1331 = vunpack.c.h.b16 %v1249
    %v1332 = vunpack.c.l.b16 %v1250
    %v1333 = vunpack.c.h.b16 %v1250
    %v1334 = vunpack.c.l.b16 %v1251
    %v1335 = vunpack.c.h.b16 %v1251
    %v1336 = vunpack.c.l.b16 %v1252
    %v1337 = vunpack.c.h.b16 %v1252
    %v1338 = vunpack.c.l.b16 %v1253
    %v1339 = vunpack.c.h.b16 %v1253
    %v1340 = vunpack.c.l.b16 %v1254
    %v1341 = vunpack.c.h.b16 %v1254
    %v1342 = vunpack.c.l.b16 %v1255
    %v1343 = vunpack.c.h.b16 %v1255
    %v1344 = vunpack.c.l.b16 %v1256
    %v1345 = vunpack.c.h.b16 %v1256
    %v1346 = vunpack.c.l.b16 %v1257
    %v1347 = vunpack.c.h.b16 %v1257
    %v1348 = vunpack.c.l.b16 %v1258
    %v1349 = vunpack.c.h.b16 %v1258
    %v1350 = vunpack.c.l.b16 %v1259
    %v1351 = vunpack.c.h.b16 %v1259
    %v1352 = vunpack.c.l.b16 %v1260
    %v1353 = vunpack.c.h.b16 %v1260
    %v1354 = vunpack.c.l.b16 %v1261
    %v1355 = vunpack.c.h.b16 %v1261
    %v1356 = vunpack.c.l.b16 %v1262
    %v1357 = vunpack.c.h.b16 %v1262
    %v1358 = vunpack.c.l.b16 %v1263
    %v1359 = vunpack.c.h.b16 %v1263
    %v1360 = vpack.c.b16 %v1300, %v1296
    %v1361 = vpack.c.b16 %v1301, %v1297
    %v1362 = vpack.c.b16 %v1302, %v1298
    %v1363 = vpack.c.b16 %v1303, %v1299
    %v1364 = vpack.c.b16 %v1308, %v1304
    %v1365 = vpack.c.b16 %v1309, %v1305
    %v1366 = vpack.c.b16 %v1310, %v1306
    %v1367 = vpack.c.b16 %v1311, %v1307
    %v1368 = vpack.c.b16 %v1316, %v1312
    %v1369 = vpack.c.b16 %v1317, %v1313
    %v1370 = vpack.c.b16 %v1318, %v1314
    %v1371 = vpack.c.b16 %v1319, %v1315
    %v1372 = vpack.c.b16 %v1324, %v1320
    %v1373 = vpack.c.b16 %v1325, %v1321
    %v1374 = vpack.c.b16 %v1326, %v1322
    %v1375 = vpack.c.b16 %v1327, %v1323
    %v1376 = vpack.c.b16 %v1332, %v1328
    %v1377 = vpack.c.b16 %v1333, %v1329
    %v1378 = vpack.c.b16 %v1334, %v1330
    %v1379 = vpack.c.b16 %v1335, %v1331
    %v1380 = vpack.c.b16 %v1340, %v1336
    %v1381 = vpack.c.b16 %v1341, %v1337
    %v1382 = vpack.c.b16 %v1342, %v1338
    %v1383 = vpack.c.b16 %v1343, %v1339
    %v1384 = vpack.c.b16 %v1348, %v1344
    %v1385 = vpack.c.b16 %v1349, %v1345
    %v1386 = vpack.c.b16 %v1350, %v1346
    %v1387 = vpack.c.b16 %v1351, %v1347
    %v1388 = vpack.c.b16 %v1356, %v1352
    %v1389 = vpack.c.b16 %v1357, %v1353
    %v1390 = vpack.c.b16 %v1358, %v1354
    %v1391 = vpack.c.b16 %v1359, %v1355
    %1424 = vmatprep.subr.bf16.mxu0 %v1361
    %1425 = vmatpush1.bf16.msra.mxu0 %v1360
    %1426 = vmatprep.subr.bf16.mxu0 %v1365
    %1427 = vmatpush1.bf16.msra.mxu0 %v1364
    %1428 = vmatprep.subr.bf16.mxu0 %v1369
    %1429 = vmatpush1.bf16.msra.mxu0 %v1368
    %1430 = vmatprep.subr.bf16.mxu0 %v1373
    %1431 = vmatpush1.bf16.msra.mxu0 %v1372
    %1432 = vmatprep.subr.bf16.mxu0 %v1377
    %1433 = vmatpush1.bf16.msra.mxu0 %v1376
    %1434 = vmatprep.subr.bf16.mxu0 %v1381
    %1435 = vmatpush1.bf16.msra.mxu0 %v1380
    %1436 = vmatprep.subr.bf16.mxu0 %v1385
    %1437 = vmatpush1.bf16.msra.mxu0 %v1384
    %1438 = vmatprep.subr.bf16.mxu0 %v1389
    %1439 = vmatpush1.bf16.msra.mxu0 %v1388
    %1440 = vmatprep.subr.bf16.mxu0 0
    %1441 = vmatpush1.bf16.msra.mxu0 0
    %1442 = vmatprep.subr.bf16.mxu0 0
    %1443 = vmatpush1.bf16.msra.mxu0 0
    %1444 = vmatprep.subr.bf16.mxu0 0
    %1445 = vmatpush1.bf16.msra.mxu0 0
    %1446 = vmatprep.subr.bf16.mxu0 0
    %1447 = vmatpush1.bf16.msra.mxu0 0
    %1448 = vmatprep.subr.bf16.mxu0 0
    %1449 = vmatpush1.bf16.msra.mxu0 0
    %1450 = vmatprep.subr.bf16.mxu0 0
    %1451 = vmatpush1.bf16.msra.mxu0 0
    %1452 = vmatprep.subr.bf16.mxu0 0
    %1453 = vmatpush1.bf16.msra.mxu0 0
    %1454 = vmatprep.subr.bf16.mxu0 0
    %1455 = vmatpush1.bf16.msra.mxu0 0
    %1456 = vmatprep.mubr.bf16.mxu0 0
    %1457 = vmatmul.mubr.bf16.gmra.mrb[0].mxu0 %v1231
    %v1458 = vpop.f32.mrb[0].mxu0
    %v1459 = vadd.f32 0.0, %v1458
    %v1460 = vpop.f32.mrb[0].mxu0
    %v1461 = vadd.f32 0.0, %v1460
    %v1462 = vpop.f32.mrb[0].mxu0
    %v1463 = vadd.f32 0.0, %v1462
    %v1464 = vpop.f32.mrb[0].mxu0
    %v1465 = vadd.f32 0.0, %v1464
    %1466 = vdwg.mxu0
    %1467 = vmatprep.subr.bf16.mxu0 %v1363
    %1468 = vmatpush1.bf16.msra.mxu0 %v1362
    %1469 = vmatprep.subr.bf16.mxu0 %v1367
    %1470 = vmatpush1.bf16.msra.mxu0 %v1366
    %1471 = vmatprep.subr.bf16.mxu0 %v1371
    %1472 = vmatpush1.bf16.msra.mxu0 %v1370
    %1473 = vmatprep.subr.bf16.mxu0 %v1375
    %1474 = vmatpush1.bf16.msra.mxu0 %v1374
    %1475 = vmatprep.subr.bf16.mxu0 %v1379
    %1476 = vmatpush1.bf16.msra.mxu0 %v1378
    %1477 = vmatprep.subr.bf16.mxu0 %v1383
    %1478 = vmatpush1.bf16.msra.mxu0 %v1382
    %1479 = vmatprep.subr.bf16.mxu0 %v1387
    %1480 = vmatpush1.bf16.msra.mxu0 %v1386
    %1481 = vmatprep.subr.bf16.mxu0 %v1391
    %1482 = vmatpush1.bf16.msra.mxu0 %v1390
    %1483 = vmatprep.subr.bf16.mxu0 0
    %1484 = vmatpush1.bf16.msra.mxu0 0
    %1485 = vmatprep.subr.bf16.mxu0 0
    %1486 = vmatpush1.bf16.msra.mxu0 0
    %1487 = vmatprep.subr.bf16.mxu0 0
    %1488 = vmatpush1.bf16.msra.mxu0 0
    %1489 = vmatprep.subr.bf16.mxu0 0
    %1490 = vmatpush1.bf16.msra.mxu0 0
    %1491 = vmatprep.subr.bf16.mxu0 0
    %1492 = vmatpush1.bf16.msra.mxu0 0
    %1493 = vmatprep.subr.bf16.mxu0 0
    %1494 = vmatpush1.bf16.msra.mxu0 0
    %1495 = vmatprep.subr.bf16.mxu0 0
    %1496 = vmatpush1.bf16.msra.mxu0 0
    %1497 = vmatprep.subr.bf16.mxu0 0
    %1498 = vmatpush1.bf16.msra.mxu0 0
    %1499 = vmatprep.mubr.bf16.mxu0 0
    %1500 = vmatmul.mubr.bf16.gmra.mrb[0].mxu0 %v1231
    %v1501 = vpop.f32.mrb[0].mxu0
    %v1502 = vadd.f32 0.0, %v1501
    %v1503 = vpop.f32.mrb[0].mxu0
    %v1504 = vadd.f32 0.0, %v1503
    %v1505 = vpop.f32.mrb[0].mxu0
    %v1506 = vadd.f32 0.0, %v1505
    %v1507 = vpop.f32.mrb[0].mxu0
    %v1508 = vadd.f32 0.0, %v1507
    %1509 = vdwg.mxu0
    %v1510 = vadd.f32 %v1180, %v1459
    %v1511 = vadd.f32 %v1182, %v1461
    %v1512 = vadd.f32 %v1223, %v1502
    %v1513 = vadd.f32 %v1225, %v1504
    %v1514 = vadd.f32 %v1184, %v1463
    %v1515 = vadd.f32 %v1186, %v1465
    %v1516 = vadd.f32 %v1227, %v1506
    %v1517 = vadd.f32 %v1229, %v1508
    %v1518 = vxor.u32 %v1510, 2147483648
    %v1519 = vxor.u32 %v1514, 2147483648
    %v1520 = vmul.f32 %v1518, 1.442695
    %v1521 = vpow.pop %v1520
    %v1522 = vmul.f32 %v1519, 1.442695
    %v1523 = vpow.pop %v1522
    %v1524 = vadd.f32 %v1521, 1.0
    %v1525 = vadd.f32 %v1523, 1.0
    %v1526 = vrcp.pop %v1524
    %v1527 = vmul.f32 1.0, %v1526
    %v1528 = vrcp.pop %v1525
    %v1529 = vmul.f32 1.0, %v1528
    %v1530 = vxor.u32 %v1511, 2147483648
    %v1531 = vxor.u32 %v1515, 2147483648
    %v1532 = vmul.f32 %v1530, 1.442695
    %v1533 = vpow.pop %v1532
    %v1534 = vmul.f32 %v1531, 1.442695
    %v1535 = vpow.pop %v1534
    %v1536 = vadd.f32 %v1533, 1.0
    %v1537 = vadd.f32 %v1535, 1.0
    %v1538 = vrcp.pop %v1536
    %v1539 = vmul.f32 1.0, %v1538
    %v1540 = vrcp.pop %v1537
    %v1541 = vmul.f32 1.0, %v1540
    %v1542 = vtanh.pop %v1512
    %v1543 = vtanh.pop %v1516
    %v1544 = vxor.u32 %v1513, 2147483648
    %v1545 = vxor.u32 %v1517, 2147483648
    %v1546 = vmul.f32 %v1544, 1.442695
    %v1547 = vpow.pop %v1546
    %v1548 = vmul.f32 %v1545, 1.442695
    %v1549 = vpow.pop %v1548
    %v1550 = vadd.f32 %v1547, 1.0
    %v1551 = vadd.f32 %v1549, 1.0
    %v1552 = vrcp.pop %v1550
    %v1553 = vmul.f32 1.0, %v1552
    %v1554 = vrcp.pop %v1551
    %v1555 = vmul.f32 1.0, %v1554
    %v1556 = vmul.f32 %v1539, %v1086
    %v1557 = vmul.f32 %v1541, %v1087
    %v1558 = vmul.f32 %v1527, %v1542
    %v1559 = vmul.f32 %v1529, %v1543
    %v1560 = vadd.f32 %v1556, %v1558
    %v1561 = vadd.f32 %v1557, %v1559
    %v1562 = vtanh.pop %v1560
    %v1563 = vtanh.pop %v1561
    %v1564 = vmul.f32 %v1553, %v1562
    %v1565 = vmul.f32 %v1555, %v1563
    %s1566 = scalar_lea.vmem [#allocation13], 32
    %1567 = vst [vmem:[%s1566] sm:$0xff] %v1564
    %1568 = vst [vmem:[%s1566 + $0x8] sm:$0xff] %v1565
    %1569 = vst [vmem:[#allocation2] sm:$0xff] %v1564
    %1570 = vst [vmem:[#allocation2 + $0x8] sm:$0xff] %v1565
    %1571 = vst [vmem:[#allocation3] sm:$0xff] %v1560
    %1572 = vst [vmem:[#allocation3 + $0x8] sm:$0xff] %v1561
    %v1573 = vld [vmem:[#allocation2] sm:$0xff]
    %v1574 = vld [vmem:[#allocation2 + $0x8] sm:$0xff]
    %v1575 = vld [vmem:[#allocation3] sm:$0xff]
    %v1576 = vld [vmem:[#allocation3 + $0x8] sm:$0xff]
    %s1577 = scalar_lea.vmem [#allocation4], 24
    %v1578 = vld [vmem:[%s1577] sm:$0xf]
    %v1579 = vld [vmem:[%s1577 + $0x4] sm:$0xf]
    %v1580 = vld [vmem:[#allocation7] sm:$0xff]
    %v1581 = vld [vmem:[#allocation7 + $0x8] sm:$0xff]
    %v1582 = vld [vmem:[#allocation7 + $0x10] sm:$0xff]
    %v1583 = vld [vmem:[#allocation7 + $0x18] sm:$0xff]
    %v1584 = vld [vmem:[#allocation9] sm:$0xf]
    %v1586 = vlaneseq
    %v1587 = vshrl.u32 %v1586, 7
    %v1588 = vsub.s32 0, %v1587
    %v1589 = vrot.slane %v1584, %v1588
    %v1590 = vlaneseq
    %v1591 = vshrl.u32 %v1590, 7
    %v1592 = vsub.s32 1, %v1591
    %v1593 = vrot.slane %v1584, %v1592
    %v1594 = vlaneseq
    %v1595 = vshrl.u32 %v1594, 7
    %v1596 = vsub.s32 2, %v1595
    %v1597 = vrot.slane %v1584, %v1596
    %v1598 = vlaneseq
    %v1599 = vshrl.u32 %v1598, 7
    %v1600 = vsub.s32 3, %v1599
    %v1601 = vrot.slane %v1584, %v1600
    %v1608 = vunpack.c.l.b16 %v1578
    %v1609 = vunpack.c.l.b16 %v1579
    %v1610 = vpack.c.b16 %v1609, %v1608
    %v1615 = vunpack.c.l.b16 %v1580
    %v1616 = vunpack.c.h.b16 %v1580
    %v1617 = vunpack.c.l.b16 %v1581
    %v1618 = vunpack.c.h.b16 %v1581
    %v1619 = vunpack.c.l.b16 %v1582
    %v1620 = vunpack.c.h.b16 %v1582
    %v1621 = vunpack.c.l.b16 %v1583
    %v1622 = vunpack.c.h.b16 %v1583
    %v1623 = vpack.c.b16 %v1619, %v1615
    %v1624 = vpack.c.b16 %v1620, %v1616
    %v1625 = vpack.c.b16 %v1621, %v1617
    %v1626 = vpack.c.b16 %v1622, %v1618
    %v1632 = vsel %vm164, %v1610, 0
    %1634 = vmatprep.subr.bf16.mxu0 %v1624
    %1635 = vmatpush1.bf16.msra.mxu0 %v1623
    %1636 = vmatprep.subr.bf16.mxu0 0
    %1637 = vmatpush1.bf16.msra.mxu0 0
    %1638 = vmatprep.subr.bf16.mxu0 0
    %1639 = vmatpush1.bf16.msra.mxu0 0
    %1640 = vmatprep.subr.bf16.mxu0 0
    %1641 = vmatpush1.bf16.msra.mxu0 0
    %1642 = vmatprep.subr.bf16.mxu0 0
    %1643 = vmatpush1.bf16.msra.mxu0 0
    %1644 = vmatprep.subr.bf16.mxu0 0
    %1645 = vmatpush1.bf16.msra.mxu0 0
    %1646 = vmatprep.subr.bf16.mxu0 0
    %1647 = vmatpush1.bf16.msra.mxu0 0
    %1648 = vmatprep.subr.bf16.mxu0 0
    %1649 = vmatpush1.bf16.msra.mxu0 0
    %1650 = vmatprep.subr.bf16.mxu0 0
    %1651 = vmatpush1.bf16.msra.mxu0 0
    %1652 = vmatprep.subr.bf16.mxu0 0
    %1653 = vmatpush1.bf16.msra.mxu0 0
    %1654 = vmatprep.subr.bf16.mxu0 0
    %1655 = vmatpush1.bf16.msra.mxu0 0
    %1656 = vmatprep.subr.bf16.mxu0 0
    %1657 = vmatpush1.bf16.msra.mxu0 0
    %1658 = vmatprep.subr.bf16.mxu0 0
    %1659 = vmatpush1.bf16.msra.mxu0 0
    %1660 = vmatprep.subr.bf16.mxu0 0
    %1661 = vmatpush1.bf16.msra.mxu0 0
    %1662 = vmatprep.subr.bf16.mxu0 0
    %1663 = vmatpush1.bf16.msra.mxu0 0
    %1664 = vmatprep.subr.bf16.mxu0 0
    %1665 = vmatpush1.bf16.msra.mxu0 0
    %1666 = vmatprep.mubr.bf16.mxu0 0
    %1667 = vmatmul.mubr.bf16.gmra.mrb[0].mxu0 %v1632
    %v1668 = vpop.f32.mrb[0].mxu0
    %v1669 = vadd.f32 %v1589, %v1668
    %v1670 = vpop.f32.mrb[0].mxu0
    %v1671 = vadd.f32 %v1593, %v1670
    %v1672 = vpop.f32.mrb[0].mxu0
    %v1673 = vadd.f32 %v1589, %v1672
    %v1674 = vpop.f32.mrb[0].mxu0
    %v1675 = vadd.f32 %v1593, %v1674
    %1676 = vdwg.mxu0
    %1677 = vmatprep.subr.bf16.mxu0 %v1626
    %1678 = vmatpush1.bf16.msra.mxu0 %v1625
    %1679 = vmatprep.subr.bf16.mxu0 0
    %1680 = vmatpush1.bf16.msra.mxu0 0
    %1681 = vmatprep.subr.bf16.mxu0 0
    %1682 = vmatpush1.bf16.msra.mxu0 0
    %1683 = vmatprep.subr.bf16.mxu0 0
    %1684 = vmatpush1.bf16.msra.mxu0 0
    %1685 = vmatprep.subr.bf16.mxu0 0
    %1686 = vmatpush1.bf16.msra.mxu0 0
    %1687 = vmatprep.subr.bf16.mxu0 0
    %1688 = vmatpush1.bf16.msra.mxu0 0
    %1689 = vmatprep.subr.bf16.mxu0 0
    %1690 = vmatpush1.bf16.msra.mxu0 0
    %1691 = vmatprep.subr.bf16.mxu0 0
    %1692 = vmatpush1.bf16.msra.mxu0 0
    %1693 = vmatprep.subr.bf16.mxu0 0
    %1694 = vmatpush1.bf16.msra.mxu0 0
    %1695 = vmatprep.subr.bf16.mxu0 0
    %1696 = vmatpush1.bf16.msra.mxu0 0
    %1697 = vmatprep.subr.bf16.mxu0 0
    %1698 = vmatpush1.bf16.msra.mxu0 0
    %1699 = vmatprep.subr.bf16.mxu0 0
    %1700 = vmatpush1.bf16.msra.mxu0 0
    %1701 = vmatprep.subr.bf16.mxu0 0
    %1702 = vmatpush1.bf16.msra.mxu0 0
    %1703 = vmatprep.subr.bf16.mxu0 0
    %1704 = vmatpush1.bf16.msra.mxu0 0
    %1705 = vmatprep.subr.bf16.mxu0 0
    %1706 = vmatpush1.bf16.msra.mxu0 0
    %1707 = vmatprep.subr.bf16.mxu0 0
    %1708 = vmatpush1.bf16.msra.mxu0 0
    %1709 = vmatprep.mubr.bf16.mxu0 0
    %1710 = vmatmul.mubr.bf16.gmra.mrb[0].mxu0 %v1632
    %v1711 = vpop.f32.mrb[0].mxu0
    %v1712 = vadd.f32 %v1597, %v1711
    %v1713 = vpop.f32.mrb[0].mxu0
    %v1714 = vadd.f32 %v1601, %v1713
    %v1715 = vpop.f32.mrb[0].mxu0
    %v1716 = vadd.f32 %v1597, %v1715
    %v1717 = vpop.f32.mrb[0].mxu0
    %v1718 = vadd.f32 %v1601, %v1717
    %1719 = vdwg.mxu0
    %v1720 = vpack.c.bf16 %v1574, %v1573
    %v1721 = vld [vmem:[#allocation10] sm:$0xff]
    %v1722 = vld [vmem:[#allocation10 + $0x8] sm:$0xff]
    %v1723 = vld [vmem:[#allocation10 + $0x10] sm:$0xff]
    %v1724 = vld [vmem:[#allocation10 + $0x18] sm:$0xff]
    %v1725 = vld [vmem:[#allocation10 + $0x20] sm:$0xff]
    %v1726 = vld [vmem:[#allocation10 + $0x28] sm:$0xff]
    %v1727 = vld [vmem:[#allocation10 + $0x30] sm:$0xff]
    %v1728 = vld [vmem:[#allocation10 + $0x38] sm:$0xff]
    %v1729 = vld [vmem:[#allocation10 + $0x40] sm:$0xff]
    %v1730 = vld [vmem:[#allocation10 + $0x48] sm:$0xff]
    %v1731 = vld [vmem:[#allocation10 + $0x50] sm:$0xff]
    %v1732 = vld [vmem:[#allocation10 + $0x58] sm:$0xff]
    %v1733 = vld [vmem:[#allocation10 + $0x60] sm:$0xff]
    %v1734 = vld [vmem:[#allocation10 + $0x68] sm:$0xff]
    %v1735 = vld [vmem:[#allocation10 + $0x70] sm:$0xff]
    %v1736 = vld [vmem:[#allocation10 + $0x78] sm:$0xff]
    %v1737 = vld [vmem:[#allocation10 + $0x80] sm:$0xff]
    %v1738 = vld [vmem:[#allocation10 + $0x88] sm:$0xff]
    %v1739 = vld [vmem:[#allocation10 + $0x90] sm:$0xff]
    %v1740 = vld [vmem:[#allocation10 + $0x98] sm:$0xff]
    %v1741 = vld [vmem:[#allocation10 + $0xa0] sm:$0xff]
    %v1742 = vld [vmem:[#allocation10 + $0xa8] sm:$0xff]
    %v1743 = vld [vmem:[#allocation10 + $0xb0] sm:$0xff]
    %v1744 = vld [vmem:[#allocation10 + $0xb8] sm:$0xff]
    %v1745 = vld [vmem:[#allocation10 + $0xc0] sm:$0xff]
    %v1746 = vld [vmem:[#allocation10 + $0xc8] sm:$0xff]
    %v1747 = vld [vmem:[#allocation10 + $0xd0] sm:$0xff]
    %v1748 = vld [vmem:[#allocation10 + $0xd8] sm:$0xff]
    %v1749 = vld [vmem:[#allocation10 + $0xe0] sm:$0xff]
    %v1750 = vld [vmem:[#allocation10 + $0xe8] sm:$0xff]
    %v1751 = vld [vmem:[#allocation10 + $0xf0] sm:$0xff]
    %v1752 = vld [vmem:[#allocation10 + $0xf8] sm:$0xff]
    %v1785 = vunpack.c.l.b16 %v1721
    %v1786 = vunpack.c.h.b16 %v1721
    %v1787 = vunpack.c.l.b16 %v1722
    %v1788 = vunpack.c.h.b16 %v1722
    %v1789 = vunpack.c.l.b16 %v1723
    %v1790 = vunpack.c.h.b16 %v1723
    %v1791 = vunpack.c.l.b16 %v1724
    %v1792 = vunpack.c.h.b16 %v1724
    %v1793 = vunpack.c.l.b16 %v1725
    %v1794 = vunpack.c.h.b16 %v1725
    %v1795 = vunpack.c.l.b16 %v1726
    %v1796 = vunpack.c.h.b16 %v1726
    %v1797 = vunpack.c.l.b16 %v1727
    %v1798 = vunpack.c.h.b16 %v1727
    %v1799 = vunpack.c.l.b16 %v1728
    %v1800 = vunpack.c.h.b16 %v1728
    %v1801 = vunpack.c.l.b16 %v1729
    %v1802 = vunpack.c.h.b16 %v1729
    %v1803 = vunpack.c.l.b16 %v1730
    %v1804 = vunpack.c.h.b16 %v1730
    %v1805 = vunpack.c.l.b16 %v1731
    %v1806 = vunpack.c.h.b16 %v1731
    %v1807 = vunpack.c.l.b16 %v1732
    %v1808 = vunpack.c.h.b16 %v1732
    %v1809 = vunpack.c.l.b16 %v1733
    %v1810 = vunpack.c.h.b16 %v1733
    %v1811 = vunpack.c.l.b16 %v1734
    %v1812 = vunpack.c.h.b16 %v1734
    %v1813 = vunpack.c.l.b16 %v1735
    %v1814 = vunpack.c.h.b16 %v1735
    %v1815 = vunpack.c.l.b16 %v1736
    %v1816 = vunpack.c.h.b16 %v1736
    %v1817 = vunpack.c.l.b16 %v1737
    %v1818 = vunpack.c.h.b16 %v1737
    %v1819 = vunpack.c.l.b16 %v1738
    %v1820 = vunpack.c.h.b16 %v1738
    %v1821 = vunpack.c.l.b16 %v1739
    %v1822 = vunpack.c.h.b16 %v1739
    %v1823 = vunpack.c.l.b16 %v1740
    %v1824 = vunpack.c.h.b16 %v1740
    %v1825 = vunpack.c.l.b16 %v1741
    %v1826 = vunpack.c.h.b16 %v1741
    %v1827 = vunpack.c.l.b16 %v1742
    %v1828 = vunpack.c.h.b16 %v1742
    %v1829 = vunpack.c.l.b16 %v1743
    %v1830 = vunpack.c.h.b16 %v1743
    %v1831 = vunpack.c.l.b16 %v1744
    %v1832 = vunpack.c.h.b16 %v1744
    %v1833 = vunpack.c.l.b16 %v1745
    %v1834 = vunpack.c.h.b16 %v1745
    %v1835 = vunpack.c.l.b16 %v1746
    %v1836 = vunpack.c.h.b16 %v1746
    %v1837 = vunpack.c.l.b16 %v1747
    %v1838 = vunpack.c.h.b16 %v1747
    %v1839 = vunpack.c.l.b16 %v1748
    %v1840 = vunpack.c.h.b16 %v1748
    %v1841 = vunpack.c.l.b16 %v1749
    %v1842 = vunpack.c.h.b16 %v1749
    %v1843 = vunpack.c.l.b16 %v1750
    %v1844 = vunpack.c.h.b16 %v1750
    %v1845 = vunpack.c.l.b16 %v1751
    %v1846 = vunpack.c.h.b16 %v1751
    %v1847 = vunpack.c.l.b16 %v1752
    %v1848 = vunpack.c.h.b16 %v1752
    %v1849 = vpack.c.b16 %v1789, %v1785
    %v1850 = vpack.c.b16 %v1790, %v1786
    %v1851 = vpack.c.b16 %v1791, %v1787
    %v1852 = vpack.c.b16 %v1792, %v1788
    %v1853 = vpack.c.b16 %v1797, %v1793
    %v1854 = vpack.c.b16 %v1798, %v1794
    %v1855 = vpack.c.b16 %v1799, %v1795
    %v1856 = vpack.c.b16 %v1800, %v1796
    %v1857 = vpack.c.b16 %v1805, %v1801
    %v1858 = vpack.c.b16 %v1806, %v1802
    %v1859 = vpack.c.b16 %v1807, %v1803
    %v1860 = vpack.c.b16 %v1808, %v1804
    %v1861 = vpack.c.b16 %v1813, %v1809
    %v1862 = vpack.c.b16 %v1814, %v1810
    %v1863 = vpack.c.b16 %v1815, %v1811
    %v1864 = vpack.c.b16 %v1816, %v1812
    %v1865 = vpack.c.b16 %v1821, %v1817
    %v1866 = vpack.c.b16 %v1822, %v1818
    %v1867 = vpack.c.b16 %v1823, %v1819
    %v1868 = vpack.c.b16 %v1824, %v1820
    %v1869 = vpack.c.b16 %v1829, %v1825
    %v1870 = vpack.c.b16 %v1830, %v1826
    %v1871 = vpack.c.b16 %v1831, %v1827
    %v1872 = vpack.c.b16 %v1832, %v1828
    %v1873 = vpack.c.b16 %v1837, %v1833
    %v1874 = vpack.c.b16 %v1838, %v1834
    %v1875 = vpack.c.b16 %v1839, %v1835
    %v1876 = vpack.c.b16 %v1840, %v1836
    %v1877 = vpack.c.b16 %v1845, %v1841
    %v1878 = vpack.c.b16 %v1846, %v1842
    %v1879 = vpack.c.b16 %v1847, %v1843
    %v1880 = vpack.c.b16 %v1848, %v1844
    %1913 = vmatprep.subr.bf16.mxu0 %v1850
    %1914 = vmatpush1.bf16.msra.mxu0 %v1849
    %1915 = vmatprep.subr.bf16.mxu0 %v1854
    %1916 = vmatpush1.bf16.msra.mxu0 %v1853
    %1917 = vmatprep.subr.bf16.mxu0 %v1858
    %1918 = vmatpush1.bf16.msra.mxu0 %v1857
    %1919 = vmatprep.subr.bf16.mxu0 %v1862
    %1920 = vmatpush1.bf16.msra.mxu0 %v1861
    %1921 = vmatprep.subr.bf16.mxu0 %v1866
    %1922 = vmatpush1.bf16.msra.mxu0 %v1865
    %1923 = vmatprep.subr.bf16.mxu0 %v1870
    %1924 = vmatpush1.bf16.msra.mxu0 %v1869
    %1925 = vmatprep.subr.bf16.mxu0 %v1874
    %1926 = vmatpush1.bf16.msra.mxu0 %v1873
    %1927 = vmatprep.subr.bf16.mxu0 %v1878
    %1928 = vmatpush1.bf16.msra.mxu0 %v1877
    %1929 = vmatprep.subr.bf16.mxu0 0
    %1930 = vmatpush1.bf16.msra.mxu0 0
    %1931 = vmatprep.subr.bf16.mxu0 0
    %1932 = vmatpush1.bf16.msra.mxu0 0
    %1933 = vmatprep.subr.bf16.mxu0 0
    %1934 = vmatpush1.bf16.msra.mxu0 0
    %1935 = vmatprep.subr.bf16.mxu0 0
    %1936 = vmatpush1.bf16.msra.mxu0 0
    %1937 = vmatprep.subr.bf16.mxu0 0
    %1938 = vmatpush1.bf16.msra.mxu0 0
    %1939 = vmatprep.subr.bf16.mxu0 0
    %1940 = vmatpush1.bf16.msra.mxu0 0
    %1941 = vmatprep.subr.bf16.mxu0 0
    %1942 = vmatpush1.bf16.msra.mxu0 0
    %1943 = vmatprep.subr.bf16.mxu0 0
    %1944 = vmatpush1.bf16.msra.mxu0 0
    %1945 = vmatprep.mubr.bf16.mxu0 0
    %1946 = vmatmul.mubr.bf16.gmra.mrb[0].mxu0 %v1720
    %v1947 = vpop.f32.mrb[0].mxu0
    %v1948 = vadd.f32 0.0, %v1947
    %v1949 = vpop.f32.mrb[0].mxu0
    %v1950 = vadd.f32 0.0, %v1949
    %v1951 = vpop.f32.mrb[0].mxu0
    %v1952 = vadd.f32 0.0, %v1951
    %v1953 = vpop.f32.mrb[0].mxu0
    %v1954 = vadd.f32 0.0, %v1953
    %1955 = vdwg.mxu0
    %1956 = vmatprep.subr.bf16.mxu0 %v1852
    %1957 = vmatpush1.bf16.msra.mxu0 %v1851
    %1958 = vmatprep.subr.bf16.mxu0 %v1856
    %1959 = vmatpush1.bf16.msra.mxu0 %v1855
    %1960 = vmatprep.subr.bf16.mxu0 %v1860
    %1961 = vmatpush1.bf16.msra.mxu0 %v1859
    %1962 = vmatprep.subr.bf16.mxu0 %v1864
    %1963 = vmatpush1.bf16.msra.mxu0 %v1863
    %1964 = vmatprep.subr.bf16.mxu0 %v1868
    %1965 = vmatpush1.bf16.msra.mxu0 %v1867
    %1966 = vmatprep.subr.bf16.mxu0 %v1872
    %1967 = vmatpush1.bf16.msra.mxu0 %v1871
    %1968 = vmatprep.subr.bf16.mxu0 %v1876
    %1969 = vmatpush1.bf16.msra.mxu0 %v1875
    %1970 = vmatprep.subr.bf16.mxu0 %v1880
    %1971 = vmatpush1.bf16.msra.mxu0 %v1879
    %1972 = vmatprep.subr.bf16.mxu0 0
    %1973 = vmatpush1.bf16.msra.mxu0 0
    %1974 = vmatprep.subr.bf16.mxu0 0
    %1975 = vmatpush1.bf16.msra.mxu0 0
    %1976 = vmatprep.subr.bf16.mxu0 0
    %1977 = vmatpush1.bf16.msra.mxu0 0
    %1978 = vmatprep.subr.bf16.mxu0 0
    %1979 = vmatpush1.bf16.msra.mxu0 0
    %1980 = vmatprep.subr.bf16.mxu0 0
    %1981 = vmatpush1.bf16.msra.mxu0 0
    %1982 = vmatprep.subr.bf16.mxu0 0
    %1983 = vmatpush1.bf16.msra.mxu0 0
    %1984 = vmatprep.subr.bf16.mxu0 0
    %1985 = vmatpush1.bf16.msra.mxu0 0
    %1986 = vmatprep.subr.bf16.mxu0 0
    %1987 = vmatpush1.bf16.msra.mxu0 0
    %1988 = vmatprep.mubr.bf16.mxu0 0
    %1989 = vmatmul.mubr.bf16.gmra.mrb[0].mxu0 %v1720
    %v1990 = vpop.f32.mrb[0].mxu0
    %v1991 = vadd.f32 0.0, %v1990
    %v1992 = vpop.f32.mrb[0].mxu0
    %v1993 = vadd.f32 0.0, %v1992
    %v1994 = vpop.f32.mrb[0].mxu0
    %v1995 = vadd.f32 0.0, %v1994
    %v1996 = vpop.f32.mrb[0].mxu0
    %v1997 = vadd.f32 0.0, %v1996
    %1998 = vdwg.mxu0
    %v1999 = vadd.f32 %v1669, %v1948
    %v2000 = vadd.f32 %v1671, %v1950
    %v2001 = vadd.f32 %v1712, %v1991
    %v2002 = vadd.f32 %v1714, %v1993
    %v2003 = vadd.f32 %v1673, %v1952
    %v2004 = vadd.f32 %v1675, %v1954
    %v2005 = vadd.f32 %v1716, %v1995
    %v2006 = vadd.f32 %v1718, %v1997
    %v2007 = vxor.u32 %v1999, 2147483648
    %v2008 = vxor.u32 %v2003, 2147483648
    %v2009 = vmul.f32 %v2007, 1.442695
    %v2010 = vpow.pop %v2009
    %v2011 = vmul.f32 %v2008, 1.442695
    %v2012 = vpow.pop %v2011
    %v2013 = vadd.f32 %v2010, 1.0
    %v2014 = vadd.f32 %v2012, 1.0
    %v2015 = vrcp.pop %v2013
    %v2016 = vmul.f32 1.0, %v2015
    %v2017 = vrcp.pop %v2014
    %v2018 = vmul.f32 1.0, %v2017
    %v2019 = vxor.u32 %v2000, 2147483648
    %v2020 = vxor.u32 %v2004, 2147483648
    %v2021 = vmul.f32 %v2019, 1.442695
    %v2022 = vpow.pop %v2021
    %v2023 = vmul.f32 %v2020, 1.442695
    %v2024 = vpow.pop %v2023
    %v2025 = vadd.f32 %v2022, 1.0
    %v2026 = vadd.f32 %v2024, 1.0
    %v2027 = vrcp.pop %v2025
    %v2028 = vmul.f32 1.0, %v2027
    %v2029 = vrcp.pop %v2026
    %v2030 = vmul.f32 1.0, %v2029
    %v2031 = vtanh.pop %v2001
    %v2032 = vtanh.pop %v2005
    %v2033 = vxor.u32 %v2002, 2147483648
    %v2034 = vxor.u32 %v2006, 2147483648
    %v2035 = vmul.f32 %v2033, 1.442695
    %v2036 = vpow.pop %v2035
    %v2037 = vmul.f32 %v2034, 1.442695
    %v2038 = vpow.pop %v2037
    %v2039 = vadd.f32 %v2036, 1.0
    %v2040 = vadd.f32 %v2038, 1.0
    %v2041 = vrcp.pop %v2039
    %v2042 = vmul.f32 1.0, %v2041
    %v2043 = vrcp.pop %v2040
    %v2044 = vmul.f32 1.0, %v2043
    %v2045 = vmul.f32 %v2028, %v1575
    %v2046 = vmul.f32 %v2030, %v1576
    %v2047 = vmul.f32 %v2016, %v2031
    %v2048 = vmul.f32 %v2018, %v2032
    %v2049 = vadd.f32 %v2045, %v2047
    %v2050 = vadd.f32 %v2046, %v2048
    %v2051 = vtanh.pop %v2049
    %v2052 = vtanh.pop %v2050
    %v2053 = vmul.f32 %v2042, %v2051
    %v2054 = vmul.f32 %v2044, %v2052
    %s2055 = scalar_lea.vmem [#allocation13], 48
    %2056 = vst [vmem:[%s2055] sm:$0xff] %v2053
    %2057 = vst [vmem:[%s2055 + $0x8] sm:$0xff] %v2054
    %2058 = vst [vmem:[#allocation2] sm:$0xff] %v2053
    %2059 = vst [vmem:[#allocation2 + $0x8] sm:$0xff] %v2054
    %2060 = vst [vmem:[#allocation3] sm:$0xff] %v2049
    %2061 = vst [vmem:[#allocation3 + $0x8] sm:$0xff] %v2050
    %v2062 = vld [vmem:[#allocation2] sm:$0xff]
    %v2063 = vld [vmem:[#allocation2 + $0x8] sm:$0xff]
    %v2064 = vld [vmem:[#allocation3] sm:$0xff]
    %v2065 = vld [vmem:[#allocation3 + $0x8] sm:$0xff]
    %s2066 = scalar_lea.vmem [#allocation4], 32
    %v2067 = vld [vmem:[%s2066] sm:$0xf]
    %v2068 = vld [vmem:[%s2066 + $0x4] sm:$0xf]
    %v2069 = vld [vmem:[#allocation7] sm:$0xff]
    %v2070 = vld [vmem:[#allocation7 + $0x8] sm:$0xff]
    %v2071 = vld [vmem:[#allocation7 + $0x10] sm:$0xff]
    %v2072 = vld [vmem:[#allocation7 + $0x18] sm:$0xff]
    %v2073 = vld [vmem:[#allocation9] sm:$0xf]
    %v2075 = vlaneseq
    %v2076 = vshrl.u32 %v2075, 7
    %v2077 = vsub.s32 0, %v2076
    %v2078 = vrot.slane %v2073, %v2077
    %v2079 = vlaneseq
    %v2080 = vshrl.u32 %v2079, 7
    %v2081 = vsub.s32 1, %v2080
    %v2082 = vrot.slane %v2073, %v2081
    %v2083 = vlaneseq
    %v2084 = vshrl.u32 %v2083, 7
    %v2085 = vsub.s32 2, %v2084
    %v2086 = vrot.slane %v2073, %v2085
    %v2087 = vlaneseq
    %v2088 = vshrl.u32 %v2087, 7
    %v2089 = vsub.s32 3, %v2088
    %v2090 = vrot.slane %v2073, %v2089
    %v2097 = vunpack.c.l.b16 %v2067
    %v2098 = vunpack.c.l.b16 %v2068
    %v2099 = vpack.c.b16 %v2098, %v2097
    %v2104 = vunpack.c.l.b16 %v2069
    %v2105 = vunpack.c.h.b16 %v2069
    %v2106 = vunpack.c.l.b16 %v2070
    %v2107 = vunpack.c.h.b16 %v2070
    %v2108 = vunpack.c.l.b16 %v2071
    %v2109 = vunpack.c.h.b16 %v2071
    %v2110 = vunpack.c.l.b16 %v2072
    %v2111 = vunpack.c.h.b16 %v2072
    %v2112 = vpack.c.b16 %v2108, %v2104
    %v2113 = vpack.c.b16 %v2109, %v2105
    %v2114 = vpack.c.b16 %v2110, %v2106
    %v2115 = vpack.c.b16 %v2111, %v2107
    %v2121 = vsel %vm164, %v2099, 0
    %2123 = vmatprep.subr.bf16.mxu0 %v2113
    %2124 = vmatpush1.bf16.msra.mxu0 %v2112
    %2125 = vmatprep.subr.bf16.mxu0 0
    %2126 = vmatpush1.bf16.msra.mxu0 0
    %2127 = vmatprep.subr.bf16.mxu0 0
    %2128 = vmatpush1.bf16.msra.mxu0 0
    %2129 = vmatprep.subr.bf16.mxu0 0
    %2130 = vmatpush1.bf16.msra.mxu0 0
    %2131 = vmatprep.subr.bf16.mxu0 0
    %2132 = vmatpush1.bf16.msra.mxu0 0
    %2133 = vmatprep.subr.bf16.mxu0 0
    %2134 = vmatpush1.bf16.msra.mxu0 0
    %2135 = vmatprep.subr.bf16.mxu0 0
    %2136 = vmatpush1.bf16.msra.mxu0 0
    %2137 = vmatprep.subr.bf16.mxu0 0
    %2138 = vmatpush1.bf16.msra.mxu0 0
    %2139 = vmatprep.subr.bf16.mxu0 0
    %2140 = vmatpush1.bf16.msra.mxu0 0
    %2141 = vmatprep.subr.bf16.mxu0 0
    %2142 = vmatpush1.bf16.msra.mxu0 0
    %2143 = vmatprep.subr.bf16.mxu0 0
    %2144 = vmatpush1.bf16.msra.mxu0 0
    %2145 = vmatprep.subr.bf16.mxu0 0
    %2146 = vmatpush1.bf16.msra.mxu0 0
    %2147 = vmatprep.subr.bf16.mxu0 0
    %2148 = vmatpush1.bf16.msra.mxu0 0
    %2149 = vmatprep.subr.bf16.mxu0 0
    %2150 = vmatpush1.bf16.msra.mxu0 0
    %2151 = vmatprep.subr.bf16.mxu0 0
    %2152 = vmatpush1.bf16.msra.mxu0 0
    %2153 = vmatprep.subr.bf16.mxu0 0
    %2154 = vmatpush1.bf16.msra.mxu0 0
    %2155 = vmatprep.mubr.bf16.mxu0 0
    %2156 = vmatmul.mubr.bf16.gmra.mrb[0].mxu0 %v2121
    %v2157 = vpop.f32.mrb[0].mxu0
    %v2158 = vadd.f32 %v2078, %v2157
    %v2159 = vpop.f32.mrb[0].mxu0
    %v2160 = vadd.f32 %v2082, %v2159
    %v2161 = vpop.f32.mrb[0].mxu0
    %v2162 = vadd.f32 %v2078, %v2161
    %v2163 = vpop.f32.mrb[0].mxu0
    %v2164 = vadd.f32 %v2082, %v2163
    %2165 = vdwg.mxu0
    %2166 = vmatprep.subr.bf16.mxu0 %v2115
    %2167 = vmatpush1.bf16.msra.mxu0 %v2114
    %2168 = vmatprep.subr.bf16.mxu0 0
    %2169 = vmatpush1.bf16.msra.mxu0 0
    %2170 = vmatprep.subr.bf16.mxu0 0
    %2171 = vmatpush1.bf16.msra.mxu0 0
    %2172 = vmatprep.subr.bf16.mxu0 0
    %2173 = vmatpush1.bf16.msra.mxu0 0
    %2174 = vmatprep.subr.bf16.mxu0 0
    %2175 = vmatpush1.bf16.msra.mxu0 0
    %2176 = vmatprep.subr.bf16.mxu0 0
    %2177 = vmatpush1.bf16.msra.mxu0 0
    %2178 = vmatprep.subr.bf16.mxu0 0
    %2179 = vmatpush1.bf16.msra.mxu0 0
    %2180 = vmatprep.subr.bf16.mxu0 0
    %2181 = vmatpush1.bf16.msra.mxu0 0
    %2182 = vmatprep.subr.bf16.mxu0 0
    %2183 = vmatpush1.bf16.msra.mxu0 0
    %2184 = vmatprep.subr.bf16.mxu0 0
    %2185 = vmatpush1.bf16.msra.mxu0 0
    %2186 = vmatprep.subr.bf16.mxu0 0
    %2187 = vmatpush1.bf16.msra.mxu0 0
    %2188 = vmatprep.subr.bf16.mxu0 0
    %2189 = vmatpush1.bf16.msra.mxu0 0
    %2190 = vmatprep.subr.bf16.mxu0 0
    %2191 = vmatpush1.bf16.msra.mxu0 0
    %2192 = vmatprep.subr.bf16.mxu0 0
    %2193 = vmatpush1.bf16.msra.mxu0 0
    %2194 = vmatprep.subr.bf16.mxu0 0
    %2195 = vmatpush1.bf16.msra.mxu0 0
    %2196 = vmatprep.subr.bf16.mxu0 0
    %2197 = vmatpush1.bf16.msra.mxu0 0
    %2198 = vmatprep.mubr.bf16.mxu0 0
    %2199 = vmatmul.mubr.bf16.gmra.mrb[0].mxu0 %v2121
    %v2200 = vpop.f32.mrb[0].mxu0
    %v2201 = vadd.f32 %v2086, %v2200
    %v2202 = vpop.f32.mrb[0].mxu0
    %v2203 = vadd.f32 %v2090, %v2202
    %v2204 = vpop.f32.mrb[0].mxu0
    %v2205 = vadd.f32 %v2086, %v2204
    %v2206 = vpop.f32.mrb[0].mxu0
    %v2207 = vadd.f32 %v2090, %v2206
    %2208 = vdwg.mxu0
    %v2209 = vpack.c.bf16 %v2063, %v2062
    %v2210 = vld [vmem:[#allocation10] sm:$0xff]
    %v2211 = vld [vmem:[#allocation10 + $0x8] sm:$0xff]
    %v2212 = vld [vmem:[#allocation10 + $0x10] sm:$0xff]
    %v2213 = vld [vmem:[#allocation10 + $0x18] sm:$0xff]
    %v2214 = vld [vmem:[#allocation10 + $0x20] sm:$0xff]
    %v2215 = vld [vmem:[#allocation10 + $0x28] sm:$0xff]
    %v2216 = vld [vmem:[#allocation10 + $0x30] sm:$0xff]
    %v2217 = vld [vmem:[#allocation10 + $0x38] sm:$0xff]
    %v2218 = vld [vmem:[#allocation10 + $0x40] sm:$0xff]
    %v2219 = vld [vmem:[#allocation10 + $0x48] sm:$0xff]
    %v2220 = vld [vmem:[#allocation10 + $0x50] sm:$0xff]
    %v2221 = vld [vmem:[#allocation10 + $0x58] sm:$0xff]
    %v2222 = vld [vmem:[#allocation10 + $0x60] sm:$0xff]
    %v2223 = vld [vmem:[#allocation10 + $0x68] sm:$0xff]
    %v2224 = vld [vmem:[#allocation10 + $0x70] sm:$0xff]
    %v2225 = vld [vmem:[#allocation10 + $0x78] sm:$0xff]
    %v2226 = vld [vmem:[#allocation10 + $0x80] sm:$0xff]
    %v2227 = vld [vmem:[#allocation10 + $0x88] sm:$0xff]
    %v2228 = vld [vmem:[#allocation10 + $0x90] sm:$0xff]
    %v2229 = vld [vmem:[#allocation10 + $0x98] sm:$0xff]
    %v2230 = vld [vmem:[#allocation10 + $0xa0] sm:$0xff]
    %v2231 = vld [vmem:[#allocation10 + $0xa8] sm:$0xff]
    %v2232 = vld [vmem:[#allocation10 + $0xb0] sm:$0xff]
    %v2233 = vld [vmem:[#allocation10 + $0xb8] sm:$0xff]
    %v2234 = vld [vmem:[#allocation10 + $0xc0] sm:$0xff]
    %v2235 = vld [vmem:[#allocation10 + $0xc8] sm:$0xff]
    %v2236 = vld [vmem:[#allocation10 + $0xd0] sm:$0xff]
    %v2237 = vld [vmem:[#allocation10 + $0xd8] sm:$0xff]
    %v2238 = vld [vmem:[#allocation10 + $0xe0] sm:$0xff]
    %v2239 = vld [vmem:[#allocation10 + $0xe8] sm:$0xff]
    %v2240 = vld [vmem:[#allocation10 + $0xf0] sm:$0xff]
    %v2241 = vld [vmem:[#allocation10 + $0xf8] sm:$0xff]
    %v2274 = vunpack.c.l.b16 %v2210
    %v2275 = vunpack.c.h.b16 %v2210
    %v2276 = vunpack.c.l.b16 %v2211
    %v2277 = vunpack.c.h.b16 %v2211
    %v2278 = vunpack.c.l.b16 %v2212
    %v2279 = vunpack.c.h.b16 %v2212
    %v2280 = vunpack.c.l.b16 %v2213
    %v2281 = vunpack.c.h.b16 %v2213
    %v2282 = vunpack.c.l.b16 %v2214
    %v2283 = vunpack.c.h.b16 %v2214
    %v2284 = vunpack.c.l.b16 %v2215
    %v2285 = vunpack.c.h.b16 %v2215
    %v2286 = vunpack.c.l.b16 %v2216
    %v2287 = vunpack.c.h.b16 %v2216
    %v2288 = vunpack.c.l.b16 %v2217
    %v2289 = vunpack.c.h.b16 %v2217
    %v2290 = vunpack.c.l.b16 %v2218
    %v2291 = vunpack.c.h.b16 %v2218
    %v2292 = vunpack.c.l.b16 %v2219
    %v2293 = vunpack.c.h.b16 %v2219
    %v2294 = vunpack.c.l.b16 %v2220
    %v2295 = vunpack.c.h.b16 %v2220
    %v2296 = vunpack.c.l.b16 %v2221
    %v2297 = vunpack.c.h.b16 %v2221
    %v2298 = vunpack.c.l.b16 %v2222
    %v2299 = vunpack.c.h.b16 %v2222
    %v2300 = vunpack.c.l.b16 %v2223
    %v2301 = vunpack.c.h.b16 %v2223
    %v2302 = vunpack.c.l.b16 %v2224
    %v2303 = vunpack.c.h.b16 %v2224
    %v2304 = vunpack.c.l.b16 %v2225
    %v2305 = vunpack.c.h.b16 %v2225
    %v2306 = vunpack.c.l.b16 %v2226
    %v2307 = vunpack.c.h.b16 %v2226
    %v2308 = vunpack.c.l.b16 %v2227
    %v2309 = vunpack.c.h.b16 %v2227
    %v2310 = vunpack.c.l.b16 %v2228
    %v2311 = vunpack.c.h.b16 %v2228
    %v2312 = vunpack.c.l.b16 %v2229
    %v2313 = vunpack.c.h.b16 %v2229
    %v2314 = vunpack.c.l.b16 %v2230
    %v2315 = vunpack.c.h.b16 %v2230
    %v2316 = vunpack.c.l.b16 %v2231
    %v2317 = vunpack.c.h.b16 %v2231
    %v2318 = vunpack.c.l.b16 %v2232
    %v2319 = vunpack.c.h.b16 %v2232
    %v2320 = vunpack.c.l.b16 %v2233
    %v2321 = vunpack.c.h.b16 %v2233
    %v2322 = vunpack.c.l.b16 %v2234
    %v2323 = vunpack.c.h.b16 %v2234
    %v2324 = vunpack.c.l.b16 %v2235
    %v2325 = vunpack.c.h.b16 %v2235
    %v2326 = vunpack.c.l.b16 %v2236
    %v2327 = vunpack.c.h.b16 %v2236
    %v2328 = vunpack.c.l.b16 %v2237
    %v2329 = vunpack.c.h.b16 %v2237
    %v2330 = vunpack.c.l.b16 %v2238
    %v2331 = vunpack.c.h.b16 %v2238
    %v2332 = vunpack.c.l.b16 %v2239
    %v2333 = vunpack.c.h.b16 %v2239
    %v2334 = vunpack.c.l.b16 %v2240
    %v2335 = vunpack.c.h.b16 %v2240
    %v2336 = vunpack.c.l.b16 %v2241
    %v2337 = vunpack.c.h.b16 %v2241
    %v2338 = vpack.c.b16 %v2278, %v2274
    %v2339 = vpack.c.b16 %v2279, %v2275
    %v2340 = vpack.c.b16 %v2280, %v2276
    %v2341 = vpack.c.b16 %v2281, %v2277
    %v2342 = vpack.c.b16 %v2286, %v2282
    %v2343 = vpack.c.b16 %v2287, %v2283
    %v2344 = vpack.c.b16 %v2288, %v2284
    %v2345 = vpack.c.b16 %v2289, %v2285
    %v2346 = vpack.c.b16 %v2294, %v2290
    %v2347 = vpack.c.b16 %v2295, %v2291
    %v2348 = vpack.c.b16 %v2296, %v2292
    %v2349 = vpack.c.b16 %v2297, %v2293
    %v2350 = vpack.c.b16 %v2302, %v2298
    %v2351 = vpack.c.b16 %v2303, %v2299
    %v2352 = vpack.c.b16 %v2304, %v2300
    %v2353 = vpack.c.b16 %v2305, %v2301
    %v2354 = vpack.c.b16 %v2310, %v2306
    %v2355 = vpack.c.b16 %v2311, %v2307
    %v2356 = vpack.c.b16 %v2312, %v2308
    %v2357 = vpack.c.b16 %v2313, %v2309
    %v2358 = vpack.c.b16 %v2318, %v2314
    %v2359 = vpack.c.b16 %v2319, %v2315
    %v2360 = vpack.c.b16 %v2320, %v2316
    %v2361 = vpack.c.b16 %v2321, %v2317
    %v2362 = vpack.c.b16 %v2326, %v2322
    %v2363 = vpack.c.b16 %v2327, %v2323
    %v2364 = vpack.c.b16 %v2328, %v2324
    %v2365 = vpack.c.b16 %v2329, %v2325
    %v2366 = vpack.c.b16 %v2334, %v2330
    %v2367 = vpack.c.b16 %v2335, %v2331
    %v2368 = vpack.c.b16 %v2336, %v2332
    %v2369 = vpack.c.b16 %v2337, %v2333
    %2402 = vmatprep.subr.bf16.mxu0 %v2339
    %2403 = vmatpush1.bf16.msra.mxu0 %v2338
    %2404 = vmatprep.subr.bf16.mxu0 %v2343
    %2405 = vmatpush1.bf16.msra.mxu0 %v2342
    %2406 = vmatprep.subr.bf16.mxu0 %v2347
    %2407 = vmatpush1.bf16.msra.mxu0 %v2346
    %2408 = vmatprep.subr.bf16.mxu0 %v2351
    %2409 = vmatpush1.bf16.msra.mxu0 %v2350
    %2410 = vmatprep.subr.bf16.mxu0 %v2355
    %2411 = vmatpush1.bf16.msra.mxu0 %v2354
    %2412 = vmatprep.subr.bf16.mxu0 %v2359
    %2413 = vmatpush1.bf16.msra.mxu0 %v2358
    %2414 = vmatprep.subr.bf16.mxu0 %v2363
    %2415 = vmatpush1.bf16.msra.mxu0 %v2362
    %2416 = vmatprep.subr.bf16.mxu0 %v2367
    %2417 = vmatpush1.bf16.msra.mxu0 %v2366
    %2418 = vmatprep.subr.bf16.mxu0 0
    %2419 = vmatpush1.bf16.msra.mxu0 0
    %2420 = vmatprep.subr.bf16.mxu0 0
    %2421 = vmatpush1.bf16.msra.mxu0 0
    %2422 = vmatprep.subr.bf16.mxu0 0
    %2423 = vmatpush1.bf16.msra.mxu0 0
    %2424 = vmatprep.subr.bf16.mxu0 0
    %2425 = vmatpush1.bf16.msra.mxu0 0
    %2426 = vmatprep.subr.bf16.mxu0 0
    %2427 = vmatpush1.bf16.msra.mxu0 0
    %2428 = vmatprep.subr.bf16.mxu0 0
    %2429 = vmatpush1.bf16.msra.mxu0 0
    %2430 = vmatprep.subr.bf16.mxu0 0
    %2431 = vmatpush1.bf16.msra.mxu0 0
    %2432 = vmatprep.subr.bf16.mxu0 0
    %2433 = vmatpush1.bf16.msra.mxu0 0
    %2434 = vmatprep.mubr.bf16.mxu0 0
    %2435 = vmatmul.mubr.bf16.gmra.mrb[0].mxu0 %v2209
    %v2436 = vpop.f32.mrb[0].mxu0
    %v2437 = vadd.f32 0.0, %v2436
    %v2438 = vpop.f32.mrb[0].mxu0
    %v2439 = vadd.f32 0.0, %v2438
    %v2440 = vpop.f32.mrb[0].mxu0
    %v2441 = vadd.f32 0.0, %v2440
    %v2442 = vpop.f32.mrb[0].mxu0
    %v2443 = vadd.f32 0.0, %v2442
    %2444 = vdwg.mxu0
    %2445 = vmatprep.subr.bf16.mxu0 %v2341
    %2446 = vmatpush1.bf16.msra.mxu0 %v2340
    %2447 = vmatprep.subr.bf16.mxu0 %v2345
    %2448 = vmatpush1.bf16.msra.mxu0 %v2344
    %2449 = vmatprep.subr.bf16.mxu0 %v2349
    %2450 = vmatpush1.bf16.msra.mxu0 %v2348
    %2451 = vmatprep.subr.bf16.mxu0 %v2353
    %2452 = vmatpush1.bf16.msra.mxu0 %v2352
    %2453 = vmatprep.subr.bf16.mxu0 %v2357
    %2454 = vmatpush1.bf16.msra.mxu0 %v2356
    %2455 = vmatprep.subr.bf16.mxu0 %v2361
    %2456 = vmatpush1.bf16.msra.mxu0 %v2360
    %2457 = vmatprep.subr.bf16.mxu0 %v2365
    %2458 = vmatpush1.bf16.msra.mxu0 %v2364
    %2459 = vmatprep.subr.bf16.mxu0 %v2369
    %2460 = vmatpush1.bf16.msra.mxu0 %v2368
    %2461 = vmatprep.subr.bf16.mxu0 0
    %2462 = vmatpush1.bf16.msra.mxu0 0
    %2463 = vmatprep.subr.bf16.mxu0 0
    %2464 = vmatpush1.bf16.msra.mxu0 0
    %2465 = vmatprep.subr.bf16.mxu0 0
    %2466 = vmatpush1.bf16.msra.mxu0 0
    %2467 = vmatprep.subr.bf16.mxu0 0
    %2468 = vmatpush1.bf16.msra.mxu0 0
    %2469 = vmatprep.subr.bf16.mxu0 0
    %2470 = vmatpush1.bf16.msra.mxu0 0
    %2471 = vmatprep.subr.bf16.mxu0 0
    %2472 = vmatpush1.bf16.msra.mxu0 0
    %2473 = vmatprep.subr.bf16.mxu0 0
    %2474 = vmatpush1.bf16.msra.mxu0 0
    %2475 = vmatprep.subr.bf16.mxu0 0
    %2476 = vmatpush1.bf16.msra.mxu0 0
    %2477 = vmatprep.mubr.bf16.mxu0 0
    %2478 = vmatmul.mubr.bf16.gmra.mrb[0].mxu0 %v2209
    %v2479 = vpop.f32.mrb[0].mxu0
    %v2480 = vadd.f32 0.0, %v2479
    %v2481 = vpop.f32.mrb[0].mxu0
    %v2482 = vadd.f32 0.0, %v2481
    %v2483 = vpop.f32.mrb[0].mxu0
    %v2484 = vadd.f32 0.0, %v2483
    %v2485 = vpop.f32.mrb[0].mxu0
    %v2486 = vadd.f32 0.0, %v2485
    %2487 = vdwg.mxu0
    %v2488 = vadd.f32 %v2158, %v2437
    %v2489 = vadd.f32 %v2160, %v2439
    %v2490 = vadd.f32 %v2201, %v2480
    %v2491 = vadd.f32 %v2203, %v2482
    %v2492 = vadd.f32 %v2162, %v2441
    %v2493 = vadd.f32 %v2164, %v2443
    %v2494 = vadd.f32 %v2205, %v2484
    %v2495 = vadd.f32 %v2207, %v2486
    %v2496 = vxor.u32 %v2488, 2147483648
    %v2497 = vxor.u32 %v2492, 2147483648
    %v2498 = vmul.f32 %v2496, 1.442695
    %v2499 = vpow.pop %v2498
    %v2500 = vmul.f32 %v2497, 1.442695
    %v2501 = vpow.pop %v2500
    %v2502 = vadd.f32 %v2499, 1.0
    %v2503 = vadd.f32 %v2501, 1.0
    %v2504 = vrcp.pop %v2502
    %v2505 = vmul.f32 1.0, %v2504
    %v2506 = vrcp.pop %v2503
    %v2507 = vmul.f32 1.0, %v2506
    %v2508 = vxor.u32 %v2489, 2147483648
    %v2509 = vxor.u32 %v2493, 2147483648
    %v2510 = vmul.f32 %v2508, 1.442695
    %v2511 = vpow.pop %v2510
    %v2512 = vmul.f32 %v2509, 1.442695
    %v2513 = vpow.pop %v2512
    %v2514 = vadd.f32 %v2511, 1.0
    %v2515 = vadd.f32 %v2513, 1.0
    %v2516 = vrcp.pop %v2514
    %v2517 = vmul.f32 1.0, %v2516
    %v2518 = vrcp.pop %v2515
    %v2519 = vmul.f32 1.0, %v2518
    %v2520 = vtanh.pop %v2490
    %v2521 = vtanh.pop %v2494
    %v2522 = vxor.u32 %v2491, 2147483648
    %v2523 = vxor.u32 %v2495, 2147483648
    %v2524 = vmul.f32 %v2522, 1.442695
    %v2525 = vpow.pop %v2524
    %v2526 = vmul.f32 %v2523, 1.442695
    %v2527 = vpow.pop %v2526
    %v2528 = vadd.f32 %v2525, 1.0
    %v2529 = vadd.f32 %v2527, 1.0
    %v2530 = vrcp.pop %v2528
    %v2531 = vmul.f32 1.0, %v2530
    %v2532 = vrcp.pop %v2529
    %v2533 = vmul.f32 1.0, %v2532
    %v2534 = vmul.f32 %v2517, %v2064
    %v2535 = vmul.f32 %v2519, %v2065
    %v2536 = vmul.f32 %v2505, %v2520
    %v2537 = vmul.f32 %v2507, %v2521
    %v2538 = vadd.f32 %v2534, %v2536
    %v2539 = vadd.f32 %v2535, %v2537
    %v2540 = vtanh.pop %v2538
    %v2541 = vtanh.pop %v2539
    %v2542 = vmul.f32 %v2531, %v2540
    %v2543 = vmul.f32 %v2533, %v2541
    %s2544 = scalar_lea.vmem [#allocation13], 64
    %2545 = vst [vmem:[%s2544] sm:$0xff] %v2542
    %2546 = vst [vmem:[%s2544 + $0x8] sm:$0xff] %v2543
    %2547 = vst [vmem:[#allocation2] sm:$0xff] %v2542
    %2548 = vst [vmem:[#allocation2 + $0x8] sm:$0xff] %v2543
    %2549 = vst [vmem:[#allocation3] sm:$0xff] %v2538
    %2550 = vst [vmem:[#allocation3 + $0x8] sm:$0xff] %v2539
    %v2551 = vld [vmem:[#allocation2] sm:$0xff]
    %v2552 = vld [vmem:[#allocation2 + $0x8] sm:$0xff]
    %v2553 = vld [vmem:[#allocation3] sm:$0xff]
    %v2554 = vld [vmem:[#allocation3 + $0x8] sm:$0xff]
    %s2555 = scalar_lea.vmem [#allocation4], 40
    %v2556 = vld [vmem:[%s2555] sm:$0xf]
    %v2557 = vld [vmem:[%s2555 + $0x4] sm:$0xf]
    %v2558 = vld [vmem:[#allocation7] sm:$0xff]
    %v2559 = vld [vmem:[#allocation7 + $0x8] sm:$0xff]
    %v2560 = vld [vmem:[#allocation7 + $0x10] sm:$0xff]
    %v2561 = vld [vmem:[#allocation7 + $0x18] sm:$0xff]
    %v2562 = vld [vmem:[#allocation9] sm:$0xf]
    %v2564 = vlaneseq
    %v2565 = vshrl.u32 %v2564, 7
    %v2566 = vsub.s32 0, %v2565
    %v2567 = vrot.slane %v2562, %v2566
    %v2568 = vlaneseq
    %v2569 = vshrl.u32 %v2568, 7
    %v2570 = vsub.s32 1, %v2569
    %v2571 = vrot.slane %v2562, %v2570
    %v2572 = vlaneseq
    %v2573 = vshrl.u32 %v2572, 7
    %v2574 = vsub.s32 2, %v2573
    %v2575 = vrot.slane %v2562, %v2574
    %v2576 = vlaneseq
    %v2577 = vshrl.u32 %v2576, 7
    %v2578 = vsub.s32 3, %v2577
    %v2579 = vrot.slane %v2562, %v2578
    %v2586 = vunpack.c.l.b16 %v2556
    %v2587 = vunpack.c.l.b16 %v2557
    %v2588 = vpack.c.b16 %v2587, %v2586
    %v2593 = vunpack.c.l.b16 %v2558
    %v2594 = vunpack.c.h.b16 %v2558
    %v2595 = vunpack.c.l.b16 %v2559
    %v2596 = vunpack.c.h.b16 %v2559
    %v2597 = vunpack.c.l.b16 %v2560
    %v2598 = vunpack.c.h.b16 %v2560
    %v2599 = vunpack.c.l.b16 %v2561
    %v2600 = vunpack.c.h.b16 %v2561
    %v2601 = vpack.c.b16 %v2597, %v2593
    %v2602 = vpack.c.b16 %v2598, %v2594
    %v2603 = vpack.c.b16 %v2599, %v2595
    %v2604 = vpack.c.b16 %v2600, %v2596
    %v2610 = vsel %vm164, %v2588, 0
    %2612 = vmatprep.subr.bf16.mxu0 %v2602
    %2613 = vmatpush1.bf16.msra.mxu0 %v2601
    %2614 = vmatprep.subr.bf16.mxu0 0
    %2615 = vmatpush1.bf16.msra.mxu0 0
    %2616 = vmatprep.subr.bf16.mxu0 0
    %2617 = vmatpush1.bf16.msra.mxu0 0
    %2618 = vmatprep.subr.bf16.mxu0 0
    %2619 = vmatpush1.bf16.msra.mxu0 0
    %2620 = vmatprep.subr.bf16.mxu0 0
    %2621 = vmatpush1.bf16.msra.mxu0 0
    %2622 = vmatprep.subr.bf16.mxu0 0
    %2623 = vmatpush1.bf16.msra.mxu0 0
    %2624 = vmatprep.subr.bf16.mxu0 0
    %2625 = vmatpush1.bf16.msra.mxu0 0
    %2626 = vmatprep.subr.bf16.mxu0 0
    %2627 = vmatpush1.bf16.msra.mxu0 0
    %2628 = vmatprep.subr.bf16.mxu0 0
    %2629 = vmatpush1.bf16.msra.mxu0 0
    %2630 = vmatprep.subr.bf16.mxu0 0
    %2631 = vmatpush1.bf16.msra.mxu0 0
    %2632 = vmatprep.subr.bf16.mxu0 0
    %2633 = vmatpush1.bf16.msra.mxu0 0
    %2634 = vmatprep.subr.bf16.mxu0 0
    %2635 = vmatpush1.bf16.msra.mxu0 0
    %2636 = vmatprep.subr.bf16.mxu0 0
    %2637 = vmatpush1.bf16.msra.mxu0 0
    %2638 = vmatprep.subr.bf16.mxu0 0
    %2639 = vmatpush1.bf16.msra.mxu0 0
    %2640 = vmatprep.subr.bf16.mxu0 0
    %2641 = vmatpush1.bf16.msra.mxu0 0
    %2642 = vmatprep.subr.bf16.mxu0 0
    %2643 = vmatpush1.bf16.msra.mxu0 0
    %2644 = vmatprep.mubr.bf16.mxu0 0
    %2645 = vmatmul.mubr.bf16.gmra.mrb[0].mxu0 %v2610
    %v2646 = vpop.f32.mrb[0].mxu0
    %v2647 = vadd.f32 %v2567, %v2646
    %v2648 = vpop.f32.mrb[0].mxu0
    %v2649 = vadd.f32 %v2571, %v2648
    %v2650 = vpop.f32.mrb[0].mxu0
    %v2651 = vadd.f32 %v2567, %v2650
    %v2652 = vpop.f32.mrb[0].mxu0
    %v2653 = vadd.f32 %v2571, %v2652
    %2654 = vdwg.mxu0
    %2655 = vmatprep.subr.bf16.mxu0 %v2604
    %2656 = vmatpush1.bf16.msra.mxu0 %v2603
    %2657 = vmatprep.subr.bf16.mxu0 0
    %2658 = vmatpush1.bf16.msra.mxu0 0
    %2659 = vmatprep.subr.bf16.mxu0 0
    %2660 = vmatpush1.bf16.msra.mxu0 0
    %2661 = vmatprep.subr.bf16.mxu0 0
    %2662 = vmatpush1.bf16.msra.mxu0 0
    %2663 = vmatprep.subr.bf16.mxu0 0
    %2664 = vmatpush1.bf16.msra.mxu0 0
    %2665 = vmatprep.subr.bf16.mxu0 0
    %2666 = vmatpush1.bf16.msra.mxu0 0
    %2667 = vmatprep.subr.bf16.mxu0 0
    %2668 = vmatpush1.bf16.msra.mxu0 0
    %2669 = vmatprep.subr.bf16.mxu0 0
    %2670 = vmatpush1.bf16.msra.mxu0 0
    %2671 = vmatprep.subr.bf16.mxu0 0
    %2672 = vmatpush1.bf16.msra.mxu0 0
    %2673 = vmatprep.subr.bf16.mxu0 0
    %2674 = vmatpush1.bf16.msra.mxu0 0
    %2675 = vmatprep.subr.bf16.mxu0 0
    %2676 = vmatpush1.bf16.msra.mxu0 0
    %2677 = vmatprep.subr.bf16.mxu0 0
    %2678 = vmatpush1.bf16.msra.mxu0 0
    %2679 = vmatprep.subr.bf16.mxu0 0
    %2680 = vmatpush1.bf16.msra.mxu0 0
    %2681 = vmatprep.subr.bf16.mxu0 0
    %2682 = vmatpush1.bf16.msra.mxu0 0
    %2683 = vmatprep.subr.bf16.mxu0 0
    %2684 = vmatpush1.bf16.msra.mxu0 0
    %2685 = vmatprep.subr.bf16.mxu0 0
    %2686 = vmatpush1.bf16.msra.mxu0 0
    %2687 = vmatprep.mubr.bf16.mxu0 0
    %2688 = vmatmul.mubr.bf16.gmra.mrb[0].mxu0 %v2610
    %v2689 = vpop.f32.mrb[0].mxu0
    %v2690 = vadd.f32 %v2575, %v2689
    %v2691 = vpop.f32.mrb[0].mxu0
    %v2692 = vadd.f32 %v2579, %v2691
    %v2693 = vpop.f32.mrb[0].mxu0
    %v2694 = vadd.f32 %v2575, %v2693
    %v2695 = vpop.f32.mrb[0].mxu0
    %v2696 = vadd.f32 %v2579, %v2695
    %2697 = vdwg.mxu0
    %v2698 = vpack.c.bf16 %v2552, %v2551
    %v2699 = vld [vmem:[#allocation10] sm:$0xff]
    %v2700 = vld [vmem:[#allocation10 + $0x8] sm:$0xff]
    %v2701 = vld [vmem:[#allocation10 + $0x10] sm:$0xff]
    %v2702 = vld [vmem:[#allocation10 + $0x18] sm:$0xff]
    %v2703 = vld [vmem:[#allocation10 + $0x20] sm:$0xff]
    %v2704 = vld [vmem:[#allocation10 + $0x28] sm:$0xff]
    %v2705 = vld [vmem:[#allocation10 + $0x30] sm:$0xff]
    %v2706 = vld [vmem:[#allocation10 + $0x38] sm:$0xff]
    %v2707 = vld [vmem:[#allocation10 + $0x40] sm:$0xff]
    %v2708 = vld [vmem:[#allocation10 + $0x48] sm:$0xff]
    %v2709 = vld [vmem:[#allocation10 + $0x50] sm:$0xff]
    %v2710 = vld [vmem:[#allocation10 + $0x58] sm:$0xff]
    %v2711 = vld [vmem:[#allocation10 + $0x60] sm:$0xff]
    %v2712 = vld [vmem:[#allocation10 + $0x68] sm:$0xff]
    %v2713 = vld [vmem:[#allocation10 + $0x70] sm:$0xff]
    %v2714 = vld [vmem:[#allocation10 + $0x78] sm:$0xff]
    %v2715 = vld [vmem:[#allocation10 + $0x80] sm:$0xff]
    %v2716 = vld [vmem:[#allocation10 + $0x88] sm:$0xff]
    %v2717 = vld [vmem:[#allocation10 + $0x90] sm:$0xff]
    %v2718 = vld [vmem:[#allocation10 + $0x98] sm:$0xff]
    %v2719 = vld [vmem:[#allocation10 + $0xa0] sm:$0xff]
    %v2720 = vld [vmem:[#allocation10 + $0xa8] sm:$0xff]
    %v2721 = vld [vmem:[#allocation10 + $0xb0] sm:$0xff]
    %v2722 = vld [vmem:[#allocation10 + $0xb8] sm:$0xff]
    %v2723 = vld [vmem:[#allocation10 + $0xc0] sm:$0xff]
    %v2724 = vld [vmem:[#allocation10 + $0xc8] sm:$0xff]
    %v2725 = vld [vmem:[#allocation10 + $0xd0] sm:$0xff]
    %v2726 = vld [vmem:[#allocation10 + $0xd8] sm:$0xff]
    %v2727 = vld [vmem:[#allocation10 + $0xe0] sm:$0xff]
    %v2728 = vld [vmem:[#allocation10 + $0xe8] sm:$0xff]
    %v2729 = vld [vmem:[#allocation10 + $0xf0] sm:$0xff]
    %v2730 = vld [vmem:[#allocation10 + $0xf8] sm:$0xff]
    %v2763 = vunpack.c.l.b16 %v2699
    %v2764 = vunpack.c.h.b16 %v2699
    %v2765 = vunpack.c.l.b16 %v2700
    %v2766 = vunpack.c.h.b16 %v2700
    %v2767 = vunpack.c.l.b16 %v2701
    %v2768 = vunpack.c.h.b16 %v2701
    %v2769 = vunpack.c.l.b16 %v2702
    %v2770 = vunpack.c.h.b16 %v2702
    %v2771 = vunpack.c.l.b16 %v2703
    %v2772 = vunpack.c.h.b16 %v2703
    %v2773 = vunpack.c.l.b16 %v2704
    %v2774 = vunpack.c.h.b16 %v2704
    %v2775 = vunpack.c.l.b16 %v2705
    %v2776 = vunpack.c.h.b16 %v2705
    %v2777 = vunpack.c.l.b16 %v2706
    %v2778 = vunpack.c.h.b16 %v2706
    %v2779 = vunpack.c.l.b16 %v2707
    %v2780 = vunpack.c.h.b16 %v2707
    %v2781 = vunpack.c.l.b16 %v2708
    %v2782 = vunpack.c.h.b16 %v2708
    %v2783 = vunpack.c.l.b16 %v2709
    %v2784 = vunpack.c.h.b16 %v2709
    %v2785 = vunpack.c.l.b16 %v2710
    %v2786 = vunpack.c.h.b16 %v2710
    %v2787 = vunpack.c.l.b16 %v2711
    %v2788 = vunpack.c.h.b16 %v2711
    %v2789 = vunpack.c.l.b16 %v2712
    %v2790 = vunpack.c.h.b16 %v2712
    %v2791 = vunpack.c.l.b16 %v2713
    %v2792 = vunpack.c.h.b16 %v2713
    %v2793 = vunpack.c.l.b16 %v2714
    %v2794 = vunpack.c.h.b16 %v2714
    %v2795 = vunpack.c.l.b16 %v2715
    %v2796 = vunpack.c.h.b16 %v2715
    %v2797 = vunpack.c.l.b16 %v2716
    %v2798 = vunpack.c.h.b16 %v2716
    %v2799 = vunpack.c.l.b16 %v2717
    %v2800 = vunpack.c.h.b16 %v2717
    %v2801 = vunpack.c.l.b16 %v2718
    %v2802 = vunpack.c.h.b16 %v2718
    %v2803 = vunpack.c.l.b16 %v2719
    %v2804 = vunpack.c.h.b16 %v2719
    %v2805 = vunpack.c.l.b16 %v2720
    %v2806 = vunpack.c.h.b16 %v2720
    %v2807 = vunpack.c.l.b16 %v2721
    %v2808 = vunpack.c.h.b16 %v2721
    %v2809 = vunpack.c.l.b16 %v2722
    %v2810 = vunpack.c.h.b16 %v2722
    %v2811 = vunpack.c.l.b16 %v2723
    %v2812 = vunpack.c.h.b16 %v2723
    %v2813 = vunpack.c.l.b16 %v2724
    %v2814 = vunpack.c.h.b16 %v2724
    %v2815 = vunpack.c.l.b16 %v2725
    %v2816 = vunpack.c.h.b16 %v2725
    %v2817 = vunpack.c.l.b16 %v2726
    %v2818 = vunpack.c.h.b16 %v2726
    %v2819 = vunpack.c.l.b16 %v2727
    %v2820 = vunpack.c.h.b16 %v2727
    %v2821 = vunpack.c.l.b16 %v2728
    %v2822 = vunpack.c.h.b16 %v2728
    %v2823 = vunpack.c.l.b16 %v2729
    %v2824 = vunpack.c.h.b16 %v2729
    %v2825 = vunpack.c.l.b16 %v2730
    %v2826 = vunpack.c.h.b16 %v2730
    %v2827 = vpack.c.b16 %v2767, %v2763
    %v2828 = vpack.c.b16 %v2768, %v2764
    %v2829 = vpack.c.b16 %v2769, %v2765
    %v2830 = vpack.c.b16 %v2770, %v2766
    %v2831 = vpack.c.b16 %v2775, %v2771
    %v2832 = vpack.c.b16 %v2776, %v2772
    %v2833 = vpack.c.b16 %v2777, %v2773
    %v2834 = vpack.c.b16 %v2778, %v2774
    %v2835 = vpack.c.b16 %v2783, %v2779
    %v2836 = vpack.c.b16 %v2784, %v2780
    %v2837 = vpack.c.b16 %v2785, %v2781
    %v2838 = vpack.c.b16 %v2786, %v2782
    %v2839 = vpack.c.b16 %v2791, %v2787
    %v2840 = vpack.c.b16 %v2792, %v2788
    %v2841 = vpack.c.b16 %v2793, %v2789
    %v2842 = vpack.c.b16 %v2794, %v2790
    %v2843 = vpack.c.b16 %v2799, %v2795
    %v2844 = vpack.c.b16 %v2800, %v2796
    %v2845 = vpack.c.b16 %v2801, %v2797
    %v2846 = vpack.c.b16 %v2802, %v2798
    %v2847 = vpack.c.b16 %v2807, %v2803
    %v2848 = vpack.c.b16 %v2808, %v2804
    %v2849 = vpack.c.b16 %v2809, %v2805
    %v2850 = vpack.c.b16 %v2810, %v2806
    %v2851 = vpack.c.b16 %v2815, %v2811
    %v2852 = vpack.c.b16 %v2816, %v2812
    %v2853 = vpack.c.b16 %v2817, %v2813
    %v2854 = vpack.c.b16 %v2818, %v2814
    %v2855 = vpack.c.b16 %v2823, %v2819
    %v2856 = vpack.c.b16 %v2824, %v2820
    %v2857 = vpack.c.b16 %v2825, %v2821
    %v2858 = vpack.c.b16 %v2826, %v2822
    %2891 = vmatprep.subr.bf16.mxu0 %v2828
    %2892 = vmatpush1.bf16.msra.mxu0 %v2827
    %2893 = vmatprep.subr.bf16.mxu0 %v2832
    %2894 = vmatpush1.bf16.msra.mxu0 %v2831
    %2895 = vmatprep.subr.bf16.mxu0 %v2836
    %2896 = vmatpush1.bf16.msra.mxu0 %v2835
    %2897 = vmatprep.subr.bf16.mxu0 %v2840
    %2898 = vmatpush1.bf16.msra.mxu0 %v2839
    %2899 = vmatprep.subr.bf16.mxu0 %v2844
    %2900 = vmatpush1.bf16.msra.mxu0 %v2843
    %2901 = vmatprep.subr.bf16.mxu0 %v2848
    %2902 = vmatpush1.bf16.msra.mxu0 %v2847
    %2903 = vmatprep.subr.bf16.mxu0 %v2852
    %2904 = vmatpush1.bf16.msra.mxu0 %v2851
    %2905 = vmatprep.subr.bf16.mxu0 %v2856
    %2906 = vmatpush1.bf16.msra.mxu0 %v2855
    %2907 = vmatprep.subr.bf16.mxu0 0
    %2908 = vmatpush1.bf16.msra.mxu0 0
    %2909 = vmatprep.subr.bf16.mxu0 0
    %2910 = vmatpush1.bf16.msra.mxu0 0
    %2911 = vmatprep.subr.bf16.mxu0 0
    %2912 = vmatpush1.bf16.msra.mxu0 0
    %2913 = vmatprep.subr.bf16.mxu0 0
    %2914 = vmatpush1.bf16.msra.mxu0 0
    %2915 = vmatprep.subr.bf16.mxu0 0
    %2916 = vmatpush1.bf16.msra.mxu0 0
    %2917 = vmatprep.subr.bf16.mxu0 0
    %2918 = vmatpush1.bf16.msra.mxu0 0
    %2919 = vmatprep.subr.bf16.mxu0 0
    %2920 = vmatpush1.bf16.msra.mxu0 0
    %2921 = vmatprep.subr.bf16.mxu0 0
    %2922 = vmatpush1.bf16.msra.mxu0 0
    %2923 = vmatprep.mubr.bf16.mxu0 0
    %2924 = vmatmul.mubr.bf16.gmra.mrb[0].mxu0 %v2698
    %v2925 = vpop.f32.mrb[0].mxu0
    %v2926 = vadd.f32 0.0, %v2925
    %v2927 = vpop.f32.mrb[0].mxu0
    %v2928 = vadd.f32 0.0, %v2927
    %v2929 = vpop.f32.mrb[0].mxu0
    %v2930 = vadd.f32 0.0, %v2929
    %v2931 = vpop.f32.mrb[0].mxu0
    %v2932 = vadd.f32 0.0, %v2931
    %2933 = vdwg.mxu0
    %2934 = vmatprep.subr.bf16.mxu0 %v2830
    %2935 = vmatpush1.bf16.msra.mxu0 %v2829
    %2936 = vmatprep.subr.bf16.mxu0 %v2834
    %2937 = vmatpush1.bf16.msra.mxu0 %v2833
    %2938 = vmatprep.subr.bf16.mxu0 %v2838
    %2939 = vmatpush1.bf16.msra.mxu0 %v2837
    %2940 = vmatprep.subr.bf16.mxu0 %v2842
    %2941 = vmatpush1.bf16.msra.mxu0 %v2841
    %2942 = vmatprep.subr.bf16.mxu0 %v2846
    %2943 = vmatpush1.bf16.msra.mxu0 %v2845
    %2944 = vmatprep.subr.bf16.mxu0 %v2850
    %2945 = vmatpush1.bf16.msra.mxu0 %v2849
    %2946 = vmatprep.subr.bf16.mxu0 %v2854
    %2947 = vmatpush1.bf16.msra.mxu0 %v2853
    %2948 = vmatprep.subr.bf16.mxu0 %v2858
    %2949 = vmatpush1.bf16.msra.mxu0 %v2857
    %2950 = vmatprep.subr.bf16.mxu0 0
    %2951 = vmatpush1.bf16.msra.mxu0 0
    %2952 = vmatprep.subr.bf16.mxu0 0
    %2953 = vmatpush1.bf16.msra.mxu0 0
    %2954 = vmatprep.subr.bf16.mxu0 0
    %2955 = vmatpush1.bf16.msra.mxu0 0
    %2956 = vmatprep.subr.bf16.mxu0 0
    %2957 = vmatpush1.bf16.msra.mxu0 0
    %2958 = vmatprep.subr.bf16.mxu0 0
    %2959 = vmatpush1.bf16.msra.mxu0 0
    %2960 = vmatprep.subr.bf16.mxu0 0
    %2961 = vmatpush1.bf16.msra.mxu0 0
    %2962 = vmatprep.subr.bf16.mxu0 0
    %2963 = vmatpush1.bf16.msra.mxu0 0
    %2964 = vmatprep.subr.bf16.mxu0 0
    %2965 = vmatpush1.bf16.msra.mxu0 0
    %2966 = vmatprep.mubr.bf16.mxu0 0
    %2967 = vmatmul.mubr.bf16.gmra.mrb[0].mxu0 %v2698
    %v2968 = vpop.f32.mrb[0].mxu0
    %v2969 = vadd.f32 0.0, %v2968
    %v2970 = vpop.f32.mrb[0].mxu0
    %v2971 = vadd.f32 0.0, %v2970
    %v2972 = vpop.f32.mrb[0].mxu0
    %v2973 = vadd.f32 0.0, %v2972
    %v2974 = vpop.f32.mrb[0].mxu0
    %v2975 = vadd.f32 0.0, %v2974
    %2976 = vdwg.mxu0
    %v2977 = vadd.f32 %v2647, %v2926
    %v2978 = vadd.f32 %v2649, %v2928
    %v2979 = vadd.f32 %v2690, %v2969
    %v2980 = vadd.f32 %v2692, %v2971
    %v2981 = vadd.f32 %v2651, %v2930
    %v2982 = vadd.f32 %v2653, %v2932
    %v2983 = vadd.f32 %v2694, %v2973
    %v2984 = vadd.f32 %v2696, %v2975
    %v2985 = vxor.u32 %v2977, 2147483648
    %v2986 = vxor.u32 %v2981, 2147483648
    %v2987 = vmul.f32 %v2985, 1.442695
    %v2988 = vpow.pop %v2987
    %v2989 = vmul.f32 %v2986, 1.442695
    %v2990 = vpow.pop %v2989
    %v2991 = vadd.f32 %v2988, 1.0
    %v2992 = vadd.f32 %v2990, 1.0
    %v2993 = vrcp.pop %v2991
    %v2994 = vmul.f32 1.0, %v2993
    %v2995 = vrcp.pop %v2992
    %v2996 = vmul.f32 1.0, %v2995
    %v2997 = vxor.u32 %v2978, 2147483648
    %v2998 = vxor.u32 %v2982, 2147483648
    %v2999 = vmul.f32 %v2997, 1.442695
    %v3000 = vpow.pop %v2999
    %v3001 = vmul.f32 %v2998, 1.442695
    %v3002 = vpow.pop %v3001
    %v3003 = vadd.f32 %v3000, 1.0
    %v3004 = vadd.f32 %v3002, 1.0
    %v3005 = vrcp.pop %v3003
    %v3006 = vmul.f32 1.0, %v3005
    %v3007 = vrcp.pop %v3004
    %v3008 = vmul.f32 1.0, %v3007
    %v3009 = vtanh.pop %v2979
    %v3010 = vtanh.pop %v2983
    %v3011 = vxor.u32 %v2980, 2147483648
    %v3012 = vxor.u32 %v2984, 2147483648
    %v3013 = vmul.f32 %v3011, 1.442695
    %v3014 = vpow.pop %v3013
    %v3015 = vmul.f32 %v3012, 1.442695
    %v3016 = vpow.pop %v3015
    %v3017 = vadd.f32 %v3014, 1.0
    %v3018 = vadd.f32 %v3016, 1.0
    %v3019 = vrcp.pop %v3017
    %v3020 = vmul.f32 1.0, %v3019
    %v3021 = vrcp.pop %v3018
    %v3022 = vmul.f32 1.0, %v3021
    %v3023 = vmul.f32 %v3006, %v2553
    %v3024 = vmul.f32 %v3008, %v2554
    %v3025 = vmul.f32 %v2994, %v3009
    %v3026 = vmul.f32 %v2996, %v3010
    %v3027 = vadd.f32 %v3023, %v3025
    %v3028 = vadd.f32 %v3024, %v3026
    %v3029 = vtanh.pop %v3027
    %v3030 = vtanh.pop %v3028
    %v3031 = vmul.f32 %v3020, %v3029
    %v3032 = vmul.f32 %v3022, %v3030
    %s3033 = scalar_lea.vmem [#allocation13], 80
    %3034 = vst [vmem:[%s3033] sm:$0xff] %v3031
    %3035 = vst [vmem:[%s3033 + $0x8] sm:$0xff] %v3032
    %3036 = vst [vmem:[#allocation2] sm:$0xff] %v3031
    %3037 = vst [vmem:[#allocation2 + $0x8] sm:$0xff] %v3032
    %3038 = vst [vmem:[#allocation3] sm:$0xff] %v3027
    %3039 = vst [vmem:[#allocation3 + $0x8] sm:$0xff] %v3028
    %v3040 = vld [vmem:[#allocation2] sm:$0xff]
    %v3041 = vld [vmem:[#allocation2 + $0x8] sm:$0xff]
    %v3042 = vld [vmem:[#allocation3] sm:$0xff]
    %v3043 = vld [vmem:[#allocation3 + $0x8] sm:$0xff]
    %s3044 = scalar_lea.vmem [#allocation4], 48
    %v3045 = vld [vmem:[%s3044] sm:$0xf]
    %v3046 = vld [vmem:[%s3044 + $0x4] sm:$0xf]
    %v3047 = vld [vmem:[#allocation7] sm:$0xff]
    %v3048 = vld [vmem:[#allocation7 + $0x8] sm:$0xff]
    %v3049 = vld [vmem:[#allocation7 + $0x10] sm:$0xff]
    %v3050 = vld [vmem:[#allocation7 + $0x18] sm:$0xff]
    %v3051 = vld [vmem:[#allocation9] sm:$0xf]
    %v3053 = vlaneseq
    %v3054 = vshrl.u32 %v3053, 7
    %v3055 = vsub.s32 0, %v3054
    %v3056 = vrot.slane %v3051, %v3055
    %v3057 = vlaneseq
    %v3058 = vshrl.u32 %v3057, 7
    %v3059 = vsub.s32 1, %v3058
    %v3060 = vrot.slane %v3051, %v3059
    %v3061 = vlaneseq
    %v3062 = vshrl.u32 %v3061, 7
    %v3063 = vsub.s32 2, %v3062
    %v3064 = vrot.slane %v3051, %v3063
    %v3065 = vlaneseq
    %v3066 = vshrl.u32 %v3065, 7
    %v3067 = vsub.s32 3, %v3066
    %v3068 = vrot.slane %v3051, %v3067
    %v3075 = vunpack.c.l.b16 %v3045
    %v3076 = vunpack.c.l.b16 %v3046
    %v3077 = vpack.c.b16 %v3076, %v3075
    %v3082 = vunpack.c.l.b16 %v3047
    %v3083 = vunpack.c.h.b16 %v3047
    %v3084 = vunpack.c.l.b16 %v3048
    %v3085 = vunpack.c.h.b16 %v3048
    %v3086 = vunpack.c.l.b16 %v3049
    %v3087 = vunpack.c.h.b16 %v3049
    %v3088 = vunpack.c.l.b16 %v3050
    %v3089 = vunpack.c.h.b16 %v3050
    %v3090 = vpack.c.b16 %v3086, %v3082
    %v3091 = vpack.c.b16 %v3087, %v3083
    %v3092 = vpack.c.b16 %v3088, %v3084
    %v3093 = vpack.c.b16 %v3089, %v3085
    %v3099 = vsel %vm164, %v3077, 0
    %3101 = vmatprep.subr.bf16.mxu0 %v3091
    %3102 = vmatpush1.bf16.msra.mxu0 %v3090
    %3103 = vmatprep.subr.bf16.mxu0 0
    %3104 = vmatpush1.bf16.msra.mxu0 0
    %3105 = vmatprep.subr.bf16.mxu0 0
    %3106 = vmatpush1.bf16.msra.mxu0 0
    %3107 = vmatprep.subr.bf16.mxu0 0
    %3108 = vmatpush1.bf16.msra.mxu0 0
    %3109 = vmatprep.subr.bf16.mxu0 0
    %3110 = vmatpush1.bf16.msra.mxu0 0
    %3111 = vmatprep.subr.bf16.mxu0 0
    %3112 = vmatpush1.bf16.msra.mxu0 0
    %3113 = vmatprep.subr.bf16.mxu0 0
    %3114 = vmatpush1.bf16.msra.mxu0 0
    %3115 = vmatprep.subr.bf16.mxu0 0
    %3116 = vmatpush1.bf16.msra.mxu0 0
    %3117 = vmatprep.subr.bf16.mxu0 0
    %3118 = vmatpush1.bf16.msra.mxu0 0
    %3119 = vmatprep.subr.bf16.mxu0 0
    %3120 = vmatpush1.bf16.msra.mxu0 0
    %3121 = vmatprep.subr.bf16.mxu0 0
    %3122 = vmatpush1.bf16.msra.mxu0 0
    %3123 = vmatprep.subr.bf16.mxu0 0
    %3124 = vmatpush1.bf16.msra.mxu0 0
    %3125 = vmatprep.subr.bf16.mxu0 0
    %3126 = vmatpush1.bf16.msra.mxu0 0
    %3127 = vmatprep.subr.bf16.mxu0 0
    %3128 = vmatpush1.bf16.msra.mxu0 0
    %3129 = vmatprep.subr.bf16.mxu0 0
    %3130 = vmatpush1.bf16.msra.mxu0 0
    %3131 = vmatprep.subr.bf16.mxu0 0
    %3132 = vmatpush1.bf16.msra.mxu0 0
    %3133 = vmatprep.mubr.bf16.mxu0 0
    %3134 = vmatmul.mubr.bf16.gmra.mrb[0].mxu0 %v3099
    %v3135 = vpop.f32.mrb[0].mxu0
    %v3136 = vadd.f32 %v3056, %v3135
    %v3137 = vpop.f32.mrb[0].mxu0
    %v3138 = vadd.f32 %v3060, %v3137
    %v3139 = vpop.f32.mrb[0].mxu0
    %v3140 = vadd.f32 %v3056, %v3139
    %v3141 = vpop.f32.mrb[0].mxu0
    %v3142 = vadd.f32 %v3060, %v3141
    %3143 = vdwg.mxu0
    %3144 = vmatprep.subr.bf16.mxu0 %v3093
    %3145 = vmatpush1.bf16.msra.mxu0 %v3092
    %3146 = vmatprep.subr.bf16.mxu0 0
    %3147 = vmatpush1.bf16.msra.mxu0 0
    %3148 = vmatprep.subr.bf16.mxu0 0
    %3149 = vmatpush1.bf16.msra.mxu0 0
    %3150 = vmatprep.subr.bf16.mxu0 0
    %3151 = vmatpush1.bf16.msra.mxu0 0
    %3152 = vmatprep.subr.bf16.mxu0 0
    %3153 = vmatpush1.bf16.msra.mxu0 0
    %3154 = vmatprep.subr.bf16.mxu0 0
    %3155 = vmatpush1.bf16.msra.mxu0 0
    %3156 = vmatprep.subr.bf16.mxu0 0
    %3157 = vmatpush1.bf16.msra.mxu0 0
    %3158 = vmatprep.subr.bf16.mxu0 0
    %3159 = vmatpush1.bf16.msra.mxu0 0
    %3160 = vmatprep.subr.bf16.mxu0 0
    %3161 = vmatpush1.bf16.msra.mxu0 0
    %3162 = vmatprep.subr.bf16.mxu0 0
    %3163 = vmatpush1.bf16.msra.mxu0 0
    %3164 = vmatprep.subr.bf16.mxu0 0
    %3165 = vmatpush1.bf16.msra.mxu0 0
    %3166 = vmatprep.subr.bf16.mxu0 0
    %3167 = vmatpush1.bf16.msra.mxu0 0
    %3168 = vmatprep.subr.bf16.mxu0 0
    %3169 = vmatpush1.bf16.msra.mxu0 0
    %3170 = vmatprep.subr.bf16.mxu0 0
    %3171 = vmatpush1.bf16.msra.mxu0 0
    %3172 = vmatprep.subr.bf16.mxu0 0
    %3173 = vmatpush1.bf16.msra.mxu0 0
    %3174 = vmatprep.subr.bf16.mxu0 0
    %3175 = vmatpush1.bf16.msra.mxu0 0
    %3176 = vmatprep.mubr.bf16.mxu0 0
    %3177 = vmatmul.mubr.bf16.gmra.mrb[0].mxu0 %v3099
    %v3178 = vpop.f32.mrb[0].mxu0
    %v3179 = vadd.f32 %v3064, %v3178
    %v3180 = vpop.f32.mrb[0].mxu0
    %v3181 = vadd.f32 %v3068, %v3180
    %v3182 = vpop.f32.mrb[0].mxu0
    %v3183 = vadd.f32 %v3064, %v3182
    %v3184 = vpop.f32.mrb[0].mxu0
    %v3185 = vadd.f32 %v3068, %v3184
    %3186 = vdwg.mxu0
    %v3187 = vpack.c.bf16 %v3041, %v3040
    %v3188 = vld [vmem:[#allocation10] sm:$0xff]
    %v3189 = vld [vmem:[#allocation10 + $0x8] sm:$0xff]
    %v3190 = vld [vmem:[#allocation10 + $0x10] sm:$0xff]
    %v3191 = vld [vmem:[#allocation10 + $0x18] sm:$0xff]
    %v3192 = vld [vmem:[#allocation10 + $0x20] sm:$0xff]
    %v3193 = vld [vmem:[#allocation10 + $0x28] sm:$0xff]
    %v3194 = vld [vmem:[#allocation10 + $0x30] sm:$0xff]
    %v3195 = vld [vmem:[#allocation10 + $0x38] sm:$0xff]
    %v3196 = vld [vmem:[#allocation10 + $0x40] sm:$0xff]
    %v3197 = vld [vmem:[#allocation10 + $0x48] sm:$0xff]
    %v3198 = vld [vmem:[#allocation10 + $0x50] sm:$0xff]
    %v3199 = vld [vmem:[#allocation10 + $0x58] sm:$0xff]
    %v3200 = vld [vmem:[#allocation10 + $0x60] sm:$0xff]
    %v3201 = vld [vmem:[#allocation10 + $0x68] sm:$0xff]
    %v3202 = vld [vmem:[#allocation10 + $0x70] sm:$0xff]
    %v3203 = vld [vmem:[#allocation10 + $0x78] sm:$0xff]
    %v3204 = vld [vmem:[#allocation10 + $0x80] sm:$0xff]
    %v3205 = vld [vmem:[#allocation10 + $0x88] sm:$0xff]
    %v3206 = vld [vmem:[#allocation10 + $0x90] sm:$0xff]
    %v3207 = vld [vmem:[#allocation10 + $0x98] sm:$0xff]
    %v3208 = vld [vmem:[#allocation10 + $0xa0] sm:$0xff]
    %v3209 = vld [vmem:[#allocation10 + $0xa8] sm:$0xff]
    %v3210 = vld [vmem:[#allocation10 + $0xb0] sm:$0xff]
    %v3211 = vld [vmem:[#allocation10 + $0xb8] sm:$0xff]
    %v3212 = vld [vmem:[#allocation10 + $0xc0] sm:$0xff]
    %v3213 = vld [vmem:[#allocation10 + $0xc8] sm:$0xff]
    %v3214 = vld [vmem:[#allocation10 + $0xd0] sm:$0xff]
    %v3215 = vld [vmem:[#allocation10 + $0xd8] sm:$0xff]
    %v3216 = vld [vmem:[#allocation10 + $0xe0] sm:$0xff]
    %v3217 = vld [vmem:[#allocation10 + $0xe8] sm:$0xff]
    %v3218 = vld [vmem:[#allocation10 + $0xf0] sm:$0xff]
    %v3219 = vld [vmem:[#allocation10 + $0xf8] sm:$0xff]
    %v3252 = vunpack.c.l.b16 %v3188
    %v3253 = vunpack.c.h.b16 %v3188
    %v3254 = vunpack.c.l.b16 %v3189
    %v3255 = vunpack.c.h.b16 %v3189
    %v3256 = vunpack.c.l.b16 %v3190
    %v3257 = vunpack.c.h.b16 %v3190
    %v3258 = vunpack.c.l.b16 %v3191
    %v3259 = vunpack.c.h.b16 %v3191
    %v3260 = vunpack.c.l.b16 %v3192
    %v3261 = vunpack.c.h.b16 %v3192
    %v3262 = vunpack.c.l.b16 %v3193
    %v3263 = vunpack.c.h.b16 %v3193
    %v3264 = vunpack.c.l.b16 %v3194
    %v3265 = vunpack.c.h.b16 %v3194
    %v3266 = vunpack.c.l.b16 %v3195
    %v3267 = vunpack.c.h.b16 %v3195
    %v3268 = vunpack.c.l.b16 %v3196
    %v3269 = vunpack.c.h.b16 %v3196
    %v3270 = vunpack.c.l.b16 %v3197
    %v3271 = vunpack.c.h.b16 %v3197
    %v3272 = vunpack.c.l.b16 %v3198
    %v3273 = vunpack.c.h.b16 %v3198
    %v3274 = vunpack.c.l.b16 %v3199
    %v3275 = vunpack.c.h.b16 %v3199
    %v3276 = vunpack.c.l.b16 %v3200
    %v3277 = vunpack.c.h.b16 %v3200
    %v3278 = vunpack.c.l.b16 %v3201
    %v3279 = vunpack.c.h.b16 %v3201
    %v3280 = vunpack.c.l.b16 %v3202
    %v3281 = vunpack.c.h.b16 %v3202
    %v3282 = vunpack.c.l.b16 %v3203
    %v3283 = vunpack.c.h.b16 %v3203
    %v3284 = vunpack.c.l.b16 %v3204
    %v3285 = vunpack.c.h.b16 %v3204
    %v3286 = vunpack.c.l.b16 %v3205
    %v3287 = vunpack.c.h.b16 %v3205
    %v3288 = vunpack.c.l.b16 %v3206
    %v3289 = vunpack.c.h.b16 %v3206
    %v3290 = vunpack.c.l.b16 %v3207
    %v3291 = vunpack.c.h.b16 %v3207
    %v3292 = vunpack.c.l.b16 %v3208
    %v3293 = vunpack.c.h.b16 %v3208
    %v3294 = vunpack.c.l.b16 %v3209
    %v3295 = vunpack.c.h.b16 %v3209
    %v3296 = vunpack.c.l.b16 %v3210
    %v3297 = vunpack.c.h.b16 %v3210
    %v3298 = vunpack.c.l.b16 %v3211
    %v3299 = vunpack.c.h.b16 %v3211
    %v3300 = vunpack.c.l.b16 %v3212
    %v3301 = vunpack.c.h.b16 %v3212
    %v3302 = vunpack.c.l.b16 %v3213
    %v3303 = vunpack.c.h.b16 %v3213
    %v3304 = vunpack.c.l.b16 %v3214
    %v3305 = vunpack.c.h.b16 %v3214
    %v3306 = vunpack.c.l.b16 %v3215
    %v3307 = vunpack.c.h.b16 %v3215
    %v3308 = vunpack.c.l.b16 %v3216
    %v3309 = vunpack.c.h.b16 %v3216
    %v3310 = vunpack.c.l.b16 %v3217
    %v3311 = vunpack.c.h.b16 %v3217
    %v3312 = vunpack.c.l.b16 %v3218
    %v3313 = vunpack.c.h.b16 %v3218
    %v3314 = vunpack.c.l.b16 %v3219
    %v3315 = vunpack.c.h.b16 %v3219
    %v3316 = vpack.c.b16 %v3256, %v3252
    %v3317 = vpack.c.b16 %v3257, %v3253
    %v3318 = vpack.c.b16 %v3258, %v3254
    %v3319 = vpack.c.b16 %v3259, %v3255
    %v3320 = vpack.c.b16 %v3264, %v3260
    %v3321 = vpack.c.b16 %v3265, %v3261
    %v3322 = vpack.c.b16 %v3266, %v3262
    %v3323 = vpack.c.b16 %v3267, %v3263
    %v3324 = vpack.c.b16 %v3272, %v3268
    %v3325 = vpack.c.b16 %v3273, %v3269
    %v3326 = vpack.c.b16 %v3274, %v3270
    %v3327 = vpack.c.b16 %v3275, %v3271
    %v3328 = vpack.c.b16 %v3280, %v3276
    %v3329 = vpack.c.b16 %v3281, %v3277
    %v3330 = vpack.c.b16 %v3282, %v3278
    %v3331 = vpack.c.b16 %v3283, %v3279
    %v3332 = vpack.c.b16 %v3288, %v3284
    %v3333 = vpack.c.b16 %v3289, %v3285
    %v3334 = vpack.c.b16 %v3290, %v3286
    %v3335 = vpack.c.b16 %v3291, %v3287
    %v3336 = vpack.c.b16 %v3296, %v3292
    %v3337 = vpack.c.b16 %v3297, %v3293
    %v3338 = vpack.c.b16 %v3298, %v3294
    %v3339 = vpack.c.b16 %v3299, %v3295
    %v3340 = vpack.c.b16 %v3304, %v3300
    %v3341 = vpack.c.b16 %v3305, %v3301
    %v3342 = vpack.c.b16 %v3306, %v3302
    %v3343 = vpack.c.b16 %v3307, %v3303
    %v3344 = vpack.c.b16 %v3312, %v3308
    %v3345 = vpack.c.b16 %v3313, %v3309
    %v3346 = vpack.c.b16 %v3314, %v3310
    %v3347 = vpack.c.b16 %v3315, %v3311
    %3380 = vmatprep.subr.bf16.mxu0 %v3317
    %3381 = vmatpush1.bf16.msra.mxu0 %v3316
    %3382 = vmatprep.subr.bf16.mxu0 %v3321
    %3383 = vmatpush1.bf16.msra.mxu0 %v3320
    %3384 = vmatprep.subr.bf16.mxu0 %v3325
    %3385 = vmatpush1.bf16.msra.mxu0 %v3324
    %3386 = vmatprep.subr.bf16.mxu0 %v3329
    %3387 = vmatpush1.bf16.msra.mxu0 %v3328
    %3388 = vmatprep.subr.bf16.mxu0 %v3333
    %3389 = vmatpush1.bf16.msra.mxu0 %v3332
    %3390 = vmatprep.subr.bf16.mxu0 %v3337
    %3391 = vmatpush1.bf16.msra.mxu0 %v3336
    %3392 = vmatprep.subr.bf16.mxu0 %v3341
    %3393 = vmatpush1.bf16.msra.mxu0 %v3340
    %3394 = vmatprep.subr.bf16.mxu0 %v3345
    %3395 = vmatpush1.bf16.msra.mxu0 %v3344
    %3396 = vmatprep.subr.bf16.mxu0 0
    %3397 = vmatpush1.bf16.msra.mxu0 0
    %3398 = vmatprep.subr.bf16.mxu0 0
    %3399 = vmatpush1.bf16.msra.mxu0 0
    %3400 = vmatprep.subr.bf16.mxu0 0
    %3401 = vmatpush1.bf16.msra.mxu0 0
    %3402 = vmatprep.subr.bf16.mxu0 0
    %3403 = vmatpush1.bf16.msra.mxu0 0
    %3404 = vmatprep.subr.bf16.mxu0 0
    %3405 = vmatpush1.bf16.msra.mxu0 0
    %3406 = vmatprep.subr.bf16.mxu0 0
    %3407 = vmatpush1.bf16.msra.mxu0 0
    %3408 = vmatprep.subr.bf16.mxu0 0
    %3409 = vmatpush1.bf16.msra.mxu0 0
    %3410 = vmatprep.subr.bf16.mxu0 0
    %3411 = vmatpush1.bf16.msra.mxu0 0
    %3412 = vmatprep.mubr.bf16.mxu0 0
    %3413 = vmatmul.mubr.bf16.gmra.mrb[0].mxu0 %v3187
    %v3414 = vpop.f32.mrb[0].mxu0
    %v3415 = vadd.f32 0.0, %v3414
    %v3416 = vpop.f32.mrb[0].mxu0
    %v3417 = vadd.f32 0.0, %v3416
    %v3418 = vpop.f32.mrb[0].mxu0
    %v3419 = vadd.f32 0.0, %v3418
    %v3420 = vpop.f32.mrb[0].mxu0
    %v3421 = vadd.f32 0.0, %v3420
    %3422 = vdwg.mxu0
    %3423 = vmatprep.subr.bf16.mxu0 %v3319
    %3424 = vmatpush1.bf16.msra.mxu0 %v3318
    %3425 = vmatprep.subr.bf16.mxu0 %v3323
    %3426 = vmatpush1.bf16.msra.mxu0 %v3322
    %3427 = vmatprep.subr.bf16.mxu0 %v3327
    %3428 = vmatpush1.bf16.msra.mxu0 %v3326
    %3429 = vmatprep.subr.bf16.mxu0 %v3331
    %3430 = vmatpush1.bf16.msra.mxu0 %v3330
    %3431 = vmatprep.subr.bf16.mxu0 %v3335
    %3432 = vmatpush1.bf16.msra.mxu0 %v3334
    %3433 = vmatprep.subr.bf16.mxu0 %v3339
    %3434 = vmatpush1.bf16.msra.mxu0 %v3338
    %3435 = vmatprep.subr.bf16.mxu0 %v3343
    %3436 = vmatpush1.bf16.msra.mxu0 %v3342
    %3437 = vmatprep.subr.bf16.mxu0 %v3347
    %3438 = vmatpush1.bf16.msra.mxu0 %v3346
    %3439 = vmatprep.subr.bf16.mxu0 0
    %3440 = vmatpush1.bf16.msra.mxu0 0
    %3441 = vmatprep.subr.bf16.mxu0 0
    %3442 = vmatpush1.bf16.msra.mxu0 0
    %3443 = vmatprep.subr.bf16.mxu0 0
    %3444 = vmatpush1.bf16.msra.mxu0 0
    %3445 = vmatprep.subr.bf16.mxu0 0
    %3446 = vmatpush1.bf16.msra.mxu0 0
    %3447 = vmatprep.subr.bf16.mxu0 0
    %3448 = vmatpush1.bf16.msra.mxu0 0
    %3449 = vmatprep.subr.bf16.mxu0 0
    %3450 = vmatpush1.bf16.msra.mxu0 0
    %3451 = vmatprep.subr.bf16.mxu0 0
    %3452 = vmatpush1.bf16.msra.mxu0 0
    %3453 = vmatprep.subr.bf16.mxu0 0
    %3454 = vmatpush1.bf16.msra.mxu0 0
    %3455 = vmatprep.mubr.bf16.mxu0 0
    %3456 = vmatmul.mubr.bf16.gmra.mrb[0].mxu0 %v3187
    %v3457 = vpop.f32.mrb[0].mxu0
    %v3458 = vadd.f32 0.0, %v3457
    %v3459 = vpop.f32.mrb[0].mxu0
    %v3460 = vadd.f32 0.0, %v3459
    %v3461 = vpop.f32.mrb[0].mxu0
    %v3462 = vadd.f32 0.0, %v3461
    %v3463 = vpop.f32.mrb[0].mxu0
    %v3464 = vadd.f32 0.0, %v3463
    %3465 = vdwg.mxu0
    %v3466 = vadd.f32 %v3136, %v3415
    %v3467 = vadd.f32 %v3138, %v3417
    %v3468 = vadd.f32 %v3179, %v3458
    %v3469 = vadd.f32 %v3181, %v3460
    %v3470 = vadd.f32 %v3140, %v3419
    %v3471 = vadd.f32 %v3142, %v3421
    %v3472 = vadd.f32 %v3183, %v3462
    %v3473 = vadd.f32 %v3185, %v3464
    %v3474 = vxor.u32 %v3466, 2147483648
    %v3475 = vxor.u32 %v3470, 2147483648
    %v3476 = vmul.f32 %v3474, 1.442695
    %v3477 = vpow.pop %v3476
    %v3478 = vmul.f32 %v3475, 1.442695
    %v3479 = vpow.pop %v3478
    %v3480 = vadd.f32 %v3477, 1.0
    %v3481 = vadd.f32 %v3479, 1.0
    %v3482 = vrcp.pop %v3480
    %v3483 = vmul.f32 1.0, %v3482
    %v3484 = vrcp.pop %v3481
    %v3485 = vmul.f32 1.0, %v3484
    %v3486 = vxor.u32 %v3467, 2147483648
    %v3487 = vxor.u32 %v3471, 2147483648
    %v3488 = vmul.f32 %v3486, 1.442695
    %v3489 = vpow.pop %v3488
    %v3490 = vmul.f32 %v3487, 1.442695
    %v3491 = vpow.pop %v3490
    %v3492 = vadd.f32 %v3489, 1.0
    %v3493 = vadd.f32 %v3491, 1.0
    %v3494 = vrcp.pop %v3492
    %v3495 = vmul.f32 1.0, %v3494
    %v3496 = vrcp.pop %v3493
    %v3497 = vmul.f32 1.0, %v3496
    %v3498 = vtanh.pop %v3468
    %v3499 = vtanh.pop %v3472
    %v3500 = vxor.u32 %v3469, 2147483648
    %v3501 = vxor.u32 %v3473, 2147483648
    %v3502 = vmul.f32 %v3500, 1.442695
    %v3503 = vpow.pop %v3502
    %v3504 = vmul.f32 %v3501, 1.442695
    %v3505 = vpow.pop %v3504
    %v3506 = vadd.f32 %v3503, 1.0
    %v3507 = vadd.f32 %v3505, 1.0
    %v3508 = vrcp.pop %v3506
    %v3509 = vmul.f32 1.0, %v3508
    %v3510 = vrcp.pop %v3507
    %v3511 = vmul.f32 1.0, %v3510
    %v3512 = vmul.f32 %v3495, %v3042
    %v3513 = vmul.f32 %v3497, %v3043
    %v3514 = vmul.f32 %v3483, %v3498
    %v3515 = vmul.f32 %v3485, %v3499
    %v3516 = vadd.f32 %v3512, %v3514
    %v3517 = vadd.f32 %v3513, %v3515
    %v3518 = vtanh.pop %v3516
    %v3519 = vtanh.pop %v3517
    %v3520 = vmul.f32 %v3509, %v3518
    %v3521 = vmul.f32 %v3511, %v3519
    %s3522 = scalar_lea.vmem [#allocation13], 96
    %3523 = vst [vmem:[%s3522] sm:$0xff] %v3520
    %3524 = vst [vmem:[%s3522 + $0x8] sm:$0xff] %v3521
    %3525 = vst [vmem:[#allocation2] sm:$0xff] %v3520
    %3526 = vst [vmem:[#allocation2 + $0x8] sm:$0xff] %v3521
    %3527 = vst [vmem:[#allocation3] sm:$0xff] %v3516
    %3528 = vst [vmem:[#allocation3 + $0x8] sm:$0xff] %v3517
    %v3529 = vld [vmem:[#allocation2] sm:$0xff]
    %v3530 = vld [vmem:[#allocation2 + $0x8] sm:$0xff]
    %v3531 = vld [vmem:[#allocation3] sm:$0xff]
    %v3532 = vld [vmem:[#allocation3 + $0x8] sm:$0xff]
    %s3533 = scalar_lea.vmem [#allocation4], 56
    %v3534 = vld [vmem:[%s3533] sm:$0xf]
    %v3535 = vld [vmem:[%s3533 + $0x4] sm:$0xf]
    %v3536 = vld [vmem:[#allocation7] sm:$0xff]
    %v3537 = vld [vmem:[#allocation7 + $0x8] sm:$0xff]
    %v3538 = vld [vmem:[#allocation7 + $0x10] sm:$0xff]
    %v3539 = vld [vmem:[#allocation7 + $0x18] sm:$0xff]
    %v3540 = vld [vmem:[#allocation9] sm:$0xf]
    %v3542 = vlaneseq
    %v3543 = vshrl.u32 %v3542, 7
    %v3544 = vsub.s32 0, %v3543
    %v3545 = vrot.slane %v3540, %v3544
    %v3546 = vlaneseq
    %v3547 = vshrl.u32 %v3546, 7
    %v3548 = vsub.s32 1, %v3547
    %v3549 = vrot.slane %v3540, %v3548
    %v3550 = vlaneseq
    %v3551 = vshrl.u32 %v3550, 7
    %v3552 = vsub.s32 2, %v3551
    %v3553 = vrot.slane %v3540, %v3552
    %v3554 = vlaneseq
    %v3555 = vshrl.u32 %v3554, 7
    %v3556 = vsub.s32 3, %v3555
    %v3557 = vrot.slane %v3540, %v3556
    %v3564 = vunpack.c.l.b16 %v3534
    %v3565 = vunpack.c.l.b16 %v3535
    %v3566 = vpack.c.b16 %v3565, %v3564
    %v3571 = vunpack.c.l.b16 %v3536
    %v3572 = vunpack.c.h.b16 %v3536
    %v3573 = vunpack.c.l.b16 %v3537
    %v3574 = vunpack.c.h.b16 %v3537
    %v3575 = vunpack.c.l.b16 %v3538
    %v3576 = vunpack.c.h.b16 %v3538
    %v3577 = vunpack.c.l.b16 %v3539
    %v3578 = vunpack.c.h.b16 %v3539
    %v3579 = vpack.c.b16 %v3575, %v3571
    %v3580 = vpack.c.b16 %v3576, %v3572
    %v3581 = vpack.c.b16 %v3577, %v3573
    %v3582 = vpack.c.b16 %v3578, %v3574
    %v3588 = vsel %vm164, %v3566, 0
    %3590 = vmatprep.subr.bf16.mxu0 %v3580
    %3591 = vmatpush1.bf16.msra.mxu0 %v3579
    %3592 = vmatprep.subr.bf16.mxu0 0
    %3593 = vmatpush1.bf16.msra.mxu0 0
    %3594 = vmatprep.subr.bf16.mxu0 0
    %3595 = vmatpush1.bf16.msra.mxu0 0
    %3596 = vmatprep.subr.bf16.mxu0 0
    %3597 = vmatpush1.bf16.msra.mxu0 0
    %3598 = vmatprep.subr.bf16.mxu0 0
    %3599 = vmatpush1.bf16.msra.mxu0 0
    %3600 = vmatprep.subr.bf16.mxu0 0
    %3601 = vmatpush1.bf16.msra.mxu0 0
    %3602 = vmatprep.subr.bf16.mxu0 0
    %3603 = vmatpush1.bf16.msra.mxu0 0
    %3604 = vmatprep.subr.bf16.mxu0 0
    %3605 = vmatpush1.bf16.msra.mxu0 0
    %3606 = vmatprep.subr.bf16.mxu0 0
    %3607 = vmatpush1.bf16.msra.mxu0 0
    %3608 = vmatprep.subr.bf16.mxu0 0
    %3609 = vmatpush1.bf16.msra.mxu0 0
    %3610 = vmatprep.subr.bf16.mxu0 0
    %3611 = vmatpush1.bf16.msra.mxu0 0
    %3612 = vmatprep.subr.bf16.mxu0 0
    %3613 = vmatpush1.bf16.msra.mxu0 0
    %3614 = vmatprep.subr.bf16.mxu0 0
    %3615 = vmatpush1.bf16.msra.mxu0 0
    %3616 = vmatprep.subr.bf16.mxu0 0
    %3617 = vmatpush1.bf16.msra.mxu0 0
    %3618 = vmatprep.subr.bf16.mxu0 0
    %3619 = vmatpush1.bf16.msra.mxu0 0
    %3620 = vmatprep.subr.bf16.mxu0 0
    %3621 = vmatpush1.bf16.msra.mxu0 0
    %3622 = vmatprep.mubr.bf16.mxu0 0
    %3623 = vmatmul.mubr.bf16.gmra.mrb[0].mxu0 %v3588
    %v3624 = vpop.f32.mrb[0].mxu0
    %v3625 = vadd.f32 %v3545, %v3624
    %v3626 = vpop.f32.mrb[0].mxu0
    %v3627 = vadd.f32 %v3549, %v3626
    %v3628 = vpop.f32.mrb[0].mxu0
    %v3629 = vadd.f32 %v3545, %v3628
    %v3630 = vpop.f32.mrb[0].mxu0
    %v3631 = vadd.f32 %v3549, %v3630
    %3632 = vdwg.mxu0
    %3633 = vmatprep.subr.bf16.mxu0 %v3582
    %3634 = vmatpush1.bf16.msra.mxu0 %v3581
    %3635 = vmatprep.subr.bf16.mxu0 0
    %3636 = vmatpush1.bf16.msra.mxu0 0
    %3637 = vmatprep.subr.bf16.mxu0 0
    %3638 = vmatpush1.bf16.msra.mxu0 0
    %3639 = vmatprep.subr.bf16.mxu0 0
    %3640 = vmatpush1.bf16.msra.mxu0 0
    %3641 = vmatprep.subr.bf16.mxu0 0
    %3642 = vmatpush1.bf16.msra.mxu0 0
    %3643 = vmatprep.subr.bf16.mxu0 0
    %3644 = vmatpush1.bf16.msra.mxu0 0
    %3645 = vmatprep.subr.bf16.mxu0 0
    %3646 = vmatpush1.bf16.msra.mxu0 0
    %3647 = vmatprep.subr.bf16.mxu0 0
    %3648 = vmatpush1.bf16.msra.mxu0 0
    %3649 = vmatprep.subr.bf16.mxu0 0
    %3650 = vmatpush1.bf16.msra.mxu0 0
    %3651 = vmatprep.subr.bf16.mxu0 0
    %3652 = vmatpush1.bf16.msra.mxu0 0
    %3653 = vmatprep.subr.bf16.mxu0 0
    %3654 = vmatpush1.bf16.msra.mxu0 0
    %3655 = vmatprep.subr.bf16.mxu0 0
    %3656 = vmatpush1.bf16.msra.mxu0 0
    %3657 = vmatprep.subr.bf16.mxu0 0
    %3658 = vmatpush1.bf16.msra.mxu0 0
    %3659 = vmatprep.subr.bf16.mxu0 0
    %3660 = vmatpush1.bf16.msra.mxu0 0
    %3661 = vmatprep.subr.bf16.mxu0 0
    %3662 = vmatpush1.bf16.msra.mxu0 0
    %3663 = vmatprep.subr.bf16.mxu0 0
    %3664 = vmatpush1.bf16.msra.mxu0 0
    %3665 = vmatprep.mubr.bf16.mxu0 0
    %3666 = vmatmul.mubr.bf16.gmra.mrb[0].mxu0 %v3588
    %v3667 = vpop.f32.mrb[0].mxu0
    %v3668 = vadd.f32 %v3553, %v3667
    %v3669 = vpop.f32.mrb[0].mxu0
    %v3670 = vadd.f32 %v3557, %v3669
    %v3671 = vpop.f32.mrb[0].mxu0
    %v3672 = vadd.f32 %v3553, %v3671
    %v3673 = vpop.f32.mrb[0].mxu0
    %v3674 = vadd.f32 %v3557, %v3673
    %3675 = vdwg.mxu0
    %v3676 = vpack.c.bf16 %v3530, %v3529
    %v3677 = vld [vmem:[#allocation10] sm:$0xff]
    %v3678 = vld [vmem:[#allocation10 + $0x8] sm:$0xff]
    %v3679 = vld [vmem:[#allocation10 + $0x10] sm:$0xff]
    %v3680 = vld [vmem:[#allocation10 + $0x18] sm:$0xff]
    %v3681 = vld [vmem:[#allocation10 + $0x20] sm:$0xff]
    %v3682 = vld [vmem:[#allocation10 + $0x28] sm:$0xff]
    %v3683 = vld [vmem:[#allocation10 + $0x30] sm:$0xff]
    %v3684 = vld [vmem:[#allocation10 + $0x38] sm:$0xff]
    %v3685 = vld [vmem:[#allocation10 + $0x40] sm:$0xff]
    %v3686 = vld [vmem:[#allocation10 + $0x48] sm:$0xff]
    %v3687 = vld [vmem:[#allocation10 + $0x50] sm:$0xff]
    %v3688 = vld [vmem:[#allocation10 + $0x58] sm:$0xff]
    %v3689 = vld [vmem:[#allocation10 + $0x60] sm:$0xff]
    %v3690 = vld [vmem:[#allocation10 + $0x68] sm:$0xff]
    %v3691 = vld [vmem:[#allocation10 + $0x70] sm:$0xff]
    %v3692 = vld [vmem:[#allocation10 + $0x78] sm:$0xff]
    %v3693 = vld [vmem:[#allocation10 + $0x80] sm:$0xff]
    %v3694 = vld [vmem:[#allocation10 + $0x88] sm:$0xff]
    %v3695 = vld [vmem:[#allocation10 + $0x90] sm:$0xff]
    %v3696 = vld [vmem:[#allocation10 + $0x98] sm:$0xff]
    %v3697 = vld [vmem:[#allocation10 + $0xa0] sm:$0xff]
    %v3698 = vld [vmem:[#allocation10 + $0xa8] sm:$0xff]
    %v3699 = vld [vmem:[#allocation10 + $0xb0] sm:$0xff]
    %v3700 = vld [vmem:[#allocation10 + $0xb8] sm:$0xff]
    %v3701 = vld [vmem:[#allocation10 + $0xc0] sm:$0xff]
    %v3702 = vld [vmem:[#allocation10 + $0xc8] sm:$0xff]
    %v3703 = vld [vmem:[#allocation10 + $0xd0] sm:$0xff]
    %v3704 = vld [vmem:[#allocation10 + $0xd8] sm:$0xff]
    %v3705 = vld [vmem:[#allocation10 + $0xe0] sm:$0xff]
    %v3706 = vld [vmem:[#allocation10 + $0xe8] sm:$0xff]
    %v3707 = vld [vmem:[#allocation10 + $0xf0] sm:$0xff]
    %v3708 = vld [vmem:[#allocation10 + $0xf8] sm:$0xff]
    %v3741 = vunpack.c.l.b16 %v3677
    %v3742 = vunpack.c.h.b16 %v3677
    %v3743 = vunpack.c.l.b16 %v3678
    %v3744 = vunpack.c.h.b16 %v3678
    %v3745 = vunpack.c.l.b16 %v3679
    %v3746 = vunpack.c.h.b16 %v3679
    %v3747 = vunpack.c.l.b16 %v3680
    %v3748 = vunpack.c.h.b16 %v3680
    %v3749 = vunpack.c.l.b16 %v3681
    %v3750 = vunpack.c.h.b16 %v3681
    %v3751 = vunpack.c.l.b16 %v3682
    %v3752 = vunpack.c.h.b16 %v3682
    %v3753 = vunpack.c.l.b16 %v3683
    %v3754 = vunpack.c.h.b16 %v3683
    %v3755 = vunpack.c.l.b16 %v3684
    %v3756 = vunpack.c.h.b16 %v3684
    %v3757 = vunpack.c.l.b16 %v3685
    %v3758 = vunpack.c.h.b16 %v3685
    %v3759 = vunpack.c.l.b16 %v3686
    %v3760 = vunpack.c.h.b16 %v3686
    %v3761 = vunpack.c.l.b16 %v3687
    %v3762 = vunpack.c.h.b16 %v3687
    %v3763 = vunpack.c.l.b16 %v3688
    %v3764 = vunpack.c.h.b16 %v3688
    %v3765 = vunpack.c.l.b16 %v3689
    %v3766 = vunpack.c.h.b16 %v3689
    %v3767 = vunpack.c.l.b16 %v3690
    %v3768 = vunpack.c.h.b16 %v3690
    %v3769 = vunpack.c.l.b16 %v3691
    %v3770 = vunpack.c.h.b16 %v3691
    %v3771 = vunpack.c.l.b16 %v3692
    %v3772 = vunpack.c.h.b16 %v3692
    %v3773 = vunpack.c.l.b16 %v3693
    %v3774 = vunpack.c.h.b16 %v3693
    %v3775 = vunpack.c.l.b16 %v3694
    %v3776 = vunpack.c.h.b16 %v3694
    %v3777 = vunpack.c.l.b16 %v3695
    %v3778 = vunpack.c.h.b16 %v3695
    %v3779 = vunpack.c.l.b16 %v3696
    %v3780 = vunpack.c.h.b16 %v3696
    %v3781 = vunpack.c.l.b16 %v3697
    %v3782 = vunpack.c.h.b16 %v3697
    %v3783 = vunpack.c.l.b16 %v3698
    %v3784 = vunpack.c.h.b16 %v3698
    %v3785 = vunpack.c.l.b16 %v3699
    %v3786 = vunpack.c.h.b16 %v3699
    %v3787 = vunpack.c.l.b16 %v3700
    %v3788 = vunpack.c.h.b16 %v3700
    %v3789 = vunpack.c.l.b16 %v3701
    %v3790 = vunpack.c.h.b16 %v3701
    %v3791 = vunpack.c.l.b16 %v3702
    %v3792 = vunpack.c.h.b16 %v3702
    %v3793 = vunpack.c.l.b16 %v3703
    %v3794 = vunpack.c.h.b16 %v3703
    %v3795 = vunpack.c.l.b16 %v3704
    %v3796 = vunpack.c.h.b16 %v3704
    %v3797 = vunpack.c.l.b16 %v3705
    %v3798 = vunpack.c.h.b16 %v3705
    %v3799 = vunpack.c.l.b16 %v3706
    %v3800 = vunpack.c.h.b16 %v3706
    %v3801 = vunpack.c.l.b16 %v3707
    %v3802 = vunpack.c.h.b16 %v3707
    %v3803 = vunpack.c.l.b16 %v3708
    %v3804 = vunpack.c.h.b16 %v3708
    %v3805 = vpack.c.b16 %v3745, %v3741
    %v3806 = vpack.c.b16 %v3746, %v3742
    %v3807 = vpack.c.b16 %v3747, %v3743
    %v3808 = vpack.c.b16 %v3748, %v3744
    %v3809 = vpack.c.b16 %v3753, %v3749
    %v3810 = vpack.c.b16 %v3754, %v3750
    %v3811 = vpack.c.b16 %v3755, %v3751
    %v3812 = vpack.c.b16 %v3756, %v3752
    %v3813 = vpack.c.b16 %v3761, %v3757
    %v3814 = vpack.c.b16 %v3762, %v3758
    %v3815 = vpack.c.b16 %v3763, %v3759
    %v3816 = vpack.c.b16 %v3764, %v3760
    %v3817 = vpack.c.b16 %v3769, %v3765
    %v3818 = vpack.c.b16 %v3770, %v3766
    %v3819 = vpack.c.b16 %v3771, %v3767
    %v3820 = vpack.c.b16 %v3772, %v3768
    %v3821 = vpack.c.b16 %v3777, %v3773
    %v3822 = vpack.c.b16 %v3778, %v3774
    %v3823 = vpack.c.b16 %v3779, %v3775
    %v3824 = vpack.c.b16 %v3780, %v3776
    %v3825 = vpack.c.b16 %v3785, %v3781
    %v3826 = vpack.c.b16 %v3786, %v3782
    %v3827 = vpack.c.b16 %v3787, %v3783
    %v3828 = vpack.c.b16 %v3788, %v3784
    %v3829 = vpack.c.b16 %v3793, %v3789
    %v3830 = vpack.c.b16 %v3794, %v3790
    %v3831 = vpack.c.b16 %v3795, %v3791
    %v3832 = vpack.c.b16 %v3796, %v3792
    %v3833 = vpack.c.b16 %v3801, %v3797
    %v3834 = vpack.c.b16 %v3802, %v3798
    %v3835 = vpack.c.b16 %v3803, %v3799
    %v3836 = vpack.c.b16 %v3804, %v3800
    %3869 = vmatprep.subr.bf16.mxu0 %v3806
    %3870 = vmatpush1.bf16.msra.mxu0 %v3805
    %3871 = vmatprep.subr.bf16.mxu0 %v3810
    %3872 = vmatpush1.bf16.msra.mxu0 %v3809
    %3873 = vmatprep.subr.bf16.mxu0 %v3814
    %3874 = vmatpush1.bf16.msra.mxu0 %v3813
    %3875 = vmatprep.subr.bf16.mxu0 %v3818
    %3876 = vmatpush1.bf16.msra.mxu0 %v3817
    %3877 = vmatprep.subr.bf16.mxu0 %v3822
    %3878 = vmatpush1.bf16.msra.mxu0 %v3821
    %3879 = vmatprep.subr.bf16.mxu0 %v3826
    %3880 = vmatpush1.bf16.msra.mxu0 %v3825
    %3881 = vmatprep.subr.bf16.mxu0 %v3830
    %3882 = vmatpush1.bf16.msra.mxu0 %v3829
    %3883 = vmatprep.subr.bf16.mxu0 %v3834
    %3884 = vmatpush1.bf16.msra.mxu0 %v3833
    %3885 = vmatprep.subr.bf16.mxu0 0
    %3886 = vmatpush1.bf16.msra.mxu0 0
    %3887 = vmatprep.subr.bf16.mxu0 0
    %3888 = vmatpush1.bf16.msra.mxu0 0
    %3889 = vmatprep.subr.bf16.mxu0 0
    %3890 = vmatpush1.bf16.msra.mxu0 0
    %3891 = vmatprep.subr.bf16.mxu0 0
    %3892 = vmatpush1.bf16.msra.mxu0 0
    %3893 = vmatprep.subr.bf16.mxu0 0
    %3894 = vmatpush1.bf16.msra.mxu0 0
    %3895 = vmatprep.subr.bf16.mxu0 0
    %3896 = vmatpush1.bf16.msra.mxu0 0
    %3897 = vmatprep.subr.bf16.mxu0 0
    %3898 = vmatpush1.bf16.msra.mxu0 0
    %3899 = vmatprep.subr.bf16.mxu0 0
    %3900 = vmatpush1.bf16.msra.mxu0 0
    %3901 = vmatprep.mubr.bf16.mxu0 0
    %3902 = vmatmul.mubr.bf16.gmra.mrb[0].mxu0 %v3676
    %v3903 = vpop.f32.mrb[0].mxu0
    %v3904 = vadd.f32 0.0, %v3903
    %v3905 = vpop.f32.mrb[0].mxu0
    %v3906 = vadd.f32 0.0, %v3905
    %v3907 = vpop.f32.mrb[0].mxu0
    %v3908 = vadd.f32 0.0, %v3907
    %v3909 = vpop.f32.mrb[0].mxu0
    %v3910 = vadd.f32 0.0, %v3909
    %3911 = vdwg.mxu0
    %3912 = vmatprep.subr.bf16.mxu0 %v3808
    %3913 = vmatpush1.bf16.msra.mxu0 %v3807
    %3914 = vmatprep.subr.bf16.mxu0 %v3812
    %3915 = vmatpush1.bf16.msra.mxu0 %v3811
    %3916 = vmatprep.subr.bf16.mxu0 %v3816
    %3917 = vmatpush1.bf16.msra.mxu0 %v3815
    %3918 = vmatprep.subr.bf16.mxu0 %v3820
    %3919 = vmatpush1.bf16.msra.mxu0 %v3819
    %3920 = vmatprep.subr.bf16.mxu0 %v3824
    %3921 = vmatpush1.bf16.msra.mxu0 %v3823
    %3922 = vmatprep.subr.bf16.mxu0 %v3828
    %3923 = vmatpush1.bf16.msra.mxu0 %v3827
    %3924 = vmatprep.subr.bf16.mxu0 %v3832
    %3925 = vmatpush1.bf16.msra.mxu0 %v3831
    %3926 = vmatprep.subr.bf16.mxu0 %v3836
    %3927 = vmatpush1.bf16.msra.mxu0 %v3835
    %3928 = vmatprep.subr.bf16.mxu0 0
    %3929 = vmatpush1.bf16.msra.mxu0 0
    %3930 = vmatprep.subr.bf16.mxu0 0
    %3931 = vmatpush1.bf16.msra.mxu0 0
    %3932 = vmatprep.subr.bf16.mxu0 0
    %3933 = vmatpush1.bf16.msra.mxu0 0
    %3934 = vmatprep.subr.bf16.mxu0 0
    %3935 = vmatpush1.bf16.msra.mxu0 0
    %3936 = vmatprep.subr.bf16.mxu0 0
    %3937 = vmatpush1.bf16.msra.mxu0 0
    %3938 = vmatprep.subr.bf16.mxu0 0
    %3939 = vmatpush1.bf16.msra.mxu0 0
    %3940 = vmatprep.subr.bf16.mxu0 0
    %3941 = vmatpush1.bf16.msra.mxu0 0
    %3942 = vmatprep.subr.bf16.mxu0 0
    %3943 = vmatpush1.bf16.msra.mxu0 0
    %3944 = vmatprep.mubr.bf16.mxu0 0
    %3945 = vmatmul.mubr.bf16.gmra.mrb[0].mxu0 %v3676
    %v3946 = vpop.f32.mrb[0].mxu0
    %v3947 = vadd.f32 0.0, %v3946
    %v3948 = vpop.f32.mrb[0].mxu0
    %v3949 = vadd.f32 0.0, %v3948
    %v3950 = vpop.f32.mrb[0].mxu0
    %v3951 = vadd.f32 0.0, %v3950
    %v3952 = vpop.f32.mrb[0].mxu0
    %v3953 = vadd.f32 0.0, %v3952
    %3954 = vdwg.mxu0
    %v3955 = vadd.f32 %v3625, %v3904
    %v3956 = vadd.f32 %v3627, %v3906
    %v3957 = vadd.f32 %v3668, %v3947
    %v3958 = vadd.f32 %v3670, %v3949
    %v3959 = vadd.f32 %v3629, %v3908
    %v3960 = vadd.f32 %v3631, %v3910
    %v3961 = vadd.f32 %v3672, %v3951
    %v3962 = vadd.f32 %v3674, %v3953
    %v3963 = vxor.u32 %v3955, 2147483648
    %v3964 = vxor.u32 %v3959, 2147483648
    %v3965 = vmul.f32 %v3963, 1.442695
    %v3966 = vpow.pop %v3965
    %v3967 = vmul.f32 %v3964, 1.442695
    %v3968 = vpow.pop %v3967
    %v3969 = vadd.f32 %v3966, 1.0
    %v3970 = vadd.f32 %v3968, 1.0
    %v3971 = vrcp.pop %v3969
    %v3972 = vmul.f32 1.0, %v3971
    %v3973 = vrcp.pop %v3970
    %v3974 = vmul.f32 1.0, %v3973
    %v3975 = vxor.u32 %v3956, 2147483648
    %v3976 = vxor.u32 %v3960, 2147483648
    %v3977 = vmul.f32 %v3975, 1.442695
    %v3978 = vpow.pop %v3977
    %v3979 = vmul.f32 %v3976, 1.442695
    %v3980 = vpow.pop %v3979
    %v3981 = vadd.f32 %v3978, 1.0
    %v3982 = vadd.f32 %v3980, 1.0
    %v3983 = vrcp.pop %v3981
    %v3984 = vmul.f32 1.0, %v3983
    %v3985 = vrcp.pop %v3982
    %v3986 = vmul.f32 1.0, %v3985
    %v3987 = vtanh.pop %v3957
    %v3988 = vtanh.pop %v3961
    %v3989 = vxor.u32 %v3958, 2147483648
    %v3990 = vxor.u32 %v3962, 2147483648
    %v3991 = vmul.f32 %v3989, 1.442695
    %v3992 = vpow.pop %v3991
    %v3993 = vmul.f32 %v3990, 1.442695
    %v3994 = vpow.pop %v3993
    %v3995 = vadd.f32 %v3992, 1.0
    %v3996 = vadd.f32 %v3994, 1.0
    %v3997 = vrcp.pop %v3995
    %v3998 = vmul.f32 1.0, %v3997
    %v3999 = vrcp.pop %v3996
    %v4000 = vmul.f32 1.0, %v3999
    %v4001 = vmul.f32 %v3984, %v3531
    %v4002 = vmul.f32 %v3986, %v3532
    %v4003 = vmul.f32 %v3972, %v3987
    %v4004 = vmul.f32 %v3974, %v3988
    %v4005 = vadd.f32 %v4001, %v4003
    %v4006 = vadd.f32 %v4002, %v4004
    %v4007 = vtanh.pop %v4005
    %v4008 = vtanh.pop %v4006
    %v4009 = vmul.f32 %v3998, %v4007
    %v4010 = vmul.f32 %v4000, %v4008
    %s4011 = scalar_lea.vmem [#allocation13], 112
    %4012 = vst [vmem:[%s4011] sm:$0xff] %v4009
    %4013 = vst [vmem:[%s4011 + $0x8] sm:$0xff] %v4010
    %4014 = vst [vmem:[#allocation2] sm:$0xff] %v4009
    %4015 = vst [vmem:[#allocation2 + $0x8] sm:$0xff] %v4010
    %4016 = vst [vmem:[#allocation3] sm:$0xff] %v4005
    %4017 = vst [vmem:[#allocation3 + $0x8] sm:$0xff] %v4006
    // Predicated region
    $region50: #{tpu_custom_call.1} parent=1 // pred_check
      %p4018 = pneg %p95
    $region51: #{tpu_custom_call.1} parent=1 // pred_check_branch
      %4020 = sbr.rel (%p4018) target = $region53
    $region52: #{tpu_custom_call.1} parent=1 // pred_region
      %v4021 = vld [vmem:[#allocation2] sm:$0xff]
      %v4022 = vld [vmem:[#allocation2 + $0x8] sm:$0xff]
      %4023 = vst [vmem:[#allocation14] sm:$0xff] %v4021
      %4024 = vst [vmem:[#allocation14 + $0x8] sm:$0xff] %v4022
      %v4025 = vld [vmem:[#allocation3] sm:$0xff]
      %v4026 = vld [vmem:[#allocation3 + $0x8] sm:$0xff]
      %4027 = vst [vmem:[#allocation16] sm:$0xff] %v4025
      %4028 = vst [vmem:[#allocation16 + $0x8] sm:$0xff] %v4026
    $region53: #{tpu_custom_call.1} parent=1 // pred_fallthru
      _
    // Predicated region
    $region54: #{tpu_custom_call.1} parent=1 // pred_check
      _
    $region55: #{tpu_custom_call.1} parent=1 // pred_check_branch
      %4030 = sbr.rel (0) target = $region57
    $region56: #{tpu_custom_call.1} parent=1 // pred_region
      %s4032 = ssub.s32 2048, 2048
      %4033 = vsyncadd [#allocation6], %s4032
      %s4034 = sshll.u32 [#allocation13], 4
      %s4035 = int_to_ptr.vmem [resolvable:$true] %s4034
      %4040 = dma.vmem_to_hbm [thread:$0]  %s4035, 2048, %s6, [#allocation6], 128, 128, 8
    $region57: #{tpu_custom_call.1} parent=1 // pred_fallthru
      _
    // Predicated region
    $region58: #{tpu_custom_call.1} parent=1 // pred_check
      _
    $region59: #{tpu_custom_call.1} parent=1 // pred_check_branch
      %4042 = sbr.rel (0) target = $region61
    $region60: #{tpu_custom_call.1} parent=1 // pred_region
      %s4044 = ssub.s32 256, 256
      %4045 = vsyncadd [#allocation15], %s4044
      %s4046 = sshll.u32 [#allocation14], 4
      %s4047 = int_to_ptr.vmem [resolvable:$true] %s4046
      %4052 = dma.vmem_to_hbm [thread:$0]  %s4047, 256, %s7, [#allocation15], 128, 128, 8
    $region61: #{tpu_custom_call.1} parent=1 // pred_fallthru
      _
    // Predicated region
    $region62: #{tpu_custom_call.1} parent=1 // pred_check
      _
    $region63: #{tpu_custom_call.1} parent=1 // pred_check_branch
      %4054 = sbr.rel (0) target = $region65
    $region64: #{tpu_custom_call.1} parent=1 // pred_region
      %s4056 = ssub.s32 256, 256
      %4057 = vsyncadd [#allocation15], %s4056
      %s4058 = sshll.u32 [#allocation16], 4
      %s4059 = int_to_ptr.vmem [resolvable:$true] %s4058
      %4064 = dma.vmem_to_hbm [thread:$0]  %s4059, 256, %s8, [#allocation15], 128, 128, 8
    $region65: #{tpu_custom_call.1} parent=1 // pred_fallthru
      _
    // Predicated region
    $region66: #{tpu_custom_call.1} parent=1 // pred_check
      _
    $region67: #{tpu_custom_call.1} parent=1 // pred_check_branch
      %4066 = sbr.rel (0) target = $region69
    $region68: #{tpu_custom_call.1} parent=1 // pred_region
      %4067 = dma.done [#allocation6], 2048
    $region69: #{tpu_custom_call.1} parent=1 // pred_fallthru
      _
    // Predicated region
    $region70: #{tpu_custom_call.1} parent=1 // pred_check
      _
    $region71: #{tpu_custom_call.1} parent=1 // pred_check_branch
      %4069 = sbr.rel (0) target = $region73
    $region72: #{tpu_custom_call.1} parent=1 // pred_region
      %4070 = dma.done [#allocation15], 256
    $region73: #{tpu_custom_call.1} parent=1 // pred_fallthru
      _
    // Predicated region
    $region74: #{tpu_custom_call.1} parent=1 // pred_check
      _
    $region75: #{tpu_custom_call.1} parent=1 // pred_check_branch
      %4072 = sbr.rel (0) target = $region77
    $region76: #{tpu_custom_call.1} parent=1 // pred_region
      %4073 = dma.done [#allocation15], 256
    $region77: #{tpu_custom_call.1} parent=1 // pred_fallthru
      _
    %4074 = vsyncpa [#allocation5], 1
    %4075 = vsyncpa [#allocation8], 1
    %4076 = vsyncpa [#allocation11], 1
    %4077 = vsyncpa [#allocation6], 1
    %4078 = vsyncpa [#allocation15], 1

// kernel: tpu_custom_call.1
$region0: #{tpu_custom_call.1}
  #allocation0 [shape = 'u32[]', space=smem, size = 0x4, offset = 0x4, fixed_abs, tag = 'smem constant byte address 0x4 - core index']
  #allocation1 [shape = 'u32[144,128]{1,0:T(1,128)}', space=vmem, size = 0x12000, scoped, tag = 'internal scratch']
  #allocation2 [shape = 'f32[16,128]{1,0:T(8,128)}', space=vmem, size = 0x2000, scoped, tag = 'scratch operand']
  #allocation3 [shape = 'f32[16,128]{1,0:T(8,128)}', space=vmem, size = 0x2000, scoped, tag = 'scratch operand']
  %s0 = inlined_call_operand.hbm [shape: bf16[8,16,16], index: 0, kind: input, shape index: {}]
  %s1 = inlined_call_operand.hbm [shape: bf16[16,512], index: 1, kind: input, shape index: {}]
  %s2 = inlined_call_operand.hbm [shape: f32[1,512], index: 2, kind: input, shape index: {}]
  %s3 = inlined_call_operand.hbm [shape: bf16[128,512], index: 3, kind: input, shape index: {}]
  %s4 = inlined_call_operand.hbm [shape: f32[16,128], index: 4, kind: input, shape index: {}]
  %s5 = inlined_call_operand.vmem [shape: f32[16,128], index: 5, kind: input, shape index: {}]
  %s6 = inlined_call_operand.hbm [shape: f32[8,16,128], index: 6, kind: output, shape index: {0}]
  %s7 = inlined_call_operand.hbm [shape: f32[16,128], index: 7, kind: output, shape index: {1}]
  %s8 = inlined_call_operand.hbm [shape: f32[16,128], index: 8, kind: output, shape index: {2}]
  %9 = xla_tuple %s6, %s7, %s8
  %s10 = sld [smem:[#allocation0]]
  $region78: #{tpu_custom_call.1} parent=0
    _
  %s12 = ssub.s32 1, %s10
  %s13 = scalar_select 0, %s12, %s10
  $region1: #{tpu_custom_call.1} parent=0
    #allocation4 [shape = 'u8[32768]{0}', space=vmem, size = 0x8000, scoped, tag = 'input window, operand 0, single buffered']
    #allocation5 [shape = 's32[1]{0}', space=sflag, size = 0x4, scoped, tag = 'scoped memory for tpu_custom_call.1']
    #allocation6 [shape = 's32[1]{0}', space=sflag, size = 0x4, scoped, tag = 'scoped memory for tpu_custom_call.1']
    #allocation7 [shape = 'u8[16384]{0}', space=vmem, size = 0x4000, scoped, tag = 'input window, operand 1, single buffered']
    #allocation8 [shape = 's32[1]{0}', space=sflag, size = 0x4, scoped, tag = 'scoped memory for tpu_custom_call.1']
    #allocation9 [shape = 'u8[2048]{0}', space=vmem, size = 0x800, scoped, tag = 'input window, operand 2, single buffered']
    #allocation10 [shape = 'u8[131072]{0}', space=vmem, size = 0x20000, scoped, tag = 'input window, operand 3, single buffered']
    #allocation11 [shape = 's32[1]{0}', space=sflag, size = 0x4, scoped, tag = 'scoped memory for tpu_custom_call.1']
    #allocation12 [shape = 'u8[8192]{0}', space=vmem, size = 0x2000, scoped, tag = 'input window, operand 4, single buffered']
    #allocation13 [shape = 'u8[65536]{0}', space=vmem, size = 0x10000, scoped, tag = 'output window, operand 0, single buffered']
    #allocation14 [shape = 'u8[8192]{0}', space=vmem, size = 0x2000, scoped, tag = 'output window, operand 1, single buffered']
    #allocation15 [shape = 's32[1]{0}', space=sflag, size = 0x4, scoped, tag = 'scoped memory for tpu_custom_call.1']
    #allocation16 [shape = 'u8[8192]{0}', space=vmem, size = 0x2000, scoped, tag = 'output window, operand 2, single buffered']
    %14 = vsyncpa [#allocation5], 0
    %15 = vsyncpa [#allocation8], 0
    %16 = vsyncpa [#allocation11], 0
    %17 = vsyncpa [#allocation6], 0
    %18 = vsyncpa [#allocation15], 0
    // Predicated region
    $region2: #{tpu_custom_call.1} parent=1 // pred_check
      _
    $region3: #{tpu_custom_call.1} parent=1 // pred_check_branch
      %20 = sbr.rel (0) target = $region5
    $region4: #{tpu_custom_call.1} parent=1 // pred_region
      %s22 = ssub.s32 1024, 1024
      %23 = vsyncadd [#allocation5], %s22
      %s24 = sshll.u32 [#allocation4], 4
      %s25 = int_to_ptr.vmem [resolvable:$true] %s24
      %30 = dma.hbm_to_vmem [thread:$0]  %s0, 1024, %s25, [#allocation5], 64, 64, 4
    $region5: #{tpu_custom_call.1} parent=1 // pred_fallthru
      _
    // Predicated region
    $region6: #{tpu_custom_call.1} parent=1 // pred_check
      _
    $region7: #{tpu_custom_call.1} parent=1 // pred_check_branch
      %32 = sbr.rel (0) target = $region9
    $region8: #{tpu_custom_call.1} parent=1 // pred_region
      %s34 = ssub.s32 512, 512
      %35 = vsyncadd [#allocation8], %s34
      %s36 = sshll.u32 [#allocation7], 4
      %s37 = int_to_ptr.vmem [resolvable:$true] %s36
      %42 = dma.hbm_to_vmem [thread:$0]  %s1, 512, %s37, [#allocation8], 256, 256, 16
    $region9: #{tpu_custom_call.1} parent=1 // pred_fallthru
      _
    // Predicated region
    $region10: #{tpu_custom_call.1} parent=1 // pred_check
      _
    $region11: #{tpu_custom_call.1} parent=1 // pred_check_branch
      %44 = sbr.rel (0) target = $region13
    $region12: #{tpu_custom_call.1} parent=1 // pred_region
      %s46 = ssub.s32 64, 64
      %47 = vsyncadd [#allocation8], %s46
      %s49 = sshll.u32 [#allocation9], 4
      %s50 = int_to_ptr.vmem [resolvable:$true] %s49
      %52 = dma.hbm_to_vmem [thread:$0]  %s2, 64, %s50, [#allocation8]
    $region13: #{tpu_custom_call.1} parent=1 // pred_fallthru
      _
    // Predicated region
    $region14: #{tpu_custom_call.1} parent=1 // pred_check
      _
    $region15: #{tpu_custom_call.1} parent=1 // pred_check_branch
      %54 = sbr.rel (0) target = $region17
    $region16: #{tpu_custom_call.1} parent=1 // pred_region
      %s56 = ssub.s32 4096, 4096
      %57 = vsyncadd [#allocation11], %s56
      %s58 = sshll.u32 [#allocation10], 4
      %s59 = int_to_ptr.vmem [resolvable:$true] %s58
      %64 = dma.hbm_to_vmem [thread:$0]  %s3, 4096, %s59, [#allocation11], 256, 256, 16
    $region17: #{tpu_custom_call.1} parent=1 // pred_fallthru
      _
    // Predicated region
    $region18: #{tpu_custom_call.1} parent=1 // pred_check
      _
    $region19: #{tpu_custom_call.1} parent=1 // pred_check_branch
      %66 = sbr.rel (0) target = $region21
    $region20: #{tpu_custom_call.1} parent=1 // pred_region
      %s68 = ssub.s32 256, 256
      %69 = vsyncadd [#allocation11], %s68
      %s70 = sshll.u32 [#allocation12], 4
      %s71 = int_to_ptr.vmem [resolvable:$true] %s70
      %76 = dma.hbm_to_vmem [thread:$0]  %s4, 256, %s71, [#allocation11], 128, 128, 8
    $region21: #{tpu_custom_call.1} parent=1 // pred_fallthru
      _
    // Predicated region
    $region22: #{tpu_custom_call.1} parent=1 // pred_check
      _
    $region23: #{tpu_custom_call.1} parent=1 // pred_check_branch
      %78 = sbr.rel (0) target = $region25
    $region24: #{tpu_custom_call.1} parent=1 // pred_region
      _
    $region25: #{tpu_custom_call.1} parent=1 // pred_fallthru
      _
    // Predicated region
    $region26: #{tpu_custom_call.1} parent=1 // pred_check
      _
    $region27: #{tpu_custom_call.1} parent=1 // pred_check_branch
      %80 = sbr.rel (0) target = $region29
    $region28: #{tpu_custom_call.1} parent=1 // pred_region
      %81 = dma.done [#allocation5], 1024
    $region29: #{tpu_custom_call.1} parent=1 // pred_fallthru
      _
    // Predicated region
    $region30: #{tpu_custom_call.1} parent=1 // pred_check
      _
    $region31: #{tpu_custom_call.1} parent=1 // pred_check_branch
      %83 = sbr.rel (0) target = $region33
    $region32: #{tpu_custom_call.1} parent=1 // pred_region
      %84 = dma.done [#allocation8], 512
    $region33: #{tpu_custom_call.1} parent=1 // pred_fallthru
      _
    // Predicated region
    $region34: #{tpu_custom_call.1} parent=1 // pred_check
      _
    $region35: #{tpu_custom_call.1} parent=1 // pred_check_branch
      %86 = sbr.rel (0) target = $region37
    $region36: #{tpu_custom_call.1} parent=1 // pred_region
      %87 = dma.done [#allocation8], 64
    $region37: #{tpu_custom_call.1} parent=1 // pred_fallthru
      _
    // Predicated region
    $region38: #{tpu_custom_call.1} parent=1 // pred_check
      _
    $region39: #{tpu_custom_call.1} parent=1 // pred_check_branch
      %89 = sbr.rel (0) target = $region41
    $region40: #{tpu_custom_call.1} parent=1 // pred_region
      %90 = dma.done [#allocation11], 4096
    $region41: #{tpu_custom_call.1} parent=1 // pred_fallthru
      _
    // Predicated region
    $region42: #{tpu_custom_call.1} parent=1 // pred_check
      _
    $region43: #{tpu_custom_call.1} parent=1 // pred_check_branch
      %92 = sbr.rel (0) target = $region45
    $region44: #{tpu_custom_call.1} parent=1 // pred_region
      %93 = dma.done [#allocation11], 256
    $region45: #{tpu_custom_call.1} parent=1 // pred_fallthru
      _
    %p95 = scmp.eq.s32.totalorder 0, 0
    // Predicated region
    $region46: #{tpu_custom_call.1} parent=1 // pred_check
      %p96 = pneg %p95
    $region47: #{tpu_custom_call.1} parent=1 // pred_check_branch
      %98 = sbr.rel (%p96) target = $region49
    $region48: #{tpu_custom_call.1} parent=1 // pred_region
      %v99 = vld [vmem:[#allocation12] sm:$0xff]
      %v100 = vld [vmem:[#allocation12 + $0x8] sm:$0xff]
      %101 = vst [vmem:[#allocation2] sm:$0xff] %v99
      %102 = vst [vmem:[#allocation2 + $0x8] sm:$0xff] %v100
      %v103 = vld [vmem:[%s5] sm:$0xff]
      %v104 = vld [vmem:[%s5 + $0x8] sm:$0xff]
      %105 = vst [vmem:[#allocation3] sm:$0xff] %v103
      %106 = vst [vmem:[#allocation3 + $0x8] sm:$0xff] %v104
    $region49: #{tpu_custom_call.1} parent=1 // pred_fallthru
      _
    %v107 = vld [vmem:[#allocation2] sm:$0xff]
    %v108 = vld [vmem:[#allocation2 + $0x8] sm:$0xff]
    %v109 = vld [vmem:[#allocation3] sm:$0xff]
    %v110 = vld [vmem:[#allocation3 + $0x8] sm:$0xff]
    %v111 = vld [vmem:[#allocation4] sm:$0xf]
    %v112 = vld [vmem:[#allocation4 + $0x4] sm:$0xf]
    %v113 = vld [vmem:[#allocation7] sm:$0xff]
    %v114 = vld [vmem:[#allocation7 + $0x8] sm:$0xff]
    %v115 = vld [vmem:[#allocation7 + $0x10] sm:$0xff]
    %v116 = vld [vmem:[#allocation7 + $0x18] sm:$0xff]
    %v117 = vld [vmem:[#allocation9] sm:$0xf]
    %v119 = vlaneseq
    %v120 = vshrl.u32 %v119, 7
    %v121 = vsub.s32 0, %v120
    %v122 = vrot.slane %v117, %v121
    %v123 = vlaneseq
    %v124 = vshrl.u32 %v123, 7
    %v125 = vsub.s32 1, %v124
    %v126 = vrot.slane %v117, %v125
    %v127 = vlaneseq
    %v128 = vshrl.u32 %v127, 7
    %v129 = vsub.s32 2, %v128
    %v130 = vrot.slane %v117, %v129
    %v131 = vlaneseq
    %v132 = vshrl.u32 %v131, 7
    %v133 = vsub.s32 3, %v132
    %v134 = vrot.slane %v117, %v133
    %v141 = vunpack.c.l.b16 %v111
    %v142 = vunpack.c.l.b16 %v112
    %v143 = vpack.c.b16 %v142, %v141
    %v148 = vunpack.c.l.b16 %v113
    %v149 = vunpack.c.h.b16 %v113
    %v150 = vunpack.c.l.b16 %v114
    %v151 = vunpack.c.h.b16 %v114
    %v152 = vunpack.c.l.b16 %v115
    %v153 = vunpack.c.h.b16 %v115
    %v154 = vunpack.c.l.b16 %v116
    %v155 = vunpack.c.h.b16 %v116
    %v156 = vpack.c.b16 %v152, %v148
    %v157 = vpack.c.b16 %v153, %v149
    %v158 = vpack.c.b16 %v154, %v150
    %v159 = vpack.c.b16 %v155, %v151
    %vm164 = vcmask 130048
    %v166 = vsel %vm164, %v143, 0
    %168 = vmatprep.subr.bf16.mxu0 %v157
    %169 = vmatpush1.bf16.msra.mxu0 %v156
    %170 = vmatprep.subr.bf16.mxu0 0
    %171 = vmatpush1.bf16.msra.mxu0 0
    %172 = vmatprep.subr.bf16.mxu0 0
    %173 = vmatpush1.bf16.msra.mxu0 0
    %174 = vmatprep.subr.bf16.mxu0 0
    %175 = vmatpush1.bf16.msra.mxu0 0
    %176 = vmatprep.subr.bf16.mxu0 0
    %177 = vmatpush1.bf16.msra.mxu0 0
    %178 = vmatprep.subr.bf16.mxu0 0
    %179 = vmatpush1.bf16.msra.mxu0 0
    %180 = vmatprep.subr.bf16.mxu0 0
    %181 = vmatpush1.bf16.msra.mxu0 0
    %182 = vmatprep.subr.bf16.mxu0 0
    %183 = vmatpush1.bf16.msra.mxu0 0
    %184 = vmatprep.subr.bf16.mxu0 0
    %185 = vmatpush1.bf16.msra.mxu0 0
    %186 = vmatprep.subr.bf16.mxu0 0
    %187 = vmatpush1.bf16.msra.mxu0 0
    %188 = vmatprep.subr.bf16.mxu0 0
    %189 = vmatpush1.bf16.msra.mxu0 0
    %190 = vmatprep.subr.bf16.mxu0 0
    %191 = vmatpush1.bf16.msra.mxu0 0
    %192 = vmatprep.subr.bf16.mxu0 0
    %193 = vmatpush1.bf16.msra.mxu0 0
    %194 = vmatprep.subr.bf16.mxu0 0
    %195 = vmatpush1.bf16.msra.mxu0 0
    %196 = vmatprep.subr.bf16.mxu0 0
    %197 = vmatpush1.bf16.msra.mxu0 0
    %198 = vmatprep.subr.bf16.mxu0 0
    %199 = vmatpush1.bf16.msra.mxu0 0
    %200 = vmatprep.mubr.bf16.mxu0 0
    %201 = vmatmul.mubr.bf16.gmra.mrb[0].mxu0 %v166
    %v202 = vpop.f32.mrb[0].mxu0
    %v203 = vadd.f32 %v122, %v202
    %v204 = vpop.f32.mrb[0].mxu0
    %v205 = vadd.f32 %v126, %v204
    %v206 = vpop.f32.mrb[0].mxu0
    %v207 = vadd.f32 %v122, %v206
    %v208 = vpop.f32.mrb[0].mxu0
    %v209 = vadd.f32 %v126, %v208
    %210 = vdwg.mxu0
    %211 = vmatprep.subr.bf16.mxu0 %v159
    %212 = vmatpush1.bf16.msra.mxu0 %v158
    %213 = vmatprep.subr.bf16.mxu0 0
    %214 = vmatpush1.bf16.msra.mxu0 0
    %215 = vmatprep.subr.bf16.mxu0 0
    %216 = vmatpush1.bf16.msra.mxu0 0
    %217 = vmatprep.subr.bf16.mxu0 0
    %218 = vmatpush1.bf16.msra.mxu0 0
    %219 = vmatprep.subr.bf16.mxu0 0
    %220 = vmatpush1.bf16.msra.mxu0 0
    %221 = vmatprep.subr.bf16.mxu0 0
    %222 = vmatpush1.bf16.msra.mxu0 0
    %223 = vmatprep.subr.bf16.mxu0 0
    %224 = vmatpush1.bf16.msra.mxu0 0
    %225 = vmatprep.subr.bf16.mxu0 0
    %226 = vmatpush1.bf16.msra.mxu0 0
    %227 = vmatprep.subr.bf16.mxu0 0
    %228 = vmatpush1.bf16.msra.mxu0 0
    %229 = vmatprep.subr.bf16.mxu0 0
    %230 = vmatpush1.bf16.msra.mxu0 0
    %231 = vmatprep.subr.bf16.mxu0 0
    %232 = vmatpush1.bf16.msra.mxu0 0
    %233 = vmatprep.subr.bf16.mxu0 0
    %234 = vmatpush1.bf16.msra.mxu0 0
    %235 = vmatprep.subr.bf16.mxu0 0
    %236 = vmatpush1.bf16.msra.mxu0 0
    %237 = vmatprep.subr.bf16.mxu0 0
    %238 = vmatpush1.bf16.msra.mxu0 0
    %239 = vmatprep.subr.bf16.mxu0 0
    %240 = vmatpush1.bf16.msra.mxu0 0
    %241 = vmatprep.subr.bf16.mxu0 0
    %242 = vmatpush1.bf16.msra.mxu0 0
    %243 = vmatprep.mubr.bf16.mxu0 0
    %244 = vmatmul.mubr.bf16.gmra.mrb[0].mxu0 %v166
    %v245 = vpop.f32.mrb[0].mxu0
    %v246 = vadd.f32 %v130, %v245
    %v247 = vpop.f32.mrb[0].mxu0
    %v248 = vadd.f32 %v134, %v247
    %v249 = vpop.f32.mrb[0].mxu0
    %v250 = vadd.f32 %v130, %v249
    %v251 = vpop.f32.mrb[0].mxu0
    %v252 = vadd.f32 %v134, %v251
    %253 = vdwg.mxu0
    %v254 = vpack.c.bf16 %v108, %v107
    %v255 = vld [vmem:[#allocation10] sm:$0xff]
    %v256 = vld [vmem:[#allocation10 + $0x8] sm:$0xff]
    %v257 = vld [vmem:[#allocation10 + $0x10] sm:$0xff]
    %v258 = vld [vmem:[#allocation10 + $0x18] sm:$0xff]
    %v259 = vld [vmem:[#allocation10 + $0x20] sm:$0xff]
    %v260 = vld [vmem:[#allocation10 + $0x28] sm:$0xff]
    %v261 = vld [vmem:[#allocation10 + $0x30] sm:$0xff]
    %v262 = vld [vmem:[#allocation10 + $0x38] sm:$0xff]
    %v263 = vld [vmem:[#allocation10 + $0x40] sm:$0xff]
    %v264 = vld [vmem:[#allocation10 + $0x48] sm:$0xff]
    %v265 = vld [vmem:[#allocation10 + $0x50] sm:$0xff]
    %v266 = vld [vmem:[#allocation10 + $0x58] sm:$0xff]
    %v267 = vld [vmem:[#allocation10 + $0x60] sm:$0xff]
    %v268 = vld [vmem:[#allocation10 + $0x68] sm:$0xff]
    %v269 = vld [vmem:[#allocation10 + $0x70] sm:$0xff]
    %v270 = vld [vmem:[#allocation10 + $0x78] sm:$0xff]
    %v271 = vld [vmem:[#allocation10 + $0x80] sm:$0xff]
    %v272 = vld [vmem:[#allocation10 + $0x88] sm:$0xff]
    %v273 = vld [vmem:[#allocation10 + $0x90] sm:$0xff]
    %v274 = vld [vmem:[#allocation10 + $0x98] sm:$0xff]
    %v275 = vld [vmem:[#allocation10 + $0xa0] sm:$0xff]
    %v276 = vld [vmem:[#allocation10 + $0xa8] sm:$0xff]
    %v277 = vld [vmem:[#allocation10 + $0xb0] sm:$0xff]
    %v278 = vld [vmem:[#allocation10 + $0xb8] sm:$0xff]
    %v279 = vld [vmem:[#allocation10 + $0xc0] sm:$0xff]
    %v280 = vld [vmem:[#allocation10 + $0xc8] sm:$0xff]
    %v281 = vld [vmem:[#allocation10 + $0xd0] sm:$0xff]
    %v282 = vld [vmem:[#allocation10 + $0xd8] sm:$0xff]
    %v283 = vld [vmem:[#allocation10 + $0xe0] sm:$0xff]
    %v284 = vld [vmem:[#allocation10 + $0xe8] sm:$0xff]
    %v285 = vld [vmem:[#allocation10 + $0xf0] sm:$0xff]
    %v286 = vld [vmem:[#allocation10 + $0xf8] sm:$0xff]
    %v319 = vunpack.c.l.b16 %v255
    %v320 = vunpack.c.h.b16 %v255
    %v321 = vunpack.c.l.b16 %v256
    %v322 = vunpack.c.h.b16 %v256
    %v323 = vunpack.c.l.b16 %v257
    %v324 = vunpack.c.h.b16 %v257
    %v325 = vunpack.c.l.b16 %v258
    %v326 = vunpack.c.h.b16 %v258
    %v327 = vunpack.c.l.b16 %v259
    %v328 = vunpack.c.h.b16 %v259
    %v329 = vunpack.c.l.b16 %v260
    %v330 = vunpack.c.h.b16 %v260
    %v331 = vunpack.c.l.b16 %v261
    %v332 = vunpack.c.h.b16 %v261
    %v333 = vunpack.c.l.b16 %v262
    %v334 = vunpack.c.h.b16 %v262
    %v335 = vunpack.c.l.b16 %v263
    %v336 = vunpack.c.h.b16 %v263
    %v337 = vunpack.c.l.b16 %v264
    %v338 = vunpack.c.h.b16 %v264
    %v339 = vunpack.c.l.b16 %v265
    %v340 = vunpack.c.h.b16 %v265
    %v341 = vunpack.c.l.b16 %v266
    %v342 = vunpack.c.h.b16 %v266
    %v343 = vunpack.c.l.b16 %v267
    %v344 = vunpack.c.h.b16 %v267
    %v345 = vunpack.c.l.b16 %v268
    %v346 = vunpack.c.h.b16 %v268
    %v347 = vunpack.c.l.b16 %v269
    %v348 = vunpack.c.h.b16 %v269
    %v349 = vunpack.c.l.b16 %v270
    %v350 = vunpack.c.h.b16 %v270
    %v351 = vunpack.c.l.b16 %v271
    %v352 = vunpack.c.h.b16 %v271
    %v353 = vunpack.c.l.b16 %v272
    %v354 = vunpack.c.h.b16 %v272
    %v355 = vunpack.c.l.b16 %v273
    %v356 = vunpack.c.h.b16 %v273
    %v357 = vunpack.c.l.b16 %v274
    %v358 = vunpack.c.h.b16 %v274
    %v359 = vunpack.c.l.b16 %v275
    %v360 = vunpack.c.h.b16 %v275
    %v361 = vunpack.c.l.b16 %v276
    %v362 = vunpack.c.h.b16 %v276
    %v363 = vunpack.c.l.b16 %v277
    %v364 = vunpack.c.h.b16 %v277
    %v365 = vunpack.c.l.b16 %v278
    %v366 = vunpack.c.h.b16 %v278
    %v367 = vunpack.c.l.b16 %v279
    %v368 = vunpack.c.h.b16 %v279
    %v369 = vunpack.c.l.b16 %v280
    %v370 = vunpack.c.h.b16 %v280
    %v371 = vunpack.c.l.b16 %v281
    %v372 = vunpack.c.h.b16 %v281
    %v373 = vunpack.c.l.b16 %v282
    %v374 = vunpack.c.h.b16 %v282
    %v375 = vunpack.c.l.b16 %v283
    %v376 = vunpack.c.h.b16 %v283
    %v377 = vunpack.c.l.b16 %v284
    %v378 = vunpack.c.h.b16 %v284
    %v379 = vunpack.c.l.b16 %v285
    %v380 = vunpack.c.h.b16 %v285
    %v381 = vunpack.c.l.b16 %v286
    %v382 = vunpack.c.h.b16 %v286
    %v383 = vpack.c.b16 %v323, %v319
    %v384 = vpack.c.b16 %v324, %v320
    %v385 = vpack.c.b16 %v325, %v321
    %v386 = vpack.c.b16 %v326, %v322
    %v387 = vpack.c.b16 %v331, %v327
    %v388 = vpack.c.b16 %v332, %v328
    %v389 = vpack.c.b16 %v333, %v329
    %v390 = vpack.c.b16 %v334, %v330
    %v391 = vpack.c.b16 %v339, %v335
    %v392 = vpack.c.b16 %v340, %v336
    %v393 = vpack.c.b16 %v341, %v337
    %v394 = vpack.c.b16 %v342, %v338
    %v395 = vpack.c.b16 %v347, %v343
    %v396 = vpack.c.b16 %v348, %v344
    %v397 = vpack.c.b16 %v349, %v345
    %v398 = vpack.c.b16 %v350, %v346
    %v399 = vpack.c.b16 %v355, %v351
    %v400 = vpack.c.b16 %v356, %v352
    %v401 = vpack.c.b16 %v357, %v353
    %v402 = vpack.c.b16 %v358, %v354
    %v403 = vpack.c.b16 %v363, %v359
    %v404 = vpack.c.b16 %v364, %v360
    %v405 = vpack.c.b16 %v365, %v361
    %v406 = vpack.c.b16 %v366, %v362
    %v407 = vpack.c.b16 %v371, %v367
    %v408 = vpack.c.b16 %v372, %v368
    %v409 = vpack.c.b16 %v373, %v369
    %v410 = vpack.c.b16 %v374, %v370
    %v411 = vpack.c.b16 %v379, %v375
    %v412 = vpack.c.b16 %v380, %v376
    %v413 = vpack.c.b16 %v381, %v377
    %v414 = vpack.c.b16 %v382, %v378
    %447 = vmatprep.subr.bf16.mxu0 %v384
    %448 = vmatpush1.bf16.msra.mxu0 %v383
    %449 = vmatprep.subr.bf16.mxu0 %v388
    %450 = vmatpush1.bf16.msra.mxu0 %v387
    %451 = vmatprep.subr.bf16.mxu0 %v392
    %452 = vmatpush1.bf16.msra.mxu0 %v391
    %453 = vmatprep.subr.bf16.mxu0 %v396
    %454 = vmatpush1.bf16.msra.mxu0 %v395
    %455 = vmatprep.subr.bf16.mxu0 %v400
    %456 = vmatpush1.bf16.msra.mxu0 %v399
    %457 = vmatprep.subr.bf16.mxu0 %v404
    %458 = vmatpush1.bf16.msra.mxu0 %v403
    %459 = vmatprep.subr.bf16.mxu0 %v408
    %460 = vmatpush1.bf16.msra.mxu0 %v407
    %461 = vmatprep.subr.bf16.mxu0 %v412
    %462 = vmatpush1.bf16.msra.mxu0 %v411
    %463 = vmatprep.subr.bf16.mxu0 0
    %464 = vmatpush1.bf16.msra.mxu0 0
    %465 = vmatprep.subr.bf16.mxu0 0
    %466 = vmatpush1.bf16.msra.mxu0 0
    %467 = vmatprep.subr.bf16.mxu0 0
    %468 = vmatpush1.bf16.msra.mxu0 0
    %469 = vmatprep.subr.bf16.mxu0 0
    %470 = vmatpush1.bf16.msra.mxu0 0
    %471 = vmatprep.subr.bf16.mxu0 0
    %472 = vmatpush1.bf16.msra.mxu0 0
    %473 = vmatprep.subr.bf16.mxu0 0
    %474 = vmatpush1.bf16.msra.mxu0 0
    %475 = vmatprep.subr.bf16.mxu0 0
    %476 = vmatpush1.bf16.msra.mxu0 0
    %477 = vmatprep.subr.bf16.mxu0 0
    %478 = vmatpush1.bf16.msra.mxu0 0
    %479 = vmatprep.mubr.bf16.mxu0 0
    %480 = vmatmul.mubr.bf16.gmra.mrb[0].mxu0 %v254
    %v481 = vpop.f32.mrb[0].mxu0
    %v482 = vadd.f32 0.0, %v481
    %v483 = vpop.f32.mrb[0].mxu0
    %v484 = vadd.f32 0.0, %v483
    %v485 = vpop.f32.mrb[0].mxu0
    %v486 = vadd.f32 0.0, %v485
    %v487 = vpop.f32.mrb[0].mxu0
    %v488 = vadd.f32 0.0, %v487
    %489 = vdwg.mxu0
    %490 = vmatprep.subr.bf16.mxu0 %v386
    %491 = vmatpush1.bf16.msra.mxu0 %v385
    %492 = vmatprep.subr.bf16.mxu0 %v390
    %493 = vmatpush1.bf16.msra.mxu0 %v389
    %494 = vmatprep.subr.bf16.mxu0 %v394
    %495 = vmatpush1.bf16.msra.mxu0 %v393
    %496 = vmatprep.subr.bf16.mxu0 %v398
    %497 = vmatpush1.bf16.msra.mxu0 %v397
    %498 = vmatprep.subr.bf16.mxu0 %v402
    %499 = vmatpush1.bf16.msra.mxu0 %v401
    %500 = vmatprep.subr.bf16.mxu0 %v406
    %501 = vmatpush1.bf16.msra.mxu0 %v405
    %502 = vmatprep.subr.bf16.mxu0 %v410
    %503 = vmatpush1.bf16.msra.mxu0 %v409
    %504 = vmatprep.subr.bf16.mxu0 %v414
    %505 = vmatpush1.bf16.msra.mxu0 %v413
    %506 = vmatprep.subr.bf16.mxu0 0
    %507 = vmatpush1.bf16.msra.mxu0 0
    %508 = vmatprep.subr.bf16.mxu0 0
    %509 = vmatpush1.bf16.msra.mxu0 0
    %510 = vmatprep.subr.bf16.mxu0 0
    %511 = vmatpush1.bf16.msra.mxu0 0
    %512 = vmatprep.subr.bf16.mxu0 0
    %513 = vmatpush1.bf16.msra.mxu0 0
    %514 = vmatprep.subr.bf16.mxu0 0
    %515 = vmatpush1.bf16.msra.mxu0 0
    %516 = vmatprep.subr.bf16.mxu0 0
    %517 = vmatpush1.bf16.msra.mxu0 0
    %518 = vmatprep.subr.bf16.mxu0 0
    %519 = vmatpush1.bf16.msra.mxu0 0
    %520 = vmatprep.subr.bf16.mxu0 0
    %521 = vmatpush1.bf16.msra.mxu0 0
    %522 = vmatprep.mubr.bf16.mxu0 0
    %523 = vmatmul.mubr.bf16.gmra.mrb[0].mxu0 %v254
    %v524 = vpop.f32.mrb[0].mxu0
    %v525 = vadd.f32 0.0, %v524
    %v526 = vpop.f32.mrb[0].mxu0
    %v527 = vadd.f32 0.0, %v526
    %v528 = vpop.f32.mrb[0].mxu0
    %v529 = vadd.f32 0.0, %v528
    %v530 = vpop.f32.mrb[0].mxu0
    %v531 = vadd.f32 0.0, %v530
    %532 = vdwg.mxu0
    %v533 = vadd.f32 %v203, %v482
    %v534 = vadd.f32 %v205, %v484
    %v535 = vadd.f32 %v246, %v525
    %v536 = vadd.f32 %v248, %v527
    %v537 = vadd.f32 %v207, %v486
    %v538 = vadd.f32 %v209, %v488
    %v539 = vadd.f32 %v250, %v529
    %v540 = vadd.f32 %v252, %v531
    %v541 = vxor.u32 %v533, 2147483648
    %v542 = vxor.u32 %v537, 2147483648
    %v543 = vmul.f32 %v541, 1.442695
    %v544 = vpow.pop %v543
    %v545 = vmul.f32 %v542, 1.442695
    %v546 = vpow.pop %v545
    %v547 = vadd.f32 %v544, 1.0
    %v548 = vadd.f32 %v546, 1.0
    %v549 = vrcp.pop %v547
    %v550 = vmul.f32 1.0, %v549
    %v551 = vrcp.pop %v548
    %v552 = vmul.f32 1.0, %v551
    %v553 = vxor.u32 %v534, 2147483648
    %v554 = vxor.u32 %v538, 2147483648
    %v555 = vmul.f32 %v553, 1.442695
    %v556 = vpow.pop %v555
    %v557 = vmul.f32 %v554, 1.442695
    %v558 = vpow.pop %v557
    %v559 = vadd.f32 %v556, 1.0
    %v560 = vadd.f32 %v558, 1.0
    %v561 = vrcp.pop %v559
    %v562 = vmul.f32 1.0, %v561
    %v563 = vrcp.pop %v560
    %v564 = vmul.f32 1.0, %v563
    %v565 = vtanh.pop %v535
    %v566 = vtanh.pop %v539
    %v567 = vxor.u32 %v536, 2147483648
    %v568 = vxor.u32 %v540, 2147483648
    %v569 = vmul.f32 %v567, 1.442695
    %v570 = vpow.pop %v569
    %v571 = vmul.f32 %v568, 1.442695
    %v572 = vpow.pop %v571
    %v573 = vadd.f32 %v570, 1.0
    %v574 = vadd.f32 %v572, 1.0
    %v575 = vrcp.pop %v573
    %v576 = vmul.f32 1.0, %v575
    %v577 = vrcp.pop %v574
    %v578 = vmul.f32 1.0, %v577
    %v579 = vmul.f32 %v562, %v109
    %v580 = vmul.f32 %v564, %v110
    %v581 = vmul.f32 %v550, %v565
    %v582 = vmul.f32 %v552, %v566
    %v583 = vadd.f32 %v579, %v581
    %v584 = vadd.f32 %v580, %v582
    %v585 = vtanh.pop %v583
    %v586 = vtanh.pop %v584
    %v587 = vmul.f32 %v576, %v585
    %v588 = vmul.f32 %v578, %v586
    %589 = vst [vmem:[#allocation13] sm:$0xff] %v587
    %590 = vst [vmem:[#allocation13 + $0x8] sm:$0xff] %v588
    %591 = vst [vmem:[#allocation2] sm:$0xff] %v587
    %592 = vst [vmem:[#allocation2 + $0x8] sm:$0xff] %v588
    %593 = vst [vmem:[#allocation3] sm:$0xff] %v583
    %594 = vst [vmem:[#allocation3 + $0x8] sm:$0xff] %v584
    %v595 = vld [vmem:[#allocation2] sm:$0xff]
    %v596 = vld [vmem:[#allocation2 + $0x8] sm:$0xff]
    %v597 = vld [vmem:[#allocation3] sm:$0xff]
    %v598 = vld [vmem:[#allocation3 + $0x8] sm:$0xff]
    %s599 = scalar_lea.vmem [#allocation4], 8
    %v600 = vld [vmem:[%s599] sm:$0xf]
    %v601 = vld [vmem:[%s599 + $0x4] sm:$0xf]
    %v602 = vld [vmem:[#allocation7] sm:$0xff]
    %v603 = vld [vmem:[#allocation7 + $0x8] sm:$0xff]
    %v604 = vld [vmem:[#allocation7 + $0x10] sm:$0xff]
    %v605 = vld [vmem:[#allocation7 + $0x18] sm:$0xff]
    %v606 = vld [vmem:[#allocation9] sm:$0xf]
    %v608 = vlaneseq
    %v609 = vshrl.u32 %v608, 7
    %v610 = vsub.s32 0, %v609
    %v611 = vrot.slane %v606, %v610
    %v612 = vlaneseq
    %v613 = vshrl.u32 %v612, 7
    %v614 = vsub.s32 1, %v613
    %v615 = vrot.slane %v606, %v614
    %v616 = vlaneseq
    %v617 = vshrl.u32 %v616, 7
    %v618 = vsub.s32 2, %v617
    %v619 = vrot.slane %v606, %v618
    %v620 = vlaneseq
    %v621 = vshrl.u32 %v620, 7
    %v622 = vsub.s32 3, %v621
    %v623 = vrot.slane %v606, %v622
    %v630 = vunpack.c.l.b16 %v600
    %v631 = vunpack.c.l.b16 %v601
    %v632 = vpack.c.b16 %v631, %v630
    %v637 = vunpack.c.l.b16 %v602
    %v638 = vunpack.c.h.b16 %v602
    %v639 = vunpack.c.l.b16 %v603
    %v640 = vunpack.c.h.b16 %v603
    %v641 = vunpack.c.l.b16 %v604
    %v642 = vunpack.c.h.b16 %v604
    %v643 = vunpack.c.l.b16 %v605
    %v644 = vunpack.c.h.b16 %v605
    %v645 = vpack.c.b16 %v641, %v637
    %v646 = vpack.c.b16 %v642, %v638
    %v647 = vpack.c.b16 %v643, %v639
    %v648 = vpack.c.b16 %v644, %v640
    %v654 = vsel %vm164, %v632, 0
    %656 = vmatprep.subr.bf16.mxu0 %v646
    %657 = vmatpush1.bf16.msra.mxu0 %v645
    %658 = vmatprep.subr.bf16.mxu0 0
    %659 = vmatpush1.bf16.msra.mxu0 0
    %660 = vmatprep.subr.bf16.mxu0 0
    %661 = vmatpush1.bf16.msra.mxu0 0
    %662 = vmatprep.subr.bf16.mxu0 0
    %663 = vmatpush1.bf16.msra.mxu0 0
    %664 = vmatprep.subr.bf16.mxu0 0
    %665 = vmatpush1.bf16.msra.mxu0 0
    %666 = vmatprep.subr.bf16.mxu0 0
    %667 = vmatpush1.bf16.msra.mxu0 0
    %668 = vmatprep.subr.bf16.mxu0 0
    %669 = vmatpush1.bf16.msra.mxu0 0
    %670 = vmatprep.subr.bf16.mxu0 0
    %671 = vmatpush1.bf16.msra.mxu0 0
    %672 = vmatprep.subr.bf16.mxu0 0
    %673 = vmatpush1.bf16.msra.mxu0 0
    %674 = vmatprep.subr.bf16.mxu0 0
    %675 = vmatpush1.bf16.msra.mxu0 0
    %676 = vmatprep.subr.bf16.mxu0 0
    %677 = vmatpush1.bf16.msra.mxu0 0
    %678 = vmatprep.subr.bf16.mxu0 0
    %679 = vmatpush1.bf16.msra.mxu0 0
    %680 = vmatprep.subr.bf16.mxu0 0
    %681 = vmatpush1.bf16.msra.mxu0 0
    %682 = vmatprep.subr.bf16.mxu0 0
    %683 = vmatpush1.bf16.msra.mxu0 0
    %684 = vmatprep.subr.bf16.mxu0 0
    %685 = vmatpush1.bf16.msra.mxu0 0
    %686 = vmatprep.subr.bf16.mxu0 0
    %687 = vmatpush1.bf16.msra.mxu0 0
    %688 = vmatprep.mubr.bf16.mxu0 0
    %689 = vmatmul.mubr.bf16.gmra.mrb[0].mxu0 %v654
    %v690 = vpop.f32.mrb[0].mxu0
    %v691 = vadd.f32 %v611, %v690
    %v692 = vpop.f32.mrb[0].mxu0
    %v693 = vadd.f32 %v615, %v692
    %v694 = vpop.f32.mrb[0].mxu0
    %v695 = vadd.f32 %v611, %v694
    %v696 = vpop.f32.mrb[0].mxu0
    %v697 = vadd.f32 %v615, %v696
    %698 = vdwg.mxu0
    %699 = vmatprep.subr.bf16.mxu0 %v648
    %700 = vmatpush1.bf16.msra.mxu0 %v647
    %701 = vmatprep.subr.bf16.mxu0 0
    %702 = vmatpush1.bf16.msra.mxu0 0
    %703 = vmatprep.subr.bf16.mxu0 0
    %704 = vmatpush1.bf16.msra.mxu0 0
    %705 = vmatprep.subr.bf16.mxu0 0
    %706 = vmatpush1.bf16.msra.mxu0 0
    %707 = vmatprep.subr.bf16.mxu0 0
    %708 = vmatpush1.bf16.msra.mxu0 0
    %709 = vmatprep.subr.bf16.mxu0 0
    %710 = vmatpush1.bf16.msra.mxu0 0
    %711 = vmatprep.subr.bf16.mxu0 0
    %712 = vmatpush1.bf16.msra.mxu0 0
    %713 = vmatprep.subr.bf16.mxu0 0
    %714 = vmatpush1.bf16.msra.mxu0 0
    %715 = vmatprep.subr.bf16.mxu0 0
    %716 = vmatpush1.bf16.msra.mxu0 0
    %717 = vmatprep.subr.bf16.mxu0 0
    %718 = vmatpush1.bf16.msra.mxu0 0
    %719 = vmatprep.subr.bf16.mxu0 0
    %720 = vmatpush1.bf16.msra.mxu0 0
    %721 = vmatprep.subr.bf16.mxu0 0
    %722 = vmatpush1.bf16.msra.mxu0 0
    %723 = vmatprep.subr.bf16.mxu0 0
    %724 = vmatpush1.bf16.msra.mxu0 0
    %725 = vmatprep.subr.bf16.mxu0 0
    %726 = vmatpush1.bf16.msra.mxu0 0
    %727 = vmatprep.subr.bf16.mxu0 0
    %728 = vmatpush1.bf16.msra.mxu0 0
    %729 = vmatprep.subr.bf16.mxu0 0
    %730 = vmatpush1.bf16.msra.mxu0 0
    %731 = vmatprep.mubr.bf16.mxu0 0
    %732 = vmatmul.mubr.bf16.gmra.mrb[0].mxu0 %v654
    %v733 = vpop.f32.mrb[0].mxu0
    %v734 = vadd.f32 %v619, %v733
    %v735 = vpop.f32.mrb[0].mxu0
    %v736 = vadd.f32 %v623, %v735
    %v737 = vpop.f32.mrb[0].mxu0
    %v738 = vadd.f32 %v619, %v737
    %v739 = vpop.f32.mrb[0].mxu0
    %v740 = vadd.f32 %v623, %v739
    %741 = vdwg.mxu0
    %v742 = vpack.c.bf16 %v596, %v595
    %v743 = vld [vmem:[#allocation10] sm:$0xff]
    %v744 = vld [vmem:[#allocation10 + $0x8] sm:$0xff]
    %v745 = vld [vmem:[#allocation10 + $0x10] sm:$0xff]
    %v746 = vld [vmem:[#allocation10 + $0x18] sm:$0xff]
    %v747 = vld [vmem:[#allocation10 + $0x20] sm:$0xff]
    %v748 = vld [vmem:[#allocation10 + $0x28] sm:$0xff]
    %v749 = vld [vmem:[#allocation10 + $0x30] sm:$0xff]
    %v750 = vld [vmem:[#allocation10 + $0x38] sm:$0xff]
    %v751 = vld [vmem:[#allocation10 + $0x40] sm:$0xff]
    %v752 = vld [vmem:[#allocation10 + $0x48] sm:$0xff]
    %v753 = vld [vmem:[#allocation10 + $0x50] sm:$0xff]
    %v754 = vld [vmem:[#allocation10 + $0x58] sm:$0xff]
    %v755 = vld [vmem:[#allocation10 + $0x60] sm:$0xff]
    %v756 = vld [vmem:[#allocation10 + $0x68] sm:$0xff]
    %v757 = vld [vmem:[#allocation10 + $0x70] sm:$0xff]
    %v758 = vld [vmem:[#allocation10 + $0x78] sm:$0xff]
    %v759 = vld [vmem:[#allocation10 + $0x80] sm:$0xff]
    %v760 = vld [vmem:[#allocation10 + $0x88] sm:$0xff]
    %v761 = vld [vmem:[#allocation10 + $0x90] sm:$0xff]
    %v762 = vld [vmem:[#allocation10 + $0x98] sm:$0xff]
    %v763 = vld [vmem:[#allocation10 + $0xa0] sm:$0xff]
    %v764 = vld [vmem:[#allocation10 + $0xa8] sm:$0xff]
    %v765 = vld [vmem:[#allocation10 + $0xb0] sm:$0xff]
    %v766 = vld [vmem:[#allocation10 + $0xb8] sm:$0xff]
    %v767 = vld [vmem:[#allocation10 + $0xc0] sm:$0xff]
    %v768 = vld [vmem:[#allocation10 + $0xc8] sm:$0xff]
    %v769 = vld [vmem:[#allocation10 + $0xd0] sm:$0xff]
    %v770 = vld [vmem:[#allocation10 + $0xd8] sm:$0xff]
    %v771 = vld [vmem:[#allocation10 + $0xe0] sm:$0xff]
    %v772 = vld [vmem:[#allocation10 + $0xe8] sm:$0xff]
    %v773 = vld [vmem:[#allocation10 + $0xf0] sm:$0xff]
    %v774 = vld [vmem:[#allocation10 + $0xf8] sm:$0xff]
    %v807 = vunpack.c.l.b16 %v743
    %v808 = vunpack.c.h.b16 %v743
    %v809 = vunpack.c.l.b16 %v744
    %v810 = vunpack.c.h.b16 %v744
    %v811 = vunpack.c.l.b16 %v745
    %v812 = vunpack.c.h.b16 %v745
    %v813 = vunpack.c.l.b16 %v746
    %v814 = vunpack.c.h.b16 %v746
    %v815 = vunpack.c.l.b16 %v747
    %v816 = vunpack.c.h.b16 %v747
    %v817 = vunpack.c.l.b16 %v748
    %v818 = vunpack.c.h.b16 %v748
    %v819 = vunpack.c.l.b16 %v749
    %v820 = vunpack.c.h.b16 %v749
    %v821 = vunpack.c.l.b16 %v750
    %v822 = vunpack.c.h.b16 %v750
    %v823 = vunpack.c.l.b16 %v751
    %v824 = vunpack.c.h.b16 %v751
    %v825 = vunpack.c.l.b16 %v752
    %v826 = vunpack.c.h.b16 %v752
    %v827 = vunpack.c.l.b16 %v753
    %v828 = vunpack.c.h.b16 %v753
    %v829 = vunpack.c.l.b16 %v754
    %v830 = vunpack.c.h.b16 %v754
    %v831 = vunpack.c.l.b16 %v755
    %v832 = vunpack.c.h.b16 %v755
    %v833 = vunpack.c.l.b16 %v756
    %v834 = vunpack.c.h.b16 %v756
    %v835 = vunpack.c.l.b16 %v757
    %v836 = vunpack.c.h.b16 %v757
    %v837 = vunpack.c.l.b16 %v758
    %v838 = vunpack.c.h.b16 %v758
    %v839 = vunpack.c.l.b16 %v759
    %v840 = vunpack.c.h.b16 %v759
    %v841 = vunpack.c.l.b16 %v760
    %v842 = vunpack.c.h.b16 %v760
    %v843 = vunpack.c.l.b16 %v761
    %v844 = vunpack.c.h.b16 %v761
    %v845 = vunpack.c.l.b16 %v762
    %v846 = vunpack.c.h.b16 %v762
    %v847 = vunpack.c.l.b16 %v763
    %v848 = vunpack.c.h.b16 %v763
    %v849 = vunpack.c.l.b16 %v764
    %v850 = vunpack.c.h.b16 %v764
    %v851 = vunpack.c.l.b16 %v765
    %v852 = vunpack.c.h.b16 %v765
    %v853 = vunpack.c.l.b16 %v766
    %v854 = vunpack.c.h.b16 %v766
    %v855 = vunpack.c.l.b16 %v767
    %v856 = vunpack.c.h.b16 %v767
    %v857 = vunpack.c.l.b16 %v768
    %v858 = vunpack.c.h.b16 %v768
    %v859 = vunpack.c.l.b16 %v769
    %v860 = vunpack.c.h.b16 %v769
    %v861 = vunpack.c.l.b16 %v770
    %v862 = vunpack.c.h.b16 %v770
    %v863 = vunpack.c.l.b16 %v771
    %v864 = vunpack.c.h.b16 %v771
    %v865 = vunpack.c.l.b16 %v772
    %v866 = vunpack.c.h.b16 %v772
    %v867 = vunpack.c.l.b16 %v773
    %v868 = vunpack.c.h.b16 %v773
    %v869 = vunpack.c.l.b16 %v774
    %v870 = vunpack.c.h.b16 %v774
    %v871 = vpack.c.b16 %v811, %v807
    %v872 = vpack.c.b16 %v812, %v808
    %v873 = vpack.c.b16 %v813, %v809
    %v874 = vpack.c.b16 %v814, %v810
    %v875 = vpack.c.b16 %v819, %v815
    %v876 = vpack.c.b16 %v820, %v816
    %v877 = vpack.c.b16 %v821, %v817
    %v878 = vpack.c.b16 %v822, %v818
    %v879 = vpack.c.b16 %v827, %v823
    %v880 = vpack.c.b16 %v828, %v824
    %v881 = vpack.c.b16 %v829, %v825
    %v882 = vpack.c.b16 %v830, %v826
    %v883 = vpack.c.b16 %v835, %v831
    %v884 = vpack.c.b16 %v836, %v832
    %v885 = vpack.c.b16 %v837, %v833
    %v886 = vpack.c.b16 %v838, %v834
    %v887 = vpack.c.b16 %v843, %v839
    %v888 = vpack.c.b16 %v844, %v840
    %v889 = vpack.c.b16 %v845, %v841
    %v890 = vpack.c.b16 %v846, %v842
    %v891 = vpack.c.b16 %v851, %v847
    %v892 = vpack.c.b16 %v852, %v848
    %v893 = vpack.c.b16 %v853, %v849
    %v894 = vpack.c.b16 %v854, %v850
    %v895 = vpack.c.b16 %v859, %v855
    %v896 = vpack.c.b16 %v860, %v856
    %v897 = vpack.c.b16 %v861, %v857
    %v898 = vpack.c.b16 %v862, %v858
    %v899 = vpack.c.b16 %v867, %v863
    %v900 = vpack.c.b16 %v868, %v864
    %v901 = vpack.c.b16 %v869, %v865
    %v902 = vpack.c.b16 %v870, %v866
    %935 = vmatprep.subr.bf16.mxu0 %v872
    %936 = vmatpush1.bf16.msra.mxu0 %v871
    %937 = vmatprep.subr.bf16.mxu0 %v876
    %938 = vmatpush1.bf16.msra.mxu0 %v875
    %939 = vmatprep.subr.bf16.mxu0 %v880
    %940 = vmatpush1.bf16.msra.mxu0 %v879
    %941 = vmatprep.subr.bf16.mxu0 %v884
    %942 = vmatpush1.bf16.msra.mxu0 %v883
    %943 = vmatprep.subr.bf16.mxu0 %v888
    %944 = vmatpush1.bf16.msra.mxu0 %v887
    %945 = vmatprep.subr.bf16.mxu0 %v892
    %946 = vmatpush1.bf16.msra.mxu0 %v891
    %947 = vmatprep.subr.bf16.mxu0 %v896
    %948 = vmatpush1.bf16.msra.mxu0 %v895
    %949 = vmatprep.subr.bf16.mxu0 %v900
    %950 = vmatpush1.bf16.msra.mxu0 %v899
    %951 = vmatprep.subr.bf16.mxu0 0
    %952 = vmatpush1.bf16.msra.mxu0 0
    %953 = vmatprep.subr.bf16.mxu0 0
    %954 = vmatpush1.bf16.msra.mxu0 0
    %955 = vmatprep.subr.bf16.mxu0 0
    %956 = vmatpush1.bf16.msra.mxu0 0
    %957 = vmatprep.subr.bf16.mxu0 0
    %958 = vmatpush1.bf16.msra.mxu0 0
    %959 = vmatprep.subr.bf16.mxu0 0
    %960 = vmatpush1.bf16.msra.mxu0 0
    %961 = vmatprep.subr.bf16.mxu0 0
    %962 = vmatpush1.bf16.msra.mxu0 0
    %963 = vmatprep.subr.bf16.mxu0 0
    %964 = vmatpush1.bf16.msra.mxu0 0
    %965 = vmatprep.subr.bf16.mxu0 0
    %966 = vmatpush1.bf16.msra.mxu0 0
    %967 = vmatprep.mubr.bf16.mxu0 0
    %968 = vmatmul.mubr.bf16.gmra.mrb[0].mxu0 %v742
    %v969 = vpop.f32.mrb[0].mxu0
    %v970 = vadd.f32 0.0, %v969
    %v971 = vpop.f32.mrb[0].mxu0
    %v972 = vadd.f32 0.0, %v971
    %v973 = vpop.f32.mrb[0].mxu0
    %v974 = vadd.f32 0.0, %v973
    %v975 = vpop.f32.mrb[0].mxu0
    %v976 = vadd.f32 0.0, %v975
    %977 = vdwg.mxu0
    %978 = vmatprep.subr.bf16.mxu0 %v874
    %979 = vmatpush1.bf16.msra.mxu0 %v873
    %980 = vmatprep.subr.bf16.mxu0 %v878
    %981 = vmatpush1.bf16.msra.mxu0 %v877
    %982 = vmatprep.subr.bf16.mxu0 %v882
    %983 = vmatpush1.bf16.msra.mxu0 %v881
    %984 = vmatprep.subr.bf16.mxu0 %v886
    %985 = vmatpush1.bf16.msra.mxu0 %v885
    %986 = vmatprep.subr.bf16.mxu0 %v890
    %987 = vmatpush1.bf16.msra.mxu0 %v889
    %988 = vmatprep.subr.bf16.mxu0 %v894
    %989 = vmatpush1.bf16.msra.mxu0 %v893
    %990 = vmatprep.subr.bf16.mxu0 %v898
    %991 = vmatpush1.bf16.msra.mxu0 %v897
    %992 = vmatprep.subr.bf16.mxu0 %v902
    %993 = vmatpush1.bf16.msra.mxu0 %v901
    %994 = vmatprep.subr.bf16.mxu0 0
    %995 = vmatpush1.bf16.msra.mxu0 0
    %996 = vmatprep.subr.bf16.mxu0 0
    %997 = vmatpush1.bf16.msra.mxu0 0
    %998 = vmatprep.subr.bf16.mxu0 0
    %999 = vmatpush1.bf16.msra.mxu0 0
    %1000 = vmatprep.subr.bf16.mxu0 0
    %1001 = vmatpush1.bf16.msra.mxu0 0
    %1002 = vmatprep.subr.bf16.mxu0 0
    %1003 = vmatpush1.bf16.msra.mxu0 0
    %1004 = vmatprep.subr.bf16.mxu0 0
    %1005 = vmatpush1.bf16.msra.mxu0 0
    %1006 = vmatprep.subr.bf16.mxu0 0
    %1007 = vmatpush1.bf16.msra.mxu0 0
    %1008 = vmatprep.subr.bf16.mxu0 0
    %1009 = vmatpush1.bf16.msra.mxu0 0
    %1010 = vmatprep.mubr.bf16.mxu0 0
    %1011 = vmatmul.mubr.bf16.gmra.mrb[0].mxu0 %v742
    %v1012 = vpop.f32.mrb[0].mxu0
    %v1013 = vadd.f32 0.0, %v1012
    %v1014 = vpop.f32.mrb[0].mxu0
    %v1015 = vadd.f32 0.0, %v1014
    %v1016 = vpop.f32.mrb[0].mxu0
    %v1017 = vadd.f32 0.0, %v1016
    %v1018 = vpop.f32.mrb[0].mxu0
    %v1019 = vadd.f32 0.0, %v1018
    %1020 = vdwg.mxu0
    %v1021 = vadd.f32 %v691, %v970
    %v1022 = vadd.f32 %v693, %v972
    %v1023 = vadd.f32 %v734, %v1013
    %v1024 = vadd.f32 %v736, %v1015
    %v1025 = vadd.f32 %v695, %v974
    %v1026 = vadd.f32 %v697, %v976
    %v1027 = vadd.f32 %v738, %v1017
    %v1028 = vadd.f32 %v740, %v1019
    %v1029 = vxor.u32 %v1021, 2147483648
    %v1030 = vxor.u32 %v1025, 2147483648
    %v1031 = vmul.f32 %v1029, 1.442695
    %v1032 = vpow.pop %v1031
    %v1033 = vmul.f32 %v1030, 1.442695
    %v1034 = vpow.pop %v1033
    %v1035 = vadd.f32 %v1032, 1.0
    %v1036 = vadd.f32 %v1034, 1.0
    %v1037 = vrcp.pop %v1035
    %v1038 = vmul.f32 1.0, %v1037
    %v1039 = vrcp.pop %v1036
    %v1040 = vmul.f32 1.0, %v1039
    %v1041 = vxor.u32 %v1022, 2147483648
    %v1042 = vxor.u32 %v1026, 2147483648
    %v1043 = vmul.f32 %v1041, 1.442695
    %v1044 = vpow.pop %v1043
    %v1045 = vmul.f32 %v1042, 1.442695
    %v1046 = vpow.pop %v1045
    %v1047 = vadd.f32 %v1044, 1.0
    %v1048 = vadd.f32 %v1046, 1.0
    %v1049 = vrcp.pop %v1047
    %v1050 = vmul.f32 1.0, %v1049
    %v1051 = vrcp.pop %v1048
    %v1052 = vmul.f32 1.0, %v1051
    %v1053 = vtanh.pop %v1023
    %v1054 = vtanh.pop %v1027
    %v1055 = vxor.u32 %v1024, 2147483648
    %v1056 = vxor.u32 %v1028, 2147483648
    %v1057 = vmul.f32 %v1055, 1.442695
    %v1058 = vpow.pop %v1057
    %v1059 = vmul.f32 %v1056, 1.442695
    %v1060 = vpow.pop %v1059
    %v1061 = vadd.f32 %v1058, 1.0
    %v1062 = vadd.f32 %v1060, 1.0
    %v1063 = vrcp.pop %v1061
    %v1064 = vmul.f32 1.0, %v1063
    %v1065 = vrcp.pop %v1062
    %v1066 = vmul.f32 1.0, %v1065
    %v1067 = vmul.f32 %v1050, %v597
    %v1068 = vmul.f32 %v1052, %v598
    %v1069 = vmul.f32 %v1038, %v1053
    %v1070 = vmul.f32 %v1040, %v1054
    %v1071 = vadd.f32 %v1067, %v1069
    %v1072 = vadd.f32 %v1068, %v1070
    %v1073 = vtanh.pop %v1071
    %v1074 = vtanh.pop %v1072
    %v1075 = vmul.f32 %v1064, %v1073
    %v1076 = vmul.f32 %v1066, %v1074
    %s1077 = scalar_lea.vmem [#allocation13], 16
    %1078 = vst [vmem:[%s1077] sm:$0xff] %v1075
    %1079 = vst [vmem:[%s1077 + $0x8] sm:$0xff] %v1076
    %1080 = vst [vmem:[#allocation2] sm:$0xff] %v1075
    %1081 = vst [vmem:[#allocation2 + $0x8] sm:$0xff] %v1076
    %1082 = vst [vmem:[#allocation3] sm:$0xff] %v1071
    %1083 = vst [vmem:[#allocation3 + $0x8] sm:$0xff] %v1072
    %v1084 = vld [vmem:[#allocation2] sm:$0xff]
    %v1085 = vld [vmem:[#allocation2 + $0x8] sm:$0xff]
    %v1086 = vld [vmem:[#allocation3] sm:$0xff]
    %v1087 = vld [vmem:[#allocation3 + $0x8] sm:$0xff]
    %s1088 = scalar_lea.vmem [#allocation4], 16
    %v1089 = vld [vmem:[%s1088] sm:$0xf]
    %v1090 = vld [vmem:[%s1088 + $0x4] sm:$0xf]
    %v1091 = vld [vmem:[#allocation7] sm:$0xff]
    %v1092 = vld [vmem:[#allocation7 + $0x8] sm:$0xff]
    %v1093 = vld [vmem:[#allocation7 + $0x10] sm:$0xff]
    %v1094 = vld [vmem:[#allocation7 + $0x18] sm:$0xff]
    %v1095 = vld [vmem:[#allocation9] sm:$0xf]
    %v1097 = vlaneseq
    %v1098 = vshrl.u32 %v1097, 7
    %v1099 = vsub.s32 0, %v1098
    %v1100 = vrot.slane %v1095, %v1099
    %v1101 = vlaneseq
    %v1102 = vshrl.u32 %v1101, 7
    %v1103 = vsub.s32 1, %v1102
    %v1104 = vrot.slane %v1095, %v1103
    %v1105 = vlaneseq
    %v1106 = vshrl.u32 %v1105, 7
    %v1107 = vsub.s32 2, %v1106
    %v1108 = vrot.slane %v1095, %v1107
    %v1109 = vlaneseq
    %v1110 = vshrl.u32 %v1109, 7
    %v1111 = vsub.s32 3, %v1110
    %v1112 = vrot.slane %v1095, %v1111
    %v1119 = vunpack.c.l.b16 %v1089
    %v1120 = vunpack.c.l.b16 %v1090
    %v1121 = vpack.c.b16 %v1120, %v1119
    %v1126 = vunpack.c.l.b16 %v1091
    %v1127 = vunpack.c.h.b16 %v1091
    %v1128 = vunpack.c.l.b16 %v1092
    %v1129 = vunpack.c.h.b16 %v1092
    %v1130 = vunpack.c.l.b16 %v1093
    %v1131 = vunpack.c.h.b16 %v1093
    %v1132 = vunpack.c.l.b16 %v1094
    %v1133 = vunpack.c.h.b16 %v1094
    %v1134 = vpack.c.b16 %v1130, %v1126
    %v1135 = vpack.c.b16 %v1131, %v1127
    %v1136 = vpack.c.b16 %v1132, %v1128
    %v1137 = vpack.c.b16 %v1133, %v1129
    %v1143 = vsel %vm164, %v1121, 0
    %1145 = vmatprep.subr.bf16.mxu0 %v1135
    %1146 = vmatpush1.bf16.msra.mxu0 %v1134
    %1147 = vmatprep.subr.bf16.mxu0 0
    %1148 = vmatpush1.bf16.msra.mxu0 0
    %1149 = vmatprep.subr.bf16.mxu0 0
    %1150 = vmatpush1.bf16.msra.mxu0 0
    %1151 = vmatprep.subr.bf16.mxu0 0
    %1152 = vmatpush1.bf16.msra.mxu0 0
    %1153 = vmatprep.subr.bf16.mxu0 0
    %1154 = vmatpush1.bf16.msra.mxu0 0
    %1155 = vmatprep.subr.bf16.mxu0 0
    %1156 = vmatpush1.bf16.msra.mxu0 0
    %1157 = vmatprep.subr.bf16.mxu0 0
    %1158 = vmatpush1.bf16.msra.mxu0 0
    %1159 = vmatprep.subr.bf16.mxu0 0
    %1160 = vmatpush1.bf16.msra.mxu0 0
    %1161 = vmatprep.subr.bf16.mxu0 0
    %1162 = vmatpush1.bf16.msra.mxu0 0
    %1163 = vmatprep.subr.bf16.mxu0 0
    %1164 = vmatpush1.bf16.msra.mxu0 0
    %1165 = vmatprep.subr.bf16.mxu0 0
    %1166 = vmatpush1.bf16.msra.mxu0 0
    %1167 = vmatprep.subr.bf16.mxu0 0
    %1168 = vmatpush1.bf16.msra.mxu0 0
    %1169 = vmatprep.subr.bf16.mxu0 0
    %1170 = vmatpush1.bf16.msra.mxu0 0
    %1171 = vmatprep.subr.bf16.mxu0 0
    %1172 = vmatpush1.bf16.msra.mxu0 0
    %1173 = vmatprep.subr.bf16.mxu0 0
    %1174 = vmatpush1.bf16.msra.mxu0 0
    %1175 = vmatprep.subr.bf16.mxu0 0
    %1176 = vmatpush1.bf16.msra.mxu0 0
    %1177 = vmatprep.mubr.bf16.mxu0 0
    %1178 = vmatmul.mubr.bf16.gmra.mrb[0].mxu0 %v1143
    %v1179 = vpop.f32.mrb[0].mxu0
    %v1180 = vadd.f32 %v1100, %v1179
    %v1181 = vpop.f32.mrb[0].mxu0
    %v1182 = vadd.f32 %v1104, %v1181
    %v1183 = vpop.f32.mrb[0].mxu0
    %v1184 = vadd.f32 %v1100, %v1183
    %v1185 = vpop.f32.mrb[0].mxu0
    %v1186 = vadd.f32 %v1104, %v1185
    %1187 = vdwg.mxu0
    %1188 = vmatprep.subr.bf16.mxu0 %v1137
    %1189 = vmatpush1.bf16.msra.mxu0 %v1136
    %1190 = vmatprep.subr.bf16.mxu0 0
    %1191 = vmatpush1.bf16.msra.mxu0 0
    %1192 = vmatprep.subr.bf16.mxu0 0
    %1193 = vmatpush1.bf16.msra.mxu0 0
    %1194 = vmatprep.subr.bf16.mxu0 0
    %1195 = vmatpush1.bf16.msra.mxu0 0
    %1196 = vmatprep.subr.bf16.mxu0 0
    %1197 = vmatpush1.bf16.msra.mxu0 0
    %1198 = vmatprep.subr.bf16.mxu0 0
    %1199 = vmatpush1.bf16.msra.mxu0 0
    %1200 = vmatprep.subr.bf16.mxu0 0
    %1201 = vmatpush1.bf16.msra.mxu0 0
    %1202 = vmatprep.subr.bf16.mxu0 0
    %1203 = vmatpush1.bf16.msra.mxu0 0
    %1204 = vmatprep.subr.bf16.mxu0 0
    %1205 = vmatpush1.bf16.msra.mxu0 0
    %1206 = vmatprep.subr.bf16.mxu0 0
    %1207 = vmatpush1.bf16.msra.mxu0 0
    %1208 = vmatprep.subr.bf16.mxu0 0
    %1209 = vmatpush1.bf16.msra.mxu0 0
    %1210 = vmatprep.subr.bf16.mxu0 0
    %1211 = vmatpush1.bf16.msra.mxu0 0
    %1212 = vmatprep.subr.bf16.mxu0 0
    %1213 = vmatpush1.bf16.msra.mxu0 0
    %1214 = vmatprep.subr.bf16.mxu0 0
    %1215 = vmatpush1.bf16.msra.mxu0 0
    %1216 = vmatprep.subr.bf16.mxu0 0
    %1217 = vmatpush1.bf16.msra.mxu0 0
    %1218 = vmatprep.subr.bf16.mxu0 0
    %1219 = vmatpush1.bf16.msra.mxu0 0
    %1220 = vmatprep.mubr.bf16.mxu0 0
    %1221 = vmatmul.mubr.bf16.gmra.mrb[0].mxu0 %v1143
    %v1222 = vpop.f32.mrb[0].mxu0
    %v1223 = vadd.f32 %v1108, %v1222
    %v1224 = vpop.f32.mrb[0].mxu0
    %v1225 = vadd.f32 %v1112, %v1224
    %v1226 = vpop.f32.mrb[0].mxu0
    %v1227 = vadd.f32 %v1108, %v1226
    %v1228 = vpop.f32.mrb[0].mxu0
    %v1229 = vadd.f32 %v1112, %v1228
    %1230 = vdwg.mxu0
    %v1231 = vpack.c.bf16 %v1085, %v1084
    %v1232 = vld [vmem:[#allocation10] sm:$0xff]
    %v1233 = vld [vmem:[#allocation10 + $0x8] sm:$0xff]
    %v1234 = vld [vmem:[#allocation10 + $0x10] sm:$0xff]
    %v1235 = vld [vmem:[#allocation10 + $0x18] sm:$0xff]
    %v1236 = vld [vmem:[#allocation10 + $0x20] sm:$0xff]
    %v1237 = vld [vmem:[#allocation10 + $0x28] sm:$0xff]
    %v1238 = vld [vmem:[#allocation10 + $0x30] sm:$0xff]
    %v1239 = vld [vmem:[#allocation10 + $0x38] sm:$0xff]
    %v1240 = vld [vmem:[#allocation10 + $0x40] sm:$0xff]
    %v1241 = vld [vmem:[#allocation10 + $0x48] sm:$0xff]
    %v1242 = vld [vmem:[#allocation10 + $0x50] sm:$0xff]
    %v1243 = vld [vmem:[#allocation10 + $0x58] sm:$0xff]
    %v1244 = vld [vmem:[#allocation10 + $0x60] sm:$0xff]
    %v1245 = vld [vmem:[#allocation10 + $0x68] sm:$0xff]
    %v1246 = vld [vmem:[#allocation10 + $0x70] sm:$0xff]
    %v1247 = vld [vmem:[#allocation10 + $0x78] sm:$0xff]
    %v1248 = vld [vmem:[#allocation10 + $0x80] sm:$0xff]
    %v1249 = vld [vmem:[#allocation10 + $0x88] sm:$0xff]
    %v1250 = vld [vmem:[#allocation10 + $0x90] sm:$0xff]
    %v1251 = vld [vmem:[#allocation10 + $0x98] sm:$0xff]
    %v1252 = vld [vmem:[#allocation10 + $0xa0] sm:$0xff]
    %v1253 = vld [vmem:[#allocation10 + $0xa8] sm:$0xff]
    %v1254 = vld [vmem:[#allocation10 + $0xb0] sm:$0xff]
    %v1255 = vld [vmem:[#allocation10 + $0xb8] sm:$0xff]
    %v1256 = vld [vmem:[#allocation10 + $0xc0] sm:$0xff]
    %v1257 = vld [vmem:[#allocation10 + $0xc8] sm:$0xff]
    %v1258 = vld [vmem:[#allocation10 + $0xd0] sm:$0xff]
    %v1259 = vld [vmem:[#allocation10 + $0xd8] sm:$0xff]
    %v1260 = vld [vmem:[#allocation10 + $0xe0] sm:$0xff]
    %v1261 = vld [vmem:[#allocation10 + $0xe8] sm:$0xff]
    %v1262 = vld [vmem:[#allocation10 + $0xf0] sm:$0xff]
    %v1263 = vld [vmem:[#allocation10 + $0xf8] sm:$0xff]
    %v1296 = vunpack.c.l.b16 %v1232
    %v1297 = vunpack.c.h.b16 %v1232
    %v1298 = vunpack.c.l.b16 %v1233
    %v1299 = vunpack.c.h.b16 %v1233
    %v1300 = vunpack.c.l.b16 %v1234
    %v1301 = vunpack.c.h.b16 %v1234
    %v1302 = vunpack.c.l.b16 %v1235
    %v1303 = vunpack.c.h.b16 %v1235
    %v1304 = vunpack.c.l.b16 %v1236
    %v1305 = vunpack.c.h.b16 %v1236
    %v1306 = vunpack.c.l.b16 %v1237
    %v1307 = vunpack.c.h.b16 %v1237
    %v1308 = vunpack.c.l.b16 %v1238
    %v1309 = vunpack.c.h.b16 %v1238
    %v1310 = vunpack.c.l.b16 %v1239
    %v1311 = vunpack.c.h.b16 %v1239
    %v1312 = vunpack.c.l.b16 %v1240
    %v1313 = vunpack.c.h.b16 %v1240
    %v1314 = vunpack.c.l.b16 %v1241
    %v1315 = vunpack.c.h.b16 %v1241
    %v1316 = vunpack.c.l.b16 %v1242
    %v1317 = vunpack.c.h.b16 %v1242
    %v1318 = vunpack.c.l.b16 %v1243
    %v1319 = vunpack.c.h.b16 %v1243
    %v1320 = vunpack.c.l.b16 %v1244
    %v1321 = vunpack.c.h.b16 %v1244
    %v1322 = vunpack.c.l.b16 %v1245
    %v1323 = vunpack.c.h.b16 %v1245
    %v1324 = vunpack.c.l.b16 %v1246
    %v1325 = vunpack.c.h.b16 %v1246
    %v1326 = vunpack.c.l.b16 %v1247
    %v1327 = vunpack.c.h.b16 %v1247
    %v1328 = vunpack.c.l.b16 %v1248
    %v1329 = vunpack.c.h.b16 %v1248
    %v1330 = vunpack.c.l.b16 %v1249
    %v1331 = vunpack.c.h.b16 %v1249
    %v1332 = vunpack.c.l.b16 %v1250
    %v1333 = vunpack.c.h.b16 %v1250
    %v1334 = vunpack.c.l.b16 %v1251
    %v1335 = vunpack.c.h.b16 %v1251
    %v1336 = vunpack.c.l.b16 %v1252
    %v1337 = vunpack.c.h.b16 %v1252
    %v1338 = vunpack.c.l.b16 %v1253
    %v1339 = vunpack.c.h.b16 %v1253
    %v1340 = vunpack.c.l.b16 %v1254
    %v1341 = vunpack.c.h.b16 %v1254
    %v1342 = vunpack.c.l.b16 %v1255
    %v1343 = vunpack.c.h.b16 %v1255
    %v1344 = vunpack.c.l.b16 %v1256
    %v1345 = vunpack.c.h.b16 %v1256
    %v1346 = vunpack.c.l.b16 %v1257
    %v1347 = vunpack.c.h.b16 %v1257
    %v1348 = vunpack.c.l.b16 %v1258
    %v1349 = vunpack.c.h.b16 %v1258
    %v1350 = vunpack.c.l.b16 %v1259
    %v1351 = vunpack.c.h.b16 %v1259
    %v1352 = vunpack.c.l.b16 %v1260
    %v1353 = vunpack.c.h.b16 %v1260
    %v1354 = vunpack.c.l.b16 %v1261
    %v1355 = vunpack.c.h.b16 %v1261
    %v1356 = vunpack.c.l.b16 %v1262
    %v1357 = vunpack.c.h.b16 %v1262
    %v1358 = vunpack.c.l.b16 %v1263
    %v1359 = vunpack.c.h.b16 %v1263
    %v1360 = vpack.c.b16 %v1300, %v1296
    %v1361 = vpack.c.b16 %v1301, %v1297
    %v1362 = vpack.c.b16 %v1302, %v1298
    %v1363 = vpack.c.b16 %v1303, %v1299
    %v1364 = vpack.c.b16 %v1308, %v1304
    %v1365 = vpack.c.b16 %v1309, %v1305
    %v1366 = vpack.c.b16 %v1310, %v1306
    %v1367 = vpack.c.b16 %v1311, %v1307
    %v1368 = vpack.c.b16 %v1316, %v1312
    %v1369 = vpack.c.b16 %v1317, %v1313
    %v1370 = vpack.c.b16 %v1318, %v1314
    %v1371 = vpack.c.b16 %v1319, %v1315
    %v1372 = vpack.c.b16 %v1324, %v1320
    %v1373 = vpack.c.b16 %v1325, %v1321
    %v1374 = vpack.c.b16 %v1326, %v1322
    %v1375 = vpack.c.b16 %v1327, %v1323
    %v1376 = vpack.c.b16 %v1332, %v1328
    %v1377 = vpack.c.b16 %v1333, %v1329
    %v1378 = vpack.c.b16 %v1334, %v1330
    %v1379 = vpack.c.b16 %v1335, %v1331
    %v1380 = vpack.c.b16 %v1340, %v1336
    %v1381 = vpack.c.b16 %v1341, %v1337
    %v1382 = vpack.c.b16 %v1342, %v1338
    %v1383 = vpack.c.b16 %v1343, %v1339
    %v1384 = vpack.c.b16 %v1348, %v1344
    %v1385 = vpack.c.b16 %v1349, %v1345
    %v1386 = vpack.c.b16 %v1350, %v1346
    %v1387 = vpack.c.b16 %v1351, %v1347
    %v1388 = vpack.c.b16 %v1356, %v1352
    %v1389 = vpack.c.b16 %v1357, %v1353
    %v1390 = vpack.c.b16 %v1358, %v1354
    %v1391 = vpack.c.b16 %v1359, %v1355
    %1424 = vmatprep.subr.bf16.mxu0 %v1361
    %1425 = vmatpush1.bf16.msra.mxu0 %v1360
    %1426 = vmatprep.subr.bf16.mxu0 %v1365
    %1427 = vmatpush1.bf16.msra.mxu0 %v1364
    %1428 = vmatprep.subr.bf16.mxu0 %v1369
    %1429 = vmatpush1.bf16.msra.mxu0 %v1368
    %1430 = vmatprep.subr.bf16.mxu0 %v1373
    %1431 = vmatpush1.bf16.msra.mxu0 %v1372
    %1432 = vmatprep.subr.bf16.mxu0 %v1377
    %1433 = vmatpush1.bf16.msra.mxu0 %v1376
    %1434 = vmatprep.subr.bf16.mxu0 %v1381
    %1435 = vmatpush1.bf16.msra.mxu0 %v1380
    %1436 = vmatprep.subr.bf16.mxu0 %v1385
    %1437 = vmatpush1.bf16.msra.mxu0 %v1384
    %1438 = vmatprep.subr.bf16.mxu0 %v1389
    %1439 = vmatpush1.bf16.msra.mxu0 %v1388
    %1440 = vmatprep.subr.bf16.mxu0 0
    %1441 = vmatpush1.bf16.msra.mxu0 0
    %1442 = vmatprep.subr.bf16.mxu0 0
    %1443 = vmatpush1.bf16.msra.mxu0 0
    %1444 = vmatprep.subr.bf16.mxu0 0
    %1445 = vmatpush1.bf16.msra.mxu0 0
    %1446 = vmatprep.subr.bf16.mxu0 0
    %1447 = vmatpush1.bf16.msra.mxu0 0
    %1448 = vmatprep.subr.bf16.mxu0 0
    %1449 = vmatpush1.bf16.msra.mxu0 0
    %1450 = vmatprep.subr.bf16.mxu0 0
    %1451 = vmatpush1.bf16.msra.mxu0 0
    %1452 = vmatprep.subr.bf16.mxu0 0
    %1453 = vmatpush1.bf16.msra.mxu0 0
    %1454 = vmatprep.subr.bf16.mxu0 0
    %1455 = vmatpush1.bf16.msra.mxu0 0
    %1456 = vmatprep.mubr.bf16.mxu0 0
    %1457 = vmatmul.mubr.bf16.gmra.mrb[0].mxu0 %v1231
    %v1458 = vpop.f32.mrb[0].mxu0
    %v1459 = vadd.f32 0.0, %v1458
    %v1460 = vpop.f32.mrb[0].mxu0
    %v1461 = vadd.f32 0.0, %v1460
    %v1462 = vpop.f32.mrb[0].mxu0
    %v1463 = vadd.f32 0.0, %v1462
    %v1464 = vpop.f32.mrb[0].mxu0
    %v1465 = vadd.f32 0.0, %v1464
    %1466 = vdwg.mxu0
    %1467 = vmatprep.subr.bf16.mxu0 %v1363
    %1468 = vmatpush1.bf16.msra.mxu0 %v1362
    %1469 = vmatprep.subr.bf16.mxu0 %v1367
    %1470 = vmatpush1.bf16.msra.mxu0 %v1366
    %1471 = vmatprep.subr.bf16.mxu0 %v1371
    %1472 = vmatpush1.bf16.msra.mxu0 %v1370
    %1473 = vmatprep.subr.bf16.mxu0 %v1375
    %1474 = vmatpush1.bf16.msra.mxu0 %v1374
    %1475 = vmatprep.subr.bf16.mxu0 %v1379
    %1476 = vmatpush1.bf16.msra.mxu0 %v1378
    %1477 = vmatprep.subr.bf16.mxu0 %v1383
    %1478 = vmatpush1.bf16.msra.mxu0 %v1382
    %1479 = vmatprep.subr.bf16.mxu0 %v1387
    %1480 = vmatpush1.bf16.msra.mxu0 %v1386
    %1481 = vmatprep.subr.bf16.mxu0 %v1391
    %1482 = vmatpush1.bf16.msra.mxu0 %v1390
    %1483 = vmatprep.subr.bf16.mxu0 0
    %1484 = vmatpush1.bf16.msra.mxu0 0
    %1485 = vmatprep.subr.bf16.mxu0 0
    %1486 = vmatpush1.bf16.msra.mxu0 0
    %1487 = vmatprep.subr.bf16.mxu0 0
    %1488 = vmatpush1.bf16.msra.mxu0 0
    %1489 = vmatprep.subr.bf16.mxu0 0
    %1490 = vmatpush1.bf16.msra.mxu0 0
    %1491 = vmatprep.subr.bf16.mxu0 0
    %1492 = vmatpush1.bf16.msra.mxu0 0
    %1493 = vmatprep.subr.bf16.mxu0 0
    %1494 = vmatpush1.bf16.msra.mxu0 0
    %1495 = vmatprep.subr.bf16.mxu0 0
    %1496 = vmatpush1.bf16.msra.mxu0 0
    %1497 = vmatprep.subr.bf16.mxu0 0
    %1498 = vmatpush1.bf16.msra.mxu0 0
    %1499 = vmatprep.mubr.bf16.mxu0 0
    %1500 = vmatmul.mubr.bf16.gmra.mrb[0].mxu0 %v1231
    %v1501 = vpop.f32.mrb[0].mxu0
    %v1502 = vadd.f32 0.0, %v1501
    %v1503 = vpop.f32.mrb[0].mxu0
    %v1504 = vadd.f32 0.0, %v1503
    %v1505 = vpop.f32.mrb[0].mxu0
    %v1506 = vadd.f32 0.0, %v1505
    %v1507 = vpop.f32.mrb[0].mxu0
    %v1508 = vadd.f32 0.0, %v1507
    %1509 = vdwg.mxu0
    %v1510 = vadd.f32 %v1180, %v1459
    %v1511 = vadd.f32 %v1182, %v1461
    %v1512 = vadd.f32 %v1223, %v1502
    %v1513 = vadd.f32 %v1225, %v1504
    %v1514 = vadd.f32 %v1184, %v1463
    %v1515 = vadd.f32 %v1186, %v1465
    %v1516 = vadd.f32 %v1227, %v1506
    %v1517 = vadd.f32 %v1229, %v1508
    %v1518 = vxor.u32 %v1510, 2147483648
    %v1519 = vxor.u32 %v1514, 2147483648
    %v1520 = vmul.f32 %v1518, 1.442695
    %v1521 = vpow.pop %v1520
    %v1522 = vmul.f32 %v1519, 1.442695
    %v1523 = vpow.pop %v1522
    %v1524 = vadd.f32 %v1521, 1.0
    %v1525 = vadd.f32 %v1523, 1.0
    %v1526 = vrcp.pop %v1524
    %v1527 = vmul.f32 1.0, %v1526
    %v1528 = vrcp.pop %v1525
    %v1529 = vmul.f32 1.0, %v1528
    %v1530 = vxor.u32 %v1511, 2147483648
    %v1531 = vxor.u32 %v1515, 2147483648
    %v1532 = vmul.f32 %v1530, 1.442695
    %v1533 = vpow.pop %v1532
    %v1534 = vmul.f32 %v1531, 1.442695
    %v1535 = vpow.pop %v1534
    %v1536 = vadd.f32 %v1533, 1.0
    %v1537 = vadd.f32 %v1535, 1.0
    %v1538 = vrcp.pop %v1536
    %v1539 = vmul.f32 1.0, %v1538
    %v1540 = vrcp.pop %v1537
    %v1541 = vmul.f32 1.0, %v1540
    %v1542 = vtanh.pop %v1512
    %v1543 = vtanh.pop %v1516
    %v1544 = vxor.u32 %v1513, 2147483648
    %v1545 = vxor.u32 %v1517, 2147483648
    %v1546 = vmul.f32 %v1544, 1.442695
    %v1547 = vpow.pop %v1546
    %v1548 = vmul.f32 %v1545, 1.442695
    %v1549 = vpow.pop %v1548
    %v1550 = vadd.f32 %v1547, 1.0
    %v1551 = vadd.f32 %v1549, 1.0
    %v1552 = vrcp.pop %v1550
    %v1553 = vmul.f32 1.0, %v1552
    %v1554 = vrcp.pop %v1551
    %v1555 = vmul.f32 1.0, %v1554
    %v1556 = vmul.f32 %v1539, %v1086
    %v1557 = vmul.f32 %v1541, %v1087
    %v1558 = vmul.f32 %v1527, %v1542
    %v1559 = vmul.f32 %v1529, %v1543
    %v1560 = vadd.f32 %v1556, %v1558
    %v1561 = vadd.f32 %v1557, %v1559
    %v1562 = vtanh.pop %v1560
    %v1563 = vtanh.pop %v1561
    %v1564 = vmul.f32 %v1553, %v1562
    %v1565 = vmul.f32 %v1555, %v1563
    %s1566 = scalar_lea.vmem [#allocation13], 32
    %1567 = vst [vmem:[%s1566] sm:$0xff] %v1564
    %1568 = vst [vmem:[%s1566 + $0x8] sm:$0xff] %v1565
    %1569 = vst [vmem:[#allocation2] sm:$0xff] %v1564
    %1570 = vst [vmem:[#allocation2 + $0x8] sm:$0xff] %v1565
    %1571 = vst [vmem:[#allocation3] sm:$0xff] %v1560
    %1572 = vst [vmem:[#allocation3 + $0x8] sm:$0xff] %v1561
    %v1573 = vld [vmem:[#allocation2] sm:$0xff]
    %v1574 = vld [vmem:[#allocation2 + $0x8] sm:$0xff]
    %v1575 = vld [vmem:[#allocation3] sm:$0xff]
    %v1576 = vld [vmem:[#allocation3 + $0x8] sm:$0xff]
    %s1577 = scalar_lea.vmem [#allocation4], 24
    %v1578 = vld [vmem:[%s1577] sm:$0xf]
    %v1579 = vld [vmem:[%s1577 + $0x4] sm:$0xf]
    %v1580 = vld [vmem:[#allocation7] sm:$0xff]
    %v1581 = vld [vmem:[#allocation7 + $0x8] sm:$0xff]
    %v1582 = vld [vmem:[#allocation7 + $0x10] sm:$0xff]
    %v1583 = vld [vmem:[#allocation7 + $0x18] sm:$0xff]
    %v1584 = vld [vmem:[#allocation9] sm:$0xf]
    %v1586 = vlaneseq
    %v1587 = vshrl.u32 %v1586, 7
    %v1588 = vsub.s32 0, %v1587
    %v1589 = vrot.slane %v1584, %v1588
    %v1590 = vlaneseq
    %v1591 = vshrl.u32 %v1590, 7
    %v1592 = vsub.s32 1, %v1591
    %v1593 = vrot.slane %v1584, %v1592
    %v1594 = vlaneseq
    %v1595 = vshrl.u32 %v1594, 7
    %v1596 = vsub.s32 2, %v1595
    %v1597 = vrot.slane %v1584, %v1596
    %v1598 = vlaneseq
    %v1599 = vshrl.u32 %v1598, 7
    %v1600 = vsub.s32 3, %v1599
    %v1601 = vrot.slane %v1584, %v1600
    %v1608 = vunpack.c.l.b16 %v1578
    %v1609 = vunpack.c.l.b16 %v1579
    %v1610 = vpack.c.b16 %v1609, %v1608
    %v1615 = vunpack.c.l.b16 %v1580
    %v1616 = vunpack.c.h.b16 %v1580
    %v1617 = vunpack.c.l.b16 %v1581
    %v1618 = vunpack.c.h.b16 %v1581
    %v1619 = vunpack.c.l.b16 %v1582
    %v1620 = vunpack.c.h.b16 %v1582
    %v1621 = vunpack.c.l.b16 %v1583
    %v1622 = vunpack.c.h.b16 %v1583
    %v1623 = vpack.c.b16 %v1619, %v1615
    %v1624 = vpack.c.b16 %v1620, %v1616
    %v1625 = vpack.c.b16 %v1621, %v1617
    %v1626 = vpack.c.b16 %v1622, %v1618
    %v1632 = vsel %vm164, %v1610, 0
    %1634 = vmatprep.subr.bf16.mxu0 %v1624
    %1635 = vmatpush1.bf16.msra.mxu0 %v1623
    %1636 = vmatprep.subr.bf16.mxu0 0
    %1637 = vmatpush1.bf16.msra.mxu0 0
    %1638 = vmatprep.subr.bf16.mxu0 0
    %1639 = vmatpush1.bf16.msra.mxu0 0
    %1640 = vmatprep.subr.bf16.mxu0 0
    %1641 = vmatpush1.bf16.msra.mxu0 0
    %1642 = vmatprep.subr.bf16.mxu0 0
    %1643 = vmatpush1.bf16.msra.mxu0 0
    %1644 = vmatprep.subr.bf16.mxu0 0
    %1645 = vmatpush1.bf16.msra.mxu0 0
    %1646 = vmatprep.subr.bf16.mxu0 0
    %1647 = vmatpush1.bf16.msra.mxu0 0
    %1648 = vmatprep.subr.bf16.mxu0 0
    %1649 = vmatpush1.bf16.msra.mxu0 0
    %1650 = vmatprep.subr.bf16.mxu0 0
    %1651 = vmatpush1.bf16.msra.mxu0 0
    %1652 = vmatprep.subr.bf16.mxu0 0
    %1653 = vmatpush1.bf16.msra.mxu0 0
    %1654 = vmatprep.subr.bf16.mxu0 0
    %1655 = vmatpush1.bf16.msra.mxu0 0
    %1656 = vmatprep.subr.bf16.mxu0 0
    %1657 = vmatpush1.bf16.msra.mxu0 0
    %1658 = vmatprep.subr.bf16.mxu0 0
    %1659 = vmatpush1.bf16.msra.mxu0 0
    %1660 = vmatprep.subr.bf16.mxu0 0
    %1661 = vmatpush1.bf16.msra.mxu0 0
    %1662 = vmatprep.subr.bf16.mxu0 0
    %1663 = vmatpush1.bf16.msra.mxu0 0
    %1664 = vmatprep.subr.bf16.mxu0 0
    %1665 = vmatpush1.bf16.msra.mxu0 0
    %1666 = vmatprep.mubr.bf16.mxu0 0
    %1667 = vmatmul.mubr.bf16.gmra.mrb[0].mxu0 %v1632
    %v1668 = vpop.f32.mrb[0].mxu0
    %v1669 = vadd.f32 %v1589, %v1668
    %v1670 = vpop.f32.mrb[0].mxu0
    %v1671 = vadd.f32 %v1593, %v1670
    %v1672 = vpop.f32.mrb[0].mxu0
    %v1673 = vadd.f32 %v1589, %v1672
    %v1674 = vpop.f32.mrb[0].mxu0
    %v1675 = vadd.f32 %v1593, %v1674
    %1676 = vdwg.mxu0
    %1677 = vmatprep.subr.bf16.mxu0 %v1626
    %1678 = vmatpush1.bf16.msra.mxu0 %v1625
    %1679 = vmatprep.subr.bf16.mxu0 0
    %1680 = vmatpush1.bf16.msra.mxu0 0
    %1681 = vmatprep.subr.bf16.mxu0 0
    %1682 = vmatpush1.bf16.msra.mxu0 0
    %1683 = vmatprep.subr.bf16.mxu0 0
    %1684 = vmatpush1.bf16.msra.mxu0 0
    %1685 = vmatprep.subr.bf16.mxu0 0
    %1686 = vmatpush1.bf16.msra.mxu0 0
    %1687 = vmatprep.subr.bf16.mxu0 0
    %1688 = vmatpush1.bf16.msra.mxu0 0
    %1689 = vmatprep.subr.bf16.mxu0 0
    %1690 = vmatpush1.bf16.msra.mxu0 0
    %1691 = vmatprep.subr.bf16.mxu0 0
    %1692 = vmatpush1.bf16.msra.mxu0 0
    %1693 = vmatprep.subr.bf16.mxu0 0
    %1694 = vmatpush1.bf16.msra.mxu0 0
    %1695 = vmatprep.subr.bf16.mxu0 0
    %1696 = vmatpush1.bf16.msra.mxu0 0
    %1697 = vmatprep.subr.bf16.mxu0 0
    %1698 = vmatpush1.bf16.msra.mxu0 0
    %1699 = vmatprep.subr.bf16.mxu0 0
    %1700 = vmatpush1.bf16.msra.mxu0 0
    %1701 = vmatprep.subr.bf16.mxu0 0
    %1702 = vmatpush1.bf16.msra.mxu0 0
    %1703 = vmatprep.subr.bf16.mxu0 0
    %1704 = vmatpush1.bf16.msra.mxu0 0
    %1705 = vmatprep.subr.bf16.mxu0 0
    %1706 = vmatpush1.bf16.msra.mxu0 0
    %1707 = vmatprep.subr.bf16.mxu0 0
    %1708 = vmatpush1.bf16.msra.mxu0 0
    %1709 = vmatprep.mubr.bf16.mxu0 0
    %1710 = vmatmul.mubr.bf16.gmra.mrb[0].mxu0 %v1632
    %v1711 = vpop.f32.mrb[0].mxu0
    %v1712 = vadd.f32 %v1597, %v1711
    %v1713 = vpop.f32.mrb[0].mxu0
    %v1714 = vadd.f32 %v1601, %v1713
    %v1715 = vpop.f32.mrb[0].mxu0
    %v1716 = vadd.f32 %v1597, %v1715
    %v1717 = vpop.f32.mrb[0].mxu0
    %v1718 = vadd.f32 %v1601, %v1717
    %1719 = vdwg.mxu0
    %v1720 = vpack.c.bf16 %v1574, %v1573
    %v1721 = vld [vmem:[#allocation10] sm:$0xff]
    %v1722 = vld [vmem:[#allocation10 + $0x8] sm:$0xff]
    %v1723 = vld [vmem:[#allocation10 + $0x10] sm:$0xff]
    %v1724 = vld [vmem:[#allocation10 + $0x18] sm:$0xff]
    %v1725 = vld [vmem:[#allocation10 + $0x20] sm:$0xff]
    %v1726 = vld [vmem:[#allocation10 + $0x28] sm:$0xff]
    %v1727 = vld [vmem:[#allocation10 + $0x30] sm:$0xff]
    %v1728 = vld [vmem:[#allocation10 + $0x38] sm:$0xff]
    %v1729 = vld [vmem:[#allocation10 + $0x40] sm:$0xff]
    %v1730 = vld [vmem:[#allocation10 + $0x48] sm:$0xff]
    %v1731 = vld [vmem:[#allocation10 + $0x50] sm:$0xff]
    %v1732 = vld [vmem:[#allocation10 + $0x58] sm:$0xff]
    %v1733 = vld [vmem:[#allocation10 + $0x60] sm:$0xff]
    %v1734 = vld [vmem:[#allocation10 + $0x68] sm:$0xff]
    %v1735 = vld [vmem:[#allocation10 + $0x70] sm:$0xff]
    %v1736 = vld [vmem:[#allocation10 + $0x78] sm:$0xff]
    %v1737 = vld [vmem:[#allocation10 + $0x80] sm:$0xff]
    %v1738 = vld [vmem:[#allocation10 + $0x88] sm:$0xff]
    %v1739 = vld [vmem:[#allocation10 + $0x90] sm:$0xff]
    %v1740 = vld [vmem:[#allocation10 + $0x98] sm:$0xff]
    %v1741 = vld [vmem:[#allocation10 + $0xa0] sm:$0xff]
    %v1742 = vld [vmem:[#allocation10 + $0xa8] sm:$0xff]
    %v1743 = vld [vmem:[#allocation10 + $0xb0] sm:$0xff]
    %v1744 = vld [vmem:[#allocation10 + $0xb8] sm:$0xff]
    %v1745 = vld [vmem:[#allocation10 + $0xc0] sm:$0xff]
    %v1746 = vld [vmem:[#allocation10 + $0xc8] sm:$0xff]
    %v1747 = vld [vmem:[#allocation10 + $0xd0] sm:$0xff]
    %v1748 = vld [vmem:[#allocation10 + $0xd8] sm:$0xff]
    %v1749 = vld [vmem:[#allocation10 + $0xe0] sm:$0xff]
    %v1750 = vld [vmem:[#allocation10 + $0xe8] sm:$0xff]
    %v1751 = vld [vmem:[#allocation10 + $0xf0] sm:$0xff]
    %v1752 = vld [vmem:[#allocation10 + $0xf8] sm:$0xff]
    %v1785 = vunpack.c.l.b16 %v1721
    %v1786 = vunpack.c.h.b16 %v1721
    %v1787 = vunpack.c.l.b16 %v1722
    %v1788 = vunpack.c.h.b16 %v1722
    %v1789 = vunpack.c.l.b16 %v1723
    %v1790 = vunpack.c.h.b16 %v1723
    %v1791 = vunpack.c.l.b16 %v1724
    %v1792 = vunpack.c.h.b16 %v1724
    %v1793 = vunpack.c.l.b16 %v1725
    %v1794 = vunpack.c.h.b16 %v1725
    %v1795 = vunpack.c.l.b16 %v1726
    %v1796 = vunpack.c.h.b16 %v1726
    %v1797 = vunpack.c.l.b16 %v1727
    %v1798 = vunpack.c.h.b16 %v1727
    %v1799 = vunpack.c.l.b16 %v1728
    %v1800 = vunpack.c.h.b16 %v1728
    %v1801 = vunpack.c.l.b16 %v1729
    %v1802 = vunpack.c.h.b16 %v1729
    %v1803 = vunpack.c.l.b16 %v1730
    %v1804 = vunpack.c.h.b16 %v1730
    %v1805 = vunpack.c.l.b16 %v1731
    %v1806 = vunpack.c.h.b16 %v1731
    %v1807 = vunpack.c.l.b16 %v1732
    %v1808 = vunpack.c.h.b16 %v1732
    %v1809 = vunpack.c.l.b16 %v1733
    %v1810 = vunpack.c.h.b16 %v1733
    %v1811 = vunpack.c.l.b16 %v1734
    %v1812 = vunpack.c.h.b16 %v1734
    %v1813 = vunpack.c.l.b16 %v1735
    %v1814 = vunpack.c.h.b16 %v1735
    %v1815 = vunpack.c.l.b16 %v1736
    %v1816 = vunpack.c.h.b16 %v1736
    %v1817 = vunpack.c.l.b16 %v1737
    %v1818 = vunpack.c.h.b16 %v1737
    %v1819 = vunpack.c.l.b16 %v1738
    %v1820 = vunpack.c.h.b16 %v1738
    %v1821 = vunpack.c.l.b16 %v1739
    %v1822 = vunpack.c.h.b16 %v1739
    %v1823 = vunpack.c.l.b16 %v1740
    %v1824 = vunpack.c.h.b16 %v1740
    %v1825 = vunpack.c.l.b16 %v1741
    %v1826 = vunpack.c.h.b16 %v1741
    %v1827 = vunpack.c.l.b16 %v1742
    %v1828 = vunpack.c.h.b16 %v1742
    %v1829 = vunpack.c.l.b16 %v1743
    %v1830 = vunpack.c.h.b16 %v1743
    %v1831 = vunpack.c.l.b16 %v1744
    %v1832 = vunpack.c.h.b16 %v1744
    %v1833 = vunpack.c.l.b16 %v1745
    %v1834 = vunpack.c.h.b16 %v1745
    %v1835 = vunpack.c.l.b16 %v1746
    %v1836 = vunpack.c.h.b16 %v1746
    %v1837 = vunpack.c.l.b16 %v1747
    %v1838 = vunpack.c.h.b16 %v1747
    %v1839 = vunpack.c.l.b16 %v1748
    %v1840 = vunpack.c.h.b16 %v1748
    %v1841 = vunpack.c.l.b16 %v1749
    %v1842 = vunpack.c.h.b16 %v1749
    %v1843 = vunpack.c.l.b16 %v1750
    %v1844 = vunpack.c.h.b16 %v1750
    %v1845 = vunpack.c.l.b16 %v1751
    %v1846 = vunpack.c.h.b16 %v1751
    %v1847 = vunpack.c.l.b16 %v1752
    %v1848 = vunpack.c.h.b16 %v1752
    %v1849 = vpack.c.b16 %v1789, %v1785
    %v1850 = vpack.c.b16 %v1790, %v1786
    %v1851 = vpack.c.b16 %v1791, %v1787
    %v1852 = vpack.c.b16 %v1792, %v1788
    %v1853 = vpack.c.b16 %v1797, %v1793
    %v1854 = vpack.c.b16 %v1798, %v1794
    %v1855 = vpack.c.b16 %v1799, %v1795
    %v1856 = vpack.c.b16 %v1800, %v1796
    %v1857 = vpack.c.b16 %v1805, %v1801
    %v1858 = vpack.c.b16 %v1806, %v1802
    %v1859 = vpack.c.b16 %v1807, %v1803
    %v1860 = vpack.c.b16 %v1808, %v1804
    %v1861 = vpack.c.b16 %v1813, %v1809
    %v1862 = vpack.c.b16 %v1814, %v1810
    %v1863 = vpack.c.b16 %v1815, %v1811
    %v1864 = vpack.c.b16 %v1816, %v1812
    %v1865 = vpack.c.b16 %v1821, %v1817
    %v1866 = vpack.c.b16 %v1822, %v1818
    %v1867 = vpack.c.b16 %v1823, %v1819
    %v1868 = vpack.c.b16 %v1824, %v1820
    %v1869 = vpack.c.b16 %v1829, %v1825
    %v1870 = vpack.c.b16 %v1830, %v1826
    %v1871 = vpack.c.b16 %v1831, %v1827
    %v1872 = vpack.c.b16 %v1832, %v1828
    %v1873 = vpack.c.b16 %v1837, %v1833
    %v1874 = vpack.c.b16 %v1838, %v1834
    %v1875 = vpack.c.b16 %v1839, %v1835
    %v1876 = vpack.c.b16 %v1840, %v1836
    %v1877 = vpack.c.b16 %v1845, %v1841
    %v1878 = vpack.c.b16 %v1846, %v1842
    %v1879 = vpack.c.b16 %v1847, %v1843
    %v1880 = vpack.c.b16 %v1848, %v1844
    %1913 = vmatprep.subr.bf16.mxu0 %v1850
    %1914 = vmatpush1.bf16.msra.mxu0 %v1849
    %1915 = vmatprep.subr.bf16.mxu0 %v1854
    %1916 = vmatpush1.bf16.msra.mxu0 %v1853
    %1917 = vmatprep.subr.bf16.mxu0 %v1858
    %1918 = vmatpush1.bf16.msra.mxu0 %v1857
    %1919 = vmatprep.subr.bf16.mxu0 %v1862
    %1920 = vmatpush1.bf16.msra.mxu0 %v1861
    %1921 = vmatprep.subr.bf16.mxu0 %v1866
    %1922 = vmatpush1.bf16.msra.mxu0 %v1865
    %1923 = vmatprep.subr.bf16.mxu0 %v1870
    %1924 = vmatpush1.bf16.msra.mxu0 %v1869
    %1925 = vmatprep.subr.bf16.mxu0 %v1874
    %1926 = vmatpush1.bf16.msra.mxu0 %v1873
    %1927 = vmatprep.subr.bf16.mxu0 %v1878
    %1928 = vmatpush1.bf16.msra.mxu0 %v1877
    %1929 = vmatprep.subr.bf16.mxu0 0
    %1930 = vmatpush1.bf16.msra.mxu0 0
    %1931 = vmatprep.subr.bf16.mxu0 0
    %1932 = vmatpush1.bf16.msra.mxu0 0
    %1933 = vmatprep.subr.bf16.mxu0 0
    %1934 = vmatpush1.bf16.msra.mxu0 0
    %1935 = vmatprep.subr.bf16.mxu0 0
    %1936 = vmatpush1.bf16.msra.mxu0 0
    %1937 = vmatprep.subr.bf16.mxu0 0
    %1938 = vmatpush1.bf16.msra.mxu0 0
    %1939 = vmatprep.subr.bf16.mxu0 0
    %1940 = vmatpush1.bf16.msra.mxu0 0
    %1941 = vmatprep.subr.bf16.mxu0 0
    %1942 = vmatpush1.bf16.msra.mxu0 0
    %1943 = vmatprep.subr.bf16.mxu0 0
    %1944 = vmatpush1.bf16.msra.mxu0 0
    %1945 = vmatprep.mubr.bf16.mxu0 0
    %1946 = vmatmul.mubr.bf16.gmra.mrb[0].mxu0 %v1720
    %v1947 = vpop.f32.mrb[0].mxu0
    %v1948 = vadd.f32 0.0, %v1947
    %v1949 = vpop.f32.mrb[0].mxu0
    %v1950 = vadd.f32 0.0, %v1949
    %v1951 = vpop.f32.mrb[0].mxu0
    %v1952 = vadd.f32 0.0, %v1951
    %v1953 = vpop.f32.mrb[0].mxu0
    %v1954 = vadd.f32 0.0, %v1953
    %1955 = vdwg.mxu0
    %1956 = vmatprep.subr.bf16.mxu0 %v1852
    %1957 = vmatpush1.bf16.msra.mxu0 %v1851
    %1958 = vmatprep.subr.bf16.mxu0 %v1856
    %1959 = vmatpush1.bf16.msra.mxu0 %v1855
    %1960 = vmatprep.subr.bf16.mxu0 %v1860
    %1961 = vmatpush1.bf16.msra.mxu0 %v1859
    %1962 = vmatprep.subr.bf16.mxu0 %v1864
    %1963 = vmatpush1.bf16.msra.mxu0 %v1863
    %1964 = vmatprep.subr.bf16.mxu0 %v1868
    %1965 = vmatpush1.bf16.msra.mxu0 %v1867
    %1966 = vmatprep.subr.bf16.mxu0 %v1872
    %1967 = vmatpush1.bf16.msra.mxu0 %v1871
    %1968 = vmatprep.subr.bf16.mxu0 %v1876
    %1969 = vmatpush1.bf16.msra.mxu0 %v1875
    %1970 = vmatprep.subr.bf16.mxu0 %v1880
    %1971 = vmatpush1.bf16.msra.mxu0 %v1879
    %1972 = vmatprep.subr.bf16.mxu0 0
    %1973 = vmatpush1.bf16.msra.mxu0 0
    %1974 = vmatprep.subr.bf16.mxu0 0
    %1975 = vmatpush1.bf16.msra.mxu0 0
    %1976 = vmatprep.subr.bf16.mxu0 0
    %1977 = vmatpush1.bf16.msra.mxu0 0
    %1978 = vmatprep.subr.bf16.mxu0 0
    %1979 = vmatpush1.bf16.msra.mxu0 0
    %1980 = vmatprep.subr.bf16.mxu0 0
    %1981 = vmatpush1.bf16.msra.mxu0 0
    %1982 = vmatprep.subr.bf16.mxu0 0
    %1983 = vmatpush1.bf16.msra.mxu0 0
    %1984 = vmatprep.subr.bf16.mxu0 0
    %1985 = vmatpush1.bf16.msra.mxu0 0
    %1986 = vmatprep.subr.bf16.mxu0 0
    %1987 = vmatpush1.bf16.msra.mxu0 0
    %1988 = vmatprep.mubr.bf16.mxu0 0
    %1989 = vmatmul.mubr.bf16.gmra.mrb[0].mxu0 %v1720
    %v1990 = vpop.f32.mrb[0].mxu0
    %v1991 = vadd.f32 0.0, %v1990
    %v1992 = vpop.f32.mrb[0].mxu0
    %v1993 = vadd.f32 0.0, %v1992
    %v1994 = vpop.f32.mrb[0].mxu0
    %v1995 = vadd.f32 0.0, %v1994
    %v1996 = vpop.f32.mrb[0].mxu0
    %v1997 = vadd.f32 0.0, %v1996
    %1998 = vdwg.mxu0
    %v1999 = vadd.f32 %v1669, %v1948
    %v2000 = vadd.f32 %v1671, %v1950
    %v2001 = vadd.f32 %v1712, %v1991
    %v2002 = vadd.f32 %v1714, %v1993
    %v2003 = vadd.f32 %v1673, %v1952
    %v2004 = vadd.f32 %v1675, %v1954
    %v2005 = vadd.f32 %v1716, %v1995
    %v2006 = vadd.f32 %v1718, %v1997
    %v2007 = vxor.u32 %v1999, 2147483648
    %v2008 = vxor.u32 %v2003, 2147483648
    %v2009 = vmul.f32 %v2007, 1.442695
    %v2010 = vpow.pop %v2009
    %v2011 = vmul.f32 %v2008, 1.442695
    %v2012 = vpow.pop %v2011
    %v2013 = vadd.f32 %v2010, 1.0
    %v2014 = vadd.f32 %v2012, 1.0
    %v2015 = vrcp.pop %v2013
    %v2016 = vmul.f32 1.0, %v2015
    %v2017 = vrcp.pop %v2014
    %v2018 = vmul.f32 1.0, %v2017
    %v2019 = vxor.u32 %v2000, 2147483648
    %v2020 = vxor.u32 %v2004, 2147483648
    %v2021 = vmul.f32 %v2019, 1.442695
    %v2022 = vpow.pop %v2021
    %v2023 = vmul.f32 %v2020, 1.442695
    %v2024 = vpow.pop %v2023
    %v2025 = vadd.f32 %v2022, 1.0
    %v2026 = vadd.f32 %v2024, 1.0
    %v2027 = vrcp.pop %v2025
    %v2028 = vmul.f32 1.0, %v2027
    %v2029 = vrcp.pop %v2026
    %v2030 = vmul.f32 1.0, %v2029
    %v2031 = vtanh.pop %v2001
    %v2032 = vtanh.pop %v2005
    %v2033 = vxor.u32 %v2002, 2147483648
    %v2034 = vxor.u32 %v2006, 2147483648
    %v2035 = vmul.f32 %v2033, 1.442695
    %v2036 = vpow.pop %v2035
    %v2037 = vmul.f32 %v2034, 1.442695
    %v2038 = vpow.pop %v2037
    %v2039 = vadd.f32 %v2036, 1.0
    %v2040 = vadd.f32 %v2038, 1.0
    %v2041 = vrcp.pop %v2039
    %v2042 = vmul.f32 1.0, %v2041
    %v2043 = vrcp.pop %v2040
    %v2044 = vmul.f32 1.0, %v2043
    %v2045 = vmul.f32 %v2028, %v1575
    %v2046 = vmul.f32 %v2030, %v1576
    %v2047 = vmul.f32 %v2016, %v2031
    %v2048 = vmul.f32 %v2018, %v2032
    %v2049 = vadd.f32 %v2045, %v2047
    %v2050 = vadd.f32 %v2046, %v2048
    %v2051 = vtanh.pop %v2049
    %v2052 = vtanh.pop %v2050
    %v2053 = vmul.f32 %v2042, %v2051
    %v2054 = vmul.f32 %v2044, %v2052
    %s2055 = scalar_lea.vmem [#allocation13], 48
    %2056 = vst [vmem:[%s2055] sm:$0xff] %v2053
    %2057 = vst [vmem:[%s2055 + $0x8] sm:$0xff] %v2054
    %2058 = vst [vmem:[#allocation2] sm:$0xff] %v2053
    %2059 = vst [vmem:[#allocation2 + $0x8] sm:$0xff] %v2054
    %2060 = vst [vmem:[#allocation3] sm:$0xff] %v2049
    %2061 = vst [vmem:[#allocation3 + $0x8] sm:$0xff] %v2050
    %v2062 = vld [vmem:[#allocation2] sm:$0xff]
    %v2063 = vld [vmem:[#allocation2 + $0x8] sm:$0xff]
    %v2064 = vld [vmem:[#allocation3] sm:$0xff]
    %v2065 = vld [vmem:[#allocation3 + $0x8] sm:$0xff]
    %s2066 = scalar_lea.vmem [#allocation4], 32
    %v2067 = vld [vmem:[%s2066] sm:$0xf]
    %v2068 = vld [vmem:[%s2066 + $0x4] sm:$0xf]
    %v2069 = vld [vmem:[#allocation7] sm:$0xff]
    %v2070 = vld [vmem:[#allocation7 + $0x8] sm:$0xff]
    %v2071 = vld [vmem:[#allocation7 + $0x10] sm:$0xff]
    %v2072 = vld [vmem:[#allocation7 + $0x18] sm:$0xff]
    %v2073 = vld [vmem:[#allocation9] sm:$0xf]
    %v2075 = vlaneseq
    %v2076 = vshrl.u32 %v2075, 7
    %v2077 = vsub.s32 0, %v2076
    %v2078 = vrot.slane %v2073, %v2077
    %v2079 = vlaneseq
    %v2080 = vshrl.u32 %v2079, 7
    %v2081 = vsub.s32 1, %v2080
    %v2082 = vrot.slane %v2073, %v2081
    %v2083 = vlaneseq
    %v2084 = vshrl.u32 %v2083, 7
    %v2085 = vsub.s32 2, %v2084
    %v2086 = vrot.slane %v2073, %v2085
    %v2087 = vlaneseq
    %v2088 = vshrl.u32 %v2087, 7
    %v2089 = vsub.s32 3, %v2088
    %v2090 = vrot.slane %v2073, %v2089
    %v2097 = vunpack.c.l.b16 %v2067
    %v2098 = vunpack.c.l.b16 %v2068
    %v2099 = vpack.c.b16 %v2098, %v2097
    %v2104 = vunpack.c.l.b16 %v2069
    %v2105 = vunpack.c.h.b16 %v2069
    %v2106 = vunpack.c.l.b16 %v2070
    %v2107 = vunpack.c.h.b16 %v2070
    %v2108 = vunpack.c.l.b16 %v2071
    %v2109 = vunpack.c.h.b16 %v2071
    %v2110 = vunpack.c.l.b16 %v2072
    %v2111 = vunpack.c.h.b16 %v2072
    %v2112 = vpack.c.b16 %v2108, %v2104
    %v2113 = vpack.c.b16 %v2109, %v2105
    %v2114 = vpack.c.b16 %v2110, %v2106
    %v2115 = vpack.c.b16 %v2111, %v2107
    %v2121 = vsel %vm164, %v2099, 0
    %2123 = vmatprep.subr.bf16.mxu0 %v2113
    %2124 = vmatpush1.bf16.msra.mxu0 %v2112
    %2125 = vmatprep.subr.bf16.mxu0 0
    %2126 = vmatpush1.bf16.msra.mxu0 0
    %2127 = vmatprep.subr.bf16.mxu0 0
    %2128 = vmatpush1.bf16.msra.mxu0 0
    %2129 = vmatprep.subr.bf16.mxu0 0
    %2130 = vmatpush1.bf16.msra.mxu0 0
    %2131 = vmatprep.subr.bf16.mxu0 0
    %2132 = vmatpush1.bf16.msra.mxu0 0
    %2133 = vmatprep.subr.bf16.mxu0 0
    %2134 = vmatpush1.bf16.msra.mxu0 0
    %2135 = vmatprep.subr.bf16.mxu0 0
    %2136 = vmatpush1.bf16.msra.mxu0 0
    %2137 = vmatprep.subr.bf16.mxu0 0
    %2138 = vmatpush1.bf16.msra.mxu0 0
    %2139 = vmatprep.subr.bf16.mxu0 0
    %2140 = vmatpush1.bf16.msra.mxu0 0
    %2141 = vmatprep.subr.bf16.mxu0 0
    %2142 = vmatpush1.bf16.msra.mxu0 0
    %2143 = vmatprep.subr.bf16.mxu0 0
    %2144 = vmatpush1.bf16.msra.mxu0 0
    %2145 = vmatprep.subr.bf16.mxu0 0
    %2146 = vmatpush1.bf16.msra.mxu0 0
    %2147 = vmatprep.subr.bf16.mxu0 0
    %2148 = vmatpush1.bf16.msra.mxu0 0
    %2149 = vmatprep.subr.bf16.mxu0 0
    %2150 = vmatpush1.bf16.msra.mxu0 0
    %2151 = vmatprep.subr.bf16.mxu0 0
    %2152 = vmatpush1.bf16.msra.mxu0 0
    %2153 = vmatprep.subr.bf16.mxu0 0
    %2154 = vmatpush1.bf16.msra.mxu0 0
    %2155 = vmatprep.mubr.bf16.mxu0 0
    %2156 = vmatmul.mubr.bf16.gmra.mrb[0].mxu0 %v2121
    %v2157 = vpop.f32.mrb[0].mxu0
    %v2158 = vadd.f32 %v2078, %v2157
    %v2159 = vpop.f32.mrb[0].mxu0
    %v2160 = vadd.f32 %v2082, %v2159
    %v2161 = vpop.f32.mrb[0].mxu0
    %v2162 = vadd.f32 %v2078, %v2161
    %v2163 = vpop.f32.mrb[0].mxu0
    %v2164 = vadd.f32 %v2082, %v2163
    %2165 = vdwg.mxu0
    %2166 = vmatprep.subr.bf16.mxu0 %v2115
    %2167 = vmatpush1.bf16.msra.mxu0 %v2114
    %2168 = vmatprep.subr.bf16.mxu0 0
    %2169 = vmatpush1.bf16.msra.mxu0 0
    %2170 = vmatprep.subr.bf16.mxu0 0
    %2171 = vmatpush1.bf16.msra.mxu0 0
    %2172 = vmatprep.subr.bf16.mxu0 0
    %2173 = vmatpush1.bf16.msra.mxu0 0
    %2174 = vmatprep.subr.bf16.mxu0 0
    %2175 = vmatpush1.bf16.msra.mxu0 0
    %2176 = vmatprep.subr.bf16.mxu0 0
    %2177 = vmatpush1.bf16.msra.mxu0 0
    %2178 = vmatprep.subr.bf16.mxu0 0
    %2179 = vmatpush1.bf16.msra.mxu0 0
    %2180 = vmatprep.subr.bf16.mxu0 0
    %2181 = vmatpush1.bf16.msra.mxu0 0
    %2182 = vmatprep.subr.bf16.mxu0 0
    %2183 = vmatpush1.bf16.msra.mxu0 0
    %2184 = vmatprep.subr.bf16.mxu0 0
    %2185 = vmatpush1.bf16.msra.mxu0 0
    %2186 = vmatprep.subr.bf16.mxu0 0
    %2187 = vmatpush1.bf16.msra.mxu0 0
    %2188 = vmatprep.subr.bf16.mxu0 0
    %2189 = vmatpush1.bf16.msra.mxu0 0
    %2190 = vmatprep.subr.bf16.mxu0 0
    %2191 = vmatpush1.bf16.msra.mxu0 0
    %2192 = vmatprep.subr.bf16.mxu0 0
    %2193 = vmatpush1.bf16.msra.mxu0 0
    %2194 = vmatprep.subr.bf16.mxu0 0
    %2195 = vmatpush1.bf16.msra.mxu0 0
    %2196 = vmatprep.subr.bf16.mxu0 0
    %2197 = vmatpush1.bf16.msra.mxu0 0
    %2198 = vmatprep.mubr.bf16.mxu0 0
    %2199 = vmatmul.mubr.bf16.gmra.mrb[0].mxu0 %v2121
    %v2200 = vpop.f32.mrb[0].mxu0
    %v2201 = vadd.f32 %v2086, %v2200
    %v2202 = vpop.f32.mrb[0].mxu0
    %v2203 = vadd.f32 %v2090, %v2202
    %v2204 = vpop.f32.mrb[0].mxu0
    %v2205 = vadd.f32 %v2086, %v2204
    %v2206 = vpop.f32.mrb[0].mxu0
    %v2207 = vadd.f32 %v2090, %v2206
    %2208 = vdwg.mxu0
    %v2209 = vpack.c.bf16 %v2063, %v2062
    %v2210 = vld [vmem:[#allocation10] sm:$0xff]
    %v2211 = vld [vmem:[#allocation10 + $0x8] sm:$0xff]
    %v2212 = vld [vmem:[#allocation10 + $0x10] sm:$0xff]
    %v2213 = vld [vmem:[#allocation10 + $0x18] sm:$0xff]
    %v2214 = vld [vmem:[#allocation10 + $0x20] sm:$0xff]
    %v2215 = vld [vmem:[#allocation10 + $0x28] sm:$0xff]
    %v2216 = vld [vmem:[#allocation10 + $0x30] sm:$0xff]
    %v2217 = vld [vmem:[#allocation10 + $0x38] sm:$0xff]
    %v2218 = vld [vmem:[#allocation10 + $0x40] sm:$0xff]
    %v2219 = vld [vmem:[#allocation10 + $0x48] sm:$0xff]
    %v2220 = vld [vmem:[#allocation10 + $0x50] sm:$0xff]
    %v2221 = vld [vmem:[#allocation10 + $0x58] sm:$0xff]
    %v2222 = vld [vmem:[#allocation10 + $0x60] sm:$0xff]
    %v2223 = vld [vmem:[#allocation10 + $0x68] sm:$0xff]
    %v2224 = vld [vmem:[#allocation10 + $0x70] sm:$0xff]
    %v2225 = vld [vmem:[#allocation10 + $0x78] sm:$0xff]
    %v2226 = vld [vmem:[#allocation10 + $0x80] sm:$0xff]
    %v2227 = vld [vmem:[#allocation10 + $0x88] sm:$0xff]
    %v2228 = vld [vmem:[#allocation10 + $0x90] sm:$0xff]
    %v2229 = vld [vmem:[#allocation10 + $0x98] sm:$0xff]
    %v2230 = vld [vmem:[#allocation10 + $0xa0] sm:$0xff]
    %v2231 = vld [vmem:[#allocation10 + $0xa8] sm:$0xff]
    %v2232 = vld [vmem:[#allocation10 + $0xb0] sm:$0xff]
    %v2233 = vld [vmem:[#allocation10 + $0xb8] sm:$0xff]
    %v2234 = vld [vmem:[#allocation10 + $0xc0] sm:$0xff]
    %v2235 = vld [vmem:[#allocation10 + $0xc8] sm:$0xff]
    %v2236 = vld [vmem:[#allocation10 + $0xd0] sm:$0xff]
    %v2237 = vld [vmem:[#allocation10 + $0xd8] sm:$0xff]
    %v2238 = vld [vmem:[#allocation10 + $0xe0] sm:$0xff]
    %v2239 = vld [vmem:[#allocation10 + $0xe8] sm:$0xff]
    %v2240 = vld [vmem:[#allocation10 + $0xf0] sm:$0xff]
    %v2241 = vld [vmem:[#allocation10 + $0xf8] sm:$0xff]
    %v2274 = vunpack.c.l.b16 %v2210
    %v2275 = vunpack.c.h.b16 %v2210
    %v2276 = vunpack.c.l.b16 %v2211
    %v2277 = vunpack.c.h.b16 %v2211
    %v2278 = vunpack.c.l.b16 %v2212
    %v2279 = vunpack.c.h.b16 %v2212
    %v2280 = vunpack.c.l.b16 %v2213
    %v2281 = vunpack.c.h.b16 %v2213
    %v2282 = vunpack.c.l.b16 %v2214
    %v2283 = vunpack.c.h.b16 %v2214
    %v2284 = vunpack.c.l.b16 %v2215
    %v2285 = vunpack.c.h.b16 %v2215
    %v2286 = vunpack.c.l.b16 %v2216
    %v2287 = vunpack.c.h.b16 %v2216
    %v2288 = vunpack.c.l.b16 %v2217
    %v2289 = vunpack.c.h.b16 %v2217
    %v2290 = vunpack.c.l.b16 %v2218
    %v2291 = vunpack.c.h.b16 %v2218
    %v2292 = vunpack.c.l.b16 %v2219
    %v2293 = vunpack.c.h.b16 %v2219
    %v2294 = vunpack.c.l.b16 %v2220
    %v2295 = vunpack.c.h.b16 %v2220
    %v2296 = vunpack.c.l.b16 %v2221
    %v2297 = vunpack.c.h.b16 %v2221
    %v2298 = vunpack.c.l.b16 %v2222
    %v2299 = vunpack.c.h.b16 %v2222
    %v2300 = vunpack.c.l.b16 %v2223
    %v2301 = vunpack.c.h.b16 %v2223
    %v2302 = vunpack.c.l.b16 %v2224
    %v2303 = vunpack.c.h.b16 %v2224
    %v2304 = vunpack.c.l.b16 %v2225
    %v2305 = vunpack.c.h.b16 %v2225
    %v2306 = vunpack.c.l.b16 %v2226
    %v2307 = vunpack.c.h.b16 %v2226
    %v2308 = vunpack.c.l.b16 %v2227
    %v2309 = vunpack.c.h.b16 %v2227
    %v2310 = vunpack.c.l.b16 %v2228
    %v2311 = vunpack.c.h.b16 %v2228
    %v2312 = vunpack.c.l.b16 %v2229
    %v2313 = vunpack.c.h.b16 %v2229
    %v2314 = vunpack.c.l.b16 %v2230
    %v2315 = vunpack.c.h.b16 %v2230
    %v2316 = vunpack.c.l.b16 %v2231
    %v2317 = vunpack.c.h.b16 %v2231
    %v2318 = vunpack.c.l.b16 %v2232
    %v2319 = vunpack.c.h.b16 %v2232
    %v2320 = vunpack.c.l.b16 %v2233
    %v2321 = vunpack.c.h.b16 %v2233
    %v2322 = vunpack.c.l.b16 %v2234
    %v2323 = vunpack.c.h.b16 %v2234
    %v2324 = vunpack.c.l.b16 %v2235
    %v2325 = vunpack.c.h.b16 %v2235
    %v2326 = vunpack.c.l.b16 %v2236
    %v2327 = vunpack.c.h.b16 %v2236
    %v2328 = vunpack.c.l.b16 %v2237
    %v2329 = vunpack.c.h.b16 %v2237
    %v2330 = vunpack.c.l.b16 %v2238
    %v2331 = vunpack.c.h.b16 %v2238
    %v2332 = vunpack.c.l.b16 %v2239
    %v2333 = vunpack.c.h.b16 %v2239
    %v2334 = vunpack.c.l.b16 %v2240
    %v2335 = vunpack.c.h.b16 %v2240
    %v2336 = vunpack.c.l.b16 %v2241
    %v2337 = vunpack.c.h.b16 %v2241
    %v2338 = vpack.c.b16 %v2278, %v2274
    %v2339 = vpack.c.b16 %v2279, %v2275
    %v2340 = vpack.c.b16 %v2280, %v2276
    %v2341 = vpack.c.b16 %v2281, %v2277
    %v2342 = vpack.c.b16 %v2286, %v2282
    %v2343 = vpack.c.b16 %v2287, %v2283
    %v2344 = vpack.c.b16 %v2288, %v2284
    %v2345 = vpack.c.b16 %v2289, %v2285
    %v2346 = vpack.c.b16 %v2294, %v2290
    %v2347 = vpack.c.b16 %v2295, %v2291
    %v2348 = vpack.c.b16 %v2296, %v2292
    %v2349 = vpack.c.b16 %v2297, %v2293
    %v2350 = vpack.c.b16 %v2302, %v2298
    %v2351 = vpack.c.b16 %v2303, %v2299
    %v2352 = vpack.c.b16 %v2304, %v2300
    %v2353 = vpack.c.b16 %v2305, %v2301
    %v2354 = vpack.c.b16 %v2310, %v2306
    %v2355 = vpack.c.b16 %v2311, %v2307
    %v2356 = vpack.c.b16 %v2312, %v2308
    %v2357 = vpack.c.b16 %v2313, %v2309
    %v2358 = vpack.c.b16 %v2318, %v2314
    %v2359 = vpack.c.b16 %v2319, %v2315
    %v2360 = vpack.c.b16 %v2320, %v2316
    %v2361 = vpack.c.b16 %v2321, %v2317
    %v2362 = vpack.c.b16 %v2326, %v2322
    %v2363 = vpack.c.b16 %v2327, %v2323
    %v2364 = vpack.c.b16 %v2328, %v2324
    %v2365 = vpack.c.b16 %v2329, %v2325
    %v2366 = vpack.c.b16 %v2334, %v2330
    %v2367 = vpack.c.b16 %v2335, %v2331
    %v2368 = vpack.c.b16 %v2336, %v2332
    %v2369 = vpack.c.b16 %v2337, %v2333
    %2402 = vmatprep.subr.bf16.mxu0 %v2339
    %2403 = vmatpush1.bf16.msra.mxu0 %v2338
    %2404 = vmatprep.subr.bf16.mxu0 %v2343
    %2405 = vmatpush1.bf16.msra.mxu0 %v2342
    %2406 = vmatprep.subr.bf16.mxu0 %v2347
    %2407 = vmatpush1.bf16.msra.mxu0 %v2346
    %2408 = vmatprep.subr.bf16.mxu0 %v2351
    %2409 = vmatpush1.bf16.msra.mxu0 %v2350
    %2410 = vmatprep.subr.bf16.mxu0 %v2355
    %2411 = vmatpush1.bf16.msra.mxu0 %v2354
    %2412 = vmatprep.subr.bf16.mxu0 %v2359
    %2413 = vmatpush1.bf16.msra.mxu0 %v2358
    %2414 = vmatprep.subr.bf16.mxu0 %v2363
    %2415 = vmatpush1.bf16.msra.mxu0 %v2362
    %2416 = vmatprep.subr.bf16.mxu0 %v2367
    %2417 = vmatpush1.bf16.msra.mxu0 %v2366
    %2418 = vmatprep.subr.bf16.mxu0 0
    %2419 = vmatpush1.bf16.msra.mxu0 0
    %2420 = vmatprep.subr.bf16.mxu0 0
    %2421 = vmatpush1.bf16.msra.mxu0 0
    %2422 = vmatprep.subr.bf16.mxu0 0
    %2423 = vmatpush1.bf16.msra.mxu0 0
    %2424 = vmatprep.subr.bf16.mxu0 0
    %2425 = vmatpush1.bf16.msra.mxu0 0
    %2426 = vmatprep.subr.bf16.mxu0 0
    %2427 = vmatpush1.bf16.msra.mxu0 0
    %2428 = vmatprep.subr.bf16.mxu0 0
    %2429 = vmatpush1.bf16.msra.mxu0 0
    %2430 = vmatprep.subr.bf16.mxu0 0
    %2431 = vmatpush1.bf16.msra.mxu0 0
    %2432 = vmatprep.subr.bf16.mxu0 0
    %2433 = vmatpush1.bf16.msra.mxu0 0
    %2434 = vmatprep.mubr.bf16.mxu0 0
    %2435 = vmatmul.mubr.bf16.gmra.mrb[0].mxu0 %v2209
    %v2436 = vpop.f32.mrb[0].mxu0
    %v2437 = vadd.f32 0.0, %v2436
    %v2438 = vpop.f32.mrb[0].mxu0
    %v2439 = vadd.f32 0.0, %v2438
    %v2440 = vpop.f32.mrb[0].mxu0
    %v2441 = vadd.f32 0.0, %v2440
    %v2442 = vpop.f32.mrb[0].mxu0
    %v2443 = vadd.f32 0.0, %v2442
    %2444 = vdwg.mxu0
    %2445 = vmatprep.subr.bf16.mxu0 %v2341
    %2446 = vmatpush1.bf16.msra.mxu0 %v2340
    %2447 = vmatprep.subr.bf16.mxu0 %v2345
    %2448 = vmatpush1.bf16.msra.mxu0 %v2344
    %2449 = vmatprep.subr.bf16.mxu0 %v2349
    %2450 = vmatpush1.bf16.msra.mxu0 %v2348
    %2451 = vmatprep.subr.bf16.mxu0 %v2353
    %2452 = vmatpush1.bf16.msra.mxu0 %v2352
    %2453 = vmatprep.subr.bf16.mxu0 %v2357
    %2454 = vmatpush1.bf16.msra.mxu0 %v2356
    %2455 = vmatprep.subr.bf16.mxu0 %v2361
    %2456 = vmatpush1.bf16.msra.mxu0 %v2360
    %2457 = vmatprep.subr.bf16.mxu0 %v2365
    %2458 = vmatpush1.bf16.msra.mxu0 %v2364
    %2459 = vmatprep.subr.bf16.mxu0 %v2369
    %2460 = vmatpush1.bf16.msra.mxu0 %v2368
    %2461 = vmatprep.subr.bf16.mxu0 0
    %2462 = vmatpush1.bf16.msra.mxu0 0
    %2463 = vmatprep.subr.bf16.mxu0 0
    %2464 = vmatpush1.bf16.msra.mxu0 0
    %2465 = vmatprep.subr.bf16.mxu0 0
    %2466 = vmatpush1.bf16.msra.mxu0 0
    %2467 = vmatprep.subr.bf16.mxu0 0
    %2468 = vmatpush1.bf16.msra.mxu0 0
    %2469 = vmatprep.subr.bf16.mxu0 0
    %2470 = vmatpush1.bf16.msra.mxu0 0
    %2471 = vmatprep.subr.bf16.mxu0 0
    %2472 = vmatpush1.bf16.msra.mxu0 0
    %2473 = vmatprep.subr.bf16.mxu0 0
    %2474 = vmatpush1.bf16.msra.mxu0 0
    %2475 = vmatprep.subr.bf16.mxu0 0
    %2476 = vmatpush1.bf16.msra.mxu0 0
    %2477 = vmatprep.mubr.bf16.mxu0 0
    %2478 = vmatmul.mubr.bf16.gmra.mrb[0].mxu0 %v2209
    %v2479 = vpop.f32.mrb[0].mxu0
    %v2480 = vadd.f32 0.0, %v2479
    %v2481 = vpop.f32.mrb[0].mxu0
    %v2482 = vadd.f32 0.0, %v2481
    %v2483 = vpop.f32.mrb[0].mxu0
    %v2484 = vadd.f32 0.0, %v2483
    %v2485 = vpop.f32.mrb[0].mxu0
    %v2486 = vadd.f32 0.0, %v2485
    %2487 = vdwg.mxu0
    %v2488 = vadd.f32 %v2158, %v2437
    %v2489 = vadd.f32 %v2160, %v2439
    %v2490 = vadd.f32 %v2201, %v2480
    %v2491 = vadd.f32 %v2203, %v2482
    %v2492 = vadd.f32 %v2162, %v2441
    %v2493 = vadd.f32 %v2164, %v2443
    %v2494 = vadd.f32 %v2205, %v2484
    %v2495 = vadd.f32 %v2207, %v2486
    %v2496 = vxor.u32 %v2488, 2147483648
    %v2497 = vxor.u32 %v2492, 2147483648
    %v2498 = vmul.f32 %v2496, 1.442695
    %v2499 = vpow.pop %v2498
    %v2500 = vmul.f32 %v2497, 1.442695
    %v2501 = vpow.pop %v2500
    %v2502 = vadd.f32 %v2499, 1.0
    %v2503 = vadd.f32 %v2501, 1.0
    %v2504 = vrcp.pop %v2502
    %v2505 = vmul.f32 1.0, %v2504
    %v2506 = vrcp.pop %v2503
    %v2507 = vmul.f32 1.0, %v2506
    %v2508 = vxor.u32 %v2489, 2147483648
    %v2509 = vxor.u32 %v2493, 2147483648
    %v2510 = vmul.f32 %v2508, 1.442695
    %v2511 = vpow.pop %v2510
    %v2512 = vmul.f32 %v2509, 1.442695
    %v2513 = vpow.pop %v2512
    %v2514 = vadd.f32 %v2511, 1.0
    %v2515 = vadd.f32 %v2513, 1.0
    %v2516 = vrcp.pop %v2514
    %v2517 = vmul.f32 1.0, %v2516
    %v2518 = vrcp.pop %v2515
    %v2519 = vmul.f32 1.0, %v2518
    %v2520 = vtanh.pop %v2490
    %v2521 = vtanh.pop %v2494
    %v2522 = vxor.u32 %v2491, 2147483648
    %v2523 = vxor.u32 %v2495, 2147483648
    %v2524 = vmul.f32 %v2522, 1.442695
    %v2525 = vpow.pop %v2524
    %v2526 = vmul.f32 %v2523, 1.442695
    %v2527 = vpow.pop %v2526
    %v2528 = vadd.f32 %v2525, 1.0
    %v2529 = vadd.f32 %v2527, 1.0
    %v2530 = vrcp.pop %v2528
    %v2531 = vmul.f32 1.0, %v2530
    %v2532 = vrcp.pop %v2529
    %v2533 = vmul.f32 1.0, %v2532
    %v2534 = vmul.f32 %v2517, %v2064
    %v2535 = vmul.f32 %v2519, %v2065
    %v2536 = vmul.f32 %v2505, %v2520
    %v2537 = vmul.f32 %v2507, %v2521
    %v2538 = vadd.f32 %v2534, %v2536
    %v2539 = vadd.f32 %v2535, %v2537
    %v2540 = vtanh.pop %v2538
    %v2541 = vtanh.pop %v2539
    %v2542 = vmul.f32 %v2531, %v2540
    %v2543 = vmul.f32 %v2533, %v2541
    %s2544 = scalar_lea.vmem [#allocation13], 64
    %2545 = vst [vmem:[%s2544] sm:$0xff] %v2542
    %2546 = vst [vmem:[%s2544 + $0x8] sm:$0xff] %v2543
    %2547 = vst [vmem:[#allocation2] sm:$0xff] %v2542
    %2548 = vst [vmem:[#allocation2 + $0x8] sm:$0xff] %v2543
    %2549 = vst [vmem:[#allocation3] sm:$0xff] %v2538
    %2550 = vst [vmem:[#allocation3 + $0x8] sm:$0xff] %v2539
    %v2551 = vld [vmem:[#allocation2] sm:$0xff]
    %v2552 = vld [vmem:[#allocation2 + $0x8] sm:$0xff]
    %v2553 = vld [vmem:[#allocation3] sm:$0xff]
    %v2554 = vld [vmem:[#allocation3 + $0x8] sm:$0xff]
    %s2555 = scalar_lea.vmem [#allocation4], 40
    %v2556 = vld [vmem:[%s2555] sm:$0xf]
    %v2557 = vld [vmem:[%s2555 + $0x4] sm:$0xf]
    %v2558 = vld [vmem:[#allocation7] sm:$0xff]
    %v2559 = vld [vmem:[#allocation7 + $0x8] sm:$0xff]
    %v2560 = vld [vmem:[#allocation7 + $0x10] sm:$0xff]
    %v2561 = vld [vmem:[#allocation7 + $0x18] sm:$0xff]
    %v2562 = vld [vmem:[#allocation9] sm:$0xf]
    %v2564 = vlaneseq
    %v2565 = vshrl.u32 %v2564, 7
    %v2566 = vsub.s32 0, %v2565
    %v2567 = vrot.slane %v2562, %v2566
    %v2568 = vlaneseq
    %v2569 = vshrl.u32 %v2568, 7
    %v2570 = vsub.s32 1, %v2569
    %v2571 = vrot.slane %v2562, %v2570
    %v2572 = vlaneseq
    %v2573 = vshrl.u32 %v2572, 7
    %v2574 = vsub.s32 2, %v2573
    %v2575 = vrot.slane %v2562, %v2574
    %v2576 = vlaneseq
    %v2577 = vshrl.u32 %v2576, 7
    %v2578 = vsub.s32 3, %v2577
    %v2579 = vrot.slane %v2562, %v2578
    %v2586 = vunpack.c.l.b16 %v2556
    %v2587 = vunpack.c.l.b16 %v2557
    %v2588 = vpack.c.b16 %v2587, %v2586
    %v2593 = vunpack.c.l.b16 %v2558
    %v2594 = vunpack.c.h.b16 %v2558
    %v2595 = vunpack.c.l.b16 %v2559
    %v2596 = vunpack.c.h.b16 %v2559
    %v2597 = vunpack.c.l.b16 %v2560
    %v2598 = vunpack.c.h.b16 %v2560
    %v2599 = vunpack.c.l.b16 %v2561
    %v2600 = vunpack.c.h.b16 %v2561
    %v2601 = vpack.c.b16 %v2597, %v2593
    %v2602 = vpack.c.b16 %v2598, %v2594
    %v2603 = vpack.c.b16 %v2599, %v2595
    %v2604 = vpack.c.b16 %v2600, %v2596
    %v2610 = vsel %vm164, %v2588, 0
    %2612 = vmatprep.subr.bf16.mxu0 %v2602
    %2613 = vmatpush1.bf16.msra.mxu0 %v2601
    %2614 = vmatprep.subr.bf16.mxu0 0
    %2615 = vmatpush1.bf16.msra.mxu0 0
    %2616 = vmatprep.subr.bf16.mxu0 0
    %2617 = vmatpush1.bf16.msra.mxu0 0
    %2618 = vmatprep.subr.bf16.mxu0 0
    %2619 = vmatpush1.bf16.msra.mxu0 0
    %2620 = vmatprep.subr.bf16.mxu0 0
    %2621 = vmatpush1.bf16.msra.mxu0 0
    %2622 = vmatprep.subr.bf16.mxu0 0
    %2623 = vmatpush1.bf16.msra.mxu0 0
    %2624 = vmatprep.subr.bf16.mxu0 0
    %2625 = vmatpush1.bf16.msra.mxu0 0
    %2626 = vmatprep.subr.bf16.mxu0 0
    %2627 = vmatpush1.bf16.msra.mxu0 0
    %2628 = vmatprep.subr.bf16.mxu0 0
    %2629 = vmatpush1.bf16.msra.mxu0 0
    %2630 = vmatprep.subr.bf16.mxu0 0
    %2631 = vmatpush1.bf16.msra.mxu0 0
    %2632 = vmatprep.subr.bf16.mxu0 0
    %2633 = vmatpush1.bf16.msra.mxu0 0
    %2634 = vmatprep.subr.bf16.mxu0 0
    %2635 = vmatpush1.bf16.msra.mxu0 0
    %2636 = vmatprep.subr.bf16.mxu0 0
    %2637 = vmatpush1.bf16.msra.mxu0 0
    %2638 = vmatprep.subr.bf16.mxu0 0
    %2639 = vmatpush1.bf16.msra.mxu0 0
    %2640 = vmatprep.subr.bf16.mxu0 0
    %2641 = vmatpush1.bf16.msra.mxu0 0
    %2642 = vmatprep.subr.bf16.mxu0 0
    %2643 = vmatpush1.bf16.msra.mxu0 0
    %2644 = vmatprep.mubr.bf16.mxu0 0
    %2645 = vmatmul.mubr.bf16.gmra.mrb[0].mxu0 %v2610
    %v2646 = vpop.f32.mrb[0].mxu0
    %v2647 = vadd.f32 %v2567, %v2646
    %v2648 = vpop.f32.mrb[0].mxu0
    %v2649 = vadd.f32 %v2571, %v2648
    %v2650 = vpop.f32.mrb[0].mxu0
    %v2651 = vadd.f32 %v2567, %v2650
    %v2652 = vpop.f32.mrb[0].mxu0
    %v2653 = vadd.f32 %v2571, %v2652
    %2654 = vdwg.mxu0
    %2655 = vmatprep.subr.bf16.mxu0 %v2604
    %2656 = vmatpush1.bf16.msra.mxu0 %v2603
    %2657 = vmatprep.subr.bf16.mxu0 0
    %2658 = vmatpush1.bf16.msra.mxu0 0
    %2659 = vmatprep.subr.bf16.mxu0 0
    %2660 = vmatpush1.bf16.msra.mxu0 0
    %2661 = vmatprep.subr.bf16.mxu0 0
    %2662 = vmatpush1.bf16.msra.mxu0 0
    %2663 = vmatprep.subr.bf16.mxu0 0
    %2664 = vmatpush1.bf16.msra.mxu0 0
    %2665 = vmatprep.subr.bf16.mxu0 0
    %2666 = vmatpush1.bf16.msra.mxu0 0
    %2667 = vmatprep.subr.bf16.mxu0 0
    %2668 = vmatpush1.bf16.msra.mxu0 0
    %2669 = vmatprep.subr.bf16.mxu0 0
    %2670 = vmatpush1.bf16.msra.mxu0 0
    %2671 = vmatprep.subr.bf16.mxu0 0
    %2672 = vmatpush1.bf16.msra.mxu0 0
    %2673 = vmatprep.subr.bf16.mxu0 0
    %2674 = vmatpush1.bf16.msra.mxu0 0
    %2675 = vmatprep.subr.bf16.mxu0 0
    %2676 = vmatpush1.bf16.msra.mxu0 0
    %2677 = vmatprep.subr.bf16.mxu0 0
    %2678 = vmatpush1.bf16.msra.mxu0 0
    %2679 = vmatprep.subr.bf16.mxu0 0
    %2680 = vmatpush1.bf16.msra.mxu0 0
    %2681 = vmatprep.subr.bf16.mxu0 0
    %2682 = vmatpush1.bf16.msra.mxu0 0
    %2683 = vmatprep.subr.bf16.mxu0 0
    %2684 = vmatpush1.bf16.msra.mxu0 0
    %2685 = vmatprep.subr.bf16.mxu0 0
    %2686 = vmatpush1.bf16.msra.mxu0 0
    %2687 = vmatprep.mubr.bf16.mxu0 0
    %2688 = vmatmul.mubr.bf16.gmra.mrb[0].mxu0 %v2610
    %v2689 = vpop.f32.mrb[0].mxu0
    %v2690 = vadd.f32 %v2575, %v2689
    %v2691 = vpop.f32.mrb[0].mxu0
    %v2692 = vadd.f32 %v2579, %v2691
    %v2693 = vpop.f32.mrb[0].mxu0
    %v2694 = vadd.f32 %v2575, %v2693
    %v2695 = vpop.f32.mrb[0].mxu0
    %v2696 = vadd.f32 %v2579, %v2695
    %2697 = vdwg.mxu0
    %v2698 = vpack.c.bf16 %v2552, %v2551
    %v2699 = vld [vmem:[#allocation10] sm:$0xff]
    %v2700 = vld [vmem:[#allocation10 + $0x8] sm:$0xff]
    %v2701 = vld [vmem:[#allocation10 + $0x10] sm:$0xff]
    %v2702 = vld [vmem:[#allocation10 + $0x18] sm:$0xff]
    %v2703 = vld [vmem:[#allocation10 + $0x20] sm:$0xff]
    %v2704 = vld [vmem:[#allocation10 + $0x28] sm:$0xff]
    %v2705 = vld [vmem:[#allocation10 + $0x30] sm:$0xff]
    %v2706 = vld [vmem:[#allocation10 + $0x38] sm:$0xff]
    %v2707 = vld [vmem:[#allocation10 + $0x40] sm:$0xff]
    %v2708 = vld [vmem:[#allocation10 + $0x48] sm:$0xff]
    %v2709 = vld [vmem:[#allocation10 + $0x50] sm:$0xff]
    %v2710 = vld [vmem:[#allocation10 + $0x58] sm:$0xff]
    %v2711 = vld [vmem:[#allocation10 + $0x60] sm:$0xff]
    %v2712 = vld [vmem:[#allocation10 + $0x68] sm:$0xff]
    %v2713 = vld [vmem:[#allocation10 + $0x70] sm:$0xff]
    %v2714 = vld [vmem:[#allocation10 + $0x78] sm:$0xff]
    %v2715 = vld [vmem:[#allocation10 + $0x80] sm:$0xff]
    %v2716 = vld [vmem:[#allocation10 + $0x88] sm:$0xff]
    %v2717 = vld [vmem:[#allocation10 + $0x90] sm:$0xff]
    %v2718 = vld [vmem:[#allocation10 + $0x98] sm:$0xff]
    %v2719 = vld [vmem:[#allocation10 + $0xa0] sm:$0xff]
    %v2720 = vld [vmem:[#allocation10 + $0xa8] sm:$0xff]
    %v2721 = vld [vmem:[#allocation10 + $0xb0] sm:$0xff]
    %v2722 = vld [vmem:[#allocation10 + $0xb8] sm:$0xff]
    %v2723 = vld [vmem:[#allocation10 + $0xc0] sm:$0xff]
    %v2724 = vld [vmem:[#allocation10 + $0xc8] sm:$0xff]
    %v2725 = vld [vmem:[#allocation10 + $0xd0] sm:$0xff]
    %v2726 = vld [vmem:[#allocation10 + $0xd8] sm:$0xff]
    %v2727 = vld [vmem:[#allocation10 + $0xe0] sm:$0xff]
    %v2728 = vld [vmem:[#allocation10 + $0xe8] sm:$0xff]
    %v2729 = vld [vmem:[#allocation10 + $0xf0] sm:$0xff]
    %v2730 = vld [vmem:[#allocation10 + $0xf8] sm:$0xff]
    %v2763 = vunpack.c.l.b16 %v2699
    %v2764 = vunpack.c.h.b16 %v2699
    %v2765 = vunpack.c.l.b16 %v2700
    %v2766 = vunpack.c.h.b16 %v2700
    %v2767 = vunpack.c.l.b16 %v2701
    %v2768 = vunpack.c.h.b16 %v2701
    %v2769 = vunpack.c.l.b16 %v2702
    %v2770 = vunpack.c.h.b16 %v2702
    %v2771 = vunpack.c.l.b16 %v2703
    %v2772 = vunpack.c.h.b16 %v2703
    %v2773 = vunpack.c.l.b16 %v2704
    %v2774 = vunpack.c.h.b16 %v2704
    %v2775 = vunpack.c.l.b16 %v2705
    %v2776 = vunpack.c.h.b16 %v2705
    %v2777 = vunpack.c.l.b16 %v2706
    %v2778 = vunpack.c.h.b16 %v2706
    %v2779 = vunpack.c.l.b16 %v2707
    %v2780 = vunpack.c.h.b16 %v2707
    %v2781 = vunpack.c.l.b16 %v2708
    %v2782 = vunpack.c.h.b16 %v2708
    %v2783 = vunpack.c.l.b16 %v2709
    %v2784 = vunpack.c.h.b16 %v2709
    %v2785 = vunpack.c.l.b16 %v2710
    %v2786 = vunpack.c.h.b16 %v2710
    %v2787 = vunpack.c.l.b16 %v2711
    %v2788 = vunpack.c.h.b16 %v2711
    %v2789 = vunpack.c.l.b16 %v2712
    %v2790 = vunpack.c.h.b16 %v2712
    %v2791 = vunpack.c.l.b16 %v2713
    %v2792 = vunpack.c.h.b16 %v2713
    %v2793 = vunpack.c.l.b16 %v2714
    %v2794 = vunpack.c.h.b16 %v2714
    %v2795 = vunpack.c.l.b16 %v2715
    %v2796 = vunpack.c.h.b16 %v2715
    %v2797 = vunpack.c.l.b16 %v2716
    %v2798 = vunpack.c.h.b16 %v2716
    %v2799 = vunpack.c.l.b16 %v2717
    %v2800 = vunpack.c.h.b16 %v2717
    %v2801 = vunpack.c.l.b16 %v2718
    %v2802 = vunpack.c.h.b16 %v2718
    %v2803 = vunpack.c.l.b16 %v2719
    %v2804 = vunpack.c.h.b16 %v2719
    %v2805 = vunpack.c.l.b16 %v2720
    %v2806 = vunpack.c.h.b16 %v2720
    %v2807 = vunpack.c.l.b16 %v2721
    %v2808 = vunpack.c.h.b16 %v2721
    %v2809 = vunpack.c.l.b16 %v2722
    %v2810 = vunpack.c.h.b16 %v2722
    %v2811 = vunpack.c.l.b16 %v2723
    %v2812 = vunpack.c.h.b16 %v2723
    %v2813 = vunpack.c.l.b16 %v2724
    %v2814 = vunpack.c.h.b16 %v2724
    %v2815 = vunpack.c.l.b16 %v2725
    %v2816 = vunpack.c.h.b16 %v2725
    %v2817 = vunpack.c.l.b16 %v2726
    %v2818 = vunpack.c.h.b16 %v2726
    %v2819 = vunpack.c.l.b16 %v2727
    %v2820 = vunpack.c.h.b16 %v2727
    %v2821 = vunpack.c.l.b16 %v2728
    %v2822 = vunpack.c.h.b16 %v2728
    %v2823 = vunpack.c.l.b16 %v2729
    %v2824 = vunpack.c.h.b16 %v2729
    %v2825 = vunpack.c.l.b16 %v2730
    %v2826 = vunpack.c.h.b16 %v2730
    %v2827 = vpack.c.b16 %v2767, %v2763
    %v2828 = vpack.c.b16 %v2768, %v2764
    %v2829 = vpack.c.b16 %v2769, %v2765
    %v2830 = vpack.c.b16 %v2770, %v2766
    %v2831 = vpack.c.b16 %v2775, %v2771
    %v2832 = vpack.c.b16 %v2776, %v2772
    %v2833 = vpack.c.b16 %v2777, %v2773
    %v2834 = vpack.c.b16 %v2778, %v2774
    %v2835 = vpack.c.b16 %v2783, %v2779
    %v2836 = vpack.c.b16 %v2784, %v2780
    %v2837 = vpack.c.b16 %v2785, %v2781
    %v2838 = vpack.c.b16 %v2786, %v2782
    %v2839 = vpack.c.b16 %v2791, %v2787
    %v2840 = vpack.c.b16 %v2792, %v2788
    %v2841 = vpack.c.b16 %v2793, %v2789
    %v2842 = vpack.c.b16 %v2794, %v2790
    %v2843 = vpack.c.b16 %v2799, %v2795
    %v2844 = vpack.c.b16 %v2800, %v2796
    %v2845 = vpack.c.b16 %v2801, %v2797
    %v2846 = vpack.c.b16 %v2802, %v2798
    %v2847 = vpack.c.b16 %v2807, %v2803
    %v2848 = vpack.c.b16 %v2808, %v2804
    %v2849 = vpack.c.b16 %v2809, %v2805
    %v2850 = vpack.c.b16 %v2810, %v2806
    %v2851 = vpack.c.b16 %v2815, %v2811
    %v2852 = vpack.c.b16 %v2816, %v2812
    %v2853 = vpack.c.b16 %v2817, %v2813
    %v2854 = vpack.c.b16 %v2818, %v2814
    %v2855 = vpack.c.b16 %v2823, %v2819
    %v2856 = vpack.c.b16 %v2824, %v2820
    %v2857 = vpack.c.b16 %v2825, %v2821
    %v2858 = vpack.c.b16 %v2826, %v2822
    %2891 = vmatprep.subr.bf16.mxu0 %v2828
    %2892 = vmatpush1.bf16.msra.mxu0 %v2827
    %2893 = vmatprep.subr.bf16.mxu0 %v2832
    %2894 = vmatpush1.bf16.msra.mxu0 %v2831
    %2895 = vmatprep.subr.bf16.mxu0 %v2836
    %2896 = vmatpush1.bf16.msra.mxu0 %v2835
    %2897 = vmatprep.subr.bf16.mxu0 %v2840
    %2898 = vmatpush1.bf16.msra.mxu0 %v2839
    %2899 = vmatprep.subr.bf16.mxu0 %v2844
    %2900 = vmatpush1.bf16.msra.mxu0 %v2843
    %2901 = vmatprep.subr.bf16.mxu0 %v2848
    %2902 = vmatpush1.bf16.msra.mxu0 %v2847
    %2903 = vmatprep.subr.bf16.mxu0 %v2852
    %2904 = vmatpush1.bf16.msra.mxu0 %v2851
    %2905 = vmatprep.subr.bf16.mxu0 %v2856
    %2906 = vmatpush1.bf16.msra.mxu0 %v2855
    %2907 = vmatprep.subr.bf16.mxu0 0
    %2908 = vmatpush1.bf16.msra.mxu0 0
    %2909 = vmatprep.subr.bf16.mxu0 0
    %2910 = vmatpush1.bf16.msra.mxu0 0
    %2911 = vmatprep.subr.bf16.mxu0 0
    %2912 = vmatpush1.bf16.msra.mxu0 0
    %2913 = vmatprep.subr.bf16.mxu0 0
    %2914 = vmatpush1.bf16.msra.mxu0 0
    %2915 = vmatprep.subr.bf16.mxu0 0
    %2916 = vmatpush1.bf16.msra.mxu0 0
    %2917 = vmatprep.subr.bf16.mxu0 0
    %2918 = vmatpush1.bf16.msra.mxu0 0
    %2919 = vmatprep.subr.bf16.mxu0 0
    %2920 = vmatpush1.bf16.msra.mxu0 0
    %2921 = vmatprep.subr.bf16.mxu0 0
    %2922 = vmatpush1.bf16.msra.mxu0 0
    %2923 = vmatprep.mubr.bf16.mxu0 0
    %2924 = vmatmul.mubr.bf16.gmra.mrb[0].mxu0 %v2698
    %v2925 = vpop.f32.mrb[0].mxu0
    %v2926 = vadd.f32 0.0, %v2925
    %v2927 = vpop.f32.mrb[0].mxu0
    %v2928 = vadd.f32 0.0, %v2927
    %v2929 = vpop.f32.mrb[0].mxu0
    %v2930 = vadd.f32 0.0, %v2929
    %v2931 = vpop.f32.mrb[0].mxu0
    %v2932 = vadd.f32 0.0, %v2931
    %2933 = vdwg.mxu0
    %2934 = vmatprep.subr.bf16.mxu0 %v2830
    %2935 = vmatpush1.bf16.msra.mxu0 %v2829
    %2936 = vmatprep.subr.bf16.mxu0 %v2834
    %2937 = vmatpush1.bf16.msra.mxu0 %v2833
    %2938 = vmatprep.subr.bf16.mxu0 %v2838
    %2939 = vmatpush1.bf16.msra.mxu0 %v2837
    %2940 = vmatprep.subr.bf16.mxu0 %v2842
    %2941 = vmatpush1.bf16.msra.mxu0 %v2841
    %2942 = vmatprep.subr.bf16.mxu0 %v2846
    %2943 = vmatpush1.bf16.msra.mxu0 %v2845
    %2944 = vmatprep.subr.bf16.mxu0 %v2850
    %2945 = vmatpush1.bf16.msra.mxu0 %v2849
    %2946 = vmatprep.subr.bf16.mxu0 %v2854
    %2947 = vmatpush1.bf16.msra.mxu0 %v2853
    %2948 = vmatprep.subr.bf16.mxu0 %v2858
    %2949 = vmatpush1.bf16.msra.mxu0 %v2857
    %2950 = vmatprep.subr.bf16.mxu0 0
    %2951 = vmatpush1.bf16.msra.mxu0 0
    %2952 = vmatprep.subr.bf16.mxu0 0
    %2953 = vmatpush1.bf16.msra.mxu0 0
    %2954 = vmatprep.subr.bf16.mxu0 0
    %2955 = vmatpush1.bf16.msra.mxu0 0
    %2956 = vmatprep.subr.bf16.mxu0 0
    %2957 = vmatpush1.bf16.msra.mxu0 0
    %2958 = vmatprep.subr.bf16.mxu0 0
    %2959 = vmatpush1.bf16.msra.mxu0 0
    %2960 = vmatprep.subr.bf16.mxu0 0
    %2961 = vmatpush1.bf16.msra.mxu0 0
    %2962 = vmatprep.subr.bf16.mxu0 0
    %2963 = vmatpush1.bf16.msra.mxu0 0
    %2964 = vmatprep.subr.bf16.mxu0 0
    %2965 = vmatpush1.bf16.msra.mxu0 0
    %2966 = vmatprep.mubr.bf16.mxu0 0
    %2967 = vmatmul.mubr.bf16.gmra.mrb[0].mxu0 %v2698
    %v2968 = vpop.f32.mrb[0].mxu0
    %v2969 = vadd.f32 0.0, %v2968
    %v2970 = vpop.f32.mrb[0].mxu0
    %v2971 = vadd.f32 0.0, %v2970
    %v2972 = vpop.f32.mrb[0].mxu0
    %v2973 = vadd.f32 0.0, %v2972
    %v2974 = vpop.f32.mrb[0].mxu0
    %v2975 = vadd.f32 0.0, %v2974
    %2976 = vdwg.mxu0
    %v2977 = vadd.f32 %v2647, %v2926
    %v2978 = vadd.f32 %v2649, %v2928
    %v2979 = vadd.f32 %v2690, %v2969
    %v2980 = vadd.f32 %v2692, %v2971
    %v2981 = vadd.f32 %v2651, %v2930
    %v2982 = vadd.f32 %v2653, %v2932
    %v2983 = vadd.f32 %v2694, %v2973
    %v2984 = vadd.f32 %v2696, %v2975
    %v2985 = vxor.u32 %v2977, 2147483648
    %v2986 = vxor.u32 %v2981, 2147483648
    %v2987 = vmul.f32 %v2985, 1.442695
    %v2988 = vpow.pop %v2987
    %v2989 = vmul.f32 %v2986, 1.442695
    %v2990 = vpow.pop %v2989
    %v2991 = vadd.f32 %v2988, 1.0
    %v2992 = vadd.f32 %v2990, 1.0
    %v2993 = vrcp.pop %v2991
    %v2994 = vmul.f32 1.0, %v2993
    %v2995 = vrcp.pop %v2992
    %v2996 = vmul.f32 1.0, %v2995
    %v2997 = vxor.u32 %v2978, 2147483648
    %v2998 = vxor.u32 %v2982, 2147483648
    %v2999 = vmul.f32 %v2997, 1.442695
    %v3000 = vpow.pop %v2999
    %v3001 = vmul.f32 %v2998, 1.442695
    %v3002 = vpow.pop %v3001
    %v3003 = vadd.f32 %v3000, 1.0
    %v3004 = vadd.f32 %v3002, 1.0
    %v3005 = vrcp.pop %v3003
    %v3006 = vmul.f32 1.0, %v3005
    %v3007 = vrcp.pop %v3004
    %v3008 = vmul.f32 1.0, %v3007
    %v3009 = vtanh.pop %v2979
    %v3010 = vtanh.pop %v2983
    %v3011 = vxor.u32 %v2980, 2147483648
    %v3012 = vxor.u32 %v2984, 2147483648
    %v3013 = vmul.f32 %v3011, 1.442695
    %v3014 = vpow.pop %v3013
    %v3015 = vmul.f32 %v3012, 1.442695
    %v3016 = vpow.pop %v3015
    %v3017 = vadd.f32 %v3014, 1.0
    %v3018 = vadd.f32 %v3016, 1.0
    %v3019 = vrcp.pop %v3017
    %v3020 = vmul.f32 1.0, %v3019
    %v3021 = vrcp.pop %v3018
    %v3022 = vmul.f32 1.0, %v3021
    %v3023 = vmul.f32 %v3006, %v2553
    %v3024 = vmul.f32 %v3008, %v2554
    %v3025 = vmul.f32 %v2994, %v3009
    %v3026 = vmul.f32 %v2996, %v3010
    %v3027 = vadd.f32 %v3023, %v3025
    %v3028 = vadd.f32 %v3024, %v3026
    %v3029 = vtanh.pop %v3027
    %v3030 = vtanh.pop %v3028
    %v3031 = vmul.f32 %v3020, %v3029
    %v3032 = vmul.f32 %v3022, %v3030
    %s3033 = scalar_lea.vmem [#allocation13], 80
    %3034 = vst [vmem:[%s3033] sm:$0xff] %v3031
    %3035 = vst [vmem:[%s3033 + $0x8] sm:$0xff] %v3032
    %3036 = vst [vmem:[#allocation2] sm:$0xff] %v3031
    %3037 = vst [vmem:[#allocation2 + $0x8] sm:$0xff] %v3032
    %3038 = vst [vmem:[#allocation3] sm:$0xff] %v3027
    %3039 = vst [vmem:[#allocation3 + $0x8] sm:$0xff] %v3028
    %v3040 = vld [vmem:[#allocation2] sm:$0xff]
    %v3041 = vld [vmem:[#allocation2 + $0x8] sm:$0xff]
    %v3042 = vld [vmem:[#allocation3] sm:$0xff]
    %v3043 = vld [vmem:[#allocation3 + $0x8] sm:$0xff]
    %s3044 = scalar_lea.vmem [#allocation4], 48
    %v3045 = vld [vmem:[%s3044] sm:$0xf]
    %v3046 = vld [vmem:[%s3044 + $0x4] sm:$0xf]
    %v3047 = vld [vmem:[#allocation7] sm:$0xff]
    %v3048 = vld [vmem:[#allocation7 + $0x8] sm:$0xff]
    %v3049 = vld [vmem:[#allocation7 + $0x10] sm:$0xff]
    %v3050 = vld [vmem:[#allocation7 + $0x18] sm:$0xff]
    %v3051 = vld [vmem:[#allocation9] sm:$0xf]
    %v3053 = vlaneseq
    %v3054 = vshrl.u32 %v3053, 7
    %v3055 = vsub.s32 0, %v3054
    %v3056 = vrot.slane %v3051, %v3055
    %v3057 = vlaneseq
    %v3058 = vshrl.u32 %v3057, 7
    %v3059 = vsub.s32 1, %v3058
    %v3060 = vrot.slane %v3051, %v3059
    %v3061 = vlaneseq
    %v3062 = vshrl.u32 %v3061, 7
    %v3063 = vsub.s32 2, %v3062
    %v3064 = vrot.slane %v3051, %v3063
    %v3065 = vlaneseq
    %v3066 = vshrl.u32 %v3065, 7
    %v3067 = vsub.s32 3, %v3066
    %v3068 = vrot.slane %v3051, %v3067
    %v3075 = vunpack.c.l.b16 %v3045
    %v3076 = vunpack.c.l.b16 %v3046
    %v3077 = vpack.c.b16 %v3076, %v3075
    %v3082 = vunpack.c.l.b16 %v3047
    %v3083 = vunpack.c.h.b16 %v3047
    %v3084 = vunpack.c.l.b16 %v3048
    %v3085 = vunpack.c.h.b16 %v3048
    %v3086 = vunpack.c.l.b16 %v3049
    %v3087 = vunpack.c.h.b16 %v3049
    %v3088 = vunpack.c.l.b16 %v3050
    %v3089 = vunpack.c.h.b16 %v3050
    %v3090 = vpack.c.b16 %v3086, %v3082
    %v3091 = vpack.c.b16 %v3087, %v3083
    %v3092 = vpack.c.b16 %v3088, %v3084
    %v3093 = vpack.c.b16 %v3089, %v3085
    %v3099 = vsel %vm164, %v3077, 0
    %3101 = vmatprep.subr.bf16.mxu0 %v3091
    %3102 = vmatpush1.bf16.msra.mxu0 %v3090
    %3103 = vmatprep.subr.bf16.mxu0 0
    %3104 = vmatpush1.bf16.msra.mxu0 0
    %3105 = vmatprep.subr.bf16.mxu0 0
    %3106 = vmatpush1.bf16.msra.mxu0 0
    %3107 = vmatprep.subr.bf16.mxu0 0
    %3108 = vmatpush1.bf16.msra.mxu0 0
    %3109 = vmatprep.subr.bf16.mxu0 0
    %3110 = vmatpush1.bf16.msra.mxu0 0
    %3111 = vmatprep.subr.bf16.mxu0 0
    %3112 = vmatpush1.bf16.msra.mxu0 0
    %3113 = vmatprep.subr.bf16.mxu0 0
    %3114 = vmatpush1.bf16.msra.mxu0 0
    %3115 = vmatprep.subr.bf16.mxu0 0
    %3116 = vmatpush1.bf16.msra.mxu0 0
    %3117 = vmatprep.subr.bf16.mxu0 0
    %3118 = vmatpush1.bf16.msra.mxu0 0
    %3119 = vmatprep.subr.bf16.mxu0 0
    %3120 = vmatpush1.bf16.msra.mxu0 0
    %3121 = vmatprep.subr.bf16.mxu0 0
    %3122 = vmatpush1.bf16.msra.mxu0 0
    %3123 = vmatprep.subr.bf16.mxu0 0
    %3124 = vmatpush1.bf16.msra.mxu0 0
    %3125 = vmatprep.subr.bf16.mxu0 0
    %3126 = vmatpush1.bf16.msra.mxu0 0
    %3127 = vmatprep.subr.bf16.mxu0 0
    %3128 = vmatpush1.bf16.msra.mxu0 0
    %3129 = vmatprep.subr.bf16.mxu0 0
    %3130 = vmatpush1.bf16.msra.mxu0 0
    %3131 = vmatprep.subr.bf16.mxu0 0
    %3132 = vmatpush1.bf16.msra.mxu0 0
    %3133 = vmatprep.mubr.bf16.mxu0 0
    %3134 = vmatmul.mubr.bf16.gmra.mrb[0].mxu0 %v3099
    %v3135 = vpop.f32.mrb[0].mxu0
    %v3136 = vadd.f32 %v3056, %v3135
    %v3137 = vpop.f32.mrb[0].mxu0
    %v3138 = vadd.f32 %v3060, %v3137
    %v3139 = vpop.f32.mrb[0].mxu0
    %v3140 = vadd.f32 %v3056, %v3139
    %v3141 = vpop.f32.mrb[0].mxu0
    %v3142 = vadd.f32 %v3060, %v3141
    %3143 = vdwg.mxu0
    %3144 = vmatprep.subr.bf16.mxu0 %v3093
    %3145 = vmatpush1.bf16.msra.mxu0 %v3092
    %3146 = vmatprep.subr.bf16.mxu0 0
    %3147 = vmatpush1.bf16.msra.mxu0 0
    %3148 = vmatprep.subr.bf16.mxu0 0
    %3149 = vmatpush1.bf16.msra.mxu0 0
    %3150 = vmatprep.subr.bf16.mxu0 0
    %3151 = vmatpush1.bf16.msra.mxu0 0
    %3152 = vmatprep.subr.bf16.mxu0 0
    %3153 = vmatpush1.bf16.msra.mxu0 0
    %3154 = vmatprep.subr.bf16.mxu0 0
    %3155 = vmatpush1.bf16.msra.mxu0 0
    %3156 = vmatprep.subr.bf16.mxu0 0
    %3157 = vmatpush1.bf16.msra.mxu0 0
    %3158 = vmatprep.subr.bf16.mxu0 0
    %3159 = vmatpush1.bf16.msra.mxu0 0
    %3160 = vmatprep.subr.bf16.mxu0 0
    %3161 = vmatpush1.bf16.msra.mxu0 0
    %3162 = vmatprep.subr.bf16.mxu0 0
    %3163 = vmatpush1.bf16.msra.mxu0 0
    %3164 = vmatprep.subr.bf16.mxu0 0
    %3165 = vmatpush1.bf16.msra.mxu0 0
    %3166 = vmatprep.subr.bf16.mxu0 0
    %3167 = vmatpush1.bf16.msra.mxu0 0
    %3168 = vmatprep.subr.bf16.mxu0 0
    %3169 = vmatpush1.bf16.msra.mxu0 0
    %3170 = vmatprep.subr.bf16.mxu0 0
    %3171 = vmatpush1.bf16.msra.mxu0 0
    %3172 = vmatprep.subr.bf16.mxu0 0
    %3173 = vmatpush1.bf16.msra.mxu0 0
    %3174 = vmatprep.subr.bf16.mxu0 0
    %3175 = vmatpush1.bf16.msra.mxu0 0
    %3176 = vmatprep.mubr.bf16.mxu0 0
    %3177 = vmatmul.mubr.bf16.gmra.mrb[0].mxu0 %v3099
    %v3178 = vpop.f32.mrb[0].mxu0
    %v3179 = vadd.f32 %v3064, %v3178
    %v3180 = vpop.f32.mrb[0].mxu0
    %v3181 = vadd.f32 %v3068, %v3180
    %v3182 = vpop.f32.mrb[0].mxu0
    %v3183 = vadd.f32 %v3064, %v3182
    %v3184 = vpop.f32.mrb[0].mxu0
    %v3185 = vadd.f32 %v3068, %v3184
    %3186 = vdwg.mxu0
    %v3187 = vpack.c.bf16 %v3041, %v3040
    %v3188 = vld [vmem:[#allocation10] sm:$0xff]
    %v3189 = vld [vmem:[#allocation10 + $0x8] sm:$0xff]
    %v3190 = vld [vmem:[#allocation10 + $0x10] sm:$0xff]
    %v3191 = vld [vmem:[#allocation10 + $0x18] sm:$0xff]
    %v3192 = vld [vmem:[#allocation10 + $0x20] sm:$0xff]
    %v3193 = vld [vmem:[#allocation10 + $0x28] sm:$0xff]
    %v3194 = vld [vmem:[#allocation10 + $0x30] sm:$0xff]
    %v3195 = vld [vmem:[#allocation10 + $0x38] sm:$0xff]
    %v3196 = vld [vmem:[#allocation10 + $0x40] sm:$0xff]
    %v3197 = vld [vmem:[#allocation10 + $0x48] sm:$0xff]
    %v3198 = vld [vmem:[#allocation10 + $0x50] sm:$0xff]
    %v3199 = vld [vmem:[#allocation10 + $0x58] sm:$0xff]
    %v3200 = vld [vmem:[#allocation10 + $0x60] sm:$0xff]
    %v3201 = vld [vmem:[#allocation10 + $0x68] sm:$0xff]
    %v3202 = vld [vmem:[#allocation10 + $0x70] sm:$0xff]
    %v3203 = vld [vmem:[#allocation10 + $0x78] sm:$0xff]
    %v3204 = vld [vmem:[#allocation10 + $0x80] sm:$0xff]
    %v3205 = vld [vmem:[#allocation10 + $0x88] sm:$0xff]
    %v3206 = vld [vmem:[#allocation10 + $0x90] sm:$0xff]
    %v3207 = vld [vmem:[#allocation10 + $0x98] sm:$0xff]
    %v3208 = vld [vmem:[#allocation10 + $0xa0] sm:$0xff]
    %v3209 = vld [vmem:[#allocation10 + $0xa8] sm:$0xff]
    %v3210 = vld [vmem:[#allocation10 + $0xb0] sm:$0xff]
    %v3211 = vld [vmem:[#allocation10 + $0xb8] sm:$0xff]
    %v3212 = vld [vmem:[#allocation10 + $0xc0] sm:$0xff]
    %v3213 = vld [vmem:[#allocation10 + $0xc8] sm:$0xff]
    %v3214 = vld [vmem:[#allocation10 + $0xd0] sm:$0xff]
    %v3215 = vld [vmem:[#allocation10 + $0xd8] sm:$0xff]
    %v3216 = vld [vmem:[#allocation10 + $0xe0] sm:$0xff]
    %v3217 = vld [vmem:[#allocation10 + $0xe8] sm:$0xff]
    %v3218 = vld [vmem:[#allocation10 + $0xf0] sm:$0xff]
    %v3219 = vld [vmem:[#allocation10 + $0xf8] sm:$0xff]
    %v3252 = vunpack.c.l.b16 %v3188
    %v3253 = vunpack.c.h.b16 %v3188
    %v3254 = vunpack.c.l.b16 %v3189
    %v3255 = vunpack.c.h.b16 %v3189
    %v3256 = vunpack.c.l.b16 %v3190
    %v3257 = vunpack.c.h.b16 %v3190
    %v3258 = vunpack.c.l.b16 %v3191
    %v3259 = vunpack.c.h.b16 %v3191
    %v3260 = vunpack.c.l.b16 %v3192
    %v3261 = vunpack.c.h.b16 %v3192
    %v3262 = vunpack.c.l.b16 %v3193
    %v3263 = vunpack.c.h.b16 %v3193
    %v3264 = vunpack.c.l.b16 %v3194
    %v3265 = vunpack.c.h.b16 %v3194
    %v3266 = vunpack.c.l.b16 %v3195
    %v3267 = vunpack.c.h.b16 %v3195
    %v3268 = vunpack.c.l.b16 %v3196
    %v3269 = vunpack.c.h.b16 %v3196
    %v3270 = vunpack.c.l.b16 %v3197
    %v3271 = vunpack.c.h.b16 %v3197
    %v3272 = vunpack.c.l.b16 %v3198
    %v3273 = vunpack.c.h.b16 %v3198
    %v3274 = vunpack.c.l.b16 %v3199
    %v3275 = vunpack.c.h.b16 %v3199
    %v3276 = vunpack.c.l.b16 %v3200
    %v3277 = vunpack.c.h.b16 %v3200
    %v3278 = vunpack.c.l.b16 %v3201
    %v3279 = vunpack.c.h.b16 %v3201
    %v3280 = vunpack.c.l.b16 %v3202
    %v3281 = vunpack.c.h.b16 %v3202
    %v3282 = vunpack.c.l.b16 %v3203
    %v3283 = vunpack.c.h.b16 %v3203
    %v3284 = vunpack.c.l.b16 %v3204
    %v3285 = vunpack.c.h.b16 %v3204
    %v3286 = vunpack.c.l.b16 %v3205
    %v3287 = vunpack.c.h.b16 %v3205
    %v3288 = vunpack.c.l.b16 %v3206
    %v3289 = vunpack.c.h.b16 %v3206
    %v3290 = vunpack.c.l.b16 %v3207
    %v3291 = vunpack.c.h.b16 %v3207
    %v3292 = vunpack.c.l.b16 %v3208
    %v3293 = vunpack.c.h.b16 %v3208
    %v3294 = vunpack.c.l.b16 %v3209
    %v3295 = vunpack.c.h.b16 %v3209
    %v3296 = vunpack.c.l.b16 %v3210
    %v3297 = vunpack.c.h.b16 %v3210
    %v3298 = vunpack.c.l.b16 %v3211
    %v3299 = vunpack.c.h.b16 %v3211
    %v3300 = vunpack.c.l.b16 %v3212
    %v3301 = vunpack.c.h.b16 %v3212
    %v3302 = vunpack.c.l.b16 %v3213
    %v3303 = vunpack.c.h.b16 %v3213
    %v3304 = vunpack.c.l.b16 %v3214
    %v3305 = vunpack.c.h.b16 %v3214
    %v3306 = vunpack.c.l.b16 %v3215
    %v3307 = vunpack.c.h.b16 %v3215
    %v3308 = vunpack.c.l.b16 %v3216
    %v3309 = vunpack.c.h.b16 %v3216
    %v3310 = vunpack.c.l.b16 %v3217
    %v3311 = vunpack.c.h.b16 %v3217
    %v3312 = vunpack.c.l.b16 %v3218
    %v3313 = vunpack.c.h.b16 %v3218
    %v3314 = vunpack.c.l.b16 %v3219
    %v3315 = vunpack.c.h.b16 %v3219
    %v3316 = vpack.c.b16 %v3256, %v3252
    %v3317 = vpack.c.b16 %v3257, %v3253
    %v3318 = vpack.c.b16 %v3258, %v3254
    %v3319 = vpack.c.b16 %v3259, %v3255
    %v3320 = vpack.c.b16 %v3264, %v3260
    %v3321 = vpack.c.b16 %v3265, %v3261
    %v3322 = vpack.c.b16 %v3266, %v3262
    %v3323 = vpack.c.b16 %v3267, %v3263
    %v3324 = vpack.c.b16 %v3272, %v3268
    %v3325 = vpack.c.b16 %v3273, %v3269
    %v3326 = vpack.c.b16 %v3274, %v3270
    %v3327 = vpack.c.b16 %v3275, %v3271
    %v3328 = vpack.c.b16 %v3280, %v3276
    %v3329 = vpack.c.b16 %v3281, %v3277
    %v3330 = vpack.c.b16 %v3282, %v3278
    %v3331 = vpack.c.b16 %v3283, %v3279
    %v3332 = vpack.c.b16 %v3288, %v3284
    %v3333 = vpack.c.b16 %v3289, %v3285
    %v3334 = vpack.c.b16 %v3290, %v3286
    %v3335 = vpack.c.b16 %v3291, %v3287
    %v3336 = vpack.c.b16 %v3296, %v3292
    %v3337 = vpack.c.b16 %v3297, %v3293
    %v3338 = vpack.c.b16 %v3298, %v3294
    %v3339 = vpack.c.b16 %v3299, %v3295
    %v3340 = vpack.c.b16 %v3304, %v3300
    %v3341 = vpack.c.b16 %v3305, %v3301
    %v3342 = vpack.c.b16 %v3306, %v3302
    %v3343 = vpack.c.b16 %v3307, %v3303
    %v3344 = vpack.c.b16 %v3312, %v3308
    %v3345 = vpack.c.b16 %v3313, %v3309
    %v3346 = vpack.c.b16 %v3314, %v3310
    %v3347 = vpack.c.b16 %v3315, %v3311
    %3380 = vmatprep.subr.bf16.mxu0 %v3317
    %3381 = vmatpush1.bf16.msra.mxu0 %v3316
    %3382 = vmatprep.subr.bf16.mxu0 %v3321
    %3383 = vmatpush1.bf16.msra.mxu0 %v3320
    %3384 = vmatprep.subr.bf16.mxu0 %v3325
    %3385 = vmatpush1.bf16.msra.mxu0 %v3324
    %3386 = vmatprep.subr.bf16.mxu0 %v3329
    %3387 = vmatpush1.bf16.msra.mxu0 %v3328
    %3388 = vmatprep.subr.bf16.mxu0 %v3333
    %3389 = vmatpush1.bf16.msra.mxu0 %v3332
    %3390 = vmatprep.subr.bf16.mxu0 %v3337
    %3391 = vmatpush1.bf16.msra.mxu0 %v3336
    %3392 = vmatprep.subr.bf16.mxu0 %v3341
    %3393 = vmatpush1.bf16.msra.mxu0 %v3340
    %3394 = vmatprep.subr.bf16.mxu0 %v3345
    %3395 = vmatpush1.bf16.msra.mxu0 %v3344
    %3396 = vmatprep.subr.bf16.mxu0 0
    %3397 = vmatpush1.bf16.msra.mxu0 0
    %3398 = vmatprep.subr.bf16.mxu0 0
    %3399 = vmatpush1.bf16.msra.mxu0 0
    %3400 = vmatprep.subr.bf16.mxu0 0
    %3401 = vmatpush1.bf16.msra.mxu0 0
    %3402 = vmatprep.subr.bf16.mxu0 0
    %3403 = vmatpush1.bf16.msra.mxu0 0
    %3404 = vmatprep.subr.bf16.mxu0 0
    %3405 = vmatpush1.bf16.msra.mxu0 0
    %3406 = vmatprep.subr.bf16.mxu0 0
    %3407 = vmatpush1.bf16.msra.mxu0 0
    %3408 = vmatprep.subr.bf16.mxu0 0
    %3409 = vmatpush1.bf16.msra.mxu0 0
    %3410 = vmatprep.subr.bf16.mxu0 0
    %3411 = vmatpush1.bf16.msra.mxu0 0
    %3412 = vmatprep.mubr.bf16.mxu0 0
    %3413 = vmatmul.mubr.bf16.gmra.mrb[0].mxu0 %v3187
    %v3414 = vpop.f32.mrb[0].mxu0
    %v3415 = vadd.f32 0.0, %v3414
    %v3416 = vpop.f32.mrb[0].mxu0
    %v3417 = vadd.f32 0.0, %v3416
    %v3418 = vpop.f32.mrb[0].mxu0
    %v3419 = vadd.f32 0.0, %v3418
    %v3420 = vpop.f32.mrb[0].mxu0
    %v3421 = vadd.f32 0.0, %v3420
    %3422 = vdwg.mxu0
    %3423 = vmatprep.subr.bf16.mxu0 %v3319
    %3424 = vmatpush1.bf16.msra.mxu0 %v3318
    %3425 = vmatprep.subr.bf16.mxu0 %v3323
    %3426 = vmatpush1.bf16.msra.mxu0 %v3322
    %3427 = vmatprep.subr.bf16.mxu0 %v3327
    %3428 = vmatpush1.bf16.msra.mxu0 %v3326
    %3429 = vmatprep.subr.bf16.mxu0 %v3331
    %3430 = vmatpush1.bf16.msra.mxu0 %v3330
    %3431 = vmatprep.subr.bf16.mxu0 %v3335
    %3432 = vmatpush1.bf16.msra.mxu0 %v3334
    %3433 = vmatprep.subr.bf16.mxu0 %v3339
    %3434 = vmatpush1.bf16.msra.mxu0 %v3338
    %3435 = vmatprep.subr.bf16.mxu0 %v3343
    %3436 = vmatpush1.bf16.msra.mxu0 %v3342
    %3437 = vmatprep.subr.bf16.mxu0 %v3347
    %3438 = vmatpush1.bf16.msra.mxu0 %v3346
    %3439 = vmatprep.subr.bf16.mxu0 0
    %3440 = vmatpush1.bf16.msra.mxu0 0
    %3441 = vmatprep.subr.bf16.mxu0 0
    %3442 = vmatpush1.bf16.msra.mxu0 0
    %3443 = vmatprep.subr.bf16.mxu0 0
    %3444 = vmatpush1.bf16.msra.mxu0 0
    %3445 = vmatprep.subr.bf16.mxu0 0
    %3446 = vmatpush1.bf16.msra.mxu0 0
    %3447 = vmatprep.subr.bf16.mxu0 0
    %3448 = vmatpush1.bf16.msra.mxu0 0
    %3449 = vmatprep.subr.bf16.mxu0 0
    %3450 = vmatpush1.bf16.msra.mxu0 0
    %3451 = vmatprep.subr.bf16.mxu0 0
    %3452 = vmatpush1.bf16.msra.mxu0 0
    %3453 = vmatprep.subr.bf16.mxu0 0
    %3454 = vmatpush1.bf16.msra.mxu0 0
    %3455 = vmatprep.mubr.bf16.mxu0 0
    %3456 = vmatmul.mubr.bf16.gmra.mrb[0].mxu0 %v3187
    %v3457 = vpop.f32.mrb[0].mxu0
    %v3458 = vadd.f32 0.0, %v3457
    %v3459 = vpop.f32.mrb[0].mxu0
    %v3460 = vadd.f32 0.0, %v3459
    %v3461 = vpop.f32.mrb[0].mxu0
    %v3462 = vadd.f32 0.0, %v3461
    %v3463 = vpop.f32.mrb[0].mxu0
    %v3464 = vadd.f32 0.0, %v3463
    %3465 = vdwg.mxu0
    %v3466 = vadd.f32 %v3136, %v3415
    %v3467 = vadd.f32 %v3138, %v3417
    %v3468 = vadd.f32 %v3179, %v3458
    %v3469 = vadd.f32 %v3181, %v3460
    %v3470 = vadd.f32 %v3140, %v3419
    %v3471 = vadd.f32 %v3142, %v3421
    %v3472 = vadd.f32 %v3183, %v3462
    %v3473 = vadd.f32 %v3185, %v3464
    %v3474 = vxor.u32 %v3466, 2147483648
    %v3475 = vxor.u32 %v3470, 2147483648
    %v3476 = vmul.f32 %v3474, 1.442695
    %v3477 = vpow.pop %v3476
    %v3478 = vmul.f32 %v3475, 1.442695
    %v3479 = vpow.pop %v3478
    %v3480 = vadd.f32 %v3477, 1.0
    %v3481 = vadd.f32 %v3479, 1.0
    %v3482 = vrcp.pop %v3480
    %v3483 = vmul.f32 1.0, %v3482
    %v3484 = vrcp.pop %v3481
    %v3485 = vmul.f32 1.0, %v3484
    %v3486 = vxor.u32 %v3467, 2147483648
    %v3487 = vxor.u32 %v3471, 2147483648
    %v3488 = vmul.f32 %v3486, 1.442695
    %v3489 = vpow.pop %v3488
    %v3490 = vmul.f32 %v3487, 1.442695
    %v3491 = vpow.pop %v3490
    %v3492 = vadd.f32 %v3489, 1.0
    %v3493 = vadd.f32 %v3491, 1.0
    %v3494 = vrcp.pop %v3492
    %v3495 = vmul.f32 1.0, %v3494
    %v3496 = vrcp.pop %v3493
    %v3497 = vmul.f32 1.0, %v3496
    %v3498 = vtanh.pop %v3468
    %v3499 = vtanh.pop %v3472
    %v3500 = vxor.u32 %v3469, 2147483648
    %v3501 = vxor.u32 %v3473, 2147483648
    %v3502 = vmul.f32 %v3500, 1.442695
    %v3503 = vpow.pop %v3502
    %v3504 = vmul.f32 %v3501, 1.442695
    %v3505 = vpow.pop %v3504
    %v3506 = vadd.f32 %v3503, 1.0
    %v3507 = vadd.f32 %v3505, 1.0
    %v3508 = vrcp.pop %v3506
    %v3509 = vmul.f32 1.0, %v3508
    %v3510 = vrcp.pop %v3507
    %v3511 = vmul.f32 1.0, %v3510
    %v3512 = vmul.f32 %v3495, %v3042
    %v3513 = vmul.f32 %v3497, %v3043
    %v3514 = vmul.f32 %v3483, %v3498
    %v3515 = vmul.f32 %v3485, %v3499
    %v3516 = vadd.f32 %v3512, %v3514
    %v3517 = vadd.f32 %v3513, %v3515
    %v3518 = vtanh.pop %v3516
    %v3519 = vtanh.pop %v3517
    %v3520 = vmul.f32 %v3509, %v3518
    %v3521 = vmul.f32 %v3511, %v3519
    %s3522 = scalar_lea.vmem [#allocation13], 96
    %3523 = vst [vmem:[%s3522] sm:$0xff] %v3520
    %3524 = vst [vmem:[%s3522 + $0x8] sm:$0xff] %v3521
    %3525 = vst [vmem:[#allocation2] sm:$0xff] %v3520
    %3526 = vst [vmem:[#allocation2 + $0x8] sm:$0xff] %v3521
    %3527 = vst [vmem:[#allocation3] sm:$0xff] %v3516
    %3528 = vst [vmem:[#allocation3 + $0x8] sm:$0xff] %v3517
    %v3529 = vld [vmem:[#allocation2] sm:$0xff]
    %v3530 = vld [vmem:[#allocation2 + $0x8] sm:$0xff]
    %v3531 = vld [vmem:[#allocation3] sm:$0xff]
    %v3532 = vld [vmem:[#allocation3 + $0x8] sm:$0xff]
    %s3533 = scalar_lea.vmem [#allocation4], 56
    %v3534 = vld [vmem:[%s3533] sm:$0xf]
    %v3535 = vld [vmem:[%s3533 + $0x4] sm:$0xf]
    %v3536 = vld [vmem:[#allocation7] sm:$0xff]
    %v3537 = vld [vmem:[#allocation7 + $0x8] sm:$0xff]
    %v3538 = vld [vmem:[#allocation7 + $0x10] sm:$0xff]
    %v3539 = vld [vmem:[#allocation7 + $0x18] sm:$0xff]
    %v3540 = vld [vmem:[#allocation9] sm:$0xf]
    %v3542 = vlaneseq
    %v3543 = vshrl.u32 %v3542, 7
    %v3544 = vsub.s32 0, %v3543
    %v3545 = vrot.slane %v3540, %v3544
    %v3546 = vlaneseq
    %v3547 = vshrl.u32 %v3546, 7
    %v3548 = vsub.s32 1, %v3547
    %v3549 = vrot.slane %v3540, %v3548
    %v3550 = vlaneseq
    %v3551 = vshrl.u32 %v3550, 7
    %v3552 = vsub.s32 2, %v3551
    %v3553 = vrot.slane %v3540, %v3552
    %v3554 = vlaneseq
    %v3555 = vshrl.u32 %v3554, 7
    %v3556 = vsub.s32 3, %v3555
    %v3557 = vrot.slane %v3540, %v3556
    %v3564 = vunpack.c.l.b16 %v3534
    %v3565 = vunpack.c.l.b16 %v3535
    %v3566 = vpack.c.b16 %v3565, %v3564
    %v3571 = vunpack.c.l.b16 %v3536
    %v3572 = vunpack.c.h.b16 %v3536
    %v3573 = vunpack.c.l.b16 %v3537
    %v3574 = vunpack.c.h.b16 %v3537
    %v3575 = vunpack.c.l.b16 %v3538
    %v3576 = vunpack.c.h.b16 %v3538
    %v3577 = vunpack.c.l.b16 %v3539
    %v3578 = vunpack.c.h.b16 %v3539
    %v3579 = vpack.c.b16 %v3575, %v3571
    %v3580 = vpack.c.b16 %v3576, %v3572
    %v3581 = vpack.c.b16 %v3577, %v3573
    %v3582 = vpack.c.b16 %v3578, %v3574
    %v3588 = vsel %vm164, %v3566, 0
    %3590 = vmatprep.subr.bf16.mxu0 %v3580
    %3591 = vmatpush1.bf16.msra.mxu0 %v3579
    %3592 = vmatprep.subr.bf16.mxu0 0
    %3593 = vmatpush1.bf16.msra.mxu0 0
    %3594 = vmatprep.subr.bf16.mxu0 0
    %3595 = vmatpush1.bf16.msra.mxu0 0
    %3596 = vmatprep.subr.bf16.mxu0 0
    %3597 = vmatpush1.bf16.msra.mxu0 0
    %3598 = vmatprep.subr.bf16.mxu0 0
    %3599 = vmatpush1.bf16.msra.mxu0 0
    %3600 = vmatprep.subr.bf16.mxu0 0
    %3601 = vmatpush1.bf16.msra.mxu0 0
    %3602 = vmatprep.subr.bf16.mxu0 0
    %3603 = vmatpush1.bf16.msra.mxu0 0
    %3604 = vmatprep.subr.bf16.mxu0 0
    %3605 = vmatpush1.bf16.msra.mxu0 0
    %3606 = vmatprep.subr.bf16.mxu0 0
    %3607 = vmatpush1.bf16.msra.mxu0 0
    %3608 = vmatprep.subr.bf16.mxu0 0
    %3609 = vmatpush1.bf16.msra.mxu0 0
    %3610 = vmatprep.subr.bf16.mxu0 0
    %3611 = vmatpush1.bf16.msra.mxu0 0
    %3612 = vmatprep.subr.bf16.mxu0 0
    %3613 = vmatpush1.bf16.msra.mxu0 0
    %3614 = vmatprep.subr.bf16.mxu0 0
    %3615 = vmatpush1.bf16.msra.mxu0 0
    %3616 = vmatprep.subr.bf16.mxu0 0
    %3617 = vmatpush1.bf16.msra.mxu0 0
    %3618 = vmatprep.subr.bf16.mxu0 0
    %3619 = vmatpush1.bf16.msra.mxu0 0
    %3620 = vmatprep.subr.bf16.mxu0 0
    %3621 = vmatpush1.bf16.msra.mxu0 0
    %3622 = vmatprep.mubr.bf16.mxu0 0
    %3623 = vmatmul.mubr.bf16.gmra.mrb[0].mxu0 %v3588
    %v3624 = vpop.f32.mrb[0].mxu0
    %v3625 = vadd.f32 %v3545, %v3624
    %v3626 = vpop.f32.mrb[0].mxu0
    %v3627 = vadd.f32 %v3549, %v3626
    %v3628 = vpop.f32.mrb[0].mxu0
    %v3629 = vadd.f32 %v3545, %v3628
    %v3630 = vpop.f32.mrb[0].mxu0
    %v3631 = vadd.f32 %v3549, %v3630
    %3632 = vdwg.mxu0
    %3633 = vmatprep.subr.bf16.mxu0 %v3582
    %3634 = vmatpush1.bf16.msra.mxu0 %v3581
    %3635 = vmatprep.subr.bf16.mxu0 0
    %3636 = vmatpush1.bf16.msra.mxu0 0
    %3637 = vmatprep.subr.bf16.mxu0 0
    %3638 = vmatpush1.bf16.msra.mxu0 0
    %3639 = vmatprep.subr.bf16.mxu0 0
    %3640 = vmatpush1.bf16.msra.mxu0 0
    %3641 = vmatprep.subr.bf16.mxu0 0
    %3642 = vmatpush1.bf16.msra.mxu0 0
    %3643 = vmatprep.subr.bf16.mxu0 0
    %3644 = vmatpush1.bf16.msra.mxu0 0
    %3645 = vmatprep.subr.bf16.mxu0 0
    %3646 = vmatpush1.bf16.msra.mxu0 0
    %3647 = vmatprep.subr.bf16.mxu0 0
    %3648 = vmatpush1.bf16.msra.mxu0 0
    %3649 = vmatprep.subr.bf16.mxu0 0
    %3650 = vmatpush1.bf16.msra.mxu0 0
    %3651 = vmatprep.subr.bf16.mxu0 0
    %3652 = vmatpush1.bf16.msra.mxu0 0
    %3653 = vmatprep.subr.bf16.mxu0 0
    %3654 = vmatpush1.bf16.msra.mxu0 0
    %3655 = vmatprep.subr.bf16.mxu0 0
    %3656 = vmatpush1.bf16.msra.mxu0 0
    %3657 = vmatprep.subr.bf16.mxu0 0
    %3658 = vmatpush1.bf16.msra.mxu0 0
    %3659 = vmatprep.subr.bf16.mxu0 0
    %3660 = vmatpush1.bf16.msra.mxu0 0
    %3661 = vmatprep.subr.bf16.mxu0 0
    %3662 = vmatpush1.bf16.msra.mxu0 0
    %3663 = vmatprep.subr.bf16.mxu0 0
    %3664 = vmatpush1.bf16.msra.mxu0 0
    %3665 = vmatprep.mubr.bf16.mxu0 0
    %3666 = vmatmul.mubr.bf16.gmra.mrb[0].mxu0 %v3588
    %v3667 = vpop.f32.mrb[0].mxu0
    %v3668 = vadd.f32 %v3553, %v3667
    %v3669 = vpop.f32.mrb[0].mxu0
    %v3670 = vadd.f32 %v3557, %v3669
    %v3671 = vpop.f32.mrb[0].mxu0
    %v3672 = vadd.f32 %v3553, %v3671
    %v3673 = vpop.f32.mrb[0].mxu0
    %v3674 = vadd.f32 %v3557, %v3673
    %3675 = vdwg.mxu0
    %v3676 = vpack.c.bf16 %v3530, %v3529
    %v3677 = vld [vmem:[#allocation10] sm:$0xff]
    %v3678 = vld [vmem:[#allocation10 + $0x8] sm:$0xff]
    %v3679 = vld [vmem:[#allocation10 + $0x10] sm:$0xff]
    %v3680 = vld [vmem:[#allocation10 + $0x18] sm:$0xff]
    %v3681 = vld [vmem:[#allocation10 + $0x20] sm:$0xff]
    %v3682 = vld [vmem:[#allocation10 + $0x28] sm:$0xff]
    %v3683 = vld [vmem:[#allocation10 + $0x30] sm:$0xff]
    %v3684 = vld [vmem:[#allocation10 + $0x38] sm:$0xff]
    %v3685 = vld [vmem:[#allocation10 + $0x40] sm:$0xff]
    %v3686 = vld [vmem:[#allocation10 + $0x48] sm:$0xff]
    %v3687 = vld [vmem:[#allocation10 + $0x50] sm:$0xff]
    %v3688 = vld [vmem:[#allocation10 + $0x58] sm:$0xff]
    %v3689 = vld [vmem:[#allocation10 + $0x60] sm:$0xff]
    %v3690 = vld [vmem:[#allocation10 + $0x68] sm:$0xff]
    %v3691 = vld [vmem:[#allocation10 + $0x70] sm:$0xff]
    %v3692 = vld [vmem:[#allocation10 + $0x78] sm:$0xff]
    %v3693 = vld [vmem:[#allocation10 + $0x80] sm:$0xff]
    %v3694 = vld [vmem:[#allocation10 + $0x88] sm:$0xff]
    %v3695 = vld [vmem:[#allocation10 + $0x90] sm:$0xff]
    %v3696 = vld [vmem:[#allocation10 + $0x98] sm:$0xff]
    %v3697 = vld [vmem:[#allocation10 + $0xa0] sm:$0xff]
    %v3698 = vld [vmem:[#allocation10 + $0xa8] sm:$0xff]
    %v3699 = vld [vmem:[#allocation10 + $0xb0] sm:$0xff]
    %v3700 = vld [vmem:[#allocation10 + $0xb8] sm:$0xff]
    %v3701 = vld [vmem:[#allocation10 + $0xc0] sm:$0xff]
    %v3702 = vld [vmem:[#allocation10 + $0xc8] sm:$0xff]
    %v3703 = vld [vmem:[#allocation10 + $0xd0] sm:$0xff]
    %v3704 = vld [vmem:[#allocation10 + $0xd8] sm:$0xff]
    %v3705 = vld [vmem:[#allocation10 + $0xe0] sm:$0xff]
    %v3706 = vld [vmem:[#allocation10 + $0xe8] sm:$0xff]
    %v3707 = vld [vmem:[#allocation10 + $0xf0] sm:$0xff]
    %v3708 = vld [vmem:[#allocation10 + $0xf8] sm:$0xff]
    %v3741 = vunpack.c.l.b16 %v3677
    %v3742 = vunpack.c.h.b16 %v3677
    %v3743 = vunpack.c.l.b16 %v3678
    %v3744 = vunpack.c.h.b16 %v3678
    %v3745 = vunpack.c.l.b16 %v3679
    %v3746 = vunpack.c.h.b16 %v3679
    %v3747 = vunpack.c.l.b16 %v3680
    %v3748 = vunpack.c.h.b16 %v3680
    %v3749 = vunpack.c.l.b16 %v3681
    %v3750 = vunpack.c.h.b16 %v3681
    %v3751 = vunpack.c.l.b16 %v3682
    %v3752 = vunpack.c.h.b16 %v3682
    %v3753 = vunpack.c.l.b16 %v3683
    %v3754 = vunpack.c.h.b16 %v3683
    %v3755 = vunpack.c.l.b16 %v3684
    %v3756 = vunpack.c.h.b16 %v3684
    %v3757 = vunpack.c.l.b16 %v3685
    %v3758 = vunpack.c.h.b16 %v3685
    %v3759 = vunpack.c.l.b16 %v3686
    %v3760 = vunpack.c.h.b16 %v3686
    %v3761 = vunpack.c.l.b16 %v3687
    %v3762 = vunpack.c.h.b16 %v3687
    %v3763 = vunpack.c.l.b16 %v3688
    %v3764 = vunpack.c.h.b16 %v3688
    %v3765 = vunpack.c.l.b16 %v3689
    %v3766 = vunpack.c.h.b16 %v3689
    %v3767 = vunpack.c.l.b16 %v3690
    %v3768 = vunpack.c.h.b16 %v3690
    %v3769 = vunpack.c.l.b16 %v3691
    %v3770 = vunpack.c.h.b16 %v3691
    %v3771 = vunpack.c.l.b16 %v3692
    %v3772 = vunpack.c.h.b16 %v3692
    %v3773 = vunpack.c.l.b16 %v3693
    %v3774 = vunpack.c.h.b16 %v3693
    %v3775 = vunpack.c.l.b16 %v3694
    %v3776 = vunpack.c.h.b16 %v3694
    %v3777 = vunpack.c.l.b16 %v3695
    %v3778 = vunpack.c.h.b16 %v3695
    %v3779 = vunpack.c.l.b16 %v3696
    %v3780 = vunpack.c.h.b16 %v3696
    %v3781 = vunpack.c.l.b16 %v3697
    %v3782 = vunpack.c.h.b16 %v3697
    %v3783 = vunpack.c.l.b16 %v3698
    %v3784 = vunpack.c.h.b16 %v3698
    %v3785 = vunpack.c.l.b16 %v3699
    %v3786 = vunpack.c.h.b16 %v3699
    %v3787 = vunpack.c.l.b16 %v3700
    %v3788 = vunpack.c.h.b16 %v3700
    %v3789 = vunpack.c.l.b16 %v3701
    %v3790 = vunpack.c.h.b16 %v3701
    %v3791 = vunpack.c.l.b16 %v3702
    %v3792 = vunpack.c.h.b16 %v3702
    %v3793 = vunpack.c.l.b16 %v3703
    %v3794 = vunpack.c.h.b16 %v3703
    %v3795 = vunpack.c.l.b16 %v3704
    %v3796 = vunpack.c.h.b16 %v3704
    %v3797 = vunpack.c.l.b16 %v3705
    %v3798 = vunpack.c.h.b16 %v3705
    %v3799 = vunpack.c.l.b16 %v3706
    %v3800 = vunpack.c.h.b16 %v3706
    %v3801 = vunpack.c.l.b16 %v3707
    %v3802 = vunpack.c.h.b16 %v3707
    %v3803 = vunpack.c.l.b16 %v3708
    %v3804 = vunpack.c.h.b16 %v3708
    %v3805 = vpack.c.b16 %v3745, %v3741
    %v3806 = vpack.c.b16 %v3746, %v3742
    %v3807 = vpack.c.b16 %v3747, %v3743
    %v3808 = vpack.c.b16 %v3748, %v3744
    %v3809 = vpack.c.b16 %v3753, %v3749
    %v3810 = vpack.c.b16 %v3754, %v3750
    %v3811 = vpack.c.b16 %v3755, %v3751
    %v3812 = vpack.c.b16 %v3756, %v3752
    %v3813 = vpack.c.b16 %v3761, %v3757
    %v3814 = vpack.c.b16 %v3762, %v3758
    %v3815 = vpack.c.b16 %v3763, %v3759
    %v3816 = vpack.c.b16 %v3764, %v3760
    %v3817 = vpack.c.b16 %v3769, %v3765
    %v3818 = vpack.c.b16 %v3770, %v3766
    %v3819 = vpack.c.b16 %v3771, %v3767
    %v3820 = vpack.c.b16 %v3772, %v3768
    %v3821 = vpack.c.b16 %v3777, %v3773
    %v3822 = vpack.c.b16 %v3778, %v3774
    %v3823 = vpack.c.b16 %v3779, %v3775
    %v3824 = vpack.c.b16 %v3780, %v3776
    %v3825 = vpack.c.b16 %v3785, %v3781
    %v3826 = vpack.c.b16 %v3786, %v3782
    %v3827 = vpack.c.b16 %v3787, %v3783
    %v3828 = vpack.c.b16 %v3788, %v3784
    %v3829 = vpack.c.b16 %v3793, %v3789
    %v3830 = vpack.c.b16 %v3794, %v3790
    %v3831 = vpack.c.b16 %v3795, %v3791
    %v3832 = vpack.c.b16 %v3796, %v3792
    %v3833 = vpack.c.b16 %v3801, %v3797
    %v3834 = vpack.c.b16 %v3802, %v3798
    %v3835 = vpack.c.b16 %v3803, %v3799
    %v3836 = vpack.c.b16 %v3804, %v3800
    %3869 = vmatprep.subr.bf16.mxu0 %v3806
    %3870 = vmatpush1.bf16.msra.mxu0 %v3805
    %3871 = vmatprep.subr.bf16.mxu0 %v3810
    %3872 = vmatpush1.bf16.msra.mxu0 %v3809
    %3873 = vmatprep.subr.bf16.mxu0 %v3814
    %3874 = vmatpush1.bf16.msra.mxu0 %v3813
    %3875 = vmatprep.subr.bf16.mxu0 %v3818
    %3876 = vmatpush1.bf16.msra.mxu0 %v3817
    %3877 = vmatprep.subr.bf16.mxu0 %v3822
    %3878 = vmatpush1.bf16.msra.mxu0 %v3821
    %3879 = vmatprep.subr.bf16.mxu0 %v3826
    %3880 = vmatpush1.bf16.msra.mxu0 %v3825
    %3881 = vmatprep.subr.bf16.mxu0 %v3830
    %3882 = vmatpush1.bf16.msra.mxu0 %v3829
    %3883 = vmatprep.subr.bf16.mxu0 %v3834
    %3884 = vmatpush1.bf16.msra.mxu0 %v3833
    %3885 = vmatprep.subr.bf16.mxu0 0
    %3886 = vmatpush1.bf16.msra.mxu0 0
    %3887 = vmatprep.subr.bf16.mxu0 0
    %3888 = vmatpush1.bf16.msra.mxu0 0
    %3889 = vmatprep.subr.bf16.mxu0 0
    %3890 = vmatpush1.bf16.msra.mxu0 0
    %3891 = vmatprep.subr.bf16.mxu0 0
    %3892 = vmatpush1.bf16.msra.mxu0 0
    %3893 = vmatprep.subr.bf16.mxu0 0
    %3894 = vmatpush1.bf16.msra.mxu0 0
    %3895 = vmatprep.subr.bf16.mxu0 0
    %3896 = vmatpush1.bf16.msra.mxu0 0
    %3897 = vmatprep.subr.bf16.mxu0 0
    %3898 = vmatpush1.bf16.msra.mxu0 0
    %3899 = vmatprep.subr.bf16.mxu0 0
    %3900 = vmatpush1.bf16.msra.mxu0 0
    %3901 = vmatprep.mubr.bf16.mxu0 0
    %3902 = vmatmul.mubr.bf16.gmra.mrb[0].mxu0 %v3676
    %v3903 = vpop.f32.mrb[0].mxu0
    %v3904 = vadd.f32 0.0, %v3903
    %v3905 = vpop.f32.mrb[0].mxu0
    %v3906 = vadd.f32 0.0, %v3905
    %v3907 = vpop.f32.mrb[0].mxu0
    %v3908 = vadd.f32 0.0, %v3907
    %v3909 = vpop.f32.mrb[0].mxu0
    %v3910 = vadd.f32 0.0, %v3909
    %3911 = vdwg.mxu0
    %3912 = vmatprep.subr.bf16.mxu0 %v3808
    %3913 = vmatpush1.bf16.msra.mxu0 %v3807
    %3914 = vmatprep.subr.bf16.mxu0 %v3812
    %3915 = vmatpush1.bf16.msra.mxu0 %v3811
    %3916 = vmatprep.subr.bf16.mxu0 %v3816
    %3917 = vmatpush1.bf16.msra.mxu0 %v3815
    %3918 = vmatprep.subr.bf16.mxu0 %v3820
    %3919 = vmatpush1.bf16.msra.mxu0 %v3819
    %3920 = vmatprep.subr.bf16.mxu0 %v3824
    %3921 = vmatpush1.bf16.msra.mxu0 %v3823
    %3922 = vmatprep.subr.bf16.mxu0 %v3828
    %3923 = vmatpush1.bf16.msra.mxu0 %v3827
    %3924 = vmatprep.subr.bf16.mxu0 %v3832
    %3925 = vmatpush1.bf16.msra.mxu0 %v3831
    %3926 = vmatprep.subr.bf16.mxu0 %v3836
    %3927 = vmatpush1.bf16.msra.mxu0 %v3835
    %3928 = vmatprep.subr.bf16.mxu0 0
    %3929 = vmatpush1.bf16.msra.mxu0 0
    %3930 = vmatprep.subr.bf16.mxu0 0
    %3931 = vmatpush1.bf16.msra.mxu0 0
    %3932 = vmatprep.subr.bf16.mxu0 0
    %3933 = vmatpush1.bf16.msra.mxu0 0
    %3934 = vmatprep.subr.bf16.mxu0 0
    %3935 = vmatpush1.bf16.msra.mxu0 0
    %3936 = vmatprep.subr.bf16.mxu0 0
    %3937 = vmatpush1.bf16.msra.mxu0 0
    %3938 = vmatprep.subr.bf16.mxu0 0
    %3939 = vmatpush1.bf16.msra.mxu0 0
    %3940 = vmatprep.subr.bf16.mxu0 0
    %3941 = vmatpush1.bf16.msra.mxu0 0
    %3942 = vmatprep.subr.bf16.mxu0 0
    %3943 = vmatpush1.bf16.msra.mxu0 0
    %3944 = vmatprep.mubr.bf16.mxu0 0
    %3945 = vmatmul.mubr.bf16.gmra.mrb[0].mxu0 %v3676
    %v3946 = vpop.f32.mrb[0].mxu0
    %v3947 = vadd.f32 0.0, %v3946
    %v3948 = vpop.f32.mrb[0].mxu0
    %v3949 = vadd.f32 0.0, %v3948
    %v3950 = vpop.f32.mrb[0].mxu0
    %v3951 = vadd.f32 0.0, %v3950
    %v3952 = vpop.f32.mrb[0].mxu0
    %v3953 = vadd.f32 0.0, %v3952
    %3954 = vdwg.mxu0
    %v3955 = vadd.f32 %v3625, %v3904
    %v3956 = vadd.f32 %v3627, %v3906
    %v3957 = vadd.f32 %v3668, %v3947
    %v3958 = vadd.f32 %v3670, %v3949
    %v3959 = vadd.f32 %v3629, %v3908
    %v3960 = vadd.f32 %v3631, %v3910
    %v3961 = vadd.f32 %v3672, %v3951
    %v3962 = vadd.f32 %v3674, %v3953
    %v3963 = vxor.u32 %v3955, 2147483648
    %v3964 = vxor.u32 %v3959, 2147483648
    %v3965 = vmul.f32 %v3963, 1.442695
    %v3966 = vpow.pop %v3965
    %v3967 = vmul.f32 %v3964, 1.442695
    %v3968 = vpow.pop %v3967
    %v3969 = vadd.f32 %v3966, 1.0
    %v3970 = vadd.f32 %v3968, 1.0
    %v3971 = vrcp.pop %v3969
    %v3972 = vmul.f32 1.0, %v3971
    %v3973 = vrcp.pop %v3970
    %v3974 = vmul.f32 1.0, %v3973
    %v3975 = vxor.u32 %v3956, 2147483648
    %v3976 = vxor.u32 %v3960, 2147483648
    %v3977 = vmul.f32 %v3975, 1.442695
    %v3978 = vpow.pop %v3977
    %v3979 = vmul.f32 %v3976, 1.442695
    %v3980 = vpow.pop %v3979
    %v3981 = vadd.f32 %v3978, 1.0
    %v3982 = vadd.f32 %v3980, 1.0
    %v3983 = vrcp.pop %v3981
    %v3984 = vmul.f32 1.0, %v3983
    %v3985 = vrcp.pop %v3982
    %v3986 = vmul.f32 1.0, %v3985
    %v3987 = vtanh.pop %v3957
    %v3988 = vtanh.pop %v3961
    %v3989 = vxor.u32 %v3958, 2147483648
    %v3990 = vxor.u32 %v3962, 2147483648
    %v3991 = vmul.f32 %v3989, 1.442695
    %v3992 = vpow.pop %v3991
    %v3993 = vmul.f32 %v3990, 1.442695
    %v3994 = vpow.pop %v3993
    %v3995 = vadd.f32 %v3992, 1.0
    %v3996 = vadd.f32 %v3994, 1.0
    %v3997 = vrcp.pop %v3995
    %v3998 = vmul.f32 1.0, %v3997
    %v3999 = vrcp.pop %v3996
    %v4000 = vmul.f32 1.0, %v3999
    %v4001 = vmul.f32 %v3984, %v3531
    %v4002 = vmul.f32 %v3986, %v3532
    %v4003 = vmul.f32 %v3972, %v3987
    %v4004 = vmul.f32 %v3974, %v3988
    %v4005 = vadd.f32 %v4001, %v4003
    %v4006 = vadd.f32 %v4002, %v4004
    %v4007 = vtanh.pop %v4005
    %v4008 = vtanh.pop %v4006
    %v4009 = vmul.f32 %v3998, %v4007
    %v4010 = vmul.f32 %v4000, %v4008
    %s4011 = scalar_lea.vmem [#allocation13], 112
    %4012 = vst [vmem:[%s4011] sm:$0xff] %v4009
    %4013 = vst [vmem:[%s4011 + $0x8] sm:$0xff] %v4010
    %4014 = vst [vmem:[#allocation2] sm:$0xff] %v4009
    %4015 = vst [vmem:[#allocation2 + $0x8] sm:$0xff] %v4010
    %4016 = vst [vmem:[#allocation3] sm:$0xff] %v4005
    %4017 = vst [vmem:[#allocation3 + $0x8] sm:$0xff] %v4006
    // Predicated region
    $region50: #{tpu_custom_call.1} parent=1 // pred_check
      %p4018 = pneg %p95
    $region51: #{tpu_custom_call.1} parent=1 // pred_check_branch
      %4020 = sbr.rel (%p4018) target = $region53
    $region52: #{tpu_custom_call.1} parent=1 // pred_region
      %v4021 = vld [vmem:[#allocation2] sm:$0xff]
      %v4022 = vld [vmem:[#allocation2 + $0x8] sm:$0xff]
      %4023 = vst [vmem:[#allocation14] sm:$0xff] %v4021
      %4024 = vst [vmem:[#allocation14 + $0x8] sm:$0xff] %v4022
      %v4025 = vld [vmem:[#allocation3] sm:$0xff]
      %v4026 = vld [vmem:[#allocation3 + $0x8] sm:$0xff]
      %4027 = vst [vmem:[#allocation16] sm:$0xff] %v4025
      %4028 = vst [vmem:[#allocation16 + $0x8] sm:$0xff] %v4026
    $region53: #{tpu_custom_call.1} parent=1 // pred_fallthru
      _
    // Predicated region
    $region54: #{tpu_custom_call.1} parent=1 // pred_check
      _
    $region55: #{tpu_custom_call.1} parent=1 // pred_check_branch
      %4030 = sbr.rel (0) target = $region57
    $region56: #{tpu_custom_call.1} parent=1 // pred_region
      %s4032 = ssub.s32 2048, 2048
      %4033 = vsyncadd [#allocation6], %s4032
      %s4034 = sshll.u32 [#allocation13], 4
      %s4035 = int_to_ptr.vmem [resolvable:$true] %s4034
      %4040 = dma.vmem_to_hbm [thread:$0]  %s4035, 2048, %s6, [#allocation6], 128, 128, 8
    $region57: #{tpu_custom_call.1} parent=1 // pred_fallthru
      _
    // Predicated region
    $region58: #{tpu_custom_call.1} parent=1 // pred_check
      _
    $region59: #{tpu_custom_call.1} parent=1 // pred_check_branch
      %4042 = sbr.rel (0) target = $region61
    $region60: #{tpu_custom_call.1} parent=1 // pred_region
      %s4044 = ssub.s32 256, 256
      %4045 = vsyncadd [#allocation15], %s4044
      %s4046 = sshll.u32 [#allocation14], 4
      %s4047 = int_to_ptr.vmem [resolvable:$true] %s4046
      %4052 = dma.vmem_to_hbm [thread:$0]  %s4047, 256, %s7, [#allocation15], 128, 128, 8
    $region61: #{tpu_custom_call.1} parent=1 // pred_fallthru
      _
    // Predicated region
    $region62: #{tpu_custom_call.1} parent=1 // pred_check
      _
    $region63: #{tpu_custom_call.1} parent=1 // pred_check_branch
      %4054 = sbr.rel (0) target = $region65
    $region64: #{tpu_custom_call.1} parent=1 // pred_region
      %s4056 = ssub.s32 256, 256
      %4057 = vsyncadd [#allocation15], %s4056
      %s4058 = sshll.u32 [#allocation16], 4
      %s4059 = int_to_ptr.vmem [resolvable:$true] %s4058
      %4064 = dma.vmem_to_hbm [thread:$0]  %s4059, 256, %s8, [#allocation15], 128, 128, 8
    $region65: #{tpu_custom_call.1} parent=1 // pred_fallthru
      _
    // Predicated region
    $region66: #{tpu_custom_call.1} parent=1 // pred_check
      _
    $region67: #{tpu_custom_call.1} parent=1 // pred_check_branch
      %4066 = sbr.rel (0) target = $region69
    $region68: #{tpu_custom_call.1} parent=1 // pred_region
      %4067 = dma.done [#allocation6], 2048
    $region69: #{tpu_custom_call.1} parent=1 // pred_fallthru
      _
    // Predicated region
    $region70: #{tpu_custom_call.1} parent=1 // pred_check
      _
    $region71: #{tpu_custom_call.1} parent=1 // pred_check_branch
      %4069 = sbr.rel (0) target = $region73
    $region72: #{tpu_custom_call.1} parent=1 // pred_region
      %4070 = dma.done [#allocation15], 256
    $region73: #{tpu_custom_call.1} parent=1 // pred_fallthru
      _
    // Predicated region
    $region74: #{tpu_custom_call.1} parent=1 // pred_check
      _
    $region75: #{tpu_custom_call.1} parent=1 // pred_check_branch
      %4072 = sbr.rel (0) target = $region77
    $region76: #{tpu_custom_call.1} parent=1 // pred_region
      %4073 = dma.done [#allocation15], 256
    $region77: #{tpu_custom_call.1} parent=1 // pred_fallthru
      _
    %4074 = vsyncpa [#allocation5], 1
    %4075 = vsyncpa [#allocation8], 1
    %4076 = vsyncpa [#allocation11], 1
    %4077 = vsyncpa [#allocation6], 1
    %4078 = vsyncpa [#allocation15], 1

</llo_original>
